<compile_context>
chip_gen: v5e
topology: v5e:2x2
jax: 0.10.0
libtpu: 0.0.40
codegen_flags: <defaults>
</compile_context>

<pallas_src>
import functools

import jax
import jax.numpy as jnp
import numpy as np
from jax.experimental import pallas as pl
from jax.experimental.pallas import tpu as pltpu


# ----------------------- block-space weight construction --------------------

def _build_block_weights(w, G):
    """ConvTranspose2d(k=3,s=2,p=1,op=1) as 4 block-space matmul weights.

    w: (Cin, Cout, 3, 3) torch-layout ConvTranspose2d weight.
    G: input block size (sub-positions per base-grid cell per axis).
    Returns np.ndarray (4, G*G*Cin, 2G*2G*Cout); index 0..3 = carry (c_h, c_w)
    in ((0,0),(0,1),(1,0),(1,1)).  Output sub-index s = 2*r + p (r = input
    sub-pos, p = output phase); input read sub-pos r' and carry c come from
    r + d (d = 0/1 tap shift), with kernel tap k = p + 1 - 2*d.
    """
    w = np.asarray(w, np.float32)
    cin, cout = w.shape[0], w.shape[1]
    gp = 2 * G
    m = np.zeros((2, 2, G * G * cin, gp * gp * cout), np.float32)
    for s_h in range(gp):
        r_h, p_h = divmod(s_h, 2)
        for s_w in range(gp):
            r_w, p_w = divmod(s_w, 2)
            for dh in range(2):
                kh = p_h + 1 - 2 * dh
                if not 0 <= kh <= 2:
                    continue
                c_h, rp_h = divmod(r_h + dh, G)
                for dw in range(2):
                    kw = p_w + 1 - 2 * dw
                    if not 0 <= kw <= 2:
                        continue
                    c_w, rp_w = divmod(r_w + dw, G)
                    r0 = (rp_h * G + rp_w) * cin
                    c0 = (s_h * gp + s_w) * cout
                    m[c_h, c_w, r0:r0 + cin, c0:c0 + cout] += w[:, :, kh, kw]
    return m.reshape(4, G * G * cin, gp * gp * cout)


def prepare_params(params, org_c, org_h, org_w):
    """One-time repack of torch-layout params into kernel-ready tensors."""
    assert org_c == 64, "decoder hard-codes 64 input channels to the first deconv"
    H0, W0 = org_h, org_w
    S = H0 * W0
    L = params["lin_w"].shape[1]
    carries = ((0, 0), (0, 1), (1, 0), (1, 1))

    # Per-cell linear weight/bias: act(u, v) = x @ wl_cell[u, v] + bl_cell[u, v].
    lin_w = np.asarray(params["lin_w"], np.float32)            # (64*S, L), rows = (c, u, v)
    lin_b = np.asarray(params["lin_b"], np.float32)
    wl_cell = lin_w.reshape(64, H0, W0, L).transpose(1, 2, 3, 0)   # (H0, W0, L, 64)
    bl_cell = lin_b.reshape(64, H0, W0).transpose(1, 2, 0)         # (H0, W0, 64)

    # --- Stage 1 (G=1): fold Linear (+bias) + ConvT1 (+bias) per cell -------
    m1 = _build_block_weights(params["ct1_w"], 1)                  # (4, 64, 128)
    b1 = np.tile(np.asarray(params["ct1_b"], np.float32), 4)       # (128,)
    w1 = np.zeros((S * (L + 1), 128), np.float32)
    for u in range(H0):
        for v in range(W0):
            j = u * W0 + v
            w_eff = np.zeros((L, 128), np.float32)
            b_eff = b1.copy()
            for idx, (ch, cw) in enumerate(carries):
                uu, vv = u + ch, v + cw
                if uu < H0 and vv < W0:                            # out-of-grid cells are zero
                    w_eff += wl_cell[uu, vv] @ m1[idx]
                    b_eff += bl_cell[uu, vv] @ m1[idx]
            w1[j * (L + 1): j * (L + 1) + L] = w_eff
            w1[j * (L + 1) + L] = b_eff                            # bias row (LHS carries a 1)

    # --- Stage 2 (G=2): fused-K weight (4 carries stacked along K) ----------
    w2 = _build_block_weights(params["ct2_w"], 2).reshape(4 * 128, 256)
    b2 = np.tile(np.asarray(params["ct2_b"], np.float32), 16).reshape(1, 256)

    # --- Stage 3 (G=4): Cout padded 3 -> 4 so the output block is 8*8*4 = 256 lanes.
    w3p = np.pad(np.asarray(params["ct3_w"], np.float32),
                 ((0, 0), (0, 1), (0, 0), (0, 0)))
    w3 = _build_block_weights(w3p, 4).reshape(4 * 256, 256)
    b3 = np.tile(np.pad(np.asarray(params["ct3_b"], np.float32), (0, 1)),
                 64).reshape(1, 256)

    as_j = lambda a: jnp.asarray(a, jnp.float32)
    return {"w1": as_j(w1), "w2": as_j(w2), "b2": as_j(b2),
            "w3": as_j(w3), "b3": as_j(b3)}


# --------------------------------- kernel ------------------------------------

def _decoder_kernel(masks_ref, xe_ref, w1_ref, w2_ref, b2_ref, w3_ref, b3_ref,
                    o_ref, x2_ref, x3_ref, *, M, W0):
    f32 = jnp.float32
    mm = masks_ref[...]                                   # (M, 4) boundary masks

    # ---- Stage 1: Linear + ConvT1 (+biases) as ONE block-diagonal matmul ----
    # Rows come out already ordered (batch, base cell); no scatter needed.
    h1 = jnp.dot(xe_ref[...], w1_ref[...], preferred_element_type=f32)
    x2_ref[pl.ds(0, M), :] = jnp.maximum(h1, 0.0)                       # ReLU
    x2_ref[pl.ds(M, x2_ref.shape[0] - M), :] = jnp.zeros(
        (x2_ref.shape[0] - M, x2_ref.shape[1]), f32)                    # pad rows

    shifts = (0, 1, W0, W0 + 1)           # carries (0,0),(0,1),(1,0),(1,1)

    def conv_stage(x_ref, w_ref, b_ref):
        parts = []
        for i, t in enumerate(shifts):
            opnd = x_ref[pl.ds(t, M), :]                  # row-shift = carry (ch,cw)
            if i:                                         # carry (0,0) never crosses
                opnd = opnd * mm[:, i:i + 1]              # zero cross-boundary rows
            parts.append(opnd)
        op = jnp.concatenate(parts, axis=1)               # (M, 4*K) fused-K operand
        return jnp.dot(op, w_ref[...], preferred_element_type=f32) + b_ref[...]

    # ---- Stage 2: ConvT2 + ReLU --------------------------------------------
    h2 = conv_stage(x2_ref, w2_ref, b2_ref)               # (M, 256)
    x3_ref[pl.ds(0, M), :] = jnp.maximum(h2, 0.0)
    x3_ref[pl.ds(M, x3_ref.shape[0] - M), :] = jnp.zeros(
        (x3_ref.shape[0] - M, x3_ref.shape[1]), f32)

    # ---- Stage 3: ConvT3 (no ReLU) -> lane-dense (M, 256) output ------------
    o_ref[...] = conv_stage(x3_ref, w3_ref, b3_ref).astype(o_ref.dtype)


# -------------------------------- wrapper ------------------------------------

def _pick_block_batch(B, S, target_rows=256):
    """Largest TB dividing B with TB*S <= target_rows; keep >= 2 grid steps."""
    cap = max(1, target_rows // S)
    tb = 1
    for cand in range(1, min(B, cap) + 1):
        if B % cand == 0:
            tb = cand
    if tb == B and B > 1:                 # keep grid length >= 2 (v7x megacore)
        for cand in range(tb // 2, 0, -1):
            if B % cand == 0:
                tb = cand
                break
    return tb


def decoder_forward(x, prep, org_h, org_w, *, block_batch=None):
    """x: (B, latent_dim) -> (B, 3, 8*org_h, 8*org_w), NCHW like the module."""
    B, L = x.shape
    H0, W0 = org_h, org_w
    S = H0 * W0
    K1 = S * (L + 1)
    assert prep["w1"].shape[0] == K1

    TB = block_batch if block_batch is not None else _pick_block_batch(B, S)
    assert B % TB == 0
    M = TB * S
    assert M % 8 == 0 or TB == B, "TB*H0*W0 must be a multiple of 8"

    # Block-diagonal LHS: row (b, cell j) holds [x[b], 1] in lane-group j, so
    # the fused Linear+ConvT1 matmul emits rows already in (batch, cell) order.
    xa = jnp.concatenate([x.astype(jnp.float32),
                          jnp.ones((B, 1), jnp.float32)], axis=1)       # (B, L+1)
    eye = jnp.eye(S, dtype=jnp.float32)
    xe = (xa[:, None, None, :] * eye[None, :, :, None]).reshape(B * S, K1)

    # Per-row boundary masks for the 4 carries (period S; column 0 all-ones).
    j = np.arange(S)
    u, v = j // W0, j % W0
    in_h, in_w = (u + 1 < H0), (v + 1 < W0)
    mrow = np.stack([np.ones(S, np.float32),
                     in_w.astype(np.float32),
                     in_h.astype(np.float32),
                     (in_h & in_w).astype(np.float32)], axis=1)
    masks = jnp.asarray(np.tile(mrow, (TB, 1)), jnp.float32)            # (M, 4)

    n_out = 256
    flops = 2 * B * S * (K1 * 128 + 512 * 256 + 1024 * 256)
    weight_bytes = 4 * sum(int(np.prod(prep[k].shape))
                           for k in ("w1", "w2", "b2", "w3", "b3"))
    bytes_accessed = int(4 * (xe.size + masks.size + B * S * n_out) + weight_bytes)

    kernel = functools.partial(_decoder_kernel, M=M, W0=W0)
    blocks = pl.pallas_call(
        kernel,
        out_shape=jax.ShapeDtypeStruct((B * S, n_out), jnp.float32),
        grid_spec=pltpu.PrefetchScalarGridSpec(
            num_scalar_prefetch=0,
            grid=(B // TB,),
            in_specs=[
                pl.BlockSpec((M, 4), lambda b: (0, 0)),          # masks (constant)
                pl.BlockSpec((M, K1), lambda b: (b, 0)),         # block-diag inputs
                pl.BlockSpec(prep["w1"].shape, lambda b: (0, 0)),
                pl.BlockSpec(prep["w2"].shape, lambda b: (0, 0)),
                pl.BlockSpec(prep["b2"].shape, lambda b: (0, 0)),
                pl.BlockSpec(prep["w3"].shape, lambda b: (0, 0)),
                pl.BlockSpec(prep["b3"].shape, lambda b: (0, 0)),
            ],
            out_specs=pl.BlockSpec((M, n_out), lambda b: (b, 0)),
            scratch_shapes=[
                pltpu.VMEM((M + 8, 128), jnp.float32),           # stage-2 input
                pltpu.VMEM((M + 8, 256), jnp.float32),           # stage-3 input
            ],
        ),
        compiler_params=pltpu.CompilerParams(
            dimension_semantics=("parallel",),
        ),
        cost_estimate=pl.CostEstimate(
            flops=flops, transcendentals=0, bytes_accessed=bytes_accessed),
    )(masks, xe, prep["w1"], prep["w2"], prep["b2"], prep["w3"], prep["b3"])

    # Un-block outside the kernel (tiny tensor):
    # rows (b, u, v), lanes (s_h, s_w, c_pad) -> NHWC -> drop pad channel -> NCHW.
    y = blocks.reshape(B, H0, W0, 8, 8, 4)
    y = y.transpose(0, 1, 3, 2, 4, 5).reshape(B, 8 * H0, 8 * W0, 4)[..., :3]
    return y.transpose(0, 3, 1, 2)


# ----------------------------- parameters ------------------------------------

def init_params(key, latent_dim, org_c, org_h, org_w):
    """Deterministic parameter init (PyTorch-style uniform bounds)."""
    def unif(k, shape, fan_in):
        bound = 1.0 / np.sqrt(fan_in)
        return jax.random.uniform(k, shape, jnp.float32, -bound, bound)

    ks = jax.random.split(key, 8)
    F = org_c * org_h * org_w
    return {
        "lin_w": unif(ks[0], (F, latent_dim), latent_dim),   # (out, in) as torch
        "lin_b": unif(ks[1], (F,), latent_dim),
        "ct1_w": unif(ks[2], (64, 32, 3, 3), 64 * 9),        # (Cin, Cout, kH, kW)
        "ct1_b": unif(ks[3], (32,), 64 * 9),
        "ct2_w": unif(ks[4], (32, 16, 3, 3), 32 * 9),
        "ct2_b": unif(ks[5], (16,), 32 * 9),
        "ct3_w": unif(ks[6], (16, 3, 3, 3), 16 * 9),
        "ct3_b": unif(ks[7], (3,), 16 * 9),
    }


# ------------------------------ reference ------------------------------------

def decoder_reference(x, params, org_c, org_h, org_w):
    """Pure-JAX (XLA) reference of the same forward pass, NCHW throughout."""
    y = x @ params["lin_w"].T + params["lin_b"]
    B = x.shape[0]
    h = y.reshape(B, org_c, org_h, org_w)
    for i, relu in ((1, True), (2, True), (3, False)):
        wt = params[f"ct{i}_w"]
        w_oihw = jnp.flip(wt, axis=(2, 3)).transpose(1, 0, 2, 3)
        h = jax.lax.conv_general_dilated(
            h, w_oihw, window_strides=(1, 1),
            padding=((1, 2), (1, 2)), lhs_dilation=(2, 2),
            dimension_numbers=("NCHW", "OIHW", "NCHW"))
        h = h + params[f"ct{i}_b"].reshape(1, -1, 1, 1)
        if relu:
            h = jnp.maximum(h, 0.0)
    return h


# --------------------------------- main --------------------------------------

if __name__ == "__main__":
    latent_dim, org_c, org_h, org_w = 32, 64, 4, 4   # decoder requires org_c == 64
    B = 32                                           # -> TB=16, grid=(2,), M=256

    key = jax.random.PRNGKey(0)
    params = init_params(key, latent_dim, org_c, org_h, org_w)
    x = jax.random.normal(jax.random.fold_in(key, 99), (B, latent_dim), jnp.float32)

    prep = prepare_params(params, org_c, org_h, org_w)   # one-time weight repack
    fwd = jax.jit(functools.partial(decoder_forward, org_h=org_h, org_w=org_w))

    out = jax.block_until_ready(fwd(x, prep))
    assert out.shape == (B, 3, 8 * org_h, 8 * org_w), out.shape

    ref = decoder_reference(x, params, org_c, org_h, org_w)
    np.testing.assert_allclose(np.asarray(out), np.asarray(ref),
                               atol=1e-3, rtol=1e-3)
    print("KERNEL_OK")
</pallas_src>

<mosaic_0001>
module attributes {stable_mosaic.version = 11 : i64} {
  func.func @_decoder_kernel(%arg0: i32, %arg1: memref<256x4xf32, #tpu.memory_space<vmem>>, %arg2: memref<256x528xf32, #tpu.memory_space<vmem>>, %arg3: memref<528x128xf32, #tpu.memory_space<vmem>>, %arg4: memref<512x256xf32, #tpu.memory_space<vmem>>, %arg5: memref<1x256xf32, #tpu.memory_space<vmem>>, %arg6: memref<1024x256xf32, #tpu.memory_space<vmem>>, %arg7: memref<1x256xf32, #tpu.memory_space<vmem>>, %arg8: memref<256x256xf32, #tpu.memory_space<vmem>>, %arg9: memref<264x128xf32, #tpu.memory_space<vmem>>, %arg10: memref<264x256xf32, #tpu.memory_space<vmem>>) attributes {dimension_semantics = [#tpu.dimension_semantics<parallel>], iteration_bounds = array<i64: 2>, scalar_prefetch = 0 : i64, scratch_operands = 2 : i64, tpu.core_type = #tpu.core_type<tc>, window_params = [{pipeline_mode = #tpu.pipeline_mode<synchronous>, transform_indices = @transform_0, window_bounds = array<i64: 256, 4>}, {transform_indices = @transform_1, window_bounds = array<i64: 256, 528>}, {pipeline_mode = #tpu.pipeline_mode<synchronous>, transform_indices = @transform_2, window_bounds = array<i64: 528, 128>}, {pipeline_mode = #tpu.pipeline_mode<synchronous>, transform_indices = @transform_3, window_bounds = array<i64: 512, 256>}, {pipeline_mode = #tpu.pipeline_mode<synchronous>, transform_indices = @transform_4, window_bounds = array<i64: 1, 256>}, {pipeline_mode = #tpu.pipeline_mode<synchronous>, transform_indices = @transform_5, window_bounds = array<i64: 1024, 256>}, {pipeline_mode = #tpu.pipeline_mode<synchronous>, transform_indices = @transform_6, window_bounds = array<i64: 1, 256>}, {transform_indices = @transform_7, window_bounds = array<i64: 256, 256>}]} {
    %c0 = arith.constant 0 : index
    %c0_0 = arith.constant 0 : index
    %0 = vector.load %arg1[%c0, %c0_0] : memref<256x4xf32, #tpu.memory_space<vmem>>, vector<256x4xf32>
    %c0_1 = arith.constant 0 : index
    %c0_2 = arith.constant 0 : index
    %1 = vector.load %arg2[%c0_1, %c0_2] : memref<256x528xf32, #tpu.memory_space<vmem>>, vector<256x528xf32>
    %c0_3 = arith.constant 0 : index
    %c0_4 = arith.constant 0 : index
    %2 = vector.load %arg3[%c0_3, %c0_4] : memref<528x128xf32, #tpu.memory_space<vmem>>, vector<528x128xf32>
    %cst = arith.constant dense<0.000000e+00> : vector<256x128xf32>
    %3 = tpu.matmul %1, %2, %cst {dimension_numbers = #tpu.dot_dimension_numbers<[1], [0], [0], [1], [0, 0, 1, 1], [], []>} : vector<256x528xf32>, vector<528x128xf32>, vector<256x128xf32> -> vector<256x128xf32>
    %cst_5 = arith.constant 0.000000e+00 : f32
    %4 = vector.broadcast %cst_5 : f32 to vector<256x128xf32>
    %5 = arith.maximumf %3, %4 : vector<256x128xf32>
    %c0_6 = arith.constant 0 : index
    %c0_7 = arith.constant 0 : index
    %6 = vector.load %arg9[%c0_6, %c0_7] : memref<264x128xf32, #tpu.memory_space<vmem>>, vector<256x128xf32>
    tpu.vector_store %arg9[%c0_6, %c0_7], %5 {strides = array<i32>} : memref<264x128xf32, #tpu.memory_space<vmem>>, vector<256x128xf32>,
    %cst_8 = arith.constant 0.000000e+00 : f32
    %7 = vector.broadcast %cst_8 : f32 to vector<8x128xf32>
    %c256 = arith.constant 256 : index
    %c0_9 = arith.constant 0 : index
    %8 = vector.load %arg9[%c256, %c0_9] : memref<264x128xf32, #tpu.memory_space<vmem>>, vector<8x128xf32>
    tpu.vector_store %arg9[%c256, %c0_9], %7 {strides = array<i32>} : memref<264x128xf32, #tpu.memory_space<vmem>>, vector<8x128xf32>,
    %c0_10 = arith.constant 0 : index
    %c0_11 = arith.constant 0 : index
    %9 = vector.load %arg9[%c0_10, %c0_11] : memref<264x128xf32, #tpu.memory_space<vmem>>, vector<256x128xf32>
    %c1 = arith.constant 1 : index
    %c0_12 = arith.constant 0 : index
    %10 = vector.load %arg9[%c1, %c0_12] : memref<264x128xf32, #tpu.memory_space<vmem>>, vector<256x128xf32>
    %11 = vector.extract_strided_slice %0 {offsets = [0, 1], sizes = [256, 1], strides = [1, 1]} : vector<256x4xf32> to vector<256x1xf32>
    %12 = vector.broadcast %11 : vector<256x1xf32> to vector<256x128xf32>
    %13 = arith.mulf %10, %12 : vector<256x128xf32>
    %c4 = arith.constant 4 : index
    %c0_13 = arith.constant 0 : index
    %14 = vector.load %arg9[%c4, %c0_13] : memref<264x128xf32, #tpu.memory_space<vmem>>, vector<256x128xf32>
    %15 = vector.extract_strided_slice %0 {offsets = [0, 2], sizes = [256, 1], strides = [1, 1]} : vector<256x4xf32> to vector<256x1xf32>
    %16 = vector.broadcast %15 : vector<256x1xf32> to vector<256x128xf32>
    %17 = arith.mulf %14, %16 : vector<256x128xf32>
    %c5 = arith.constant 5 : index
    %c0_14 = arith.constant 0 : index
    %18 = vector.load %arg9[%c5, %c0_14] : memref<264x128xf32, #tpu.memory_space<vmem>>, vector<256x128xf32>
    %19 = vector.extract_strided_slice %0 {offsets = [0, 3], sizes = [256, 1], strides = [1, 1]} : vector<256x4xf32> to vector<256x1xf32>
    %20 = vector.broadcast %19 : vector<256x1xf32> to vector<256x128xf32>
    %21 = arith.mulf %18, %20 : vector<256x128xf32>
    %22 = tpu.concatenate %9, %13, %17, %21 in 1 : vector<256x128xf32>, vector<256x128xf32>, vector<256x128xf32>, vector<256x128xf32> -> vector<256x512xf32>
    %c0_15 = arith.constant 0 : index
    %c0_16 = arith.constant 0 : index
    %23 = vector.load %arg4[%c0_15, %c0_16] : memref<512x256xf32, #tpu.memory_space<vmem>>, vector<512x256xf32>
    %cst_17 = arith.constant dense<0.000000e+00> : vector<256x256xf32>
    %24 = tpu.matmul %22, %23, %cst_17 {dimension_numbers = #tpu.dot_dimension_numbers<[1], [0], [0], [1], [0, 0, 1, 1], [], []>} : vector<256x512xf32>, vector<512x256xf32>, vector<256x256xf32> -> vector<256x256xf32>
    %c0_18 = arith.constant 0 : index
    %c0_19 = arith.constant 0 : index
    %25 = vector.load %arg5[%c0_18, %c0_19] : memref<1x256xf32, #tpu.memory_space<vmem>>, vector<1x256xf32>
    %26 = vector.broadcast %25 : vector<1x256xf32> to vector<256x256xf32>
    %27 = arith.addf %24, %26 : vector<256x256xf32>
    %cst_20 = arith.constant 0.000000e+00 : f32
    %28 = vector.broadcast %cst_20 : f32 to vector<256x256xf32>
    %29 = arith.maximumf %27, %28 : vector<256x256xf32>
    %c0_21 = arith.constant 0 : index
    %c0_22 = arith.constant 0 : index
    %30 = vector.load %arg10[%c0_21, %c0_22] : memref<264x256xf32, #tpu.memory_space<vmem>>, vector<256x256xf32>
    tpu.vector_store %arg10[%c0_21, %c0_22], %29 {strides = array<i32>} : memref<264x256xf32, #tpu.memory_space<vmem>>, vector<256x256xf32>,
    %cst_23 = arith.constant 0.000000e+00 : f32
    %31 = vector.broadcast %cst_23 : f32 to vector<8x256xf32>
    %c256_24 = arith.constant 256 : index
    %c0_25 = arith.constant 0 : index
    %32 = vector.load %arg10[%c256_24, %c0_25] : memref<264x256xf32, #tpu.memory_space<vmem>>, vector<8x256xf32>
    tpu.vector_store %arg10[%c256_24, %c0_25], %31 {strides = array<i32>} : memref<264x256xf32, #tpu.memory_space<vmem>>, vector<8x256xf32>,
    %c0_26 = arith.constant 0 : index
    %c0_27 = arith.constant 0 : index
    %33 = vector.load %arg10[%c0_26, %c0_27] : memref<264x256xf32, #tpu.memory_space<vmem>>, vector<256x256xf32>
    %c1_28 = arith.constant 1 : index
    %c0_29 = arith.constant 0 : index
    %34 = vector.load %arg10[%c1_28, %c0_29] : memref<264x256xf32, #tpu.memory_space<vmem>>, vector<256x256xf32>
    %35 = vector.extract_strided_slice %0 {offsets = [0, 1], sizes = [256, 1], strides = [1, 1]} : vector<256x4xf32> to vector<256x1xf32>
    %36 = vector.broadcast %35 : vector<256x1xf32> to vector<256x256xf32>
    %37 = arith.mulf %34, %36 : vector<256x256xf32>
    %c4_30 = arith.constant 4 : index
    %c0_31 = arith.constant 0 : index
    %38 = vector.load %arg10[%c4_30, %c0_31] : memref<264x256xf32, #tpu.memory_space<vmem>>, vector<256x256xf32>
    %39 = vector.extract_strided_slice %0 {offsets = [0, 2], sizes = [256, 1], strides = [1, 1]} : vector<256x4xf32> to vector<256x1xf32>
    %40 = vector.broadcast %39 : vector<256x1xf32> to vector<256x256xf32>
    %41 = arith.mulf %38, %40 : vector<256x256xf32>
    %c5_32 = arith.constant 5 : index
    %c0_33 = arith.constant 0 : index
    %42 = vector.load %arg10[%c5_32, %c0_33] : memref<264x256xf32, #tpu.memory_space<vmem>>, vector<256x256xf32>
    %43 = vector.extract_strided_slice %0 {offsets = [0, 3], sizes = [256, 1], strides = [1, 1]} : vector<256x4xf32> to vector<256x1xf32>
    %44 = vector.broadcast %43 : vector<256x1xf32> to vector<256x256xf32>
    %45 = arith.mulf %42, %44 : vector<256x256xf32>
    %46 = tpu.concatenate %33, %37, %41, %45 in 1 : vector<256x256xf32>, vector<256x256xf32>, vector<256x256xf32>, vector<256x256xf32> -> vector<256x1024xf32>
    %c0_34 = arith.constant 0 : index
    %c0_35 = arith.constant 0 : index
    %47 = vector.load %arg6[%c0_34, %c0_35] : memref<1024x256xf32, #tpu.memory_space<vmem>>, vector<1024x256xf32>
    %cst_36 = arith.constant dense<0.000000e+00> : vector<256x256xf32>
    %48 = tpu.matmul %46, %47, %cst_36 {dimension_numbers = #tpu.dot_dimension_numbers<[1], [0], [0], [1], [0, 0, 1, 1], [], []>} : vector<256x1024xf32>, vector<1024x256xf32>, vector<256x256xf32> -> vector<256x256xf32>
    %c0_37 = arith.constant 0 : index
    %c0_38 = arith.constant 0 : index
    %49 = vector.load %arg7[%c0_37, %c0_38] : memref<1x256xf32, #tpu.memory_space<vmem>>, vector<1x256xf32>
    %50 = vector.broadcast %49 : vector<1x256xf32> to vector<256x256xf32>
    %51 = arith.addf %48, %50 : vector<256x256xf32>
    %c0_39 = arith.constant 0 : index
    %c0_40 = arith.constant 0 : index
    %52 = vector.load %arg8[%c0_39, %c0_40] : memref<256x256xf32, #tpu.memory_space<vmem>>, vector<256x256xf32>
    tpu.vector_store %arg8[%c0_39, %c0_40], %51 {strides = array<i32>} : memref<256x256xf32, #tpu.memory_space<vmem>>, vector<256x256xf32>,
    return
  }
  func.func @transform_0(%arg0: i32) -> (i32, i32) {
    %c0_i32 = arith.constant 0 : i32
    %c0_i32_0 = arith.constant 0 : i32
    %c0_i32_1 = arith.constant 0 : i32
    return %c0_i32, %c0_i32_0 : i32, i32
  }
  func.func @transform_1(%arg0: i32) -> (i32, i32) {
    %c0_i32 = arith.constant 0 : i32
    %c0_i32_0 = arith.constant 0 : i32
    return %arg0, %c0_i32 : i32, i32
  }
  func.func @transform_2(%arg0: i32) -> (i32, i32) {
    %c0_i32 = arith.constant 0 : i32
    %c0_i32_0 = arith.constant 0 : i32
    %c0_i32_1 = arith.constant 0 : i32
    return %c0_i32, %c0_i32_0 : i32, i32
  }
  func.func @transform_3(%arg0: i32) -> (i32, i32) {
    %c0_i32 = arith.constant 0 : i32
    %c0_i32_0 = arith.constant 0 : i32
    %c0_i32_1 = arith.constant 0 : i32
    return %c0_i32, %c0_i32_0 : i32, i32
  }
  func.func @transform_4(%arg0: i32) -> (i32, i32) {
    %c0_i32 = arith.constant 0 : i32
    %c0_i32_0 = arith.constant 0 : i32
    %c0_i32_1 = arith.constant 0 : i32
    return %c0_i32, %c0_i32_0 : i32, i32
  }
  func.func @transform_5(%arg0: i32) -> (i32, i32) {
    %c0_i32 = arith.constant 0 : i32
    %c0_i32_0 = arith.constant 0 : i32
    %c0_i32_1 = arith.constant 0 : i32
    return %c0_i32, %c0_i32_0 : i32, i32
  }
  func.func @transform_6(%arg0: i32) -> (i32, i32) {
    %c0_i32 = arith.constant 0 : i32
    %c0_i32_0 = arith.constant 0 : i32
    %c0_i32_1 = arith.constant 0 : i32
    return %c0_i32, %c0_i32_0 : i32, i32
  }
  func.func @transform_7(%arg0: i32) -> (i32, i32) {
    %c0_i32 = arith.constant 0 : i32
    %c0_i32_0 = arith.constant 0 : i32
    return %arg0, %c0_i32 : i32, i32
  }
}

</mosaic_0001>

<llo_original>
// kernel: decoder_forward.1
$region0: #{decoder_forward.1}
  #allocation0 [shape = 'u32[]', space=smem, size = 0x4, offset = 0x4, fixed_abs, tag = 'smem constant byte address 0x4 - core index']
  #allocation1 [shape = 'u32[72,128]{1,0:T(1,128)}', space=vmem, size = 0x9000, scoped, tag = 'internal scratch']
  #allocation2 [shape = 'f32[264,128]{1,0:T(8,128)}', space=vmem, size = 0x21000, scoped, tag = 'scratch operand']
  #allocation3 [shape = 'f32[264,256]{1,0:T(8,128)}', space=vmem, size = 0x42000, scoped, tag = 'scratch operand']
  %s0 = inlined_call_operand.vmem [shape: f32[256,4], index: 0, kind: input, shape index: {}]
  %s1 = inlined_call_operand.vmem [shape: f32[512,528], index: 1, kind: input, shape index: {}]
  %s2 = inlined_call_operand.vmem [shape: f32[528,128], index: 2, kind: input, shape index: {}]
  %s3 = inlined_call_operand.vmem [shape: f32[512,256], index: 3, kind: input, shape index: {}]
  %s4 = inlined_call_operand.vmem [shape: f32[1,256], index: 4, kind: input, shape index: {}]
  %s5 = inlined_call_operand.vmem [shape: f32[1024,256], index: 5, kind: input, shape index: {}]
  %s6 = inlined_call_operand.vmem [shape: f32[1,256], index: 6, kind: input, shape index: {}]
  %s7 = inlined_call_operand.vmem [shape: f32[512,256], index: 7, kind: output, shape index: {}]
  %s8 = sld [smem:[#allocation0]]
  $region61: #{decoder_forward.1} parent=0
    _
  %s10 = ssub.s32 1, %s8
  %s11 = scalar_select 0, %s10, %s8
  loop: start=0, step=1, limit=4
  $region2: #{decoder_forward.1} parent=0 // loop_pre_header
    _
  $region3: #{decoder_forward.1} parent=0 // loop_header
    %s13 = sphi 0, %s17
    %p14 = scmp.ge.s32.totalorder %s13, 4
    %s21 = sphi 0, %s21
    %s23 = sphi 0, %s21
    %s24 = sphi 0, %s23
    %s38 = sphi 0, %s24
    %s44 = sphi 0, %s46
    %s47 = sphi 0, %s44
    %s48 = sphi 0, %s47
    %s64 = sphi 0, %s48
    %s68 = sphi 0, %s68
    %s70 = sphi 0, %s68
    %s71 = sphi 0, %s70
    %s85 = sphi 0, %s71
    %s89 = sphi 0, %s89
    %s91 = sphi 0, %s89
    %s92 = sphi 0, %s91
    %s106 = sphi 0, %s92
    %s110 = sphi 0, %s110
    %s112 = sphi 0, %s110
    %s113 = sphi 0, %s112
    %s127 = sphi 0, %s113
    %s131 = sphi 0, %s131
    %s133 = sphi 0, %s131
    %s134 = sphi 0, %s133
    %s148 = sphi 0, %s134
    %s152 = sphi 0, %s152
    %s154 = sphi 0, %s152
    %s155 = sphi 0, %s154
    %s169 = sphi 0, %s155
    %s175 = sphi 0, %s177
    %s178 = sphi 0, %s175
    %s179 = sphi 0, %s178
    %s195 = sphi 0, %s179
  $region4: #{decoder_forward.1} parent=0 // loop_header_branch
    %16 = sbr.rel (%p14) target = $region8
  $region5: #{decoder_forward.1} parent=0 // loop_body
    %s18 = ssub.s32 %s13, 1
    %s19 = ssub.s32 %s13, 2
    %s20 = sadd.s32 %s13, 1
    %s22 = sadd.s32 %s21, 1
    %p25 = scmp.eq.s32.totalorder %s13, 1
    %p26 = scmp.ne.s32.totalorder %s21, %s23
    %p27 = scmp.eq.s32.totalorder %s13, 0
    %p28 = por %p26, %p27
    %p29 = scmp.ne.s32.totalorder %s21, %s23
    %p30 = scmp.eq.s32.totalorder %s18, 1
    %p31 = por %p29, %p30
    %p32 = scmp.ne.s32.totalorder %s23, %s24
    %p33 = scmp.eq.s32.totalorder %s18, 0
    %p34 = por %p32, %p33
    %p35 = scmp.ne.s32.totalorder %s23, %s24
    %p36 = scmp.eq.s32.totalorder %s19, 1
    %p37 = por %p35, %p36
    %p39 = scmp.ne.s32.totalorder %s24, %s38
    %p40 = scmp.eq.s32.totalorder %s19, 0
    %p41 = por %p39, %p40
    %s42 = ssub.s32 %s13, %s20
    %p43 = scmp.eq.s32.totalorder %s42, 0
    %s45 = sadd.s32 %s44, 1
    %s46 = scalar_select %p43, %s44, %s45
    %p49 = pneg %p43
    %p50 = scmp.eq.s32.totalorder %s13, 1
    %p51 = por %p49, %p50
    %p52 = scmp.ne.s32.totalorder %s44, %s47
    %p53 = scmp.eq.s32.totalorder %s13, 0
    %p54 = por %p52, %p53
    %p55 = scmp.ne.s32.totalorder %s44, %s47
    %p56 = scmp.eq.s32.totalorder %s18, 1
    %p57 = por %p55, %p56
    %p58 = scmp.ne.s32.totalorder %s47, %s48
    %p59 = scmp.eq.s32.totalorder %s18, 0
    %p60 = por %p58, %p59
    %p61 = scmp.ne.s32.totalorder %s47, %s48
    %p62 = scmp.eq.s32.totalorder %s19, 1
    %p63 = por %p61, %p62
    %p65 = scmp.ne.s32.totalorder %s48, %s64
    %p66 = scmp.eq.s32.totalorder %s19, 0
    %p67 = por %p65, %p66
    %s69 = sadd.s32 %s68, 1
    %p72 = scmp.eq.s32.totalorder %s13, 1
    %p73 = scmp.ne.s32.totalorder %s68, %s70
    %p74 = scmp.eq.s32.totalorder %s13, 0
    %p75 = por %p73, %p74
    %p76 = scmp.ne.s32.totalorder %s68, %s70
    %p77 = scmp.eq.s32.totalorder %s18, 1
    %p78 = por %p76, %p77
    %p79 = scmp.ne.s32.totalorder %s70, %s71
    %p80 = scmp.eq.s32.totalorder %s18, 0
    %p81 = por %p79, %p80
    %p82 = scmp.ne.s32.totalorder %s70, %s71
    %p83 = scmp.eq.s32.totalorder %s19, 1
    %p84 = por %p82, %p83
    %p86 = scmp.ne.s32.totalorder %s71, %s85
    %p87 = scmp.eq.s32.totalorder %s19, 0
    %p88 = por %p86, %p87
    %s90 = sadd.s32 %s89, 1
    %p93 = scmp.eq.s32.totalorder %s13, 1
    %p94 = scmp.ne.s32.totalorder %s89, %s91
    %p95 = scmp.eq.s32.totalorder %s13, 0
    %p96 = por %p94, %p95
    %p97 = scmp.ne.s32.totalorder %s89, %s91
    %p98 = scmp.eq.s32.totalorder %s18, 1
    %p99 = por %p97, %p98
    %p100 = scmp.ne.s32.totalorder %s91, %s92
    %p101 = scmp.eq.s32.totalorder %s18, 0
    %p102 = por %p100, %p101
    %p103 = scmp.ne.s32.totalorder %s91, %s92
    %p104 = scmp.eq.s32.totalorder %s19, 1
    %p105 = por %p103, %p104
    %p107 = scmp.ne.s32.totalorder %s92, %s106
    %p108 = scmp.eq.s32.totalorder %s19, 0
    %p109 = por %p107, %p108
    %s111 = sadd.s32 %s110, 1
    %p114 = scmp.eq.s32.totalorder %s13, 1
    %p115 = scmp.ne.s32.totalorder %s110, %s112
    %p116 = scmp.eq.s32.totalorder %s13, 0
    %p117 = por %p115, %p116
    %p118 = scmp.ne.s32.totalorder %s110, %s112
    %p119 = scmp.eq.s32.totalorder %s18, 1
    %p120 = por %p118, %p119
    %p121 = scmp.ne.s32.totalorder %s112, %s113
    %p122 = scmp.eq.s32.totalorder %s18, 0
    %p123 = por %p121, %p122
    %p124 = scmp.ne.s32.totalorder %s112, %s113
    %p125 = scmp.eq.s32.totalorder %s19, 1
    %p126 = por %p124, %p125
    %p128 = scmp.ne.s32.totalorder %s113, %s127
    %p129 = scmp.eq.s32.totalorder %s19, 0
    %p130 = por %p128, %p129
    %s132 = sadd.s32 %s131, 1
    %p135 = scmp.eq.s32.totalorder %s13, 1
    %p136 = scmp.ne.s32.totalorder %s131, %s133
    %p137 = scmp.eq.s32.totalorder %s13, 0
    %p138 = por %p136, %p137
    %p139 = scmp.ne.s32.totalorder %s131, %s133
    %p140 = scmp.eq.s32.totalorder %s18, 1
    %p141 = por %p139, %p140
    %p142 = scmp.ne.s32.totalorder %s133, %s134
    %p143 = scmp.eq.s32.totalorder %s18, 0
    %p144 = por %p142, %p143
    %p145 = scmp.ne.s32.totalorder %s133, %s134
    %p146 = scmp.eq.s32.totalorder %s19, 1
    %p147 = por %p145, %p146
    %p149 = scmp.ne.s32.totalorder %s134, %s148
    %p150 = scmp.eq.s32.totalorder %s19, 0
    %p151 = por %p149, %p150
    %s153 = sadd.s32 %s152, 1
    %p156 = scmp.eq.s32.totalorder %s13, 1
    %p157 = scmp.ne.s32.totalorder %s152, %s154
    %p158 = scmp.eq.s32.totalorder %s13, 0
    %p159 = por %p157, %p158
    %p160 = scmp.ne.s32.totalorder %s152, %s154
    %p161 = scmp.eq.s32.totalorder %s18, 1
    %p162 = por %p160, %p161
    %p163 = scmp.ne.s32.totalorder %s154, %s155
    %p164 = scmp.eq.s32.totalorder %s18, 0
    %p165 = por %p163, %p164
    %p166 = scmp.ne.s32.totalorder %s154, %s155
    %p167 = scmp.eq.s32.totalorder %s19, 1
    %p168 = por %p166, %p167
    %p170 = scmp.ne.s32.totalorder %s155, %s169
    %p171 = scmp.eq.s32.totalorder %s19, 0
    %p172 = por %p170, %p171
    %s173 = ssub.s32 %s13, %s20
    %p174 = scmp.eq.s32.totalorder %s173, 0
    %s176 = sadd.s32 %s175, 1
    %s177 = scalar_select %p174, %s175, %s176
    %p180 = pneg %p174
    %p181 = scmp.eq.s32.totalorder %s13, 1
    %p182 = por %p180, %p181
    %p183 = scmp.ne.s32.totalorder %s175, %s178
    %p184 = scmp.eq.s32.totalorder %s13, 0
    %p185 = por %p183, %p184
    %p186 = scmp.ne.s32.totalorder %s175, %s178
    %p187 = scmp.eq.s32.totalorder %s18, 1
    %p188 = por %p186, %p187
    %p189 = scmp.ne.s32.totalorder %s178, %s179
    %p190 = scmp.eq.s32.totalorder %s18, 0
    %p191 = por %p189, %p190
    %p192 = scmp.ne.s32.totalorder %s178, %s179
    %p193 = scmp.eq.s32.totalorder %s19, 1
    %p194 = por %p192, %p193
    %p196 = scmp.ne.s32.totalorder %s179, %s195
    %p197 = scmp.eq.s32.totalorder %s19, 0
    %p198 = por %p196, %p197
    %p199 = scmp.le.s32.totalorder 1, %s13
    %p200 = scmp.lt.s32.totalorder %s13, 3
    %p201 = pnand %p199, %p200
    %p202 = pneg %p201
    // Predicated region
    $region9: #{decoder_forward.1} parent=5 // pred_check
      _
    $region10: #{decoder_forward.1} parent=5 // pred_check_branch
      %204 = sbr.rel (%p201) target = $region12
    $region11: #{decoder_forward.1} parent=5 // pred_region
      %s205 = ssub.s32 %s13, 1
      // Predicated region
      $region13: #{decoder_forward.1} parent=11 // pred_check
        %p206 = pneg %p34
      $region14: #{decoder_forward.1} parent=11 // pred_check_branch
        %208 = sbr.rel (%p206) target = $region16
      $region15: #{decoder_forward.1} parent=11 // pred_region
        _
      $region16: #{decoder_forward.1} parent=11 // pred_fallthru
        _
      // Predicated region
      $region17: #{decoder_forward.1} parent=11 // pred_check
        %p209 = pneg %p81
      $region18: #{decoder_forward.1} parent=11 // pred_check_branch
        %211 = sbr.rel (%p209) target = $region20
      $region19: #{decoder_forward.1} parent=11 // pred_region
        _
      $region20: #{decoder_forward.1} parent=11 // pred_fallthru
        _
      // Predicated region
      $region21: #{decoder_forward.1} parent=11 // pred_check
        %p212 = pneg %p102
      $region22: #{decoder_forward.1} parent=11 // pred_check_branch
        %214 = sbr.rel (%p212) target = $region24
      $region23: #{decoder_forward.1} parent=11 // pred_region
        _
      $region24: #{decoder_forward.1} parent=11 // pred_fallthru
        _
      // Predicated region
      $region25: #{decoder_forward.1} parent=11 // pred_check
        %p215 = pneg %p123
      $region26: #{decoder_forward.1} parent=11 // pred_check_branch
        %217 = sbr.rel (%p215) target = $region28
      $region27: #{decoder_forward.1} parent=11 // pred_region
        _
      $region28: #{decoder_forward.1} parent=11 // pred_fallthru
        _
      // Predicated region
      $region29: #{decoder_forward.1} parent=11 // pred_check
        %p218 = pneg %p144
      $region30: #{decoder_forward.1} parent=11 // pred_check_branch
        %220 = sbr.rel (%p218) target = $region32
      $region31: #{decoder_forward.1} parent=11 // pred_region
        _
      $region32: #{decoder_forward.1} parent=11 // pred_fallthru
        _
      // Predicated region
      $region33: #{decoder_forward.1} parent=11 // pred_check
        %p221 = pneg %p165
      $region34: #{decoder_forward.1} parent=11 // pred_check_branch
        %223 = sbr.rel (%p221) target = $region36
      $region35: #{decoder_forward.1} parent=11 // pred_region
        _
      $region36: #{decoder_forward.1} parent=11 // pred_fallthru
        _
    $region12: #{decoder_forward.1} parent=5 // pred_fallthru
      _
    %p224 = scmp.lt.s32.totalorder %s13, 2
    // Predicated region
    $region37: #{decoder_forward.1} parent=5 // pred_check
      %p225 = pneg %p224
    $region38: #{decoder_forward.1} parent=5 // pred_check_branch
      %227 = sbr.rel (%p225) target = $region40
    $region39: #{decoder_forward.1} parent=5 // pred_region
      // Predicated region
      $region41: #{decoder_forward.1} parent=39 // pred_check
        %p228 = pneg %p54
      $region42: #{decoder_forward.1} parent=39 // pred_check_branch
        %230 = sbr.rel (%p228) target = $region44
      $region43: #{decoder_forward.1} parent=39 // pred_region
        %s231 = smul.u32 32, %s13
        %p232 = scmp.lt.s32.totalorder %s231, 63
        %s233 = scalar_select %p232, %s231, 63
        %s234 = smul.addr %s233, 5
        %s235 = smul.addr %s234, 8
        %s236 = scalar_lea.vmem %s1, %s235
        %s237 = smul.u32 32, %s13
      $region44: #{decoder_forward.1} parent=39 // pred_fallthru
        _
    $region40: #{decoder_forward.1} parent=5 // pred_fallthru
      _
    %p238 = scmp.le.s32.totalorder 1, %s13
    %p239 = scmp.lt.s32.totalorder %s13, 3
    %p240 = pnand %p238, %p239
    %p241 = pneg %p240
    // Predicated region
    $region45: #{decoder_forward.1} parent=5 // pred_check
      _
    $region46: #{decoder_forward.1} parent=5 // pred_check_branch
      %243 = sbr.rel (%p240) target = $region48
    $region47: #{decoder_forward.1} parent=5 // pred_region
      %s244 = ssub.s32 %s13, 1
      %p245 = pneg %p34
      %p246 = pneg %p31
      %s247 = smul.u32 32, %s18
      %p248 = scmp.lt.s32.totalorder %s247, 63
      %s249 = scalar_select %p248, %s247, 63
      %s250 = smul.addr %s249, 5
      %s251 = smul.addr %s250, 8
      %s252 = scalar_lea.vmem %s1, %s251
      %p253 = pneg %p60
      %p254 = pneg %p57
      %p255 = pneg %p81
      %p256 = pneg %p78
      %p257 = pneg %p102
      %p258 = pneg %p99
      %p259 = pneg %p123
      %p260 = pneg %p120
      %p261 = pneg %p144
      %p262 = pneg %p141
      %p263 = pneg %p165
      %p264 = pneg %p162
      %p265 = pneg %p191
      %p266 = pneg %p188
      %s267 = smul.u32 32, %s18
      %p268 = scmp.lt.s32.totalorder %s267, 63
      %s269 = scalar_select %p268, %s267, 63
      %s270 = smul.addr %s269, 2
      %s271 = smul.addr %s270, 8
      %s272 = scalar_lea.vmem %s7, %s271
      %s273 = smul.u32 32, %s18
      %p274 = scmp.lt.s32.totalorder %s273, 63
      %s275 = scalar_select %p274, %s273, 63
      %s276 = smul.addr %s275, 5
      %s277 = smul.addr %s276, 8
      %s278 = scalar_lea.vmem %s1, %s277
      %s279 = smul.u32 32, %s18
      %s280 = smul.u32 32, %s18
      %p281 = scmp.lt.s32.totalorder %s280, 63
      %s282 = scalar_select %p281, %s280, 63
      %s283 = smul.addr %s282, 2
      %s284 = smul.addr %s283, 8
      %s285 = scalar_lea.vmem %s7, %s284
      %s286 = smul.u32 32, %s18
      %v287 = vld [vmem:[%s0] sm:$0xff]
      %v288 = vld [vmem:[%s0 + $0x8] sm:$0xff]
      %v289 = vld [vmem:[%s0 + $0x10] sm:$0xff]
      %v290 = vld [vmem:[%s0 + $0x18] sm:$0xff]
      %v291 = vld [vmem:[%s0 + $0x20] sm:$0xff]
      %v292 = vld [vmem:[%s0 + $0x28] sm:$0xff]
      %v293 = vld [vmem:[%s0 + $0x30] sm:$0xff]
      %v294 = vld [vmem:[%s0 + $0x38] sm:$0xff]
      %v295 = vld [vmem:[%s0 + $0x40] sm:$0xff]
      %v296 = vld [vmem:[%s0 + $0x48] sm:$0xff]
      %v297 = vld [vmem:[%s0 + $0x50] sm:$0xff]
      %v298 = vld [vmem:[%s0 + $0x58] sm:$0xff]
      %v299 = vld [vmem:[%s0 + $0x60] sm:$0xff]
      %v300 = vld [vmem:[%s0 + $0x68] sm:$0xff]
      %v301 = vld [vmem:[%s0 + $0x70] sm:$0xff]
      %v302 = vld [vmem:[%s0 + $0x78] sm:$0xff]
      %v303 = vld [vmem:[%s0 + $0x80] sm:$0xff]
      %v304 = vld [vmem:[%s0 + $0x88] sm:$0xff]
      %v305 = vld [vmem:[%s0 + $0x90] sm:$0xff]
      %v306 = vld [vmem:[%s0 + $0x98] sm:$0xff]
      %v307 = vld [vmem:[%s0 + $0xa0] sm:$0xff]
      %v308 = vld [vmem:[%s0 + $0xa8] sm:$0xff]
      %v309 = vld [vmem:[%s0 + $0xb0] sm:$0xff]
      %v310 = vld [vmem:[%s0 + $0xb8] sm:$0xff]
      %v311 = vld [vmem:[%s0 + $0xc0] sm:$0xff]
      %v312 = vld [vmem:[%s0 + $0xc8] sm:$0xff]
      %v313 = vld [vmem:[%s0 + $0xd0] sm:$0xff]
      %v314 = vld [vmem:[%s0 + $0xd8] sm:$0xff]
      %v315 = vld [vmem:[%s0 + $0xe0] sm:$0xff]
      %v316 = vld [vmem:[%s0 + $0xe8] sm:$0xff]
      %v317 = vld [vmem:[%s0 + $0xf0] sm:$0xff]
      %v318 = vld [vmem:[%s0 + $0xf8] sm:$0xff]
      %v319 = vld [vmem:[%s278] sm:$0xff]
      %v320 = vld [vmem:[%s278 + $0x8] sm:$0xff]
      %v321 = vld [vmem:[%s278 + $0x10] sm:$0xff]
      %v322 = vld [vmem:[%s278 + $0x18] sm:$0xff]
      %v323 = vld [vmem:[%s278 + $0x20] sm:$0xff]
      %v324 = vld [vmem:[%s278 + $0x28] sm:$0xff]
      %v325 = vld [vmem:[%s278 + $0x30] sm:$0xff]
      %v326 = vld [vmem:[%s278 + $0x38] sm:$0xff]
      %v327 = vld [vmem:[%s278 + $0x40] sm:$0xff]
      %v328 = vld [vmem:[%s278 + $0x48] sm:$0xff]
      %v329 = vld [vmem:[%s278 + $0x50] sm:$0xff]
      %v330 = vld [vmem:[%s278 + $0x58] sm:$0xff]
      %v331 = vld [vmem:[%s278 + $0x60] sm:$0xff]
      %v332 = vld [vmem:[%s278 + $0x68] sm:$0xff]
      %v333 = vld [vmem:[%s278 + $0x70] sm:$0xff]
      %v334 = vld [vmem:[%s278 + $0x78] sm:$0xff]
      %v335 = vld [vmem:[%s278 + $0x80] sm:$0xff]
      %v336 = vld [vmem:[%s278 + $0x88] sm:$0xff]
      %v337 = vld [vmem:[%s278 + $0x90] sm:$0xff]
      %v338 = vld [vmem:[%s278 + $0x98] sm:$0xff]
      %v339 = vld [vmem:[%s278 + $0xa0] sm:$0xff]
      %v340 = vld [vmem:[%s278 + $0xa8] sm:$0xff]
      %v341 = vld [vmem:[%s278 + $0xb0] sm:$0xff]
      %v342 = vld [vmem:[%s278 + $0xb8] sm:$0xff]
      %v343 = vld [vmem:[%s278 + $0xc0] sm:$0xff]
      %v344 = vld [vmem:[%s278 + $0xc8] sm:$0xff]
      %v345 = vld [vmem:[%s278 + $0xd0] sm:$0xff]
      %v346 = vld [vmem:[%s278 + $0xd8] sm:$0xff]
      %v347 = vld [vmem:[%s278 + $0xe0] sm:$0xff]
      %v348 = vld [vmem:[%s278 + $0xe8] sm:$0xff]
      %v349 = vld [vmem:[%s278 + $0xf0] sm:$0xff]
      %v350 = vld [vmem:[%s278 + $0xf8] sm:$0xff]
      %v351 = vld [vmem:[%s278 + $0x100] sm:$0xff]
      %v352 = vld [vmem:[%s278 + $0x108] sm:$0xff]
      %v353 = vld [vmem:[%s278 + $0x110] sm:$0xff]
      %v354 = vld [vmem:[%s278 + $0x118] sm:$0xff]
      %v355 = vld [vmem:[%s278 + $0x120] sm:$0xff]
      %v356 = vld [vmem:[%s278 + $0x128] sm:$0xff]
      %v357 = vld [vmem:[%s278 + $0x130] sm:$0xff]
      %v358 = vld [vmem:[%s278 + $0x138] sm:$0xff]
      %v359 = vld [vmem:[%s278 + $0x140] sm:$0xff]
      %v360 = vld [vmem:[%s278 + $0x148] sm:$0xff]
      %v361 = vld [vmem:[%s278 + $0x150] sm:$0xff]
      %v362 = vld [vmem:[%s278 + $0x158] sm:$0xff]
      %v363 = vld [vmem:[%s278 + $0x160] sm:$0xff]
      %v364 = vld [vmem:[%s278 + $0x168] sm:$0xff]
      %v365 = vld [vmem:[%s278 + $0x170] sm:$0xff]
      %v366 = vld [vmem:[%s278 + $0x178] sm:$0xff]
      %v367 = vld [vmem:[%s278 + $0x180] sm:$0xff]
      %v368 = vld [vmem:[%s278 + $0x188] sm:$0xff]
      %v369 = vld [vmem:[%s278 + $0x190] sm:$0xff]
      %v370 = vld [vmem:[%s278 + $0x198] sm:$0xff]
      %v371 = vld [vmem:[%s278 + $0x1a0] sm:$0xff]
      %v372 = vld [vmem:[%s278 + $0x1a8] sm:$0xff]
      %v373 = vld [vmem:[%s278 + $0x1b0] sm:$0xff]
      %v374 = vld [vmem:[%s278 + $0x1b8] sm:$0xff]
      %v375 = vld [vmem:[%s278 + $0x1c0] sm:$0xff]
      %v376 = vld [vmem:[%s278 + $0x1c8] sm:$0xff]
      %v377 = vld [vmem:[%s278 + $0x1d0] sm:$0xff]
      %v378 = vld [vmem:[%s278 + $0x1d8] sm:$0xff]
      %v379 = vld [vmem:[%s278 + $0x1e0] sm:$0xff]
      %v380 = vld [vmem:[%s278 + $0x1e8] sm:$0xff]
      %v381 = vld [vmem:[%s278 + $0x1f0] sm:$0xff]
      %v382 = vld [vmem:[%s278 + $0x1f8] sm:$0xff]
      %v383 = vld [vmem:[%s278 + $0x200] sm:$0xff]
      %v384 = vld [vmem:[%s278 + $0x208] sm:$0xff]
      %v385 = vld [vmem:[%s278 + $0x210] sm:$0xff]
      %v386 = vld [vmem:[%s278 + $0x218] sm:$0xff]
      %v387 = vld [vmem:[%s278 + $0x220] sm:$0xff]
      %v388 = vld [vmem:[%s278 + $0x228] sm:$0xff]
      %v389 = vld [vmem:[%s278 + $0x230] sm:$0xff]
      %v390 = vld [vmem:[%s278 + $0x238] sm:$0xff]
      %v391 = vld [vmem:[%s278 + $0x240] sm:$0xff]
      %v392 = vld [vmem:[%s278 + $0x248] sm:$0xff]
      %v393 = vld [vmem:[%s278 + $0x250] sm:$0xff]
      %v394 = vld [vmem:[%s278 + $0x258] sm:$0xff]
      %v395 = vld [vmem:[%s278 + $0x260] sm:$0xff]
      %v396 = vld [vmem:[%s278 + $0x268] sm:$0xff]
      %v397 = vld [vmem:[%s278 + $0x270] sm:$0xff]
      %v398 = vld [vmem:[%s278 + $0x278] sm:$0xff]
      %v399 = vld [vmem:[%s278 + $0x280] sm:$0xff]
      %v400 = vld [vmem:[%s278 + $0x288] sm:$0xff]
      %v401 = vld [vmem:[%s278 + $0x290] sm:$0xff]
      %v402 = vld [vmem:[%s278 + $0x298] sm:$0xff]
      %v403 = vld [vmem:[%s278 + $0x2a0] sm:$0xff]
      %v404 = vld [vmem:[%s278 + $0x2a8] sm:$0xff]
      %v405 = vld [vmem:[%s278 + $0x2b0] sm:$0xff]
      %v406 = vld [vmem:[%s278 + $0x2b8] sm:$0xff]
      %v407 = vld [vmem:[%s278 + $0x2c0] sm:$0xff]
      %v408 = vld [vmem:[%s278 + $0x2c8] sm:$0xff]
      %v409 = vld [vmem:[%s278 + $0x2d0] sm:$0xff]
      %v410 = vld [vmem:[%s278 + $0x2d8] sm:$0xff]
      %v411 = vld [vmem:[%s278 + $0x2e0] sm:$0xff]
      %v412 = vld [vmem:[%s278 + $0x2e8] sm:$0xff]
      %v413 = vld [vmem:[%s278 + $0x2f0] sm:$0xff]
      %v414 = vld [vmem:[%s278 + $0x2f8] sm:$0xff]
      %v415 = vld [vmem:[%s278 + $0x300] sm:$0xff]
      %v416 = vld [vmem:[%s278 + $0x308] sm:$0xff]
      %v417 = vld [vmem:[%s278 + $0x310] sm:$0xff]
      %v418 = vld [vmem:[%s278 + $0x318] sm:$0xff]
      %v419 = vld [vmem:[%s278 + $0x320] sm:$0xff]
      %v420 = vld [vmem:[%s278 + $0x328] sm:$0xff]
      %v421 = vld [vmem:[%s278 + $0x330] sm:$0xff]
      %v422 = vld [vmem:[%s278 + $0x338] sm:$0xff]
      %v423 = vld [vmem:[%s278 + $0x340] sm:$0xff]
      %v424 = vld [vmem:[%s278 + $0x348] sm:$0xff]
      %v425 = vld [vmem:[%s278 + $0x350] sm:$0xff]
      %v426 = vld [vmem:[%s278 + $0x358] sm:$0xff]
      %v427 = vld [vmem:[%s278 + $0x360] sm:$0xff]
      %v428 = vld [vmem:[%s278 + $0x368] sm:$0xff]
      %v429 = vld [vmem:[%s278 + $0x370] sm:$0xff]
      %v430 = vld [vmem:[%s278 + $0x378] sm:$0xff]
      %v431 = vld [vmem:[%s278 + $0x380] sm:$0xff]
      %v432 = vld [vmem:[%s278 + $0x388] sm:$0xff]
      %v433 = vld [vmem:[%s278 + $0x390] sm:$0xff]
      %v434 = vld [vmem:[%s278 + $0x398] sm:$0xff]
      %v435 = vld [vmem:[%s278 + $0x3a0] sm:$0xff]
      %v436 = vld [vmem:[%s278 + $0x3a8] sm:$0xff]
      %v437 = vld [vmem:[%s278 + $0x3b0] sm:$0xff]
      %v438 = vld [vmem:[%s278 + $0x3b8] sm:$0xff]
      %v439 = vld [vmem:[%s278 + $0x3c0] sm:$0xff]
      %v440 = vld [vmem:[%s278 + $0x3c8] sm:$0xff]
      %v441 = vld [vmem:[%s278 + $0x3d0] sm:$0xff]
      %v442 = vld [vmem:[%s278 + $0x3d8] sm:$0xff]
      %v443 = vld [vmem:[%s278 + $0x3e0] sm:$0xff]
      %v444 = vld [vmem:[%s278 + $0x3e8] sm:$0xff]
      %v445 = vld [vmem:[%s278 + $0x3f0] sm:$0xff]
      %v446 = vld [vmem:[%s278 + $0x3f8] sm:$0xff]
      %v447 = vld [vmem:[%s278 + $0x400] sm:$0xff]
      %v448 = vld [vmem:[%s278 + $0x408] sm:$0xff]
      %v449 = vld [vmem:[%s278 + $0x410] sm:$0xff]
      %v450 = vld [vmem:[%s278 + $0x418] sm:$0xff]
      %v451 = vld [vmem:[%s278 + $0x420] sm:$0xff]
      %v452 = vld [vmem:[%s278 + $0x428] sm:$0xff]
      %v453 = vld [vmem:[%s278 + $0x430] sm:$0xff]
      %v454 = vld [vmem:[%s278 + $0x438] sm:$0xff]
      %v455 = vld [vmem:[%s278 + $0x440] sm:$0xff]
      %v456 = vld [vmem:[%s278 + $0x448] sm:$0xff]
      %v457 = vld [vmem:[%s278 + $0x450] sm:$0xff]
      %v458 = vld [vmem:[%s278 + $0x458] sm:$0xff]
      %v459 = vld [vmem:[%s278 + $0x460] sm:$0xff]
      %v460 = vld [vmem:[%s278 + $0x468] sm:$0xff]
      %v461 = vld [vmem:[%s278 + $0x470] sm:$0xff]
      %v462 = vld [vmem:[%s278 + $0x478] sm:$0xff]
      %v463 = vld [vmem:[%s278 + $0x480] sm:$0xff]
      %v464 = vld [vmem:[%s278 + $0x488] sm:$0xff]
      %v465 = vld [vmem:[%s278 + $0x490] sm:$0xff]
      %v466 = vld [vmem:[%s278 + $0x498] sm:$0xff]
      %v467 = vld [vmem:[%s278 + $0x4a0] sm:$0xff]
      %v468 = vld [vmem:[%s278 + $0x4a8] sm:$0xff]
      %v469 = vld [vmem:[%s278 + $0x4b0] sm:$0xff]
      %v470 = vld [vmem:[%s278 + $0x4b8] sm:$0xff]
      %v471 = vld [vmem:[%s278 + $0x4c0] sm:$0xff]
      %v472 = vld [vmem:[%s278 + $0x4c8] sm:$0xff]
      %v473 = vld [vmem:[%s278 + $0x4d0] sm:$0xff]
      %v474 = vld [vmem:[%s278 + $0x4d8] sm:$0xff]
      %v475 = vld [vmem:[%s278 + $0x4e0] sm:$0xff]
      %v476 = vld [vmem:[%s278 + $0x4e8] sm:$0xff]
      %v477 = vld [vmem:[%s278 + $0x4f0] sm:$0xff]
      %v478 = vld [vmem:[%s278 + $0x4f8] sm:$0xff]
      %v479 = vld [vmem:[%s2] sm:$0xff]
      %v480 = vld [vmem:[%s2 + $0x8] sm:$0xff]
      %v481 = vld [vmem:[%s2 + $0x10] sm:$0xff]
      %v482 = vld [vmem:[%s2 + $0x18] sm:$0xff]
      %v483 = vld [vmem:[%s2 + $0x20] sm:$0xff]
      %v484 = vld [vmem:[%s2 + $0x28] sm:$0xff]
      %v485 = vld [vmem:[%s2 + $0x30] sm:$0xff]
      %v486 = vld [vmem:[%s2 + $0x38] sm:$0xff]
      %v487 = vld [vmem:[%s2 + $0x40] sm:$0xff]
      %v488 = vld [vmem:[%s2 + $0x48] sm:$0xff]
      %v489 = vld [vmem:[%s2 + $0x50] sm:$0xff]
      %v490 = vld [vmem:[%s2 + $0x58] sm:$0xff]
      %v491 = vld [vmem:[%s2 + $0x60] sm:$0xff]
      %v492 = vld [vmem:[%s2 + $0x68] sm:$0xff]
      %v493 = vld [vmem:[%s2 + $0x70] sm:$0xff]
      %v494 = vld [vmem:[%s2 + $0x78] sm:$0xff]
      %v495 = vld [vmem:[%s2 + $0x80] sm:$0xff]
      %v496 = vld [vmem:[%s2 + $0x88] sm:$0xff]
      %v497 = vld [vmem:[%s2 + $0x90] sm:$0xff]
      %v498 = vld [vmem:[%s2 + $0x98] sm:$0xff]
      %v499 = vld [vmem:[%s2 + $0xa0] sm:$0xff]
      %v500 = vld [vmem:[%s2 + $0xa8] sm:$0xff]
      %v501 = vld [vmem:[%s2 + $0xb0] sm:$0xff]
      %v502 = vld [vmem:[%s2 + $0xb8] sm:$0xff]
      %v503 = vld [vmem:[%s2 + $0xc0] sm:$0xff]
      %v504 = vld [vmem:[%s2 + $0xc8] sm:$0xff]
      %v505 = vld [vmem:[%s2 + $0xd0] sm:$0xff]
      %v506 = vld [vmem:[%s2 + $0xd8] sm:$0xff]
      %v507 = vld [vmem:[%s2 + $0xe0] sm:$0xff]
      %v508 = vld [vmem:[%s2 + $0xe8] sm:$0xff]
      %v509 = vld [vmem:[%s2 + $0xf0] sm:$0xff]
      %v510 = vld [vmem:[%s2 + $0xf8] sm:$0xff]
      %v511 = vld [vmem:[%s2 + $0x100] sm:$0xff]
      %v512 = vld [vmem:[%s2 + $0x108] sm:$0xff]
      %v513 = vld [vmem:[%s2 + $0x110] sm:$0xff]
      %v514 = vld [vmem:[%s2 + $0x118] sm:$0xff]
      %v515 = vld [vmem:[%s2 + $0x120] sm:$0xff]
      %v516 = vld [vmem:[%s2 + $0x128] sm:$0xff]
      %v517 = vld [vmem:[%s2 + $0x130] sm:$0xff]
      %v518 = vld [vmem:[%s2 + $0x138] sm:$0xff]
      %v519 = vld [vmem:[%s2 + $0x140] sm:$0xff]
      %v520 = vld [vmem:[%s2 + $0x148] sm:$0xff]
      %v521 = vld [vmem:[%s2 + $0x150] sm:$0xff]
      %v522 = vld [vmem:[%s2 + $0x158] sm:$0xff]
      %v523 = vld [vmem:[%s2 + $0x160] sm:$0xff]
      %v524 = vld [vmem:[%s2 + $0x168] sm:$0xff]
      %v525 = vld [vmem:[%s2 + $0x170] sm:$0xff]
      %v526 = vld [vmem:[%s2 + $0x178] sm:$0xff]
      %v527 = vld [vmem:[%s2 + $0x180] sm:$0xff]
      %v528 = vld [vmem:[%s2 + $0x188] sm:$0xff]
      %v529 = vld [vmem:[%s2 + $0x190] sm:$0xff]
      %v530 = vld [vmem:[%s2 + $0x198] sm:$0xff]
      %v531 = vld [vmem:[%s2 + $0x1a0] sm:$0xff]
      %v532 = vld [vmem:[%s2 + $0x1a8] sm:$0xff]
      %v533 = vld [vmem:[%s2 + $0x1b0] sm:$0xff]
      %v534 = vld [vmem:[%s2 + $0x1b8] sm:$0xff]
      %v535 = vld [vmem:[%s2 + $0x1c0] sm:$0xff]
      %v536 = vld [vmem:[%s2 + $0x1c8] sm:$0xff]
      %v537 = vld [vmem:[%s2 + $0x1d0] sm:$0xff]
      %v538 = vld [vmem:[%s2 + $0x1d8] sm:$0xff]
      %v539 = vld [vmem:[%s2 + $0x1e0] sm:$0xff]
      %v540 = vld [vmem:[%s2 + $0x1e8] sm:$0xff]
      %v541 = vld [vmem:[%s2 + $0x1f0] sm:$0xff]
      %v542 = vld [vmem:[%s2 + $0x1f8] sm:$0xff]
      %v543 = vld [vmem:[%s2 + $0x200] sm:$0xff]
      %v544 = vld [vmem:[%s2 + $0x208] sm:$0xff]
      %vm545 = vcmask 130048
      %v547 = vsel %vm545, %v323, 0
      %v550 = vsel %vm545, %v328, 0
      %v553 = vsel %vm545, %v333, 0
      %v556 = vsel %vm545, %v338, 0
      %v559 = vsel %vm545, %v343, 0
      %v562 = vsel %vm545, %v348, 0
      %v565 = vsel %vm545, %v353, 0
      %v568 = vsel %vm545, %v358, 0
      %v571 = vsel %vm545, %v363, 0
      %v574 = vsel %vm545, %v368, 0
      %v577 = vsel %vm545, %v373, 0
      %v580 = vsel %vm545, %v378, 0
      %v583 = vsel %vm545, %v383, 0
      %v586 = vsel %vm545, %v388, 0
      %v589 = vsel %vm545, %v393, 0
      %v592 = vsel %vm545, %v398, 0
      %v595 = vsel %vm545, %v403, 0
      %v598 = vsel %vm545, %v408, 0
      %v601 = vsel %vm545, %v413, 0
      %v604 = vsel %vm545, %v418, 0
      %v607 = vsel %vm545, %v423, 0
      %v610 = vsel %vm545, %v428, 0
      %v613 = vsel %vm545, %v433, 0
      %v616 = vsel %vm545, %v438, 0
      %v619 = vsel %vm545, %v443, 0
      %v622 = vsel %vm545, %v448, 0
      %v625 = vsel %vm545, %v453, 0
      %v628 = vsel %vm545, %v458, 0
      %v631 = vsel %vm545, %v463, 0
      %v634 = vsel %vm545, %v468, 0
      %v637 = vsel %vm545, %v473, 0
      %v640 = vsel %vm545, %v478, 0
      %642 = vmatpush.msra.mxu0 %v494
      %643 = vmatpush.msra.mxu0 %v493
      %644 = vmatpush.msra.mxu0 %v492
      %645 = vmatpush.msra.mxu0 %v491
      %646 = vmatpush.msra.mxu0 %v490
      %647 = vmatpush.msra.mxu0 %v489
      %648 = vmatpush.msra.mxu0 %v488
      %649 = vmatpush.msra.mxu0 %v487
      %650 = vmatpush.msra.mxu0 %v486
      %651 = vmatpush.msra.mxu0 %v485
      %652 = vmatpush.msra.mxu0 %v484
      %653 = vmatpush.msra.mxu0 %v483
      %654 = vmatpush.msra.mxu0 %v482
      %655 = vmatpush.msra.mxu0 %v481
      %656 = vmatpush.msra.mxu0 %v480
      %657 = vmatpush.msra.mxu0 %v479
      %658 = vmatmul.f32.gmra.mxu0 %v319
      %v659 = vpop.f32.mrf.mxu0
      %v660 = vadd.f32 0.0, %v659
      %661 = vmatmul.f32.gmra.mxu0 %v324
      %v662 = vpop.f32.mrf.mxu0
      %v663 = vadd.f32 0.0, %v662
      %664 = vmatmul.f32.gmra.mxu0 %v329
      %v665 = vpop.f32.mrf.mxu0
      %v666 = vadd.f32 0.0, %v665
      %667 = vmatmul.f32.gmra.mxu0 %v334
      %v668 = vpop.f32.mrf.mxu0
      %v669 = vadd.f32 0.0, %v668
      %670 = vmatmul.f32.gmra.mxu0 %v339
      %v671 = vpop.f32.mrf.mxu0
      %v672 = vadd.f32 0.0, %v671
      %673 = vmatmul.f32.gmra.mxu0 %v344
      %v674 = vpop.f32.mrf.mxu0
      %v675 = vadd.f32 0.0, %v674
      %676 = vmatmul.f32.gmra.mxu0 %v349
      %v677 = vpop.f32.mrf.mxu0
      %v678 = vadd.f32 0.0, %v677
      %679 = vmatmul.f32.gmra.mxu0 %v354
      %v680 = vpop.f32.mrf.mxu0
      %v681 = vadd.f32 0.0, %v680
      %682 = vmatmul.f32.gmra.mxu0 %v359
      %v683 = vpop.f32.mrf.mxu0
      %v684 = vadd.f32 0.0, %v683
      %685 = vmatmul.f32.gmra.mxu0 %v364
      %v686 = vpop.f32.mrf.mxu0
      %v687 = vadd.f32 0.0, %v686
      %688 = vmatmul.f32.gmra.mxu0 %v369
      %v689 = vpop.f32.mrf.mxu0
      %v690 = vadd.f32 0.0, %v689
      %691 = vmatmul.f32.gmra.mxu0 %v374
      %v692 = vpop.f32.mrf.mxu0
      %v693 = vadd.f32 0.0, %v692
      %694 = vmatmul.f32.gmra.mxu0 %v379
      %v695 = vpop.f32.mrf.mxu0
      %v696 = vadd.f32 0.0, %v695
      %697 = vmatmul.f32.gmra.mxu0 %v384
      %v698 = vpop.f32.mrf.mxu0
      %v699 = vadd.f32 0.0, %v698
      %700 = vmatmul.f32.gmra.mxu0 %v389
      %v701 = vpop.f32.mrf.mxu0
      %v702 = vadd.f32 0.0, %v701
      %703 = vmatmul.f32.gmra.mxu0 %v394
      %v704 = vpop.f32.mrf.mxu0
      %v705 = vadd.f32 0.0, %v704
      %706 = vmatmul.f32.gmra.mxu0 %v399
      %v707 = vpop.f32.mrf.mxu0
      %v708 = vadd.f32 0.0, %v707
      %709 = vmatmul.f32.gmra.mxu0 %v404
      %v710 = vpop.f32.mrf.mxu0
      %v711 = vadd.f32 0.0, %v710
      %712 = vmatmul.f32.gmra.mxu0 %v409
      %v713 = vpop.f32.mrf.mxu0
      %v714 = vadd.f32 0.0, %v713
      %715 = vmatmul.f32.gmra.mxu0 %v414
      %v716 = vpop.f32.mrf.mxu0
      %v717 = vadd.f32 0.0, %v716
      %718 = vmatmul.f32.gmra.mxu0 %v419
      %v719 = vpop.f32.mrf.mxu0
      %v720 = vadd.f32 0.0, %v719
      %721 = vmatmul.f32.gmra.mxu0 %v424
      %v722 = vpop.f32.mrf.mxu0
      %v723 = vadd.f32 0.0, %v722
      %724 = vmatmul.f32.gmra.mxu0 %v429
      %v725 = vpop.f32.mrf.mxu0
      %v726 = vadd.f32 0.0, %v725
      %727 = vmatmul.f32.gmra.mxu0 %v434
      %v728 = vpop.f32.mrf.mxu0
      %v729 = vadd.f32 0.0, %v728
      %730 = vmatmul.f32.gmra.mxu0 %v439
      %v731 = vpop.f32.mrf.mxu0
      %v732 = vadd.f32 0.0, %v731
      %733 = vmatmul.f32.gmra.mxu0 %v444
      %v734 = vpop.f32.mrf.mxu0
      %v735 = vadd.f32 0.0, %v734
      %736 = vmatmul.f32.gmra.mxu0 %v449
      %v737 = vpop.f32.mrf.mxu0
      %v738 = vadd.f32 0.0, %v737
      %739 = vmatmul.f32.gmra.mxu0 %v454
      %v740 = vpop.f32.mrf.mxu0
      %v741 = vadd.f32 0.0, %v740
      %742 = vmatmul.f32.gmra.mxu0 %v459
      %v743 = vpop.f32.mrf.mxu0
      %v744 = vadd.f32 0.0, %v743
      %745 = vmatmul.f32.gmra.mxu0 %v464
      %v746 = vpop.f32.mrf.mxu0
      %v747 = vadd.f32 0.0, %v746
      %748 = vmatmul.f32.gmra.mxu0 %v469
      %v749 = vpop.f32.mrf.mxu0
      %v750 = vadd.f32 0.0, %v749
      %751 = vmatmul.f32.gmra.mxu0 %v474
      %v752 = vpop.f32.mrf.mxu0
      %v753 = vadd.f32 0.0, %v752
      %754 = vdwg.mxu0
      %755 = vmatpush.msra.mxu0 %v510
      %756 = vmatpush.msra.mxu0 %v509
      %757 = vmatpush.msra.mxu0 %v508
      %758 = vmatpush.msra.mxu0 %v507
      %759 = vmatpush.msra.mxu0 %v506
      %760 = vmatpush.msra.mxu0 %v505
      %761 = vmatpush.msra.mxu0 %v504
      %762 = vmatpush.msra.mxu0 %v503
      %763 = vmatpush.msra.mxu0 %v502
      %764 = vmatpush.msra.mxu0 %v501
      %765 = vmatpush.msra.mxu0 %v500
      %766 = vmatpush.msra.mxu0 %v499
      %767 = vmatpush.msra.mxu0 %v498
      %768 = vmatpush.msra.mxu0 %v497
      %769 = vmatpush.msra.mxu0 %v496
      %770 = vmatpush.msra.mxu0 %v495
      %771 = vmatmul.f32.gmra.mxu0 %v320
      %v772 = vpop.f32.mrf.mxu0
      %v773 = vadd.f32 %v660, %v772
      %774 = vmatmul.f32.gmra.mxu0 %v325
      %v775 = vpop.f32.mrf.mxu0
      %v776 = vadd.f32 %v663, %v775
      %777 = vmatmul.f32.gmra.mxu0 %v330
      %v778 = vpop.f32.mrf.mxu0
      %v779 = vadd.f32 %v666, %v778
      %780 = vmatmul.f32.gmra.mxu0 %v335
      %v781 = vpop.f32.mrf.mxu0
      %v782 = vadd.f32 %v669, %v781
      %783 = vmatmul.f32.gmra.mxu0 %v340
      %v784 = vpop.f32.mrf.mxu0
      %v785 = vadd.f32 %v672, %v784
      %786 = vmatmul.f32.gmra.mxu0 %v345
      %v787 = vpop.f32.mrf.mxu0
      %v788 = vadd.f32 %v675, %v787
      %789 = vmatmul.f32.gmra.mxu0 %v350
      %v790 = vpop.f32.mrf.mxu0
      %v791 = vadd.f32 %v678, %v790
      %792 = vmatmul.f32.gmra.mxu0 %v355
      %v793 = vpop.f32.mrf.mxu0
      %v794 = vadd.f32 %v681, %v793
      %795 = vmatmul.f32.gmra.mxu0 %v360
      %v796 = vpop.f32.mrf.mxu0
      %v797 = vadd.f32 %v684, %v796
      %798 = vmatmul.f32.gmra.mxu0 %v365
      %v799 = vpop.f32.mrf.mxu0
      %v800 = vadd.f32 %v687, %v799
      %801 = vmatmul.f32.gmra.mxu0 %v370
      %v802 = vpop.f32.mrf.mxu0
      %v803 = vadd.f32 %v690, %v802
      %804 = vmatmul.f32.gmra.mxu0 %v375
      %v805 = vpop.f32.mrf.mxu0
      %v806 = vadd.f32 %v693, %v805
      %807 = vmatmul.f32.gmra.mxu0 %v380
      %v808 = vpop.f32.mrf.mxu0
      %v809 = vadd.f32 %v696, %v808
      %810 = vmatmul.f32.gmra.mxu0 %v385
      %v811 = vpop.f32.mrf.mxu0
      %v812 = vadd.f32 %v699, %v811
      %813 = vmatmul.f32.gmra.mxu0 %v390
      %v814 = vpop.f32.mrf.mxu0
      %v815 = vadd.f32 %v702, %v814
      %816 = vmatmul.f32.gmra.mxu0 %v395
      %v817 = vpop.f32.mrf.mxu0
      %v818 = vadd.f32 %v705, %v817
      %819 = vmatmul.f32.gmra.mxu0 %v400
      %v820 = vpop.f32.mrf.mxu0
      %v821 = vadd.f32 %v708, %v820
      %822 = vmatmul.f32.gmra.mxu0 %v405
      %v823 = vpop.f32.mrf.mxu0
      %v824 = vadd.f32 %v711, %v823
      %825 = vmatmul.f32.gmra.mxu0 %v410
      %v826 = vpop.f32.mrf.mxu0
      %v827 = vadd.f32 %v714, %v826
      %828 = vmatmul.f32.gmra.mxu0 %v415
      %v829 = vpop.f32.mrf.mxu0
      %v830 = vadd.f32 %v717, %v829
      %831 = vmatmul.f32.gmra.mxu0 %v420
      %v832 = vpop.f32.mrf.mxu0
      %v833 = vadd.f32 %v720, %v832
      %834 = vmatmul.f32.gmra.mxu0 %v425
      %v835 = vpop.f32.mrf.mxu0
      %v836 = vadd.f32 %v723, %v835
      %837 = vmatmul.f32.gmra.mxu0 %v430
      %v838 = vpop.f32.mrf.mxu0
      %v839 = vadd.f32 %v726, %v838
      %840 = vmatmul.f32.gmra.mxu0 %v435
      %v841 = vpop.f32.mrf.mxu0
      %v842 = vadd.f32 %v729, %v841
      %843 = vmatmul.f32.gmra.mxu0 %v440
      %v844 = vpop.f32.mrf.mxu0
      %v845 = vadd.f32 %v732, %v844
      %846 = vmatmul.f32.gmra.mxu0 %v445
      %v847 = vpop.f32.mrf.mxu0
      %v848 = vadd.f32 %v735, %v847
      %849 = vmatmul.f32.gmra.mxu0 %v450
      %v850 = vpop.f32.mrf.mxu0
      %v851 = vadd.f32 %v738, %v850
      %852 = vmatmul.f32.gmra.mxu0 %v455
      %v853 = vpop.f32.mrf.mxu0
      %v854 = vadd.f32 %v741, %v853
      %855 = vmatmul.f32.gmra.mxu0 %v460
      %v856 = vpop.f32.mrf.mxu0
      %v857 = vadd.f32 %v744, %v856
      %858 = vmatmul.f32.gmra.mxu0 %v465
      %v859 = vpop.f32.mrf.mxu0
      %v860 = vadd.f32 %v747, %v859
      %861 = vmatmul.f32.gmra.mxu0 %v470
      %v862 = vpop.f32.mrf.mxu0
      %v863 = vadd.f32 %v750, %v862
      %864 = vmatmul.f32.gmra.mxu0 %v475
      %v865 = vpop.f32.mrf.mxu0
      %v866 = vadd.f32 %v753, %v865
      %867 = vdwg.mxu0
      %868 = vmatpush.msra.mxu0 %v526
      %869 = vmatpush.msra.mxu0 %v525
      %870 = vmatpush.msra.mxu0 %v524
      %871 = vmatpush.msra.mxu0 %v523
      %872 = vmatpush.msra.mxu0 %v522
      %873 = vmatpush.msra.mxu0 %v521
      %874 = vmatpush.msra.mxu0 %v520
      %875 = vmatpush.msra.mxu0 %v519
      %876 = vmatpush.msra.mxu0 %v518
      %877 = vmatpush.msra.mxu0 %v517
      %878 = vmatpush.msra.mxu0 %v516
      %879 = vmatpush.msra.mxu0 %v515
      %880 = vmatpush.msra.mxu0 %v514
      %881 = vmatpush.msra.mxu0 %v513
      %882 = vmatpush.msra.mxu0 %v512
      %883 = vmatpush.msra.mxu0 %v511
      %884 = vmatmul.f32.gmra.mxu0 %v321
      %v885 = vpop.f32.mrf.mxu0
      %v886 = vadd.f32 %v773, %v885
      %887 = vmatmul.f32.gmra.mxu0 %v326
      %v888 = vpop.f32.mrf.mxu0
      %v889 = vadd.f32 %v776, %v888
      %890 = vmatmul.f32.gmra.mxu0 %v331
      %v891 = vpop.f32.mrf.mxu0
      %v892 = vadd.f32 %v779, %v891
      %893 = vmatmul.f32.gmra.mxu0 %v336
      %v894 = vpop.f32.mrf.mxu0
      %v895 = vadd.f32 %v782, %v894
      %896 = vmatmul.f32.gmra.mxu0 %v341
      %v897 = vpop.f32.mrf.mxu0
      %v898 = vadd.f32 %v785, %v897
      %899 = vmatmul.f32.gmra.mxu0 %v346
      %v900 = vpop.f32.mrf.mxu0
      %v901 = vadd.f32 %v788, %v900
      %902 = vmatmul.f32.gmra.mxu0 %v351
      %v903 = vpop.f32.mrf.mxu0
      %v904 = vadd.f32 %v791, %v903
      %905 = vmatmul.f32.gmra.mxu0 %v356
      %v906 = vpop.f32.mrf.mxu0
      %v907 = vadd.f32 %v794, %v906
      %908 = vmatmul.f32.gmra.mxu0 %v361
      %v909 = vpop.f32.mrf.mxu0
      %v910 = vadd.f32 %v797, %v909
      %911 = vmatmul.f32.gmra.mxu0 %v366
      %v912 = vpop.f32.mrf.mxu0
      %v913 = vadd.f32 %v800, %v912
      %914 = vmatmul.f32.gmra.mxu0 %v371
      %v915 = vpop.f32.mrf.mxu0
      %v916 = vadd.f32 %v803, %v915
      %917 = vmatmul.f32.gmra.mxu0 %v376
      %v918 = vpop.f32.mrf.mxu0
      %v919 = vadd.f32 %v806, %v918
      %920 = vmatmul.f32.gmra.mxu0 %v381
      %v921 = vpop.f32.mrf.mxu0
      %v922 = vadd.f32 %v809, %v921
      %923 = vmatmul.f32.gmra.mxu0 %v386
      %v924 = vpop.f32.mrf.mxu0
      %v925 = vadd.f32 %v812, %v924
      %926 = vmatmul.f32.gmra.mxu0 %v391
      %v927 = vpop.f32.mrf.mxu0
      %v928 = vadd.f32 %v815, %v927
      %929 = vmatmul.f32.gmra.mxu0 %v396
      %v930 = vpop.f32.mrf.mxu0
      %v931 = vadd.f32 %v818, %v930
      %932 = vmatmul.f32.gmra.mxu0 %v401
      %v933 = vpop.f32.mrf.mxu0
      %v934 = vadd.f32 %v821, %v933
      %935 = vmatmul.f32.gmra.mxu0 %v406
      %v936 = vpop.f32.mrf.mxu0
      %v937 = vadd.f32 %v824, %v936
      %938 = vmatmul.f32.gmra.mxu0 %v411
      %v939 = vpop.f32.mrf.mxu0
      %v940 = vadd.f32 %v827, %v939
      %941 = vmatmul.f32.gmra.mxu0 %v416
      %v942 = vpop.f32.mrf.mxu0
      %v943 = vadd.f32 %v830, %v942
      %944 = vmatmul.f32.gmra.mxu0 %v421
      %v945 = vpop.f32.mrf.mxu0
      %v946 = vadd.f32 %v833, %v945
      %947 = vmatmul.f32.gmra.mxu0 %v426
      %v948 = vpop.f32.mrf.mxu0
      %v949 = vadd.f32 %v836, %v948
      %950 = vmatmul.f32.gmra.mxu0 %v431
      %v951 = vpop.f32.mrf.mxu0
      %v952 = vadd.f32 %v839, %v951
      %953 = vmatmul.f32.gmra.mxu0 %v436
      %v954 = vpop.f32.mrf.mxu0
      %v955 = vadd.f32 %v842, %v954
      %956 = vmatmul.f32.gmra.mxu0 %v441
      %v957 = vpop.f32.mrf.mxu0
      %v958 = vadd.f32 %v845, %v957
      %959 = vmatmul.f32.gmra.mxu0 %v446
      %v960 = vpop.f32.mrf.mxu0
      %v961 = vadd.f32 %v848, %v960
      %962 = vmatmul.f32.gmra.mxu0 %v451
      %v963 = vpop.f32.mrf.mxu0
      %v964 = vadd.f32 %v851, %v963
      %965 = vmatmul.f32.gmra.mxu0 %v456
      %v966 = vpop.f32.mrf.mxu0
      %v967 = vadd.f32 %v854, %v966
      %968 = vmatmul.f32.gmra.mxu0 %v461
      %v969 = vpop.f32.mrf.mxu0
      %v970 = vadd.f32 %v857, %v969
      %971 = vmatmul.f32.gmra.mxu0 %v466
      %v972 = vpop.f32.mrf.mxu0
      %v973 = vadd.f32 %v860, %v972
      %974 = vmatmul.f32.gmra.mxu0 %v471
      %v975 = vpop.f32.mrf.mxu0
      %v976 = vadd.f32 %v863, %v975
      %977 = vmatmul.f32.gmra.mxu0 %v476
      %v978 = vpop.f32.mrf.mxu0
      %v979 = vadd.f32 %v866, %v978
      %980 = vdwg.mxu0
      %981 = vmatpush.msra.mxu0 %v542
      %982 = vmatpush.msra.mxu0 %v541
      %983 = vmatpush.msra.mxu0 %v540
      %984 = vmatpush.msra.mxu0 %v539
      %985 = vmatpush.msra.mxu0 %v538
      %986 = vmatpush.msra.mxu0 %v537
      %987 = vmatpush.msra.mxu0 %v536
      %988 = vmatpush.msra.mxu0 %v535
      %989 = vmatpush.msra.mxu0 %v534
      %990 = vmatpush.msra.mxu0 %v533
      %991 = vmatpush.msra.mxu0 %v532
      %992 = vmatpush.msra.mxu0 %v531
      %993 = vmatpush.msra.mxu0 %v530
      %994 = vmatpush.msra.mxu0 %v529
      %995 = vmatpush.msra.mxu0 %v528
      %996 = vmatpush.msra.mxu0 %v527
      %997 = vmatmul.f32.gmra.mxu0 %v322
      %v998 = vpop.f32.mrf.mxu0
      %v999 = vadd.f32 %v886, %v998
      %1000 = vmatmul.f32.gmra.mxu0 %v327
      %v1001 = vpop.f32.mrf.mxu0
      %v1002 = vadd.f32 %v889, %v1001
      %1003 = vmatmul.f32.gmra.mxu0 %v332
      %v1004 = vpop.f32.mrf.mxu0
      %v1005 = vadd.f32 %v892, %v1004
      %1006 = vmatmul.f32.gmra.mxu0 %v337
      %v1007 = vpop.f32.mrf.mxu0
      %v1008 = vadd.f32 %v895, %v1007
      %1009 = vmatmul.f32.gmra.mxu0 %v342
      %v1010 = vpop.f32.mrf.mxu0
      %v1011 = vadd.f32 %v898, %v1010
      %1012 = vmatmul.f32.gmra.mxu0 %v347
      %v1013 = vpop.f32.mrf.mxu0
      %v1014 = vadd.f32 %v901, %v1013
      %1015 = vmatmul.f32.gmra.mxu0 %v352
      %v1016 = vpop.f32.mrf.mxu0
      %v1017 = vadd.f32 %v904, %v1016
      %1018 = vmatmul.f32.gmra.mxu0 %v357
      %v1019 = vpop.f32.mrf.mxu0
      %v1020 = vadd.f32 %v907, %v1019
      %1021 = vmatmul.f32.gmra.mxu0 %v362
      %v1022 = vpop.f32.mrf.mxu0
      %v1023 = vadd.f32 %v910, %v1022
      %1024 = vmatmul.f32.gmra.mxu0 %v367
      %v1025 = vpop.f32.mrf.mxu0
      %v1026 = vadd.f32 %v913, %v1025
      %1027 = vmatmul.f32.gmra.mxu0 %v372
      %v1028 = vpop.f32.mrf.mxu0
      %v1029 = vadd.f32 %v916, %v1028
      %1030 = vmatmul.f32.gmra.mxu0 %v377
      %v1031 = vpop.f32.mrf.mxu0
      %v1032 = vadd.f32 %v919, %v1031
      %1033 = vmatmul.f32.gmra.mxu0 %v382
      %v1034 = vpop.f32.mrf.mxu0
      %v1035 = vadd.f32 %v922, %v1034
      %1036 = vmatmul.f32.gmra.mxu0 %v387
      %v1037 = vpop.f32.mrf.mxu0
      %v1038 = vadd.f32 %v925, %v1037
      %1039 = vmatmul.f32.gmra.mxu0 %v392
      %v1040 = vpop.f32.mrf.mxu0
      %v1041 = vadd.f32 %v928, %v1040
      %1042 = vmatmul.f32.gmra.mxu0 %v397
      %v1043 = vpop.f32.mrf.mxu0
      %v1044 = vadd.f32 %v931, %v1043
      %1045 = vmatmul.f32.gmra.mxu0 %v402
      %v1046 = vpop.f32.mrf.mxu0
      %v1047 = vadd.f32 %v934, %v1046
      %1048 = vmatmul.f32.gmra.mxu0 %v407
      %v1049 = vpop.f32.mrf.mxu0
      %v1050 = vadd.f32 %v937, %v1049
      %1051 = vmatmul.f32.gmra.mxu0 %v412
      %v1052 = vpop.f32.mrf.mxu0
      %v1053 = vadd.f32 %v940, %v1052
      %1054 = vmatmul.f32.gmra.mxu0 %v417
      %v1055 = vpop.f32.mrf.mxu0
      %v1056 = vadd.f32 %v943, %v1055
      %1057 = vmatmul.f32.gmra.mxu0 %v422
      %v1058 = vpop.f32.mrf.mxu0
      %v1059 = vadd.f32 %v946, %v1058
      %1060 = vmatmul.f32.gmra.mxu0 %v427
      %v1061 = vpop.f32.mrf.mxu0
      %v1062 = vadd.f32 %v949, %v1061
      %1063 = vmatmul.f32.gmra.mxu0 %v432
      %v1064 = vpop.f32.mrf.mxu0
      %v1065 = vadd.f32 %v952, %v1064
      %1066 = vmatmul.f32.gmra.mxu0 %v437
      %v1067 = vpop.f32.mrf.mxu0
      %v1068 = vadd.f32 %v955, %v1067
      %1069 = vmatmul.f32.gmra.mxu0 %v442
      %v1070 = vpop.f32.mrf.mxu0
      %v1071 = vadd.f32 %v958, %v1070
      %1072 = vmatmul.f32.gmra.mxu0 %v447
      %v1073 = vpop.f32.mrf.mxu0
      %v1074 = vadd.f32 %v961, %v1073
      %1075 = vmatmul.f32.gmra.mxu0 %v452
      %v1076 = vpop.f32.mrf.mxu0
      %v1077 = vadd.f32 %v964, %v1076
      %1078 = vmatmul.f32.gmra.mxu0 %v457
      %v1079 = vpop.f32.mrf.mxu0
      %v1080 = vadd.f32 %v967, %v1079
      %1081 = vmatmul.f32.gmra.mxu0 %v462
      %v1082 = vpop.f32.mrf.mxu0
      %v1083 = vadd.f32 %v970, %v1082
      %1084 = vmatmul.f32.gmra.mxu0 %v467
      %v1085 = vpop.f32.mrf.mxu0
      %v1086 = vadd.f32 %v973, %v1085
      %1087 = vmatmul.f32.gmra.mxu0 %v472
      %v1088 = vpop.f32.mrf.mxu0
      %v1089 = vadd.f32 %v976, %v1088
      %1090 = vmatmul.f32.gmra.mxu0 %v477
      %v1091 = vpop.f32.mrf.mxu0
      %v1092 = vadd.f32 %v979, %v1091
      %1093 = vdwg.mxu0
      %1094 = vmatpush.msra.mxu0 0.0
      %1095 = vmatpush.msra.mxu0 0.0
      %1096 = vmatpush.msra.mxu0 0.0
      %1097 = vmatpush.msra.mxu0 0.0
      %1098 = vmatpush.msra.mxu0 0.0
      %1099 = vmatpush.msra.mxu0 0.0
      %1100 = vmatpush.msra.mxu0 0.0
      %1101 = vmatpush.msra.mxu0 0.0
      %1102 = vmatpush.msra.mxu0 0.0
      %1103 = vmatpush.msra.mxu0 0.0
      %1104 = vmatpush.msra.mxu0 0.0
      %1105 = vmatpush.msra.mxu0 0.0
      %1106 = vmatpush.msra.mxu0 0.0
      %1107 = vmatpush.msra.mxu0 0.0
      %1108 = vmatpush.msra.mxu0 %v544
      %1109 = vmatpush.msra.mxu0 %v543
      %1110 = vmatmul.f32.gmra.mxu0 %v547
      %v1111 = vpop.f32.mrf.mxu0
      %v1112 = vadd.f32 %v999, %v1111
      %1113 = vmatmul.f32.gmra.mxu0 %v550
      %v1114 = vpop.f32.mrf.mxu0
      %v1115 = vadd.f32 %v1002, %v1114
      %1116 = vmatmul.f32.gmra.mxu0 %v553
      %v1117 = vpop.f32.mrf.mxu0
      %v1118 = vadd.f32 %v1005, %v1117
      %1119 = vmatmul.f32.gmra.mxu0 %v556
      %v1120 = vpop.f32.mrf.mxu0
      %v1121 = vadd.f32 %v1008, %v1120
      %1122 = vmatmul.f32.gmra.mxu0 %v559
      %v1123 = vpop.f32.mrf.mxu0
      %v1124 = vadd.f32 %v1011, %v1123
      %1125 = vmatmul.f32.gmra.mxu0 %v562
      %v1126 = vpop.f32.mrf.mxu0
      %v1127 = vadd.f32 %v1014, %v1126
      %1128 = vmatmul.f32.gmra.mxu0 %v565
      %v1129 = vpop.f32.mrf.mxu0
      %v1130 = vadd.f32 %v1017, %v1129
      %1131 = vmatmul.f32.gmra.mxu0 %v568
      %v1132 = vpop.f32.mrf.mxu0
      %v1133 = vadd.f32 %v1020, %v1132
      %1134 = vmatmul.f32.gmra.mxu0 %v571
      %v1135 = vpop.f32.mrf.mxu0
      %v1136 = vadd.f32 %v1023, %v1135
      %1137 = vmatmul.f32.gmra.mxu0 %v574
      %v1138 = vpop.f32.mrf.mxu0
      %v1139 = vadd.f32 %v1026, %v1138
      %1140 = vmatmul.f32.gmra.mxu0 %v577
      %v1141 = vpop.f32.mrf.mxu0
      %v1142 = vadd.f32 %v1029, %v1141
      %1143 = vmatmul.f32.gmra.mxu0 %v580
      %v1144 = vpop.f32.mrf.mxu0
      %v1145 = vadd.f32 %v1032, %v1144
      %1146 = vmatmul.f32.gmra.mxu0 %v583
      %v1147 = vpop.f32.mrf.mxu0
      %v1148 = vadd.f32 %v1035, %v1147
      %1149 = vmatmul.f32.gmra.mxu0 %v586
      %v1150 = vpop.f32.mrf.mxu0
      %v1151 = vadd.f32 %v1038, %v1150
      %1152 = vmatmul.f32.gmra.mxu0 %v589
      %v1153 = vpop.f32.mrf.mxu0
      %v1154 = vadd.f32 %v1041, %v1153
      %1155 = vmatmul.f32.gmra.mxu0 %v592
      %v1156 = vpop.f32.mrf.mxu0
      %v1157 = vadd.f32 %v1044, %v1156
      %1158 = vmatmul.f32.gmra.mxu0 %v595
      %v1159 = vpop.f32.mrf.mxu0
      %v1160 = vadd.f32 %v1047, %v1159
      %1161 = vmatmul.f32.gmra.mxu0 %v598
      %v1162 = vpop.f32.mrf.mxu0
      %v1163 = vadd.f32 %v1050, %v1162
      %1164 = vmatmul.f32.gmra.mxu0 %v601
      %v1165 = vpop.f32.mrf.mxu0
      %v1166 = vadd.f32 %v1053, %v1165
      %1167 = vmatmul.f32.gmra.mxu0 %v604
      %v1168 = vpop.f32.mrf.mxu0
      %v1169 = vadd.f32 %v1056, %v1168
      %1170 = vmatmul.f32.gmra.mxu0 %v607
      %v1171 = vpop.f32.mrf.mxu0
      %v1172 = vadd.f32 %v1059, %v1171
      %1173 = vmatmul.f32.gmra.mxu0 %v610
      %v1174 = vpop.f32.mrf.mxu0
      %v1175 = vadd.f32 %v1062, %v1174
      %1176 = vmatmul.f32.gmra.mxu0 %v613
      %v1177 = vpop.f32.mrf.mxu0
      %v1178 = vadd.f32 %v1065, %v1177
      %1179 = vmatmul.f32.gmra.mxu0 %v616
      %v1180 = vpop.f32.mrf.mxu0
      %v1181 = vadd.f32 %v1068, %v1180
      %1182 = vmatmul.f32.gmra.mxu0 %v619
      %v1183 = vpop.f32.mrf.mxu0
      %v1184 = vadd.f32 %v1071, %v1183
      %1185 = vmatmul.f32.gmra.mxu0 %v622
      %v1186 = vpop.f32.mrf.mxu0
      %v1187 = vadd.f32 %v1074, %v1186
      %1188 = vmatmul.f32.gmra.mxu0 %v625
      %v1189 = vpop.f32.mrf.mxu0
      %v1190 = vadd.f32 %v1077, %v1189
      %1191 = vmatmul.f32.gmra.mxu0 %v628
      %v1192 = vpop.f32.mrf.mxu0
      %v1193 = vadd.f32 %v1080, %v1192
      %1194 = vmatmul.f32.gmra.mxu0 %v631
      %v1195 = vpop.f32.mrf.mxu0
      %v1196 = vadd.f32 %v1083, %v1195
      %1197 = vmatmul.f32.gmra.mxu0 %v634
      %v1198 = vpop.f32.mrf.mxu0
      %v1199 = vadd.f32 %v1086, %v1198
      %1200 = vmatmul.f32.gmra.mxu0 %v637
      %v1201 = vpop.f32.mrf.mxu0
      %v1202 = vadd.f32 %v1089, %v1201
      %1203 = vmatmul.f32.gmra.mxu0 %v640
      %v1204 = vpop.f32.mrf.mxu0
      %v1205 = vadd.f32 %v1092, %v1204
      %1206 = vdwg.mxu0
      %v1207 = vmax.f32 %v1112, 0.0
      %v1208 = vmax.f32 %v1115, 0.0
      %v1209 = vmax.f32 %v1118, 0.0
      %v1210 = vmax.f32 %v1121, 0.0
      %v1211 = vmax.f32 %v1124, 0.0
      %v1212 = vmax.f32 %v1127, 0.0
      %v1213 = vmax.f32 %v1130, 0.0
      %v1214 = vmax.f32 %v1133, 0.0
      %v1215 = vmax.f32 %v1136, 0.0
      %v1216 = vmax.f32 %v1139, 0.0
      %v1217 = vmax.f32 %v1142, 0.0
      %v1218 = vmax.f32 %v1145, 0.0
      %v1219 = vmax.f32 %v1148, 0.0
      %v1220 = vmax.f32 %v1151, 0.0
      %v1221 = vmax.f32 %v1154, 0.0
      %v1222 = vmax.f32 %v1157, 0.0
      %v1223 = vmax.f32 %v1160, 0.0
      %v1224 = vmax.f32 %v1163, 0.0
      %v1225 = vmax.f32 %v1166, 0.0
      %v1226 = vmax.f32 %v1169, 0.0
      %v1227 = vmax.f32 %v1172, 0.0
      %v1228 = vmax.f32 %v1175, 0.0
      %v1229 = vmax.f32 %v1178, 0.0
      %v1230 = vmax.f32 %v1181, 0.0
      %v1231 = vmax.f32 %v1184, 0.0
      %v1232 = vmax.f32 %v1187, 0.0
      %v1233 = vmax.f32 %v1190, 0.0
      %v1234 = vmax.f32 %v1193, 0.0
      %v1235 = vmax.f32 %v1196, 0.0
      %v1236 = vmax.f32 %v1199, 0.0
      %v1237 = vmax.f32 %v1202, 0.0
      %v1238 = vmax.f32 %v1205, 0.0
      %1239 = vst [vmem:[#allocation2] sm:$0xff] %v1207
      %1240 = vst [vmem:[#allocation2 + $0x8] sm:$0xff] %v1208
      %1241 = vst [vmem:[#allocation2 + $0x10] sm:$0xff] %v1209
      %1242 = vst [vmem:[#allocation2 + $0x18] sm:$0xff] %v1210
      %1243 = vst [vmem:[#allocation2 + $0x20] sm:$0xff] %v1211
      %1244 = vst [vmem:[#allocation2 + $0x28] sm:$0xff] %v1212
      %1245 = vst [vmem:[#allocation2 + $0x30] sm:$0xff] %v1213
      %1246 = vst [vmem:[#allocation2 + $0x38] sm:$0xff] %v1214
      %1247 = vst [vmem:[#allocation2 + $0x40] sm:$0xff] %v1215
      %1248 = vst [vmem:[#allocation2 + $0x48] sm:$0xff] %v1216
      %1249 = vst [vmem:[#allocation2 + $0x50] sm:$0xff] %v1217
      %1250 = vst [vmem:[#allocation2 + $0x58] sm:$0xff] %v1218
      %1251 = vst [vmem:[#allocation2 + $0x60] sm:$0xff] %v1219
      %1252 = vst [vmem:[#allocation2 + $0x68] sm:$0xff] %v1220
      %1253 = vst [vmem:[#allocation2 + $0x70] sm:$0xff] %v1221
      %1254 = vst [vmem:[#allocation2 + $0x78] sm:$0xff] %v1222
      %1255 = vst [vmem:[#allocation2 + $0x80] sm:$0xff] %v1223
      %1256 = vst [vmem:[#allocation2 + $0x88] sm:$0xff] %v1224
      %1257 = vst [vmem:[#allocation2 + $0x90] sm:$0xff] %v1225
      %1258 = vst [vmem:[#allocation2 + $0x98] sm:$0xff] %v1226
      %1259 = vst [vmem:[#allocation2 + $0xa0] sm:$0xff] %v1227
      %1260 = vst [vmem:[#allocation2 + $0xa8] sm:$0xff] %v1228
      %1261 = vst [vmem:[#allocation2 + $0xb0] sm:$0xff] %v1229
      %1262 = vst [vmem:[#allocation2 + $0xb8] sm:$0xff] %v1230
      %1263 = vst [vmem:[#allocation2 + $0xc0] sm:$0xff] %v1231
      %1264 = vst [vmem:[#allocation2 + $0xc8] sm:$0xff] %v1232
      %1265 = vst [vmem:[#allocation2 + $0xd0] sm:$0xff] %v1233
      %1266 = vst [vmem:[#allocation2 + $0xd8] sm:$0xff] %v1234
      %1267 = vst [vmem:[#allocation2 + $0xe0] sm:$0xff] %v1235
      %1268 = vst [vmem:[#allocation2 + $0xe8] sm:$0xff] %v1236
      %1269 = vst [vmem:[#allocation2 + $0xf0] sm:$0xff] %v1237
      %1270 = vst [vmem:[#allocation2 + $0xf8] sm:$0xff] %v1238
      %1271 = vst [vmem:[#allocation2 + $0x100] sm:$0xff] 0.0
      %v1272 = vld [vmem:[#allocation2] sm:$0xff]
      %v1273 = vld [vmem:[#allocation2 + $0x8] sm:$0xff]
      %v1274 = vld [vmem:[#allocation2 + $0x10] sm:$0xff]
      %v1275 = vld [vmem:[#allocation2 + $0x18] sm:$0xff]
      %v1276 = vld [vmem:[#allocation2 + $0x20] sm:$0xff]
      %v1277 = vld [vmem:[#allocation2 + $0x28] sm:$0xff]
      %v1278 = vld [vmem:[#allocation2 + $0x30] sm:$0xff]
      %v1279 = vld [vmem:[#allocation2 + $0x38] sm:$0xff]
      %v1280 = vld [vmem:[#allocation2 + $0x40] sm:$0xff]
      %v1281 = vld [vmem:[#allocation2 + $0x48] sm:$0xff]
      %v1282 = vld [vmem:[#allocation2 + $0x50] sm:$0xff]
      %v1283 = vld [vmem:[#allocation2 + $0x58] sm:$0xff]
      %v1284 = vld [vmem:[#allocation2 + $0x60] sm:$0xff]
      %v1285 = vld [vmem:[#allocation2 + $0x68] sm:$0xff]
      %v1286 = vld [vmem:[#allocation2 + $0x70] sm:$0xff]
      %v1287 = vld [vmem:[#allocation2 + $0x78] sm:$0xff]
      %v1288 = vld [vmem:[#allocation2 + $0x80] sm:$0xff]
      %v1289 = vld [vmem:[#allocation2 + $0x88] sm:$0xff]
      %v1290 = vld [vmem:[#allocation2 + $0x90] sm:$0xff]
      %v1291 = vld [vmem:[#allocation2 + $0x98] sm:$0xff]
      %v1292 = vld [vmem:[#allocation2 + $0xa0] sm:$0xff]
      %v1293 = vld [vmem:[#allocation2 + $0xa8] sm:$0xff]
      %v1294 = vld [vmem:[#allocation2 + $0xb0] sm:$0xff]
      %v1295 = vld [vmem:[#allocation2 + $0xb8] sm:$0xff]
      %v1296 = vld [vmem:[#allocation2 + $0xc0] sm:$0xff]
      %v1297 = vld [vmem:[#allocation2 + $0xc8] sm:$0xff]
      %v1298 = vld [vmem:[#allocation2 + $0xd0] sm:$0xff]
      %v1299 = vld [vmem:[#allocation2 + $0xd8] sm:$0xff]
      %v1300 = vld [vmem:[#allocation2 + $0xe0] sm:$0xff]
      %v1301 = vld [vmem:[#allocation2 + $0xe8] sm:$0xff]
      %v1302 = vld [vmem:[#allocation2 + $0xf0] sm:$0xff]
      %v1303 = vld [vmem:[#allocation2 + $0xf8] sm:$0xff]
      %v1304 = vld [vmem:[#allocation2 + $0x1] sm:$0xff]
      %v1305 = vld [vmem:[#allocation2 + $0x9] sm:$0xff]
      %v1306 = vld [vmem:[#allocation2 + $0x11] sm:$0xff]
      %v1307 = vld [vmem:[#allocation2 + $0x19] sm:$0xff]
      %v1308 = vld [vmem:[#allocation2 + $0x21] sm:$0xff]
      %v1309 = vld [vmem:[#allocation2 + $0x29] sm:$0xff]
      %v1310 = vld [vmem:[#allocation2 + $0x31] sm:$0xff]
      %v1311 = vld [vmem:[#allocation2 + $0x39] sm:$0xff]
      %v1312 = vld [vmem:[#allocation2 + $0x41] sm:$0xff]
      %v1313 = vld [vmem:[#allocation2 + $0x49] sm:$0xff]
      %v1314 = vld [vmem:[#allocation2 + $0x51] sm:$0xff]
      %v1315 = vld [vmem:[#allocation2 + $0x59] sm:$0xff]
      %v1316 = vld [vmem:[#allocation2 + $0x61] sm:$0xff]
      %v1317 = vld [vmem:[#allocation2 + $0x69] sm:$0xff]
      %v1318 = vld [vmem:[#allocation2 + $0x71] sm:$0xff]
      %v1319 = vld [vmem:[#allocation2 + $0x79] sm:$0xff]
      %v1320 = vld [vmem:[#allocation2 + $0x81] sm:$0xff]
      %v1321 = vld [vmem:[#allocation2 + $0x89] sm:$0xff]
      %v1322 = vld [vmem:[#allocation2 + $0x91] sm:$0xff]
      %v1323 = vld [vmem:[#allocation2 + $0x99] sm:$0xff]
      %v1324 = vld [vmem:[#allocation2 + $0xa1] sm:$0xff]
      %v1325 = vld [vmem:[#allocation2 + $0xa9] sm:$0xff]
      %v1326 = vld [vmem:[#allocation2 + $0xb1] sm:$0xff]
      %v1327 = vld [vmem:[#allocation2 + $0xb9] sm:$0xff]
      %v1328 = vld [vmem:[#allocation2 + $0xc1] sm:$0xff]
      %v1329 = vld [vmem:[#allocation2 + $0xc9] sm:$0xff]
      %v1330 = vld [vmem:[#allocation2 + $0xd1] sm:$0xff]
      %v1331 = vld [vmem:[#allocation2 + $0xd9] sm:$0xff]
      %v1332 = vld [vmem:[#allocation2 + $0xe1] sm:$0xff]
      %v1333 = vld [vmem:[#allocation2 + $0xe9] sm:$0xff]
      %v1334 = vld [vmem:[#allocation2 + $0xf1] sm:$0xff]
      %v1335 = vld [vmem:[#allocation2 + $0xf9] sm:$0xff]
      %1337 = vset.pattern.permute.xlu0 1
      %1338 = vperm.xlu0 %1337, %v287
      %v1339 = vpop.permute.xlu0 %1338
      %1342 = vset.pattern.permute.xlu0 1
      %1343 = vperm.xlu0 %1342, %v288
      %v1344 = vpop.permute.xlu0 %1343
      %1347 = vset.pattern.permute.xlu0 1
      %1348 = vperm.xlu0 %1347, %v289
      %v1349 = vpop.permute.xlu0 %1348
      %1352 = vset.pattern.permute.xlu0 1
      %1353 = vperm.xlu0 %1352, %v290
      %v1354 = vpop.permute.xlu0 %1353
      %1357 = vset.pattern.permute.xlu0 1
      %1358 = vperm.xlu0 %1357, %v291
      %v1359 = vpop.permute.xlu0 %1358
      %1362 = vset.pattern.permute.xlu0 1
      %1363 = vperm.xlu0 %1362, %v292
      %v1364 = vpop.permute.xlu0 %1363
      %1367 = vset.pattern.permute.xlu0 1
      %1368 = vperm.xlu0 %1367, %v293
      %v1369 = vpop.permute.xlu0 %1368
      %1372 = vset.pattern.permute.xlu0 1
      %1373 = vperm.xlu0 %1372, %v294
      %v1374 = vpop.permute.xlu0 %1373
      %1377 = vset.pattern.permute.xlu0 1
      %1378 = vperm.xlu0 %1377, %v295
      %v1379 = vpop.permute.xlu0 %1378
      %1382 = vset.pattern.permute.xlu0 1
      %1383 = vperm.xlu0 %1382, %v296
      %v1384 = vpop.permute.xlu0 %1383
      %1387 = vset.pattern.permute.xlu0 1
      %1388 = vperm.xlu0 %1387, %v297
      %v1389 = vpop.permute.xlu0 %1388
      %1392 = vset.pattern.permute.xlu0 1
      %1393 = vperm.xlu0 %1392, %v298
      %v1394 = vpop.permute.xlu0 %1393
      %1397 = vset.pattern.permute.xlu0 1
      %1398 = vperm.xlu0 %1397, %v299
      %v1399 = vpop.permute.xlu0 %1398
      %1402 = vset.pattern.permute.xlu0 1
      %1403 = vperm.xlu0 %1402, %v300
      %v1404 = vpop.permute.xlu0 %1403
      %1407 = vset.pattern.permute.xlu0 1
      %1408 = vperm.xlu0 %1407, %v301
      %v1409 = vpop.permute.xlu0 %1408
      %1412 = vset.pattern.permute.xlu0 1
      %1413 = vperm.xlu0 %1412, %v302
      %v1414 = vpop.permute.xlu0 %1413
      %1417 = vset.pattern.permute.xlu0 1
      %1418 = vperm.xlu0 %1417, %v303
      %v1419 = vpop.permute.xlu0 %1418
      %1422 = vset.pattern.permute.xlu0 1
      %1423 = vperm.xlu0 %1422, %v304
      %v1424 = vpop.permute.xlu0 %1423
      %1427 = vset.pattern.permute.xlu0 1
      %1428 = vperm.xlu0 %1427, %v305
      %v1429 = vpop.permute.xlu0 %1428
      %1432 = vset.pattern.permute.xlu0 1
      %1433 = vperm.xlu0 %1432, %v306
      %v1434 = vpop.permute.xlu0 %1433
      %1437 = vset.pattern.permute.xlu0 1
      %1438 = vperm.xlu0 %1437, %v307
      %v1439 = vpop.permute.xlu0 %1438
      %1442 = vset.pattern.permute.xlu0 1
      %1443 = vperm.xlu0 %1442, %v308
      %v1444 = vpop.permute.xlu0 %1443
      %1447 = vset.pattern.permute.xlu0 1
      %1448 = vperm.xlu0 %1447, %v309
      %v1449 = vpop.permute.xlu0 %1448
      %1452 = vset.pattern.permute.xlu0 1
      %1453 = vperm.xlu0 %1452, %v310
      %v1454 = vpop.permute.xlu0 %1453
      %1457 = vset.pattern.permute.xlu0 1
      %1458 = vperm.xlu0 %1457, %v311
      %v1459 = vpop.permute.xlu0 %1458
      %1462 = vset.pattern.permute.xlu0 1
      %1463 = vperm.xlu0 %1462, %v312
      %v1464 = vpop.permute.xlu0 %1463
      %1467 = vset.pattern.permute.xlu0 1
      %1468 = vperm.xlu0 %1467, %v313
      %v1469 = vpop.permute.xlu0 %1468
      %1472 = vset.pattern.permute.xlu0 1
      %1473 = vperm.xlu0 %1472, %v314
      %v1474 = vpop.permute.xlu0 %1473
      %1477 = vset.pattern.permute.xlu0 1
      %1478 = vperm.xlu0 %1477, %v315
      %v1479 = vpop.permute.xlu0 %1478
      %1482 = vset.pattern.permute.xlu0 1
      %1483 = vperm.xlu0 %1482, %v316
      %v1484 = vpop.permute.xlu0 %1483
      %1487 = vset.pattern.permute.xlu0 1
      %1488 = vperm.xlu0 %1487, %v317
      %v1489 = vpop.permute.xlu0 %1488
      %1492 = vset.pattern.permute.xlu0 1
      %1493 = vperm.xlu0 %1492, %v318
      %v1494 = vpop.permute.xlu0 %1493
      %v1496 = vmul.f32 %v1304, %v1339
      %v1497 = vmul.f32 %v1305, %v1344
      %v1498 = vmul.f32 %v1306, %v1349
      %v1499 = vmul.f32 %v1307, %v1354
      %v1500 = vmul.f32 %v1308, %v1359
      %v1501 = vmul.f32 %v1309, %v1364
      %v1502 = vmul.f32 %v1310, %v1369
      %v1503 = vmul.f32 %v1311, %v1374
      %v1504 = vmul.f32 %v1312, %v1379
      %v1505 = vmul.f32 %v1313, %v1384
      %v1506 = vmul.f32 %v1314, %v1389
      %v1507 = vmul.f32 %v1315, %v1394
      %v1508 = vmul.f32 %v1316, %v1399
      %v1509 = vmul.f32 %v1317, %v1404
      %v1510 = vmul.f32 %v1318, %v1409
      %v1511 = vmul.f32 %v1319, %v1414
      %v1512 = vmul.f32 %v1320, %v1419
      %v1513 = vmul.f32 %v1321, %v1424
      %v1514 = vmul.f32 %v1322, %v1429
      %v1515 = vmul.f32 %v1323, %v1434
      %v1516 = vmul.f32 %v1324, %v1439
      %v1517 = vmul.f32 %v1325, %v1444
      %v1518 = vmul.f32 %v1326, %v1449
      %v1519 = vmul.f32 %v1327, %v1454
      %v1520 = vmul.f32 %v1328, %v1459
      %v1521 = vmul.f32 %v1329, %v1464
      %v1522 = vmul.f32 %v1330, %v1469
      %v1523 = vmul.f32 %v1331, %v1474
      %v1524 = vmul.f32 %v1332, %v1479
      %v1525 = vmul.f32 %v1333, %v1484
      %v1526 = vmul.f32 %v1334, %v1489
      %v1527 = vmul.f32 %v1335, %v1494
      %v1528 = vld [vmem:[#allocation2 + $0x4] sm:$0xff]
      %v1529 = vld [vmem:[#allocation2 + $0xc] sm:$0xff]
      %v1530 = vld [vmem:[#allocation2 + $0x14] sm:$0xff]
      %v1531 = vld [vmem:[#allocation2 + $0x1c] sm:$0xff]
      %v1532 = vld [vmem:[#allocation2 + $0x24] sm:$0xff]
      %v1533 = vld [vmem:[#allocation2 + $0x2c] sm:$0xff]
      %v1534 = vld [vmem:[#allocation2 + $0x34] sm:$0xff]
      %v1535 = vld [vmem:[#allocation2 + $0x3c] sm:$0xff]
      %v1536 = vld [vmem:[#allocation2 + $0x44] sm:$0xff]
      %v1537 = vld [vmem:[#allocation2 + $0x4c] sm:$0xff]
      %v1538 = vld [vmem:[#allocation2 + $0x54] sm:$0xff]
      %v1539 = vld [vmem:[#allocation2 + $0x5c] sm:$0xff]
      %v1540 = vld [vmem:[#allocation2 + $0x64] sm:$0xff]
      %v1541 = vld [vmem:[#allocation2 + $0x6c] sm:$0xff]
      %v1542 = vld [vmem:[#allocation2 + $0x74] sm:$0xff]
      %v1543 = vld [vmem:[#allocation2 + $0x7c] sm:$0xff]
      %v1544 = vld [vmem:[#allocation2 + $0x84] sm:$0xff]
      %v1545 = vld [vmem:[#allocation2 + $0x8c] sm:$0xff]
      %v1546 = vld [vmem:[#allocation2 + $0x94] sm:$0xff]
      %v1547 = vld [vmem:[#allocation2 + $0x9c] sm:$0xff]
      %v1548 = vld [vmem:[#allocation2 + $0xa4] sm:$0xff]
      %v1549 = vld [vmem:[#allocation2 + $0xac] sm:$0xff]
      %v1550 = vld [vmem:[#allocation2 + $0xb4] sm:$0xff]
      %v1551 = vld [vmem:[#allocation2 + $0xbc] sm:$0xff]
      %v1552 = vld [vmem:[#allocation2 + $0xc4] sm:$0xff]
      %v1553 = vld [vmem:[#allocation2 + $0xcc] sm:$0xff]
      %v1554 = vld [vmem:[#allocation2 + $0xd4] sm:$0xff]
      %v1555 = vld [vmem:[#allocation2 + $0xdc] sm:$0xff]
      %v1556 = vld [vmem:[#allocation2 + $0xe4] sm:$0xff]
      %v1557 = vld [vmem:[#allocation2 + $0xec] sm:$0xff]
      %v1558 = vld [vmem:[#allocation2 + $0xf4] sm:$0xff]
      %v1559 = vld [vmem:[#allocation2 + $0xfc] sm:$0xff]
      %1560 = vset.pattern.permute.xlu0 2
      %1561 = vperm.xlu0 %1560, %v287
      %v1562 = vpop.permute.xlu0 %1561
      %1564 = vset.pattern.permute.xlu0 2
      %1565 = vperm.xlu0 %1564, %v288
      %v1566 = vpop.permute.xlu0 %1565
      %1568 = vset.pattern.permute.xlu0 2
      %1569 = vperm.xlu0 %1568, %v289
      %v1570 = vpop.permute.xlu0 %1569
      %1572 = vset.pattern.permute.xlu0 2
      %1573 = vperm.xlu0 %1572, %v290
      %v1574 = vpop.permute.xlu0 %1573
      %1576 = vset.pattern.permute.xlu0 2
      %1577 = vperm.xlu0 %1576, %v291
      %v1578 = vpop.permute.xlu0 %1577
      %1580 = vset.pattern.permute.xlu0 2
      %1581 = vperm.xlu0 %1580, %v292
      %v1582 = vpop.permute.xlu0 %1581
      %1584 = vset.pattern.permute.xlu0 2
      %1585 = vperm.xlu0 %1584, %v293
      %v1586 = vpop.permute.xlu0 %1585
      %1588 = vset.pattern.permute.xlu0 2
      %1589 = vperm.xlu0 %1588, %v294
      %v1590 = vpop.permute.xlu0 %1589
      %1592 = vset.pattern.permute.xlu0 2
      %1593 = vperm.xlu0 %1592, %v295
      %v1594 = vpop.permute.xlu0 %1593
      %1596 = vset.pattern.permute.xlu0 2
      %1597 = vperm.xlu0 %1596, %v296
      %v1598 = vpop.permute.xlu0 %1597
      %1600 = vset.pattern.permute.xlu0 2
      %1601 = vperm.xlu0 %1600, %v297
      %v1602 = vpop.permute.xlu0 %1601
      %1604 = vset.pattern.permute.xlu0 2
      %1605 = vperm.xlu0 %1604, %v298
      %v1606 = vpop.permute.xlu0 %1605
      %1608 = vset.pattern.permute.xlu0 2
      %1609 = vperm.xlu0 %1608, %v299
      %v1610 = vpop.permute.xlu0 %1609
      %1612 = vset.pattern.permute.xlu0 2
      %1613 = vperm.xlu0 %1612, %v300
      %v1614 = vpop.permute.xlu0 %1613
      %1616 = vset.pattern.permute.xlu0 2
      %1617 = vperm.xlu0 %1616, %v301
      %v1618 = vpop.permute.xlu0 %1617
      %1620 = vset.pattern.permute.xlu0 2
      %1621 = vperm.xlu0 %1620, %v302
      %v1622 = vpop.permute.xlu0 %1621
      %1624 = vset.pattern.permute.xlu0 2
      %1625 = vperm.xlu0 %1624, %v303
      %v1626 = vpop.permute.xlu0 %1625
      %1628 = vset.pattern.permute.xlu0 2
      %1629 = vperm.xlu0 %1628, %v304
      %v1630 = vpop.permute.xlu0 %1629
      %1632 = vset.pattern.permute.xlu0 2
      %1633 = vperm.xlu0 %1632, %v305
      %v1634 = vpop.permute.xlu0 %1633
      %1636 = vset.pattern.permute.xlu0 2
      %1637 = vperm.xlu0 %1636, %v306
      %v1638 = vpop.permute.xlu0 %1637
      %1640 = vset.pattern.permute.xlu0 2
      %1641 = vperm.xlu0 %1640, %v307
      %v1642 = vpop.permute.xlu0 %1641
      %1644 = vset.pattern.permute.xlu0 2
      %1645 = vperm.xlu0 %1644, %v308
      %v1646 = vpop.permute.xlu0 %1645
      %1648 = vset.pattern.permute.xlu0 2
      %1649 = vperm.xlu0 %1648, %v309
      %v1650 = vpop.permute.xlu0 %1649
      %1652 = vset.pattern.permute.xlu0 2
      %1653 = vperm.xlu0 %1652, %v310
      %v1654 = vpop.permute.xlu0 %1653
      %1656 = vset.pattern.permute.xlu0 2
      %1657 = vperm.xlu0 %1656, %v311
      %v1658 = vpop.permute.xlu0 %1657
      %1660 = vset.pattern.permute.xlu0 2
      %1661 = vperm.xlu0 %1660, %v312
      %v1662 = vpop.permute.xlu0 %1661
      %1664 = vset.pattern.permute.xlu0 2
      %1665 = vperm.xlu0 %1664, %v313
      %v1666 = vpop.permute.xlu0 %1665
      %1668 = vset.pattern.permute.xlu0 2
      %1669 = vperm.xlu0 %1668, %v314
      %v1670 = vpop.permute.xlu0 %1669
      %1672 = vset.pattern.permute.xlu0 2
      %1673 = vperm.xlu0 %1672, %v315
      %v1674 = vpop.permute.xlu0 %1673
      %1676 = vset.pattern.permute.xlu0 2
      %1677 = vperm.xlu0 %1676, %v316
      %v1678 = vpop.permute.xlu0 %1677
      %1680 = vset.pattern.permute.xlu0 2
      %1681 = vperm.xlu0 %1680, %v317
      %v1682 = vpop.permute.xlu0 %1681
      %1684 = vset.pattern.permute.xlu0 2
      %1685 = vperm.xlu0 %1684, %v318
      %v1686 = vpop.permute.xlu0 %1685
      %v1688 = vmul.f32 %v1528, %v1562
      %v1689 = vmul.f32 %v1529, %v1566
      %v1690 = vmul.f32 %v1530, %v1570
      %v1691 = vmul.f32 %v1531, %v1574
      %v1692 = vmul.f32 %v1532, %v1578
      %v1693 = vmul.f32 %v1533, %v1582
      %v1694 = vmul.f32 %v1534, %v1586
      %v1695 = vmul.f32 %v1535, %v1590
      %v1696 = vmul.f32 %v1536, %v1594
      %v1697 = vmul.f32 %v1537, %v1598
      %v1698 = vmul.f32 %v1538, %v1602
      %v1699 = vmul.f32 %v1539, %v1606
      %v1700 = vmul.f32 %v1540, %v1610
      %v1701 = vmul.f32 %v1541, %v1614
      %v1702 = vmul.f32 %v1542, %v1618
      %v1703 = vmul.f32 %v1543, %v1622
      %v1704 = vmul.f32 %v1544, %v1626
      %v1705 = vmul.f32 %v1545, %v1630
      %v1706 = vmul.f32 %v1546, %v1634
      %v1707 = vmul.f32 %v1547, %v1638
      %v1708 = vmul.f32 %v1548, %v1642
      %v1709 = vmul.f32 %v1549, %v1646
      %v1710 = vmul.f32 %v1550, %v1650
      %v1711 = vmul.f32 %v1551, %v1654
      %v1712 = vmul.f32 %v1552, %v1658
      %v1713 = vmul.f32 %v1553, %v1662
      %v1714 = vmul.f32 %v1554, %v1666
      %v1715 = vmul.f32 %v1555, %v1670
      %v1716 = vmul.f32 %v1556, %v1674
      %v1717 = vmul.f32 %v1557, %v1678
      %v1718 = vmul.f32 %v1558, %v1682
      %v1719 = vmul.f32 %v1559, %v1686
      %v1720 = vld [vmem:[#allocation2 + $0x5] sm:$0xff]
      %v1721 = vld [vmem:[#allocation2 + $0xd] sm:$0xff]
      %v1722 = vld [vmem:[#allocation2 + $0x15] sm:$0xff]
      %v1723 = vld [vmem:[#allocation2 + $0x1d] sm:$0xff]
      %v1724 = vld [vmem:[#allocation2 + $0x25] sm:$0xff]
      %v1725 = vld [vmem:[#allocation2 + $0x2d] sm:$0xff]
      %v1726 = vld [vmem:[#allocation2 + $0x35] sm:$0xff]
      %v1727 = vld [vmem:[#allocation2 + $0x3d] sm:$0xff]
      %v1728 = vld [vmem:[#allocation2 + $0x45] sm:$0xff]
      %v1729 = vld [vmem:[#allocation2 + $0x4d] sm:$0xff]
      %v1730 = vld [vmem:[#allocation2 + $0x55] sm:$0xff]
      %v1731 = vld [vmem:[#allocation2 + $0x5d] sm:$0xff]
      %v1732 = vld [vmem:[#allocation2 + $0x65] sm:$0xff]
      %v1733 = vld [vmem:[#allocation2 + $0x6d] sm:$0xff]
      %v1734 = vld [vmem:[#allocation2 + $0x75] sm:$0xff]
      %v1735 = vld [vmem:[#allocation2 + $0x7d] sm:$0xff]
      %v1736 = vld [vmem:[#allocation2 + $0x85] sm:$0xff]
      %v1737 = vld [vmem:[#allocation2 + $0x8d] sm:$0xff]
      %v1738 = vld [vmem:[#allocation2 + $0x95] sm:$0xff]
      %v1739 = vld [vmem:[#allocation2 + $0x9d] sm:$0xff]
      %v1740 = vld [vmem:[#allocation2 + $0xa5] sm:$0xff]
      %v1741 = vld [vmem:[#allocation2 + $0xad] sm:$0xff]
      %v1742 = vld [vmem:[#allocation2 + $0xb5] sm:$0xff]
      %v1743 = vld [vmem:[#allocation2 + $0xbd] sm:$0xff]
      %v1744 = vld [vmem:[#allocation2 + $0xc5] sm:$0xff]
      %v1745 = vld [vmem:[#allocation2 + $0xcd] sm:$0xff]
      %v1746 = vld [vmem:[#allocation2 + $0xd5] sm:$0xff]
      %v1747 = vld [vmem:[#allocation2 + $0xdd] sm:$0xff]
      %v1748 = vld [vmem:[#allocation2 + $0xe5] sm:$0xff]
      %v1749 = vld [vmem:[#allocation2 + $0xed] sm:$0xff]
      %v1750 = vld [vmem:[#allocation2 + $0xf5] sm:$0xff]
      %v1751 = vld [vmem:[#allocation2 + $0xfd] sm:$0xff]
      %1752 = vset.pattern.permute.xlu0 3
      %1753 = vperm.xlu0 %1752, %v287
      %v1754 = vpop.permute.xlu0 %1753
      %1756 = vset.pattern.permute.xlu0 3
      %1757 = vperm.xlu0 %1756, %v288
      %v1758 = vpop.permute.xlu0 %1757
      %1760 = vset.pattern.permute.xlu0 3
      %1761 = vperm.xlu0 %1760, %v289
      %v1762 = vpop.permute.xlu0 %1761
      %1764 = vset.pattern.permute.xlu0 3
      %1765 = vperm.xlu0 %1764, %v290
      %v1766 = vpop.permute.xlu0 %1765
      %1768 = vset.pattern.permute.xlu0 3
      %1769 = vperm.xlu0 %1768, %v291
      %v1770 = vpop.permute.xlu0 %1769
      %1772 = vset.pattern.permute.xlu0 3
      %1773 = vperm.xlu0 %1772, %v292
      %v1774 = vpop.permute.xlu0 %1773
      %1776 = vset.pattern.permute.xlu0 3
      %1777 = vperm.xlu0 %1776, %v293
      %v1778 = vpop.permute.xlu0 %1777
      %1780 = vset.pattern.permute.xlu0 3
      %1781 = vperm.xlu0 %1780, %v294
      %v1782 = vpop.permute.xlu0 %1781
      %1784 = vset.pattern.permute.xlu0 3
      %1785 = vperm.xlu0 %1784, %v295
      %v1786 = vpop.permute.xlu0 %1785
      %1788 = vset.pattern.permute.xlu0 3
      %1789 = vperm.xlu0 %1788, %v296
      %v1790 = vpop.permute.xlu0 %1789
      %1792 = vset.pattern.permute.xlu0 3
      %1793 = vperm.xlu0 %1792, %v297
      %v1794 = vpop.permute.xlu0 %1793
      %1796 = vset.pattern.permute.xlu0 3
      %1797 = vperm.xlu0 %1796, %v298
      %v1798 = vpop.permute.xlu0 %1797
      %1800 = vset.pattern.permute.xlu0 3
      %1801 = vperm.xlu0 %1800, %v299
      %v1802 = vpop.permute.xlu0 %1801
      %1804 = vset.pattern.permute.xlu0 3
      %1805 = vperm.xlu0 %1804, %v300
      %v1806 = vpop.permute.xlu0 %1805
      %1808 = vset.pattern.permute.xlu0 3
      %1809 = vperm.xlu0 %1808, %v301
      %v1810 = vpop.permute.xlu0 %1809
      %1812 = vset.pattern.permute.xlu0 3
      %1813 = vperm.xlu0 %1812, %v302
      %v1814 = vpop.permute.xlu0 %1813
      %1816 = vset.pattern.permute.xlu0 3
      %1817 = vperm.xlu0 %1816, %v303
      %v1818 = vpop.permute.xlu0 %1817
      %1820 = vset.pattern.permute.xlu0 3
      %1821 = vperm.xlu0 %1820, %v304
      %v1822 = vpop.permute.xlu0 %1821
      %1824 = vset.pattern.permute.xlu0 3
      %1825 = vperm.xlu0 %1824, %v305
      %v1826 = vpop.permute.xlu0 %1825
      %1828 = vset.pattern.permute.xlu0 3
      %1829 = vperm.xlu0 %1828, %v306
      %v1830 = vpop.permute.xlu0 %1829
      %1832 = vset.pattern.permute.xlu0 3
      %1833 = vperm.xlu0 %1832, %v307
      %v1834 = vpop.permute.xlu0 %1833
      %1836 = vset.pattern.permute.xlu0 3
      %1837 = vperm.xlu0 %1836, %v308
      %v1838 = vpop.permute.xlu0 %1837
      %1840 = vset.pattern.permute.xlu0 3
      %1841 = vperm.xlu0 %1840, %v309
      %v1842 = vpop.permute.xlu0 %1841
      %1844 = vset.pattern.permute.xlu0 3
      %1845 = vperm.xlu0 %1844, %v310
      %v1846 = vpop.permute.xlu0 %1845
      %1848 = vset.pattern.permute.xlu0 3
      %1849 = vperm.xlu0 %1848, %v311
      %v1850 = vpop.permute.xlu0 %1849
      %1852 = vset.pattern.permute.xlu0 3
      %1853 = vperm.xlu0 %1852, %v312
      %v1854 = vpop.permute.xlu0 %1853
      %1856 = vset.pattern.permute.xlu0 3
      %1857 = vperm.xlu0 %1856, %v313
      %v1858 = vpop.permute.xlu0 %1857
      %1860 = vset.pattern.permute.xlu0 3
      %1861 = vperm.xlu0 %1860, %v314
      %v1862 = vpop.permute.xlu0 %1861
      %1864 = vset.pattern.permute.xlu0 3
      %1865 = vperm.xlu0 %1864, %v315
      %v1866 = vpop.permute.xlu0 %1865
      %1868 = vset.pattern.permute.xlu0 3
      %1869 = vperm.xlu0 %1868, %v316
      %v1870 = vpop.permute.xlu0 %1869
      %1872 = vset.pattern.permute.xlu0 3
      %1873 = vperm.xlu0 %1872, %v317
      %v1874 = vpop.permute.xlu0 %1873
      %1876 = vset.pattern.permute.xlu0 3
      %1877 = vperm.xlu0 %1876, %v318
      %v1878 = vpop.permute.xlu0 %1877
      %v1880 = vmul.f32 %v1720, %v1754
      %v1881 = vmul.f32 %v1721, %v1758
      %v1882 = vmul.f32 %v1722, %v1762
      %v1883 = vmul.f32 %v1723, %v1766
      %v1884 = vmul.f32 %v1724, %v1770
      %v1885 = vmul.f32 %v1725, %v1774
      %v1886 = vmul.f32 %v1726, %v1778
      %v1887 = vmul.f32 %v1727, %v1782
      %v1888 = vmul.f32 %v1728, %v1786
      %v1889 = vmul.f32 %v1729, %v1790
      %v1890 = vmul.f32 %v1730, %v1794
      %v1891 = vmul.f32 %v1731, %v1798
      %v1892 = vmul.f32 %v1732, %v1802
      %v1893 = vmul.f32 %v1733, %v1806
      %v1894 = vmul.f32 %v1734, %v1810
      %v1895 = vmul.f32 %v1735, %v1814
      %v1896 = vmul.f32 %v1736, %v1818
      %v1897 = vmul.f32 %v1737, %v1822
      %v1898 = vmul.f32 %v1738, %v1826
      %v1899 = vmul.f32 %v1739, %v1830
      %v1900 = vmul.f32 %v1740, %v1834
      %v1901 = vmul.f32 %v1741, %v1838
      %v1902 = vmul.f32 %v1742, %v1842
      %v1903 = vmul.f32 %v1743, %v1846
      %v1904 = vmul.f32 %v1744, %v1850
      %v1905 = vmul.f32 %v1745, %v1854
      %v1906 = vmul.f32 %v1746, %v1858
      %v1907 = vmul.f32 %v1747, %v1862
      %v1908 = vmul.f32 %v1748, %v1866
      %v1909 = vmul.f32 %v1749, %v1870
      %v1910 = vmul.f32 %v1750, %v1874
      %v1911 = vmul.f32 %v1751, %v1878
      %v1912 = vld [vmem:[%s3] sm:$0xff]
      %v1913 = vld [vmem:[%s3 + $0x8] sm:$0xff]
      %v1914 = vld [vmem:[%s3 + $0x10] sm:$0xff]
      %v1915 = vld [vmem:[%s3 + $0x18] sm:$0xff]
      %v1916 = vld [vmem:[%s3 + $0x20] sm:$0xff]
      %v1917 = vld [vmem:[%s3 + $0x28] sm:$0xff]
      %v1918 = vld [vmem:[%s3 + $0x30] sm:$0xff]
      %v1919 = vld [vmem:[%s3 + $0x38] sm:$0xff]
      %v1920 = vld [vmem:[%s3 + $0x40] sm:$0xff]
      %v1921 = vld [vmem:[%s3 + $0x48] sm:$0xff]
      %v1922 = vld [vmem:[%s3 + $0x50] sm:$0xff]
      %v1923 = vld [vmem:[%s3 + $0x58] sm:$0xff]
      %v1924 = vld [vmem:[%s3 + $0x60] sm:$0xff]
      %v1925 = vld [vmem:[%s3 + $0x68] sm:$0xff]
      %v1926 = vld [vmem:[%s3 + $0x70] sm:$0xff]
      %v1927 = vld [vmem:[%s3 + $0x78] sm:$0xff]
      %v1928 = vld [vmem:[%s3 + $0x80] sm:$0xff]
      %v1929 = vld [vmem:[%s3 + $0x88] sm:$0xff]
      %v1930 = vld [vmem:[%s3 + $0x90] sm:$0xff]
      %v1931 = vld [vmem:[%s3 + $0x98] sm:$0xff]
      %v1932 = vld [vmem:[%s3 + $0xa0] sm:$0xff]
      %v1933 = vld [vmem:[%s3 + $0xa8] sm:$0xff]
      %v1934 = vld [vmem:[%s3 + $0xb0] sm:$0xff]
      %v1935 = vld [vmem:[%s3 + $0xb8] sm:$0xff]
      %v1936 = vld [vmem:[%s3 + $0xc0] sm:$0xff]
      %v1937 = vld [vmem:[%s3 + $0xc8] sm:$0xff]
      %v1938 = vld [vmem:[%s3 + $0xd0] sm:$0xff]
      %v1939 = vld [vmem:[%s3 + $0xd8] sm:$0xff]
      %v1940 = vld [vmem:[%s3 + $0xe0] sm:$0xff]
      %v1941 = vld [vmem:[%s3 + $0xe8] sm:$0xff]
      %v1942 = vld [vmem:[%s3 + $0xf0] sm:$0xff]
      %v1943 = vld [vmem:[%s3 + $0xf8] sm:$0xff]
      %v1944 = vld [vmem:[%s3 + $0x100] sm:$0xff]
      %v1945 = vld [vmem:[%s3 + $0x108] sm:$0xff]
      %v1946 = vld [vmem:[%s3 + $0x110] sm:$0xff]
      %v1947 = vld [vmem:[%s3 + $0x118] sm:$0xff]
      %v1948 = vld [vmem:[%s3 + $0x120] sm:$0xff]
      %v1949 = vld [vmem:[%s3 + $0x128] sm:$0xff]
      %v1950 = vld [vmem:[%s3 + $0x130] sm:$0xff]
      %v1951 = vld [vmem:[%s3 + $0x138] sm:$0xff]
      %v1952 = vld [vmem:[%s3 + $0x140] sm:$0xff]
      %v1953 = vld [vmem:[%s3 + $0x148] sm:$0xff]
      %v1954 = vld [vmem:[%s3 + $0x150] sm:$0xff]
      %v1955 = vld [vmem:[%s3 + $0x158] sm:$0xff]
      %v1956 = vld [vmem:[%s3 + $0x160] sm:$0xff]
      %v1957 = vld [vmem:[%s3 + $0x168] sm:$0xff]
      %v1958 = vld [vmem:[%s3 + $0x170] sm:$0xff]
      %v1959 = vld [vmem:[%s3 + $0x178] sm:$0xff]
      %v1960 = vld [vmem:[%s3 + $0x180] sm:$0xff]
      %v1961 = vld [vmem:[%s3 + $0x188] sm:$0xff]
      %v1962 = vld [vmem:[%s3 + $0x190] sm:$0xff]
      %v1963 = vld [vmem:[%s3 + $0x198] sm:$0xff]
      %v1964 = vld [vmem:[%s3 + $0x1a0] sm:$0xff]
      %v1965 = vld [vmem:[%s3 + $0x1a8] sm:$0xff]
      %v1966 = vld [vmem:[%s3 + $0x1b0] sm:$0xff]
      %v1967 = vld [vmem:[%s3 + $0x1b8] sm:$0xff]
      %v1968 = vld [vmem:[%s3 + $0x1c0] sm:$0xff]
      %v1969 = vld [vmem:[%s3 + $0x1c8] sm:$0xff]
      %v1970 = vld [vmem:[%s3 + $0x1d0] sm:$0xff]
      %v1971 = vld [vmem:[%s3 + $0x1d8] sm:$0xff]
      %v1972 = vld [vmem:[%s3 + $0x1e0] sm:$0xff]
      %v1973 = vld [vmem:[%s3 + $0x1e8] sm:$0xff]
      %v1974 = vld [vmem:[%s3 + $0x1f0] sm:$0xff]
      %v1975 = vld [vmem:[%s3 + $0x1f8] sm:$0xff]
      %v1976 = vld [vmem:[%s3 + $0x200] sm:$0xff]
      %v1977 = vld [vmem:[%s3 + $0x208] sm:$0xff]
      %v1978 = vld [vmem:[%s3 + $0x210] sm:$0xff]
      %v1979 = vld [vmem:[%s3 + $0x218] sm:$0xff]
      %v1980 = vld [vmem:[%s3 + $0x220] sm:$0xff]
      %v1981 = vld [vmem:[%s3 + $0x228] sm:$0xff]
      %v1982 = vld [vmem:[%s3 + $0x230] sm:$0xff]
      %v1983 = vld [vmem:[%s3 + $0x238] sm:$0xff]
      %v1984 = vld [vmem:[%s3 + $0x240] sm:$0xff]
      %v1985 = vld [vmem:[%s3 + $0x248] sm:$0xff]
      %v1986 = vld [vmem:[%s3 + $0x250] sm:$0xff]
      %v1987 = vld [vmem:[%s3 + $0x258] sm:$0xff]
      %v1988 = vld [vmem:[%s3 + $0x260] sm:$0xff]
      %v1989 = vld [vmem:[%s3 + $0x268] sm:$0xff]
      %v1990 = vld [vmem:[%s3 + $0x270] sm:$0xff]
      %v1991 = vld [vmem:[%s3 + $0x278] sm:$0xff]
      %v1992 = vld [vmem:[%s3 + $0x280] sm:$0xff]
      %v1993 = vld [vmem:[%s3 + $0x288] sm:$0xff]
      %v1994 = vld [vmem:[%s3 + $0x290] sm:$0xff]
      %v1995 = vld [vmem:[%s3 + $0x298] sm:$0xff]
      %v1996 = vld [vmem:[%s3 + $0x2a0] sm:$0xff]
      %v1997 = vld [vmem:[%s3 + $0x2a8] sm:$0xff]
      %v1998 = vld [vmem:[%s3 + $0x2b0] sm:$0xff]
      %v1999 = vld [vmem:[%s3 + $0x2b8] sm:$0xff]
      %v2000 = vld [vmem:[%s3 + $0x2c0] sm:$0xff]
      %v2001 = vld [vmem:[%s3 + $0x2c8] sm:$0xff]
      %v2002 = vld [vmem:[%s3 + $0x2d0] sm:$0xff]
      %v2003 = vld [vmem:[%s3 + $0x2d8] sm:$0xff]
      %v2004 = vld [vmem:[%s3 + $0x2e0] sm:$0xff]
      %v2005 = vld [vmem:[%s3 + $0x2e8] sm:$0xff]
      %v2006 = vld [vmem:[%s3 + $0x2f0] sm:$0xff]
      %v2007 = vld [vmem:[%s3 + $0x2f8] sm:$0xff]
      %v2008 = vld [vmem:[%s3 + $0x300] sm:$0xff]
      %v2009 = vld [vmem:[%s3 + $0x308] sm:$0xff]
      %v2010 = vld [vmem:[%s3 + $0x310] sm:$0xff]
      %v2011 = vld [vmem:[%s3 + $0x318] sm:$0xff]
      %v2012 = vld [vmem:[%s3 + $0x320] sm:$0xff]
      %v2013 = vld [vmem:[%s3 + $0x328] sm:$0xff]
      %v2014 = vld [vmem:[%s3 + $0x330] sm:$0xff]
      %v2015 = vld [vmem:[%s3 + $0x338] sm:$0xff]
      %v2016 = vld [vmem:[%s3 + $0x340] sm:$0xff]
      %v2017 = vld [vmem:[%s3 + $0x348] sm:$0xff]
      %v2018 = vld [vmem:[%s3 + $0x350] sm:$0xff]
      %v2019 = vld [vmem:[%s3 + $0x358] sm:$0xff]
      %v2020 = vld [vmem:[%s3 + $0x360] sm:$0xff]
      %v2021 = vld [vmem:[%s3 + $0x368] sm:$0xff]
      %v2022 = vld [vmem:[%s3 + $0x370] sm:$0xff]
      %v2023 = vld [vmem:[%s3 + $0x378] sm:$0xff]
      %v2024 = vld [vmem:[%s3 + $0x380] sm:$0xff]
      %v2025 = vld [vmem:[%s3 + $0x388] sm:$0xff]
      %v2026 = vld [vmem:[%s3 + $0x390] sm:$0xff]
      %v2027 = vld [vmem:[%s3 + $0x398] sm:$0xff]
      %v2028 = vld [vmem:[%s3 + $0x3a0] sm:$0xff]
      %v2029 = vld [vmem:[%s3 + $0x3a8] sm:$0xff]
      %v2030 = vld [vmem:[%s3 + $0x3b0] sm:$0xff]
      %v2031 = vld [vmem:[%s3 + $0x3b8] sm:$0xff]
      %v2032 = vld [vmem:[%s3 + $0x3c0] sm:$0xff]
      %v2033 = vld [vmem:[%s3 + $0x3c8] sm:$0xff]
      %v2034 = vld [vmem:[%s3 + $0x3d0] sm:$0xff]
      %v2035 = vld [vmem:[%s3 + $0x3d8] sm:$0xff]
      %v2036 = vld [vmem:[%s3 + $0x3e0] sm:$0xff]
      %v2037 = vld [vmem:[%s3 + $0x3e8] sm:$0xff]
      %v2038 = vld [vmem:[%s3 + $0x3f0] sm:$0xff]
      %v2039 = vld [vmem:[%s3 + $0x3f8] sm:$0xff]
      %v2040 = vld [vmem:[%s4] sm:$0x3]
      %v2042 = vperm.slane %v2040, 0
      %v2043 = vperm.slane %v2040, 1
      %2046 = vmatpush.msra.mxu0 %v1942
      %2047 = vmatpush.msra.mxu0 %v1940
      %2048 = vmatpush.msra.mxu0 %v1938
      %2049 = vmatpush.msra.mxu0 %v1936
      %2050 = vmatpush.msra.mxu0 %v1934
      %2051 = vmatpush.msra.mxu0 %v1932
      %2052 = vmatpush.msra.mxu0 %v1930
      %2053 = vmatpush.msra.mxu0 %v1928
      %2054 = vmatpush.msra.mxu0 %v1926
      %2055 = vmatpush.msra.mxu0 %v1924
      %2056 = vmatpush.msra.mxu0 %v1922
      %2057 = vmatpush.msra.mxu0 %v1920
      %2058 = vmatpush.msra.mxu0 %v1918
      %2059 = vmatpush.msra.mxu0 %v1916
      %2060 = vmatpush.msra.mxu0 %v1914
      %2061 = vmatpush.msra.mxu0 %v1912
      %2062 = vmatmul.f32.gmra.mxu0 %v1272
      %v2063 = vpop.f32.mrf.mxu0
      %v2064 = vadd.f32 %v2042, %v2063
      %2065 = vmatmul.f32.gmra.mxu0 %v1273
      %v2066 = vpop.f32.mrf.mxu0
      %v2067 = vadd.f32 %v2042, %v2066
      %2068 = vmatmul.f32.gmra.mxu0 %v1274
      %v2069 = vpop.f32.mrf.mxu0
      %v2070 = vadd.f32 %v2042, %v2069
      %2071 = vmatmul.f32.gmra.mxu0 %v1275
      %v2072 = vpop.f32.mrf.mxu0
      %v2073 = vadd.f32 %v2042, %v2072
      %2074 = vmatmul.f32.gmra.mxu0 %v1276
      %v2075 = vpop.f32.mrf.mxu0
      %v2076 = vadd.f32 %v2042, %v2075
      %2077 = vmatmul.f32.gmra.mxu0 %v1277
      %v2078 = vpop.f32.mrf.mxu0
      %v2079 = vadd.f32 %v2042, %v2078
      %2080 = vmatmul.f32.gmra.mxu0 %v1278
      %v2081 = vpop.f32.mrf.mxu0
      %v2082 = vadd.f32 %v2042, %v2081
      %2083 = vmatmul.f32.gmra.mxu0 %v1279
      %v2084 = vpop.f32.mrf.mxu0
      %v2085 = vadd.f32 %v2042, %v2084
      %2086 = vmatmul.f32.gmra.mxu0 %v1280
      %v2087 = vpop.f32.mrf.mxu0
      %v2088 = vadd.f32 %v2042, %v2087
      %2089 = vmatmul.f32.gmra.mxu0 %v1281
      %v2090 = vpop.f32.mrf.mxu0
      %v2091 = vadd.f32 %v2042, %v2090
      %2092 = vmatmul.f32.gmra.mxu0 %v1282
      %v2093 = vpop.f32.mrf.mxu0
      %v2094 = vadd.f32 %v2042, %v2093
      %2095 = vmatmul.f32.gmra.mxu0 %v1283
      %v2096 = vpop.f32.mrf.mxu0
      %v2097 = vadd.f32 %v2042, %v2096
      %2098 = vmatmul.f32.gmra.mxu0 %v1284
      %v2099 = vpop.f32.mrf.mxu0
      %v2100 = vadd.f32 %v2042, %v2099
      %2101 = vmatmul.f32.gmra.mxu0 %v1285
      %v2102 = vpop.f32.mrf.mxu0
      %v2103 = vadd.f32 %v2042, %v2102
      %2104 = vmatmul.f32.gmra.mxu0 %v1286
      %v2105 = vpop.f32.mrf.mxu0
      %v2106 = vadd.f32 %v2042, %v2105
      %2107 = vmatmul.f32.gmra.mxu0 %v1287
      %v2108 = vpop.f32.mrf.mxu0
      %v2109 = vadd.f32 %v2042, %v2108
      %2110 = vmatmul.f32.gmra.mxu0 %v1288
      %v2111 = vpop.f32.mrf.mxu0
      %v2112 = vadd.f32 %v2042, %v2111
      %2113 = vmatmul.f32.gmra.mxu0 %v1289
      %v2114 = vpop.f32.mrf.mxu0
      %v2115 = vadd.f32 %v2042, %v2114
      %2116 = vmatmul.f32.gmra.mxu0 %v1290
      %v2117 = vpop.f32.mrf.mxu0
      %v2118 = vadd.f32 %v2042, %v2117
      %2119 = vmatmul.f32.gmra.mxu0 %v1291
      %v2120 = vpop.f32.mrf.mxu0
      %v2121 = vadd.f32 %v2042, %v2120
      %2122 = vmatmul.f32.gmra.mxu0 %v1292
      %v2123 = vpop.f32.mrf.mxu0
      %v2124 = vadd.f32 %v2042, %v2123
      %2125 = vmatmul.f32.gmra.mxu0 %v1293
      %v2126 = vpop.f32.mrf.mxu0
      %v2127 = vadd.f32 %v2042, %v2126
      %2128 = vmatmul.f32.gmra.mxu0 %v1294
      %v2129 = vpop.f32.mrf.mxu0
      %v2130 = vadd.f32 %v2042, %v2129
      %2131 = vmatmul.f32.gmra.mxu0 %v1295
      %v2132 = vpop.f32.mrf.mxu0
      %v2133 = vadd.f32 %v2042, %v2132
      %2134 = vmatmul.f32.gmra.mxu0 %v1296
      %v2135 = vpop.f32.mrf.mxu0
      %v2136 = vadd.f32 %v2042, %v2135
      %2137 = vmatmul.f32.gmra.mxu0 %v1297
      %v2138 = vpop.f32.mrf.mxu0
      %v2139 = vadd.f32 %v2042, %v2138
      %2140 = vmatmul.f32.gmra.mxu0 %v1298
      %v2141 = vpop.f32.mrf.mxu0
      %v2142 = vadd.f32 %v2042, %v2141
      %2143 = vmatmul.f32.gmra.mxu0 %v1299
      %v2144 = vpop.f32.mrf.mxu0
      %v2145 = vadd.f32 %v2042, %v2144
      %2146 = vmatmul.f32.gmra.mxu0 %v1300
      %v2147 = vpop.f32.mrf.mxu0
      %v2148 = vadd.f32 %v2042, %v2147
      %2149 = vmatmul.f32.gmra.mxu0 %v1301
      %v2150 = vpop.f32.mrf.mxu0
      %v2151 = vadd.f32 %v2042, %v2150
      %2152 = vmatmul.f32.gmra.mxu0 %v1302
      %v2153 = vpop.f32.mrf.mxu0
      %v2154 = vadd.f32 %v2042, %v2153
      %2155 = vmatmul.f32.gmra.mxu0 %v1303
      %v2156 = vpop.f32.mrf.mxu0
      %v2157 = vadd.f32 %v2042, %v2156
      %2158 = vdwg.mxu0
      %2159 = vmatpush.msra.mxu0 %v1974
      %2160 = vmatpush.msra.mxu0 %v1972
      %2161 = vmatpush.msra.mxu0 %v1970
      %2162 = vmatpush.msra.mxu0 %v1968
      %2163 = vmatpush.msra.mxu0 %v1966
      %2164 = vmatpush.msra.mxu0 %v1964
      %2165 = vmatpush.msra.mxu0 %v1962
      %2166 = vmatpush.msra.mxu0 %v1960
      %2167 = vmatpush.msra.mxu0 %v1958
      %2168 = vmatpush.msra.mxu0 %v1956
      %2169 = vmatpush.msra.mxu0 %v1954
      %2170 = vmatpush.msra.mxu0 %v1952
      %2171 = vmatpush.msra.mxu0 %v1950
      %2172 = vmatpush.msra.mxu0 %v1948
      %2173 = vmatpush.msra.mxu0 %v1946
      %2174 = vmatpush.msra.mxu0 %v1944
      %2175 = vmatmul.f32.gmra.mxu0 %v1496
      %v2176 = vpop.f32.mrf.mxu0
      %v2177 = vadd.f32 %v2064, %v2176
      %2178 = vmatmul.f32.gmra.mxu0 %v1497
      %v2179 = vpop.f32.mrf.mxu0
      %v2180 = vadd.f32 %v2067, %v2179
      %2181 = vmatmul.f32.gmra.mxu0 %v1498
      %v2182 = vpop.f32.mrf.mxu0
      %v2183 = vadd.f32 %v2070, %v2182
      %2184 = vmatmul.f32.gmra.mxu0 %v1499
      %v2185 = vpop.f32.mrf.mxu0
      %v2186 = vadd.f32 %v2073, %v2185
      %2187 = vmatmul.f32.gmra.mxu0 %v1500
      %v2188 = vpop.f32.mrf.mxu0
      %v2189 = vadd.f32 %v2076, %v2188
      %2190 = vmatmul.f32.gmra.mxu0 %v1501
      %v2191 = vpop.f32.mrf.mxu0
      %v2192 = vadd.f32 %v2079, %v2191
      %2193 = vmatmul.f32.gmra.mxu0 %v1502
      %v2194 = vpop.f32.mrf.mxu0
      %v2195 = vadd.f32 %v2082, %v2194
      %2196 = vmatmul.f32.gmra.mxu0 %v1503
      %v2197 = vpop.f32.mrf.mxu0
      %v2198 = vadd.f32 %v2085, %v2197
      %2199 = vmatmul.f32.gmra.mxu0 %v1504
      %v2200 = vpop.f32.mrf.mxu0
      %v2201 = vadd.f32 %v2088, %v2200
      %2202 = vmatmul.f32.gmra.mxu0 %v1505
      %v2203 = vpop.f32.mrf.mxu0
      %v2204 = vadd.f32 %v2091, %v2203
      %2205 = vmatmul.f32.gmra.mxu0 %v1506
      %v2206 = vpop.f32.mrf.mxu0
      %v2207 = vadd.f32 %v2094, %v2206
      %2208 = vmatmul.f32.gmra.mxu0 %v1507
      %v2209 = vpop.f32.mrf.mxu0
      %v2210 = vadd.f32 %v2097, %v2209
      %2211 = vmatmul.f32.gmra.mxu0 %v1508
      %v2212 = vpop.f32.mrf.mxu0
      %v2213 = vadd.f32 %v2100, %v2212
      %2214 = vmatmul.f32.gmra.mxu0 %v1509
      %v2215 = vpop.f32.mrf.mxu0
      %v2216 = vadd.f32 %v2103, %v2215
      %2217 = vmatmul.f32.gmra.mxu0 %v1510
      %v2218 = vpop.f32.mrf.mxu0
      %v2219 = vadd.f32 %v2106, %v2218
      %2220 = vmatmul.f32.gmra.mxu0 %v1511
      %v2221 = vpop.f32.mrf.mxu0
      %v2222 = vadd.f32 %v2109, %v2221
      %2223 = vmatmul.f32.gmra.mxu0 %v1512
      %v2224 = vpop.f32.mrf.mxu0
      %v2225 = vadd.f32 %v2112, %v2224
      %2226 = vmatmul.f32.gmra.mxu0 %v1513
      %v2227 = vpop.f32.mrf.mxu0
      %v2228 = vadd.f32 %v2115, %v2227
      %2229 = vmatmul.f32.gmra.mxu0 %v1514
      %v2230 = vpop.f32.mrf.mxu0
      %v2231 = vadd.f32 %v2118, %v2230
      %2232 = vmatmul.f32.gmra.mxu0 %v1515
      %v2233 = vpop.f32.mrf.mxu0
      %v2234 = vadd.f32 %v2121, %v2233
      %2235 = vmatmul.f32.gmra.mxu0 %v1516
      %v2236 = vpop.f32.mrf.mxu0
      %v2237 = vadd.f32 %v2124, %v2236
      %2238 = vmatmul.f32.gmra.mxu0 %v1517
      %v2239 = vpop.f32.mrf.mxu0
      %v2240 = vadd.f32 %v2127, %v2239
      %2241 = vmatmul.f32.gmra.mxu0 %v1518
      %v2242 = vpop.f32.mrf.mxu0
      %v2243 = vadd.f32 %v2130, %v2242
      %2244 = vmatmul.f32.gmra.mxu0 %v1519
      %v2245 = vpop.f32.mrf.mxu0
      %v2246 = vadd.f32 %v2133, %v2245
      %2247 = vmatmul.f32.gmra.mxu0 %v1520
      %v2248 = vpop.f32.mrf.mxu0
      %v2249 = vadd.f32 %v2136, %v2248
      %2250 = vmatmul.f32.gmra.mxu0 %v1521
      %v2251 = vpop.f32.mrf.mxu0
      %v2252 = vadd.f32 %v2139, %v2251
      %2253 = vmatmul.f32.gmra.mxu0 %v1522
      %v2254 = vpop.f32.mrf.mxu0
      %v2255 = vadd.f32 %v2142, %v2254
      %2256 = vmatmul.f32.gmra.mxu0 %v1523
      %v2257 = vpop.f32.mrf.mxu0
      %v2258 = vadd.f32 %v2145, %v2257
      %2259 = vmatmul.f32.gmra.mxu0 %v1524
      %v2260 = vpop.f32.mrf.mxu0
      %v2261 = vadd.f32 %v2148, %v2260
      %2262 = vmatmul.f32.gmra.mxu0 %v1525
      %v2263 = vpop.f32.mrf.mxu0
      %v2264 = vadd.f32 %v2151, %v2263
      %2265 = vmatmul.f32.gmra.mxu0 %v1526
      %v2266 = vpop.f32.mrf.mxu0
      %v2267 = vadd.f32 %v2154, %v2266
      %2268 = vmatmul.f32.gmra.mxu0 %v1527
      %v2269 = vpop.f32.mrf.mxu0
      %v2270 = vadd.f32 %v2157, %v2269
      %2271 = vdwg.mxu0
      %2272 = vmatpush.msra.mxu0 %v2006
      %2273 = vmatpush.msra.mxu0 %v2004
      %2274 = vmatpush.msra.mxu0 %v2002
      %2275 = vmatpush.msra.mxu0 %v2000
      %2276 = vmatpush.msra.mxu0 %v1998
      %2277 = vmatpush.msra.mxu0 %v1996
      %2278 = vmatpush.msra.mxu0 %v1994
      %2279 = vmatpush.msra.mxu0 %v1992
      %2280 = vmatpush.msra.mxu0 %v1990
      %2281 = vmatpush.msra.mxu0 %v1988
      %2282 = vmatpush.msra.mxu0 %v1986
      %2283 = vmatpush.msra.mxu0 %v1984
      %2284 = vmatpush.msra.mxu0 %v1982
      %2285 = vmatpush.msra.mxu0 %v1980
      %2286 = vmatpush.msra.mxu0 %v1978
      %2287 = vmatpush.msra.mxu0 %v1976
      %2288 = vmatmul.f32.gmra.mxu0 %v1688
      %v2289 = vpop.f32.mrf.mxu0
      %v2290 = vadd.f32 %v2177, %v2289
      %2291 = vmatmul.f32.gmra.mxu0 %v1689
      %v2292 = vpop.f32.mrf.mxu0
      %v2293 = vadd.f32 %v2180, %v2292
      %2294 = vmatmul.f32.gmra.mxu0 %v1690
      %v2295 = vpop.f32.mrf.mxu0
      %v2296 = vadd.f32 %v2183, %v2295
      %2297 = vmatmul.f32.gmra.mxu0 %v1691
      %v2298 = vpop.f32.mrf.mxu0
      %v2299 = vadd.f32 %v2186, %v2298
      %2300 = vmatmul.f32.gmra.mxu0 %v1692
      %v2301 = vpop.f32.mrf.mxu0
      %v2302 = vadd.f32 %v2189, %v2301
      %2303 = vmatmul.f32.gmra.mxu0 %v1693
      %v2304 = vpop.f32.mrf.mxu0
      %v2305 = vadd.f32 %v2192, %v2304
      %2306 = vmatmul.f32.gmra.mxu0 %v1694
      %v2307 = vpop.f32.mrf.mxu0
      %v2308 = vadd.f32 %v2195, %v2307
      %2309 = vmatmul.f32.gmra.mxu0 %v1695
      %v2310 = vpop.f32.mrf.mxu0
      %v2311 = vadd.f32 %v2198, %v2310
      %2312 = vmatmul.f32.gmra.mxu0 %v1696
      %v2313 = vpop.f32.mrf.mxu0
      %v2314 = vadd.f32 %v2201, %v2313
      %2315 = vmatmul.f32.gmra.mxu0 %v1697
      %v2316 = vpop.f32.mrf.mxu0
      %v2317 = vadd.f32 %v2204, %v2316
      %2318 = vmatmul.f32.gmra.mxu0 %v1698
      %v2319 = vpop.f32.mrf.mxu0
      %v2320 = vadd.f32 %v2207, %v2319
      %2321 = vmatmul.f32.gmra.mxu0 %v1699
      %v2322 = vpop.f32.mrf.mxu0
      %v2323 = vadd.f32 %v2210, %v2322
      %2324 = vmatmul.f32.gmra.mxu0 %v1700
      %v2325 = vpop.f32.mrf.mxu0
      %v2326 = vadd.f32 %v2213, %v2325
      %2327 = vmatmul.f32.gmra.mxu0 %v1701
      %v2328 = vpop.f32.mrf.mxu0
      %v2329 = vadd.f32 %v2216, %v2328
      %2330 = vmatmul.f32.gmra.mxu0 %v1702
      %v2331 = vpop.f32.mrf.mxu0
      %v2332 = vadd.f32 %v2219, %v2331
      %2333 = vmatmul.f32.gmra.mxu0 %v1703
      %v2334 = vpop.f32.mrf.mxu0
      %v2335 = vadd.f32 %v2222, %v2334
      %2336 = vmatmul.f32.gmra.mxu0 %v1704
      %v2337 = vpop.f32.mrf.mxu0
      %v2338 = vadd.f32 %v2225, %v2337
      %2339 = vmatmul.f32.gmra.mxu0 %v1705
      %v2340 = vpop.f32.mrf.mxu0
      %v2341 = vadd.f32 %v2228, %v2340
      %2342 = vmatmul.f32.gmra.mxu0 %v1706
      %v2343 = vpop.f32.mrf.mxu0
      %v2344 = vadd.f32 %v2231, %v2343
      %2345 = vmatmul.f32.gmra.mxu0 %v1707
      %v2346 = vpop.f32.mrf.mxu0
      %v2347 = vadd.f32 %v2234, %v2346
      %2348 = vmatmul.f32.gmra.mxu0 %v1708
      %v2349 = vpop.f32.mrf.mxu0
      %v2350 = vadd.f32 %v2237, %v2349
      %2351 = vmatmul.f32.gmra.mxu0 %v1709
      %v2352 = vpop.f32.mrf.mxu0
      %v2353 = vadd.f32 %v2240, %v2352
      %2354 = vmatmul.f32.gmra.mxu0 %v1710
      %v2355 = vpop.f32.mrf.mxu0
      %v2356 = vadd.f32 %v2243, %v2355
      %2357 = vmatmul.f32.gmra.mxu0 %v1711
      %v2358 = vpop.f32.mrf.mxu0
      %v2359 = vadd.f32 %v2246, %v2358
      %2360 = vmatmul.f32.gmra.mxu0 %v1712
      %v2361 = vpop.f32.mrf.mxu0
      %v2362 = vadd.f32 %v2249, %v2361
      %2363 = vmatmul.f32.gmra.mxu0 %v1713
      %v2364 = vpop.f32.mrf.mxu0
      %v2365 = vadd.f32 %v2252, %v2364
      %2366 = vmatmul.f32.gmra.mxu0 %v1714
      %v2367 = vpop.f32.mrf.mxu0
      %v2368 = vadd.f32 %v2255, %v2367
      %2369 = vmatmul.f32.gmra.mxu0 %v1715
      %v2370 = vpop.f32.mrf.mxu0
      %v2371 = vadd.f32 %v2258, %v2370
      %2372 = vmatmul.f32.gmra.mxu0 %v1716
      %v2373 = vpop.f32.mrf.mxu0
      %v2374 = vadd.f32 %v2261, %v2373
      %2375 = vmatmul.f32.gmra.mxu0 %v1717
      %v2376 = vpop.f32.mrf.mxu0
      %v2377 = vadd.f32 %v2264, %v2376
      %2378 = vmatmul.f32.gmra.mxu0 %v1718
      %v2379 = vpop.f32.mrf.mxu0
      %v2380 = vadd.f32 %v2267, %v2379
      %2381 = vmatmul.f32.gmra.mxu0 %v1719
      %v2382 = vpop.f32.mrf.mxu0
      %v2383 = vadd.f32 %v2270, %v2382
      %2384 = vdwg.mxu0
      %2385 = vmatpush.msra.mxu0 %v2038
      %2386 = vmatpush.msra.mxu0 %v2036
      %2387 = vmatpush.msra.mxu0 %v2034
      %2388 = vmatpush.msra.mxu0 %v2032
      %2389 = vmatpush.msra.mxu0 %v2030
      %2390 = vmatpush.msra.mxu0 %v2028
      %2391 = vmatpush.msra.mxu0 %v2026
      %2392 = vmatpush.msra.mxu0 %v2024
      %2393 = vmatpush.msra.mxu0 %v2022
      %2394 = vmatpush.msra.mxu0 %v2020
      %2395 = vmatpush.msra.mxu0 %v2018
      %2396 = vmatpush.msra.mxu0 %v2016
      %2397 = vmatpush.msra.mxu0 %v2014
      %2398 = vmatpush.msra.mxu0 %v2012
      %2399 = vmatpush.msra.mxu0 %v2010
      %2400 = vmatpush.msra.mxu0 %v2008
      %2401 = vmatmul.f32.gmra.mxu0 %v1880
      %v2402 = vpop.f32.mrf.mxu0
      %v2403 = vadd.f32 %v2290, %v2402
      %2404 = vmatmul.f32.gmra.mxu0 %v1881
      %v2405 = vpop.f32.mrf.mxu0
      %v2406 = vadd.f32 %v2293, %v2405
      %2407 = vmatmul.f32.gmra.mxu0 %v1882
      %v2408 = vpop.f32.mrf.mxu0
      %v2409 = vadd.f32 %v2296, %v2408
      %2410 = vmatmul.f32.gmra.mxu0 %v1883
      %v2411 = vpop.f32.mrf.mxu0
      %v2412 = vadd.f32 %v2299, %v2411
      %2413 = vmatmul.f32.gmra.mxu0 %v1884
      %v2414 = vpop.f32.mrf.mxu0
      %v2415 = vadd.f32 %v2302, %v2414
      %2416 = vmatmul.f32.gmra.mxu0 %v1885
      %v2417 = vpop.f32.mrf.mxu0
      %v2418 = vadd.f32 %v2305, %v2417
      %2419 = vmatmul.f32.gmra.mxu0 %v1886
      %v2420 = vpop.f32.mrf.mxu0
      %v2421 = vadd.f32 %v2308, %v2420
      %2422 = vmatmul.f32.gmra.mxu0 %v1887
      %v2423 = vpop.f32.mrf.mxu0
      %v2424 = vadd.f32 %v2311, %v2423
      %2425 = vmatmul.f32.gmra.mxu0 %v1888
      %v2426 = vpop.f32.mrf.mxu0
      %v2427 = vadd.f32 %v2314, %v2426
      %2428 = vmatmul.f32.gmra.mxu0 %v1889
      %v2429 = vpop.f32.mrf.mxu0
      %v2430 = vadd.f32 %v2317, %v2429
      %2431 = vmatmul.f32.gmra.mxu0 %v1890
      %v2432 = vpop.f32.mrf.mxu0
      %v2433 = vadd.f32 %v2320, %v2432
      %2434 = vmatmul.f32.gmra.mxu0 %v1891
      %v2435 = vpop.f32.mrf.mxu0
      %v2436 = vadd.f32 %v2323, %v2435
      %2437 = vmatmul.f32.gmra.mxu0 %v1892
      %v2438 = vpop.f32.mrf.mxu0
      %v2439 = vadd.f32 %v2326, %v2438
      %2440 = vmatmul.f32.gmra.mxu0 %v1893
      %v2441 = vpop.f32.mrf.mxu0
      %v2442 = vadd.f32 %v2329, %v2441
      %2443 = vmatmul.f32.gmra.mxu0 %v1894
      %v2444 = vpop.f32.mrf.mxu0
      %v2445 = vadd.f32 %v2332, %v2444
      %2446 = vmatmul.f32.gmra.mxu0 %v1895
      %v2447 = vpop.f32.mrf.mxu0
      %v2448 = vadd.f32 %v2335, %v2447
      %2449 = vmatmul.f32.gmra.mxu0 %v1896
      %v2450 = vpop.f32.mrf.mxu0
      %v2451 = vadd.f32 %v2338, %v2450
      %2452 = vmatmul.f32.gmra.mxu0 %v1897
      %v2453 = vpop.f32.mrf.mxu0
      %v2454 = vadd.f32 %v2341, %v2453
      %2455 = vmatmul.f32.gmra.mxu0 %v1898
      %v2456 = vpop.f32.mrf.mxu0
      %v2457 = vadd.f32 %v2344, %v2456
      %2458 = vmatmul.f32.gmra.mxu0 %v1899
      %v2459 = vpop.f32.mrf.mxu0
      %v2460 = vadd.f32 %v2347, %v2459
      %2461 = vmatmul.f32.gmra.mxu0 %v1900
      %v2462 = vpop.f32.mrf.mxu0
      %v2463 = vadd.f32 %v2350, %v2462
      %2464 = vmatmul.f32.gmra.mxu0 %v1901
      %v2465 = vpop.f32.mrf.mxu0
      %v2466 = vadd.f32 %v2353, %v2465
      %2467 = vmatmul.f32.gmra.mxu0 %v1902
      %v2468 = vpop.f32.mrf.mxu0
      %v2469 = vadd.f32 %v2356, %v2468
      %2470 = vmatmul.f32.gmra.mxu0 %v1903
      %v2471 = vpop.f32.mrf.mxu0
      %v2472 = vadd.f32 %v2359, %v2471
      %2473 = vmatmul.f32.gmra.mxu0 %v1904
      %v2474 = vpop.f32.mrf.mxu0
      %v2475 = vadd.f32 %v2362, %v2474
      %2476 = vmatmul.f32.gmra.mxu0 %v1905
      %v2477 = vpop.f32.mrf.mxu0
      %v2478 = vadd.f32 %v2365, %v2477
      %2479 = vmatmul.f32.gmra.mxu0 %v1906
      %v2480 = vpop.f32.mrf.mxu0
      %v2481 = vadd.f32 %v2368, %v2480
      %2482 = vmatmul.f32.gmra.mxu0 %v1907
      %v2483 = vpop.f32.mrf.mxu0
      %v2484 = vadd.f32 %v2371, %v2483
      %2485 = vmatmul.f32.gmra.mxu0 %v1908
      %v2486 = vpop.f32.mrf.mxu0
      %v2487 = vadd.f32 %v2374, %v2486
      %2488 = vmatmul.f32.gmra.mxu0 %v1909
      %v2489 = vpop.f32.mrf.mxu0
      %v2490 = vadd.f32 %v2377, %v2489
      %2491 = vmatmul.f32.gmra.mxu0 %v1910
      %v2492 = vpop.f32.mrf.mxu0
      %v2493 = vadd.f32 %v2380, %v2492
      %2494 = vmatmul.f32.gmra.mxu0 %v1911
      %v2495 = vpop.f32.mrf.mxu0
      %v2496 = vadd.f32 %v2383, %v2495
      %2497 = vdwg.mxu0
      %2498 = vmatpush.msra.mxu0 %v1943
      %2499 = vmatpush.msra.mxu0 %v1941
      %2500 = vmatpush.msra.mxu0 %v1939
      %2501 = vmatpush.msra.mxu0 %v1937
      %2502 = vmatpush.msra.mxu0 %v1935
      %2503 = vmatpush.msra.mxu0 %v1933
      %2504 = vmatpush.msra.mxu0 %v1931
      %2505 = vmatpush.msra.mxu0 %v1929
      %2506 = vmatpush.msra.mxu0 %v1927
      %2507 = vmatpush.msra.mxu0 %v1925
      %2508 = vmatpush.msra.mxu0 %v1923
      %2509 = vmatpush.msra.mxu0 %v1921
      %2510 = vmatpush.msra.mxu0 %v1919
      %2511 = vmatpush.msra.mxu0 %v1917
      %2512 = vmatpush.msra.mxu0 %v1915
      %2513 = vmatpush.msra.mxu0 %v1913
      %2514 = vmatmul.f32.gmra.mxu0 %v1272
      %v2515 = vpop.f32.mrf.mxu0
      %v2516 = vadd.f32 %v2043, %v2515
      %2517 = vmatmul.f32.gmra.mxu0 %v1273
      %v2518 = vpop.f32.mrf.mxu0
      %v2519 = vadd.f32 %v2043, %v2518
      %2520 = vmatmul.f32.gmra.mxu0 %v1274
      %v2521 = vpop.f32.mrf.mxu0
      %v2522 = vadd.f32 %v2043, %v2521
      %2523 = vmatmul.f32.gmra.mxu0 %v1275
      %v2524 = vpop.f32.mrf.mxu0
      %v2525 = vadd.f32 %v2043, %v2524
      %2526 = vmatmul.f32.gmra.mxu0 %v1276
      %v2527 = vpop.f32.mrf.mxu0
      %v2528 = vadd.f32 %v2043, %v2527
      %2529 = vmatmul.f32.gmra.mxu0 %v1277
      %v2530 = vpop.f32.mrf.mxu0
      %v2531 = vadd.f32 %v2043, %v2530
      %2532 = vmatmul.f32.gmra.mxu0 %v1278
      %v2533 = vpop.f32.mrf.mxu0
      %v2534 = vadd.f32 %v2043, %v2533
      %2535 = vmatmul.f32.gmra.mxu0 %v1279
      %v2536 = vpop.f32.mrf.mxu0
      %v2537 = vadd.f32 %v2043, %v2536
      %2538 = vmatmul.f32.gmra.mxu0 %v1280
      %v2539 = vpop.f32.mrf.mxu0
      %v2540 = vadd.f32 %v2043, %v2539
      %2541 = vmatmul.f32.gmra.mxu0 %v1281
      %v2542 = vpop.f32.mrf.mxu0
      %v2543 = vadd.f32 %v2043, %v2542
      %2544 = vmatmul.f32.gmra.mxu0 %v1282
      %v2545 = vpop.f32.mrf.mxu0
      %v2546 = vadd.f32 %v2043, %v2545
      %2547 = vmatmul.f32.gmra.mxu0 %v1283
      %v2548 = vpop.f32.mrf.mxu0
      %v2549 = vadd.f32 %v2043, %v2548
      %2550 = vmatmul.f32.gmra.mxu0 %v1284
      %v2551 = vpop.f32.mrf.mxu0
      %v2552 = vadd.f32 %v2043, %v2551
      %2553 = vmatmul.f32.gmra.mxu0 %v1285
      %v2554 = vpop.f32.mrf.mxu0
      %v2555 = vadd.f32 %v2043, %v2554
      %2556 = vmatmul.f32.gmra.mxu0 %v1286
      %v2557 = vpop.f32.mrf.mxu0
      %v2558 = vadd.f32 %v2043, %v2557
      %2559 = vmatmul.f32.gmra.mxu0 %v1287
      %v2560 = vpop.f32.mrf.mxu0
      %v2561 = vadd.f32 %v2043, %v2560
      %2562 = vmatmul.f32.gmra.mxu0 %v1288
      %v2563 = vpop.f32.mrf.mxu0
      %v2564 = vadd.f32 %v2043, %v2563
      %2565 = vmatmul.f32.gmra.mxu0 %v1289
      %v2566 = vpop.f32.mrf.mxu0
      %v2567 = vadd.f32 %v2043, %v2566
      %2568 = vmatmul.f32.gmra.mxu0 %v1290
      %v2569 = vpop.f32.mrf.mxu0
      %v2570 = vadd.f32 %v2043, %v2569
      %2571 = vmatmul.f32.gmra.mxu0 %v1291
      %v2572 = vpop.f32.mrf.mxu0
      %v2573 = vadd.f32 %v2043, %v2572
      %2574 = vmatmul.f32.gmra.mxu0 %v1292
      %v2575 = vpop.f32.mrf.mxu0
      %v2576 = vadd.f32 %v2043, %v2575
      %2577 = vmatmul.f32.gmra.mxu0 %v1293
      %v2578 = vpop.f32.mrf.mxu0
      %v2579 = vadd.f32 %v2043, %v2578
      %2580 = vmatmul.f32.gmra.mxu0 %v1294
      %v2581 = vpop.f32.mrf.mxu0
      %v2582 = vadd.f32 %v2043, %v2581
      %2583 = vmatmul.f32.gmra.mxu0 %v1295
      %v2584 = vpop.f32.mrf.mxu0
      %v2585 = vadd.f32 %v2043, %v2584
      %2586 = vmatmul.f32.gmra.mxu0 %v1296
      %v2587 = vpop.f32.mrf.mxu0
      %v2588 = vadd.f32 %v2043, %v2587
      %2589 = vmatmul.f32.gmra.mxu0 %v1297
      %v2590 = vpop.f32.mrf.mxu0
      %v2591 = vadd.f32 %v2043, %v2590
      %2592 = vmatmul.f32.gmra.mxu0 %v1298
      %v2593 = vpop.f32.mrf.mxu0
      %v2594 = vadd.f32 %v2043, %v2593
      %2595 = vmatmul.f32.gmra.mxu0 %v1299
      %v2596 = vpop.f32.mrf.mxu0
      %v2597 = vadd.f32 %v2043, %v2596
      %2598 = vmatmul.f32.gmra.mxu0 %v1300
      %v2599 = vpop.f32.mrf.mxu0
      %v2600 = vadd.f32 %v2043, %v2599
      %2601 = vmatmul.f32.gmra.mxu0 %v1301
      %v2602 = vpop.f32.mrf.mxu0
      %v2603 = vadd.f32 %v2043, %v2602
      %2604 = vmatmul.f32.gmra.mxu0 %v1302
      %v2605 = vpop.f32.mrf.mxu0
      %v2606 = vadd.f32 %v2043, %v2605
      %2607 = vmatmul.f32.gmra.mxu0 %v1303
      %v2608 = vpop.f32.mrf.mxu0
      %v2609 = vadd.f32 %v2043, %v2608
      %2610 = vdwg.mxu0
      %2611 = vmatpush.msra.mxu0 %v1975
      %2612 = vmatpush.msra.mxu0 %v1973
      %2613 = vmatpush.msra.mxu0 %v1971
      %2614 = vmatpush.msra.mxu0 %v1969
      %2615 = vmatpush.msra.mxu0 %v1967
      %2616 = vmatpush.msra.mxu0 %v1965
      %2617 = vmatpush.msra.mxu0 %v1963
      %2618 = vmatpush.msra.mxu0 %v1961
      %2619 = vmatpush.msra.mxu0 %v1959
      %2620 = vmatpush.msra.mxu0 %v1957
      %2621 = vmatpush.msra.mxu0 %v1955
      %2622 = vmatpush.msra.mxu0 %v1953
      %2623 = vmatpush.msra.mxu0 %v1951
      %2624 = vmatpush.msra.mxu0 %v1949
      %2625 = vmatpush.msra.mxu0 %v1947
      %2626 = vmatpush.msra.mxu0 %v1945
      %2627 = vmatmul.f32.gmra.mxu0 %v1496
      %v2628 = vpop.f32.mrf.mxu0
      %v2629 = vadd.f32 %v2516, %v2628
      %2630 = vmatmul.f32.gmra.mxu0 %v1497
      %v2631 = vpop.f32.mrf.mxu0
      %v2632 = vadd.f32 %v2519, %v2631
      %2633 = vmatmul.f32.gmra.mxu0 %v1498
      %v2634 = vpop.f32.mrf.mxu0
      %v2635 = vadd.f32 %v2522, %v2634
      %2636 = vmatmul.f32.gmra.mxu0 %v1499
      %v2637 = vpop.f32.mrf.mxu0
      %v2638 = vadd.f32 %v2525, %v2637
      %2639 = vmatmul.f32.gmra.mxu0 %v1500
      %v2640 = vpop.f32.mrf.mxu0
      %v2641 = vadd.f32 %v2528, %v2640
      %2642 = vmatmul.f32.gmra.mxu0 %v1501
      %v2643 = vpop.f32.mrf.mxu0
      %v2644 = vadd.f32 %v2531, %v2643
      %2645 = vmatmul.f32.gmra.mxu0 %v1502
      %v2646 = vpop.f32.mrf.mxu0
      %v2647 = vadd.f32 %v2534, %v2646
      %2648 = vmatmul.f32.gmra.mxu0 %v1503
      %v2649 = vpop.f32.mrf.mxu0
      %v2650 = vadd.f32 %v2537, %v2649
      %2651 = vmatmul.f32.gmra.mxu0 %v1504
      %v2652 = vpop.f32.mrf.mxu0
      %v2653 = vadd.f32 %v2540, %v2652
      %2654 = vmatmul.f32.gmra.mxu0 %v1505
      %v2655 = vpop.f32.mrf.mxu0
      %v2656 = vadd.f32 %v2543, %v2655
      %2657 = vmatmul.f32.gmra.mxu0 %v1506
      %v2658 = vpop.f32.mrf.mxu0
      %v2659 = vadd.f32 %v2546, %v2658
      %2660 = vmatmul.f32.gmra.mxu0 %v1507
      %v2661 = vpop.f32.mrf.mxu0
      %v2662 = vadd.f32 %v2549, %v2661
      %2663 = vmatmul.f32.gmra.mxu0 %v1508
      %v2664 = vpop.f32.mrf.mxu0
      %v2665 = vadd.f32 %v2552, %v2664
      %2666 = vmatmul.f32.gmra.mxu0 %v1509
      %v2667 = vpop.f32.mrf.mxu0
      %v2668 = vadd.f32 %v2555, %v2667
      %2669 = vmatmul.f32.gmra.mxu0 %v1510
      %v2670 = vpop.f32.mrf.mxu0
      %v2671 = vadd.f32 %v2558, %v2670
      %2672 = vmatmul.f32.gmra.mxu0 %v1511
      %v2673 = vpop.f32.mrf.mxu0
      %v2674 = vadd.f32 %v2561, %v2673
      %2675 = vmatmul.f32.gmra.mxu0 %v1512
      %v2676 = vpop.f32.mrf.mxu0
      %v2677 = vadd.f32 %v2564, %v2676
      %2678 = vmatmul.f32.gmra.mxu0 %v1513
      %v2679 = vpop.f32.mrf.mxu0
      %v2680 = vadd.f32 %v2567, %v2679
      %2681 = vmatmul.f32.gmra.mxu0 %v1514
      %v2682 = vpop.f32.mrf.mxu0
      %v2683 = vadd.f32 %v2570, %v2682
      %2684 = vmatmul.f32.gmra.mxu0 %v1515
      %v2685 = vpop.f32.mrf.mxu0
      %v2686 = vadd.f32 %v2573, %v2685
      %2687 = vmatmul.f32.gmra.mxu0 %v1516
      %v2688 = vpop.f32.mrf.mxu0
      %v2689 = vadd.f32 %v2576, %v2688
      %2690 = vmatmul.f32.gmra.mxu0 %v1517
      %v2691 = vpop.f32.mrf.mxu0
      %v2692 = vadd.f32 %v2579, %v2691
      %2693 = vmatmul.f32.gmra.mxu0 %v1518
      %v2694 = vpop.f32.mrf.mxu0
      %v2695 = vadd.f32 %v2582, %v2694
      %2696 = vmatmul.f32.gmra.mxu0 %v1519
      %v2697 = vpop.f32.mrf.mxu0
      %v2698 = vadd.f32 %v2585, %v2697
      %2699 = vmatmul.f32.gmra.mxu0 %v1520
      %v2700 = vpop.f32.mrf.mxu0
      %v2701 = vadd.f32 %v2588, %v2700
      %2702 = vmatmul.f32.gmra.mxu0 %v1521
      %v2703 = vpop.f32.mrf.mxu0
      %v2704 = vadd.f32 %v2591, %v2703
      %2705 = vmatmul.f32.gmra.mxu0 %v1522
      %v2706 = vpop.f32.mrf.mxu0
      %v2707 = vadd.f32 %v2594, %v2706
      %2708 = vmatmul.f32.gmra.mxu0 %v1523
      %v2709 = vpop.f32.mrf.mxu0
      %v2710 = vadd.f32 %v2597, %v2709
      %2711 = vmatmul.f32.gmra.mxu0 %v1524
      %v2712 = vpop.f32.mrf.mxu0
      %v2713 = vadd.f32 %v2600, %v2712
      %2714 = vmatmul.f32.gmra.mxu0 %v1525
      %v2715 = vpop.f32.mrf.mxu0
      %v2716 = vadd.f32 %v2603, %v2715
      %2717 = vmatmul.f32.gmra.mxu0 %v1526
      %v2718 = vpop.f32.mrf.mxu0
      %v2719 = vadd.f32 %v2606, %v2718
      %2720 = vmatmul.f32.gmra.mxu0 %v1527
      %v2721 = vpop.f32.mrf.mxu0
      %v2722 = vadd.f32 %v2609, %v2721
      %2723 = vdwg.mxu0
      %2724 = vmatpush.msra.mxu0 %v2007
      %2725 = vmatpush.msra.mxu0 %v2005
      %2726 = vmatpush.msra.mxu0 %v2003
      %2727 = vmatpush.msra.mxu0 %v2001
      %2728 = vmatpush.msra.mxu0 %v1999
      %2729 = vmatpush.msra.mxu0 %v1997
      %2730 = vmatpush.msra.mxu0 %v1995
      %2731 = vmatpush.msra.mxu0 %v1993
      %2732 = vmatpush.msra.mxu0 %v1991
      %2733 = vmatpush.msra.mxu0 %v1989
      %2734 = vmatpush.msra.mxu0 %v1987
      %2735 = vmatpush.msra.mxu0 %v1985
      %2736 = vmatpush.msra.mxu0 %v1983
      %2737 = vmatpush.msra.mxu0 %v1981
      %2738 = vmatpush.msra.mxu0 %v1979
      %2739 = vmatpush.msra.mxu0 %v1977
      %2740 = vmatmul.f32.gmra.mxu0 %v1688
      %v2741 = vpop.f32.mrf.mxu0
      %v2742 = vadd.f32 %v2629, %v2741
      %2743 = vmatmul.f32.gmra.mxu0 %v1689
      %v2744 = vpop.f32.mrf.mxu0
      %v2745 = vadd.f32 %v2632, %v2744
      %2746 = vmatmul.f32.gmra.mxu0 %v1690
      %v2747 = vpop.f32.mrf.mxu0
      %v2748 = vadd.f32 %v2635, %v2747
      %2749 = vmatmul.f32.gmra.mxu0 %v1691
      %v2750 = vpop.f32.mrf.mxu0
      %v2751 = vadd.f32 %v2638, %v2750
      %2752 = vmatmul.f32.gmra.mxu0 %v1692
      %v2753 = vpop.f32.mrf.mxu0
      %v2754 = vadd.f32 %v2641, %v2753
      %2755 = vmatmul.f32.gmra.mxu0 %v1693
      %v2756 = vpop.f32.mrf.mxu0
      %v2757 = vadd.f32 %v2644, %v2756
      %2758 = vmatmul.f32.gmra.mxu0 %v1694
      %v2759 = vpop.f32.mrf.mxu0
      %v2760 = vadd.f32 %v2647, %v2759
      %2761 = vmatmul.f32.gmra.mxu0 %v1695
      %v2762 = vpop.f32.mrf.mxu0
      %v2763 = vadd.f32 %v2650, %v2762
      %2764 = vmatmul.f32.gmra.mxu0 %v1696
      %v2765 = vpop.f32.mrf.mxu0
      %v2766 = vadd.f32 %v2653, %v2765
      %2767 = vmatmul.f32.gmra.mxu0 %v1697
      %v2768 = vpop.f32.mrf.mxu0
      %v2769 = vadd.f32 %v2656, %v2768
      %2770 = vmatmul.f32.gmra.mxu0 %v1698
      %v2771 = vpop.f32.mrf.mxu0
      %v2772 = vadd.f32 %v2659, %v2771
      %2773 = vmatmul.f32.gmra.mxu0 %v1699
      %v2774 = vpop.f32.mrf.mxu0
      %v2775 = vadd.f32 %v2662, %v2774
      %2776 = vmatmul.f32.gmra.mxu0 %v1700
      %v2777 = vpop.f32.mrf.mxu0
      %v2778 = vadd.f32 %v2665, %v2777
      %2779 = vmatmul.f32.gmra.mxu0 %v1701
      %v2780 = vpop.f32.mrf.mxu0
      %v2781 = vadd.f32 %v2668, %v2780
      %2782 = vmatmul.f32.gmra.mxu0 %v1702
      %v2783 = vpop.f32.mrf.mxu0
      %v2784 = vadd.f32 %v2671, %v2783
      %2785 = vmatmul.f32.gmra.mxu0 %v1703
      %v2786 = vpop.f32.mrf.mxu0
      %v2787 = vadd.f32 %v2674, %v2786
      %2788 = vmatmul.f32.gmra.mxu0 %v1704
      %v2789 = vpop.f32.mrf.mxu0
      %v2790 = vadd.f32 %v2677, %v2789
      %2791 = vmatmul.f32.gmra.mxu0 %v1705
      %v2792 = vpop.f32.mrf.mxu0
      %v2793 = vadd.f32 %v2680, %v2792
      %2794 = vmatmul.f32.gmra.mxu0 %v1706
      %v2795 = vpop.f32.mrf.mxu0
      %v2796 = vadd.f32 %v2683, %v2795
      %2797 = vmatmul.f32.gmra.mxu0 %v1707
      %v2798 = vpop.f32.mrf.mxu0
      %v2799 = vadd.f32 %v2686, %v2798
      %2800 = vmatmul.f32.gmra.mxu0 %v1708
      %v2801 = vpop.f32.mrf.mxu0
      %v2802 = vadd.f32 %v2689, %v2801
      %2803 = vmatmul.f32.gmra.mxu0 %v1709
      %v2804 = vpop.f32.mrf.mxu0
      %v2805 = vadd.f32 %v2692, %v2804
      %2806 = vmatmul.f32.gmra.mxu0 %v1710
      %v2807 = vpop.f32.mrf.mxu0
      %v2808 = vadd.f32 %v2695, %v2807
      %2809 = vmatmul.f32.gmra.mxu0 %v1711
      %v2810 = vpop.f32.mrf.mxu0
      %v2811 = vadd.f32 %v2698, %v2810
      %2812 = vmatmul.f32.gmra.mxu0 %v1712
      %v2813 = vpop.f32.mrf.mxu0
      %v2814 = vadd.f32 %v2701, %v2813
      %2815 = vmatmul.f32.gmra.mxu0 %v1713
      %v2816 = vpop.f32.mrf.mxu0
      %v2817 = vadd.f32 %v2704, %v2816
      %2818 = vmatmul.f32.gmra.mxu0 %v1714
      %v2819 = vpop.f32.mrf.mxu0
      %v2820 = vadd.f32 %v2707, %v2819
      %2821 = vmatmul.f32.gmra.mxu0 %v1715
      %v2822 = vpop.f32.mrf.mxu0
      %v2823 = vadd.f32 %v2710, %v2822
      %2824 = vmatmul.f32.gmra.mxu0 %v1716
      %v2825 = vpop.f32.mrf.mxu0
      %v2826 = vadd.f32 %v2713, %v2825
      %2827 = vmatmul.f32.gmra.mxu0 %v1717
      %v2828 = vpop.f32.mrf.mxu0
      %v2829 = vadd.f32 %v2716, %v2828
      %2830 = vmatmul.f32.gmra.mxu0 %v1718
      %v2831 = vpop.f32.mrf.mxu0
      %v2832 = vadd.f32 %v2719, %v2831
      %2833 = vmatmul.f32.gmra.mxu0 %v1719
      %v2834 = vpop.f32.mrf.mxu0
      %v2835 = vadd.f32 %v2722, %v2834
      %2836 = vdwg.mxu0
      %2837 = vmatpush.msra.mxu0 %v2039
      %2838 = vmatpush.msra.mxu0 %v2037
      %2839 = vmatpush.msra.mxu0 %v2035
      %2840 = vmatpush.msra.mxu0 %v2033
      %2841 = vmatpush.msra.mxu0 %v2031
      %2842 = vmatpush.msra.mxu0 %v2029
      %2843 = vmatpush.msra.mxu0 %v2027
      %2844 = vmatpush.msra.mxu0 %v2025
      %2845 = vmatpush.msra.mxu0 %v2023
      %2846 = vmatpush.msra.mxu0 %v2021
      %2847 = vmatpush.msra.mxu0 %v2019
      %2848 = vmatpush.msra.mxu0 %v2017
      %2849 = vmatpush.msra.mxu0 %v2015
      %2850 = vmatpush.msra.mxu0 %v2013
      %2851 = vmatpush.msra.mxu0 %v2011
      %2852 = vmatpush.msra.mxu0 %v2009
      %2853 = vmatmul.f32.gmra.mxu0 %v1880
      %v2854 = vpop.f32.mrf.mxu0
      %v2855 = vadd.f32 %v2742, %v2854
      %2856 = vmatmul.f32.gmra.mxu0 %v1881
      %v2857 = vpop.f32.mrf.mxu0
      %v2858 = vadd.f32 %v2745, %v2857
      %2859 = vmatmul.f32.gmra.mxu0 %v1882
      %v2860 = vpop.f32.mrf.mxu0
      %v2861 = vadd.f32 %v2748, %v2860
      %2862 = vmatmul.f32.gmra.mxu0 %v1883
      %v2863 = vpop.f32.mrf.mxu0
      %v2864 = vadd.f32 %v2751, %v2863
      %2865 = vmatmul.f32.gmra.mxu0 %v1884
      %v2866 = vpop.f32.mrf.mxu0
      %v2867 = vadd.f32 %v2754, %v2866
      %2868 = vmatmul.f32.gmra.mxu0 %v1885
      %v2869 = vpop.f32.mrf.mxu0
      %v2870 = vadd.f32 %v2757, %v2869
      %2871 = vmatmul.f32.gmra.mxu0 %v1886
      %v2872 = vpop.f32.mrf.mxu0
      %v2873 = vadd.f32 %v2760, %v2872
      %2874 = vmatmul.f32.gmra.mxu0 %v1887
      %v2875 = vpop.f32.mrf.mxu0
      %v2876 = vadd.f32 %v2763, %v2875
      %2877 = vmatmul.f32.gmra.mxu0 %v1888
      %v2878 = vpop.f32.mrf.mxu0
      %v2879 = vadd.f32 %v2766, %v2878
      %2880 = vmatmul.f32.gmra.mxu0 %v1889
      %v2881 = vpop.f32.mrf.mxu0
      %v2882 = vadd.f32 %v2769, %v2881
      %2883 = vmatmul.f32.gmra.mxu0 %v1890
      %v2884 = vpop.f32.mrf.mxu0
      %v2885 = vadd.f32 %v2772, %v2884
      %2886 = vmatmul.f32.gmra.mxu0 %v1891
      %v2887 = vpop.f32.mrf.mxu0
      %v2888 = vadd.f32 %v2775, %v2887
      %2889 = vmatmul.f32.gmra.mxu0 %v1892
      %v2890 = vpop.f32.mrf.mxu0
      %v2891 = vadd.f32 %v2778, %v2890
      %2892 = vmatmul.f32.gmra.mxu0 %v1893
      %v2893 = vpop.f32.mrf.mxu0
      %v2894 = vadd.f32 %v2781, %v2893
      %2895 = vmatmul.f32.gmra.mxu0 %v1894
      %v2896 = vpop.f32.mrf.mxu0
      %v2897 = vadd.f32 %v2784, %v2896
      %2898 = vmatmul.f32.gmra.mxu0 %v1895
      %v2899 = vpop.f32.mrf.mxu0
      %v2900 = vadd.f32 %v2787, %v2899
      %2901 = vmatmul.f32.gmra.mxu0 %v1896
      %v2902 = vpop.f32.mrf.mxu0
      %v2903 = vadd.f32 %v2790, %v2902
      %2904 = vmatmul.f32.gmra.mxu0 %v1897
      %v2905 = vpop.f32.mrf.mxu0
      %v2906 = vadd.f32 %v2793, %v2905
      %2907 = vmatmul.f32.gmra.mxu0 %v1898
      %v2908 = vpop.f32.mrf.mxu0
      %v2909 = vadd.f32 %v2796, %v2908
      %2910 = vmatmul.f32.gmra.mxu0 %v1899
      %v2911 = vpop.f32.mrf.mxu0
      %v2912 = vadd.f32 %v2799, %v2911
      %2913 = vmatmul.f32.gmra.mxu0 %v1900
      %v2914 = vpop.f32.mrf.mxu0
      %v2915 = vadd.f32 %v2802, %v2914
      %2916 = vmatmul.f32.gmra.mxu0 %v1901
      %v2917 = vpop.f32.mrf.mxu0
      %v2918 = vadd.f32 %v2805, %v2917
      %2919 = vmatmul.f32.gmra.mxu0 %v1902
      %v2920 = vpop.f32.mrf.mxu0
      %v2921 = vadd.f32 %v2808, %v2920
      %2922 = vmatmul.f32.gmra.mxu0 %v1903
      %v2923 = vpop.f32.mrf.mxu0
      %v2924 = vadd.f32 %v2811, %v2923
      %2925 = vmatmul.f32.gmra.mxu0 %v1904
      %v2926 = vpop.f32.mrf.mxu0
      %v2927 = vadd.f32 %v2814, %v2926
      %2928 = vmatmul.f32.gmra.mxu0 %v1905
      %v2929 = vpop.f32.mrf.mxu0
      %v2930 = vadd.f32 %v2817, %v2929
      %2931 = vmatmul.f32.gmra.mxu0 %v1906
      %v2932 = vpop.f32.mrf.mxu0
      %v2933 = vadd.f32 %v2820, %v2932
      %2934 = vmatmul.f32.gmra.mxu0 %v1907
      %v2935 = vpop.f32.mrf.mxu0
      %v2936 = vadd.f32 %v2823, %v2935
      %2937 = vmatmul.f32.gmra.mxu0 %v1908
      %v2938 = vpop.f32.mrf.mxu0
      %v2939 = vadd.f32 %v2826, %v2938
      %2940 = vmatmul.f32.gmra.mxu0 %v1909
      %v2941 = vpop.f32.mrf.mxu0
      %v2942 = vadd.f32 %v2829, %v2941
      %2943 = vmatmul.f32.gmra.mxu0 %v1910
      %v2944 = vpop.f32.mrf.mxu0
      %v2945 = vadd.f32 %v2832, %v2944
      %2946 = vmatmul.f32.gmra.mxu0 %v1911
      %v2947 = vpop.f32.mrf.mxu0
      %v2948 = vadd.f32 %v2835, %v2947
      %2949 = vdwg.mxu0
      %v2950 = vmax.f32 %v2403, 0.0
      %v2951 = vmax.f32 %v2855, 0.0
      %v2952 = vmax.f32 %v2406, 0.0
      %v2953 = vmax.f32 %v2858, 0.0
      %v2954 = vmax.f32 %v2409, 0.0
      %v2955 = vmax.f32 %v2861, 0.0
      %v2956 = vmax.f32 %v2412, 0.0
      %v2957 = vmax.f32 %v2864, 0.0
      %v2958 = vmax.f32 %v2415, 0.0
      %v2959 = vmax.f32 %v2867, 0.0
      %v2960 = vmax.f32 %v2418, 0.0
      %v2961 = vmax.f32 %v2870, 0.0
      %v2962 = vmax.f32 %v2421, 0.0
      %v2963 = vmax.f32 %v2873, 0.0
      %v2964 = vmax.f32 %v2424, 0.0
      %v2965 = vmax.f32 %v2876, 0.0
      %v2966 = vmax.f32 %v2427, 0.0
      %v2967 = vmax.f32 %v2879, 0.0
      %v2968 = vmax.f32 %v2430, 0.0
      %v2969 = vmax.f32 %v2882, 0.0
      %v2970 = vmax.f32 %v2433, 0.0
      %v2971 = vmax.f32 %v2885, 0.0
      %v2972 = vmax.f32 %v2436, 0.0
      %v2973 = vmax.f32 %v2888, 0.0
      %v2974 = vmax.f32 %v2439, 0.0
      %v2975 = vmax.f32 %v2891, 0.0
      %v2976 = vmax.f32 %v2442, 0.0
      %v2977 = vmax.f32 %v2894, 0.0
      %v2978 = vmax.f32 %v2445, 0.0
      %v2979 = vmax.f32 %v2897, 0.0
      %v2980 = vmax.f32 %v2448, 0.0
      %v2981 = vmax.f32 %v2900, 0.0
      %v2982 = vmax.f32 %v2451, 0.0
      %v2983 = vmax.f32 %v2903, 0.0
      %v2984 = vmax.f32 %v2454, 0.0
      %v2985 = vmax.f32 %v2906, 0.0
      %v2986 = vmax.f32 %v2457, 0.0
      %v2987 = vmax.f32 %v2909, 0.0
      %v2988 = vmax.f32 %v2460, 0.0
      %v2989 = vmax.f32 %v2912, 0.0
      %v2990 = vmax.f32 %v2463, 0.0
      %v2991 = vmax.f32 %v2915, 0.0
      %v2992 = vmax.f32 %v2466, 0.0
      %v2993 = vmax.f32 %v2918, 0.0
      %v2994 = vmax.f32 %v2469, 0.0
      %v2995 = vmax.f32 %v2921, 0.0
      %v2996 = vmax.f32 %v2472, 0.0
      %v2997 = vmax.f32 %v2924, 0.0
      %v2998 = vmax.f32 %v2475, 0.0
      %v2999 = vmax.f32 %v2927, 0.0
      %v3000 = vmax.f32 %v2478, 0.0
      %v3001 = vmax.f32 %v2930, 0.0
      %v3002 = vmax.f32 %v2481, 0.0
      %v3003 = vmax.f32 %v2933, 0.0
      %v3004 = vmax.f32 %v2484, 0.0
      %v3005 = vmax.f32 %v2936, 0.0
      %v3006 = vmax.f32 %v2487, 0.0
      %v3007 = vmax.f32 %v2939, 0.0
      %v3008 = vmax.f32 %v2490, 0.0
      %v3009 = vmax.f32 %v2942, 0.0
      %v3010 = vmax.f32 %v2493, 0.0
      %v3011 = vmax.f32 %v2945, 0.0
      %v3012 = vmax.f32 %v2496, 0.0
      %v3013 = vmax.f32 %v2948, 0.0
      %3014 = vst [vmem:[#allocation3] sm:$0xff] %v2950
      %3015 = vst [vmem:[#allocation3 + $0x8] sm:$0xff] %v2951
      %3016 = vst [vmem:[#allocation3 + $0x10] sm:$0xff] %v2952
      %3017 = vst [vmem:[#allocation3 + $0x18] sm:$0xff] %v2953
      %3018 = vst [vmem:[#allocation3 + $0x20] sm:$0xff] %v2954
      %3019 = vst [vmem:[#allocation3 + $0x28] sm:$0xff] %v2955
      %3020 = vst [vmem:[#allocation3 + $0x30] sm:$0xff] %v2956
      %3021 = vst [vmem:[#allocation3 + $0x38] sm:$0xff] %v2957
      %3022 = vst [vmem:[#allocation3 + $0x40] sm:$0xff] %v2958
      %3023 = vst [vmem:[#allocation3 + $0x48] sm:$0xff] %v2959
      %3024 = vst [vmem:[#allocation3 + $0x50] sm:$0xff] %v2960
      %3025 = vst [vmem:[#allocation3 + $0x58] sm:$0xff] %v2961
      %3026 = vst [vmem:[#allocation3 + $0x60] sm:$0xff] %v2962
      %3027 = vst [vmem:[#allocation3 + $0x68] sm:$0xff] %v2963
      %3028 = vst [vmem:[#allocation3 + $0x70] sm:$0xff] %v2964
      %3029 = vst [vmem:[#allocation3 + $0x78] sm:$0xff] %v2965
      %3030 = vst [vmem:[#allocation3 + $0x80] sm:$0xff] %v2966
      %3031 = vst [vmem:[#allocation3 + $0x88] sm:$0xff] %v2967
      %3032 = vst [vmem:[#allocation3 + $0x90] sm:$0xff] %v2968
      %3033 = vst [vmem:[#allocation3 + $0x98] sm:$0xff] %v2969
      %3034 = vst [vmem:[#allocation3 + $0xa0] sm:$0xff] %v2970
      %3035 = vst [vmem:[#allocation3 + $0xa8] sm:$0xff] %v2971
      %3036 = vst [vmem:[#allocation3 + $0xb0] sm:$0xff] %v2972
      %3037 = vst [vmem:[#allocation3 + $0xb8] sm:$0xff] %v2973
      %3038 = vst [vmem:[#allocation3 + $0xc0] sm:$0xff] %v2974
      %3039 = vst [vmem:[#allocation3 + $0xc8] sm:$0xff] %v2975
      %3040 = vst [vmem:[#allocation3 + $0xd0] sm:$0xff] %v2976
      %3041 = vst [vmem:[#allocation3 + $0xd8] sm:$0xff] %v2977
      %3042 = vst [vmem:[#allocation3 + $0xe0] sm:$0xff] %v2978
      %3043 = vst [vmem:[#allocation3 + $0xe8] sm:$0xff] %v2979
      %3044 = vst [vmem:[#allocation3 + $0xf0] sm:$0xff] %v2980
      %3045 = vst [vmem:[#allocation3 + $0xf8] sm:$0xff] %v2981
      %3046 = vst [vmem:[#allocation3 + $0x100] sm:$0xff] %v2982
      %3047 = vst [vmem:[#allocation3 + $0x108] sm:$0xff] %v2983
      %3048 = vst [vmem:[#allocation3 + $0x110] sm:$0xff] %v2984
      %3049 = vst [vmem:[#allocation3 + $0x118] sm:$0xff] %v2985
      %3050 = vst [vmem:[#allocation3 + $0x120] sm:$0xff] %v2986
      %3051 = vst [vmem:[#allocation3 + $0x128] sm:$0xff] %v2987
      %3052 = vst [vmem:[#allocation3 + $0x130] sm:$0xff] %v2988
      %3053 = vst [vmem:[#allocation3 + $0x138] sm:$0xff] %v2989
      %3054 = vst [vmem:[#allocation3 + $0x140] sm:$0xff] %v2990
      %3055 = vst [vmem:[#allocation3 + $0x148] sm:$0xff] %v2991
      %3056 = vst [vmem:[#allocation3 + $0x150] sm:$0xff] %v2992
      %3057 = vst [vmem:[#allocation3 + $0x158] sm:$0xff] %v2993
      %3058 = vst [vmem:[#allocation3 + $0x160] sm:$0xff] %v2994
      %3059 = vst [vmem:[#allocation3 + $0x168] sm:$0xff] %v2995
      %3060 = vst [vmem:[#allocation3 + $0x170] sm:$0xff] %v2996
      %3061 = vst [vmem:[#allocation3 + $0x178] sm:$0xff] %v2997
      %3062 = vst [vmem:[#allocation3 + $0x180] sm:$0xff] %v2998
      %3063 = vst [vmem:[#allocation3 + $0x188] sm:$0xff] %v2999
      %3064 = vst [vmem:[#allocation3 + $0x190] sm:$0xff] %v3000
      %3065 = vst [vmem:[#allocation3 + $0x198] sm:$0xff] %v3001
      %3066 = vst [vmem:[#allocation3 + $0x1a0] sm:$0xff] %v3002
      %3067 = vst [vmem:[#allocation3 + $0x1a8] sm:$0xff] %v3003
      %3068 = vst [vmem:[#allocation3 + $0x1b0] sm:$0xff] %v3004
      %3069 = vst [vmem:[#allocation3 + $0x1b8] sm:$0xff] %v3005
      %3070 = vst [vmem:[#allocation3 + $0x1c0] sm:$0xff] %v3006
      %3071 = vst [vmem:[#allocation3 + $0x1c8] sm:$0xff] %v3007
      %3072 = vst [vmem:[#allocation3 + $0x1d0] sm:$0xff] %v3008
      %3073 = vst [vmem:[#allocation3 + $0x1d8] sm:$0xff] %v3009
      %3074 = vst [vmem:[#allocation3 + $0x1e0] sm:$0xff] %v3010
      %3075 = vst [vmem:[#allocation3 + $0x1e8] sm:$0xff] %v3011
      %3076 = vst [vmem:[#allocation3 + $0x1f0] sm:$0xff] %v3012
      %3077 = vst [vmem:[#allocation3 + $0x1f8] sm:$0xff] %v3013
      %3078 = vst [vmem:[#allocation3 + $0x200] sm:$0xff] 0.0
      %3079 = vst [vmem:[#allocation3 + $0x208] sm:$0xff] 0.0
      %v3080 = vld [vmem:[#allocation3] sm:$0xff]
      %v3081 = vld [vmem:[#allocation3 + $0x8] sm:$0xff]
      %v3082 = vld [vmem:[#allocation3 + $0x10] sm:$0xff]
      %v3083 = vld [vmem:[#allocation3 + $0x18] sm:$0xff]
      %v3084 = vld [vmem:[#allocation3 + $0x20] sm:$0xff]
      %v3085 = vld [vmem:[#allocation3 + $0x28] sm:$0xff]
      %v3086 = vld [vmem:[#allocation3 + $0x30] sm:$0xff]
      %v3087 = vld [vmem:[#allocation3 + $0x38] sm:$0xff]
      %v3088 = vld [vmem:[#allocation3 + $0x40] sm:$0xff]
      %v3089 = vld [vmem:[#allocation3 + $0x48] sm:$0xff]
      %v3090 = vld [vmem:[#allocation3 + $0x50] sm:$0xff]
      %v3091 = vld [vmem:[#allocation3 + $0x58] sm:$0xff]
      %v3092 = vld [vmem:[#allocation3 + $0x60] sm:$0xff]
      %v3093 = vld [vmem:[#allocation3 + $0x68] sm:$0xff]
      %v3094 = vld [vmem:[#allocation3 + $0x70] sm:$0xff]
      %v3095 = vld [vmem:[#allocation3 + $0x78] sm:$0xff]
      %v3096 = vld [vmem:[#allocation3 + $0x80] sm:$0xff]
      %v3097 = vld [vmem:[#allocation3 + $0x88] sm:$0xff]
      %v3098 = vld [vmem:[#allocation3 + $0x90] sm:$0xff]
      %v3099 = vld [vmem:[#allocation3 + $0x98] sm:$0xff]
      %v3100 = vld [vmem:[#allocation3 + $0xa0] sm:$0xff]
      %v3101 = vld [vmem:[#allocation3 + $0xa8] sm:$0xff]
      %v3102 = vld [vmem:[#allocation3 + $0xb0] sm:$0xff]
      %v3103 = vld [vmem:[#allocation3 + $0xb8] sm:$0xff]
      %v3104 = vld [vmem:[#allocation3 + $0xc0] sm:$0xff]
      %v3105 = vld [vmem:[#allocation3 + $0xc8] sm:$0xff]
      %v3106 = vld [vmem:[#allocation3 + $0xd0] sm:$0xff]
      %v3107 = vld [vmem:[#allocation3 + $0xd8] sm:$0xff]
      %v3108 = vld [vmem:[#allocation3 + $0xe0] sm:$0xff]
      %v3109 = vld [vmem:[#allocation3 + $0xe8] sm:$0xff]
      %v3110 = vld [vmem:[#allocation3 + $0xf0] sm:$0xff]
      %v3111 = vld [vmem:[#allocation3 + $0xf8] sm:$0xff]
      %v3112 = vld [vmem:[#allocation3 + $0x100] sm:$0xff]
      %v3113 = vld [vmem:[#allocation3 + $0x108] sm:$0xff]
      %v3114 = vld [vmem:[#allocation3 + $0x110] sm:$0xff]
      %v3115 = vld [vmem:[#allocation3 + $0x118] sm:$0xff]
      %v3116 = vld [vmem:[#allocation3 + $0x120] sm:$0xff]
      %v3117 = vld [vmem:[#allocation3 + $0x128] sm:$0xff]
      %v3118 = vld [vmem:[#allocation3 + $0x130] sm:$0xff]
      %v3119 = vld [vmem:[#allocation3 + $0x138] sm:$0xff]
      %v3120 = vld [vmem:[#allocation3 + $0x140] sm:$0xff]
      %v3121 = vld [vmem:[#allocation3 + $0x148] sm:$0xff]
      %v3122 = vld [vmem:[#allocation3 + $0x150] sm:$0xff]
      %v3123 = vld [vmem:[#allocation3 + $0x158] sm:$0xff]
      %v3124 = vld [vmem:[#allocation3 + $0x160] sm:$0xff]
      %v3125 = vld [vmem:[#allocation3 + $0x168] sm:$0xff]
      %v3126 = vld [vmem:[#allocation3 + $0x170] sm:$0xff]
      %v3127 = vld [vmem:[#allocation3 + $0x178] sm:$0xff]
      %v3128 = vld [vmem:[#allocation3 + $0x180] sm:$0xff]
      %v3129 = vld [vmem:[#allocation3 + $0x188] sm:$0xff]
      %v3130 = vld [vmem:[#allocation3 + $0x190] sm:$0xff]
      %v3131 = vld [vmem:[#allocation3 + $0x198] sm:$0xff]
      %v3132 = vld [vmem:[#allocation3 + $0x1a0] sm:$0xff]
      %v3133 = vld [vmem:[#allocation3 + $0x1a8] sm:$0xff]
      %v3134 = vld [vmem:[#allocation3 + $0x1b0] sm:$0xff]
      %v3135 = vld [vmem:[#allocation3 + $0x1b8] sm:$0xff]
      %v3136 = vld [vmem:[#allocation3 + $0x1c0] sm:$0xff]
      %v3137 = vld [vmem:[#allocation3 + $0x1c8] sm:$0xff]
      %v3138 = vld [vmem:[#allocation3 + $0x1d0] sm:$0xff]
      %v3139 = vld [vmem:[#allocation3 + $0x1d8] sm:$0xff]
      %v3140 = vld [vmem:[#allocation3 + $0x1e0] sm:$0xff]
      %v3141 = vld [vmem:[#allocation3 + $0x1e8] sm:$0xff]
      %v3142 = vld [vmem:[#allocation3 + $0x1f0] sm:$0xff]
      %v3143 = vld [vmem:[#allocation3 + $0x1f8] sm:$0xff]
      %v3144 = vld [vmem:[#allocation3] sm:$0xfe]
      %v3145 = vld [vmem:[#allocation3 + $0x8] sm:$0xfe]
      %v3146 = vld [vmem:[#allocation3 + $0x10] sm:$0xff]
      %v3147 = vld [vmem:[#allocation3 + $0x18] sm:$0xff]
      %v3148 = vld [vmem:[#allocation3 + $0x20] sm:$0xff]
      %v3149 = vld [vmem:[#allocation3 + $0x28] sm:$0xff]
      %v3150 = vld [vmem:[#allocation3 + $0x30] sm:$0xff]
      %v3151 = vld [vmem:[#allocation3 + $0x38] sm:$0xff]
      %v3152 = vld [vmem:[#allocation3 + $0x40] sm:$0xff]
      %v3153 = vld [vmem:[#allocation3 + $0x48] sm:$0xff]
      %v3154 = vld [vmem:[#allocation3 + $0x50] sm:$0xff]
      %v3155 = vld [vmem:[#allocation3 + $0x58] sm:$0xff]
      %v3156 = vld [vmem:[#allocation3 + $0x60] sm:$0xff]
      %v3157 = vld [vmem:[#allocation3 + $0x68] sm:$0xff]
      %v3158 = vld [vmem:[#allocation3 + $0x70] sm:$0xff]
      %v3159 = vld [vmem:[#allocation3 + $0x78] sm:$0xff]
      %v3160 = vld [vmem:[#allocation3 + $0x80] sm:$0xff]
      %v3161 = vld [vmem:[#allocation3 + $0x88] sm:$0xff]
      %v3162 = vld [vmem:[#allocation3 + $0x90] sm:$0xff]
      %v3163 = vld [vmem:[#allocation3 + $0x98] sm:$0xff]
      %v3164 = vld [vmem:[#allocation3 + $0xa0] sm:$0xff]
      %v3165 = vld [vmem:[#allocation3 + $0xa8] sm:$0xff]
      %v3166 = vld [vmem:[#allocation3 + $0xb0] sm:$0xff]
      %v3167 = vld [vmem:[#allocation3 + $0xb8] sm:$0xff]
      %v3168 = vld [vmem:[#allocation3 + $0xc0] sm:$0xff]
      %v3169 = vld [vmem:[#allocation3 + $0xc8] sm:$0xff]
      %v3170 = vld [vmem:[#allocation3 + $0xd0] sm:$0xff]
      %v3171 = vld [vmem:[#allocation3 + $0xd8] sm:$0xff]
      %v3172 = vld [vmem:[#allocation3 + $0xe0] sm:$0xff]
      %v3173 = vld [vmem:[#allocation3 + $0xe8] sm:$0xff]
      %v3174 = vld [vmem:[#allocation3 + $0xf0] sm:$0xff]
      %v3175 = vld [vmem:[#allocation3 + $0xf8] sm:$0xff]
      %v3176 = vld [vmem:[#allocation3 + $0x100] sm:$0xff]
      %v3177 = vld [vmem:[#allocation3 + $0x108] sm:$0xff]
      %v3178 = vld [vmem:[#allocation3 + $0x110] sm:$0xff]
      %v3179 = vld [vmem:[#allocation3 + $0x118] sm:$0xff]
      %v3180 = vld [vmem:[#allocation3 + $0x120] sm:$0xff]
      %v3181 = vld [vmem:[#allocation3 + $0x128] sm:$0xff]
      %v3182 = vld [vmem:[#allocation3 + $0x130] sm:$0xff]
      %v3183 = vld [vmem:[#allocation3 + $0x138] sm:$0xff]
      %v3184 = vld [vmem:[#allocation3 + $0x140] sm:$0xff]
      %v3185 = vld [vmem:[#allocation3 + $0x148] sm:$0xff]
      %v3186 = vld [vmem:[#allocation3 + $0x150] sm:$0xff]
      %v3187 = vld [vmem:[#allocation3 + $0x158] sm:$0xff]
      %v3188 = vld [vmem:[#allocation3 + $0x160] sm:$0xff]
      %v3189 = vld [vmem:[#allocation3 + $0x168] sm:$0xff]
      %v3190 = vld [vmem:[#allocation3 + $0x170] sm:$0xff]
      %v3191 = vld [vmem:[#allocation3 + $0x178] sm:$0xff]
      %v3192 = vld [vmem:[#allocation3 + $0x180] sm:$0xff]
      %v3193 = vld [vmem:[#allocation3 + $0x188] sm:$0xff]
      %v3194 = vld [vmem:[#allocation3 + $0x190] sm:$0xff]
      %v3195 = vld [vmem:[#allocation3 + $0x198] sm:$0xff]
      %v3196 = vld [vmem:[#allocation3 + $0x1a0] sm:$0xff]
      %v3197 = vld [vmem:[#allocation3 + $0x1a8] sm:$0xff]
      %v3198 = vld [vmem:[#allocation3 + $0x1b0] sm:$0xff]
      %v3199 = vld [vmem:[#allocation3 + $0x1b8] sm:$0xff]
      %v3200 = vld [vmem:[#allocation3 + $0x1c0] sm:$0xff]
      %v3201 = vld [vmem:[#allocation3 + $0x1c8] sm:$0xff]
      %v3202 = vld [vmem:[#allocation3 + $0x1d0] sm:$0xff]
      %v3203 = vld [vmem:[#allocation3 + $0x1d8] sm:$0xff]
      %v3204 = vld [vmem:[#allocation3 + $0x1e0] sm:$0xff]
      %v3205 = vld [vmem:[#allocation3 + $0x1e8] sm:$0xff]
      %v3206 = vld [vmem:[#allocation3 + $0x1f0] sm:$0xff]
      %v3207 = vld [vmem:[#allocation3 + $0x1f8] sm:$0xff]
      %v3208 = vld [vmem:[#allocation3 + $0x200] sm:$0x1]
      %v3209 = vld [vmem:[#allocation3 + $0x208] sm:$0x1]
      %vm3210 = vcmask 1040384
      %v3211 = vrot.slane %v1339, 7
      %v3212 = vrot.slane %v1344, 7
      %v3213 = vsel %vm3210, %v3211, %v3212
      %v3214 = vrot.slane %v1349, 7
      %v3215 = vsel %vm3210, %v3212, %v3214
      %v3216 = vrot.slane %v1354, 7
      %v3217 = vsel %vm3210, %v3214, %v3216
      %v3218 = vrot.slane %v1359, 7
      %v3219 = vsel %vm3210, %v3216, %v3218
      %v3220 = vrot.slane %v1364, 7
      %v3221 = vsel %vm3210, %v3218, %v3220
      %v3222 = vrot.slane %v1369, 7
      %v3223 = vsel %vm3210, %v3220, %v3222
      %v3224 = vrot.slane %v1374, 7
      %v3225 = vsel %vm3210, %v3222, %v3224
      %v3226 = vrot.slane %v1379, 7
      %v3227 = vsel %vm3210, %v3224, %v3226
      %v3228 = vrot.slane %v1384, 7
      %v3229 = vsel %vm3210, %v3226, %v3228
      %v3230 = vrot.slane %v1389, 7
      %v3231 = vsel %vm3210, %v3228, %v3230
      %v3232 = vrot.slane %v1394, 7
      %v3233 = vsel %vm3210, %v3230, %v3232
      %v3234 = vrot.slane %v1399, 7
      %v3235 = vsel %vm3210, %v3232, %v3234
      %v3236 = vrot.slane %v1404, 7
      %v3237 = vsel %vm3210, %v3234, %v3236
      %v3238 = vrot.slane %v1409, 7
      %v3239 = vsel %vm3210, %v3236, %v3238
      %v3240 = vrot.slane %v1414, 7
      %v3241 = vsel %vm3210, %v3238, %v3240
      %v3242 = vrot.slane %v1419, 7
      %v3243 = vsel %vm3210, %v3240, %v3242
      %v3244 = vrot.slane %v1424, 7
      %v3245 = vsel %vm3210, %v3242, %v3244
      %v3246 = vrot.slane %v1429, 7
      %v3247 = vsel %vm3210, %v3244, %v3246
      %v3248 = vrot.slane %v1434, 7
      %v3249 = vsel %vm3210, %v3246, %v3248
      %v3250 = vrot.slane %v1439, 7
      %v3251 = vsel %vm3210, %v3248, %v3250
      %v3252 = vrot.slane %v1444, 7
      %v3253 = vsel %vm3210, %v3250, %v3252
      %v3254 = vrot.slane %v1449, 7
      %v3255 = vsel %vm3210, %v3252, %v3254
      %v3256 = vrot.slane %v1454, 7
      %v3257 = vsel %vm3210, %v3254, %v3256
      %v3258 = vrot.slane %v1459, 7
      %v3259 = vsel %vm3210, %v3256, %v3258
      %v3260 = vrot.slane %v1464, 7
      %v3261 = vsel %vm3210, %v3258, %v3260
      %v3262 = vrot.slane %v1469, 7
      %v3263 = vsel %vm3210, %v3260, %v3262
      %v3264 = vrot.slane %v1474, 7
      %v3265 = vsel %vm3210, %v3262, %v3264
      %v3266 = vrot.slane %v1479, 7
      %v3267 = vsel %vm3210, %v3264, %v3266
      %v3268 = vrot.slane %v1484, 7
      %v3269 = vsel %vm3210, %v3266, %v3268
      %v3270 = vrot.slane %v1489, 7
      %v3271 = vsel %vm3210, %v3268, %v3270
      %v3272 = vrot.slane %v1494, 7
      %v3273 = vsel %vm3210, %v3270, %v3272
      %v3307 = vmul.f32 %v3144, %v3211
      %v3308 = vmul.f32 %v3145, %v3211
      %v3309 = vmul.f32 %v3146, %v3213
      %v3310 = vmul.f32 %v3147, %v3213
      %v3311 = vmul.f32 %v3148, %v3215
      %v3312 = vmul.f32 %v3149, %v3215
      %v3313 = vmul.f32 %v3150, %v3217
      %v3314 = vmul.f32 %v3151, %v3217
      %v3315 = vmul.f32 %v3152, %v3219
      %v3316 = vmul.f32 %v3153, %v3219
      %v3317 = vmul.f32 %v3154, %v3221
      %v3318 = vmul.f32 %v3155, %v3221
      %v3319 = vmul.f32 %v3156, %v3223
      %v3320 = vmul.f32 %v3157, %v3223
      %v3321 = vmul.f32 %v3158, %v3225
      %v3322 = vmul.f32 %v3159, %v3225
      %v3323 = vmul.f32 %v3160, %v3227
      %v3324 = vmul.f32 %v3161, %v3227
      %v3325 = vmul.f32 %v3162, %v3229
      %v3326 = vmul.f32 %v3163, %v3229
      %v3327 = vmul.f32 %v3164, %v3231
      %v3328 = vmul.f32 %v3165, %v3231
      %v3329 = vmul.f32 %v3166, %v3233
      %v3330 = vmul.f32 %v3167, %v3233
      %v3331 = vmul.f32 %v3168, %v3235
      %v3332 = vmul.f32 %v3169, %v3235
      %v3333 = vmul.f32 %v3170, %v3237
      %v3334 = vmul.f32 %v3171, %v3237
      %v3335 = vmul.f32 %v3172, %v3239
      %v3336 = vmul.f32 %v3173, %v3239
      %v3337 = vmul.f32 %v3174, %v3241
      %v3338 = vmul.f32 %v3175, %v3241
      %v3339 = vmul.f32 %v3176, %v3243
      %v3340 = vmul.f32 %v3177, %v3243
      %v3341 = vmul.f32 %v3178, %v3245
      %v3342 = vmul.f32 %v3179, %v3245
      %v3343 = vmul.f32 %v3180, %v3247
      %v3344 = vmul.f32 %v3181, %v3247
      %v3345 = vmul.f32 %v3182, %v3249
      %v3346 = vmul.f32 %v3183, %v3249
      %v3347 = vmul.f32 %v3184, %v3251
      %v3348 = vmul.f32 %v3185, %v3251
      %v3349 = vmul.f32 %v3186, %v3253
      %v3350 = vmul.f32 %v3187, %v3253
      %v3351 = vmul.f32 %v3188, %v3255
      %v3352 = vmul.f32 %v3189, %v3255
      %v3353 = vmul.f32 %v3190, %v3257
      %v3354 = vmul.f32 %v3191, %v3257
      %v3355 = vmul.f32 %v3192, %v3259
      %v3356 = vmul.f32 %v3193, %v3259
      %v3357 = vmul.f32 %v3194, %v3261
      %v3358 = vmul.f32 %v3195, %v3261
      %v3359 = vmul.f32 %v3196, %v3263
      %v3360 = vmul.f32 %v3197, %v3263
      %v3361 = vmul.f32 %v3198, %v3265
      %v3362 = vmul.f32 %v3199, %v3265
      %v3363 = vmul.f32 %v3200, %v3267
      %v3364 = vmul.f32 %v3201, %v3267
      %v3365 = vmul.f32 %v3202, %v3269
      %v3366 = vmul.f32 %v3203, %v3269
      %v3367 = vmul.f32 %v3204, %v3271
      %v3368 = vmul.f32 %v3205, %v3271
      %v3369 = vmul.f32 %v3206, %v3273
      %v3370 = vmul.f32 %v3207, %v3273
      %v3371 = vmul.f32 %v3208, %v3272
      %v3372 = vmul.f32 %v3209, %v3272
      %v3373 = vld [vmem:[#allocation3] sm:$0xf0]
      %v3374 = vld [vmem:[#allocation3 + $0x8] sm:$0xf0]
      %v3375 = vld [vmem:[#allocation3 + $0x200] sm:$0xf]
      %v3376 = vld [vmem:[#allocation3 + $0x208] sm:$0xf]
      %vm3377 = vcmask 1043456
      %v3378 = vrot.slane %v1562, 4
      %v3379 = vrot.slane %v1566, 4
      %v3380 = vsel %vm3377, %v3378, %v3379
      %v3381 = vrot.slane %v1570, 4
      %v3382 = vsel %vm3377, %v3379, %v3381
      %v3383 = vrot.slane %v1574, 4
      %v3384 = vsel %vm3377, %v3381, %v3383
      %v3385 = vrot.slane %v1578, 4
      %v3386 = vsel %vm3377, %v3383, %v3385
      %v3387 = vrot.slane %v1582, 4
      %v3388 = vsel %vm3377, %v3385, %v3387
      %v3389 = vrot.slane %v1586, 4
      %v3390 = vsel %vm3377, %v3387, %v3389
      %v3391 = vrot.slane %v1590, 4
      %v3392 = vsel %vm3377, %v3389, %v3391
      %v3393 = vrot.slane %v1594, 4
      %v3394 = vsel %vm3377, %v3391, %v3393
      %v3395 = vrot.slane %v1598, 4
      %v3396 = vsel %vm3377, %v3393, %v3395
      %v3397 = vrot.slane %v1602, 4
      %v3398 = vsel %vm3377, %v3395, %v3397
      %v3399 = vrot.slane %v1606, 4
      %v3400 = vsel %vm3377, %v3397, %v3399
      %v3401 = vrot.slane %v1610, 4
      %v3402 = vsel %vm3377, %v3399, %v3401
      %v3403 = vrot.slane %v1614, 4
      %v3404 = vsel %vm3377, %v3401, %v3403
      %v3405 = vrot.slane %v1618, 4
      %v3406 = vsel %vm3377, %v3403, %v3405
      %v3407 = vrot.slane %v1622, 4
      %v3408 = vsel %vm3377, %v3405, %v3407
      %v3409 = vrot.slane %v1626, 4
      %v3410 = vsel %vm3377, %v3407, %v3409
      %v3411 = vrot.slane %v1630, 4
      %v3412 = vsel %vm3377, %v3409, %v3411
      %v3413 = vrot.slane %v1634, 4
      %v3414 = vsel %vm3377, %v3411, %v3413
      %v3415 = vrot.slane %v1638, 4
      %v3416 = vsel %vm3377, %v3413, %v3415
      %v3417 = vrot.slane %v1642, 4
      %v3418 = vsel %vm3377, %v3415, %v3417
      %v3419 = vrot.slane %v1646, 4
      %v3420 = vsel %vm3377, %v3417, %v3419
      %v3421 = vrot.slane %v1650, 4
      %v3422 = vsel %vm3377, %v3419, %v3421
      %v3423 = vrot.slane %v1654, 4
      %v3424 = vsel %vm3377, %v3421, %v3423
      %v3425 = vrot.slane %v1658, 4
      %v3426 = vsel %vm3377, %v3423, %v3425
      %v3427 = vrot.slane %v1662, 4
      %v3428 = vsel %vm3377, %v3425, %v3427
      %v3429 = vrot.slane %v1666, 4
      %v3430 = vsel %vm3377, %v3427, %v3429
      %v3431 = vrot.slane %v1670, 4
      %v3432 = vsel %vm3377, %v3429, %v3431
      %v3433 = vrot.slane %v1674, 4
      %v3434 = vsel %vm3377, %v3431, %v3433
      %v3435 = vrot.slane %v1678, 4
      %v3436 = vsel %vm3377, %v3433, %v3435
      %v3437 = vrot.slane %v1682, 4
      %v3438 = vsel %vm3377, %v3435, %v3437
      %v3439 = vrot.slane %v1686, 4
      %v3440 = vsel %vm3377, %v3437, %v3439
      %v3474 = vmul.f32 %v3373, %v3378
      %v3475 = vmul.f32 %v3374, %v3378
      %v3476 = vmul.f32 %v3146, %v3380
      %v3477 = vmul.f32 %v3147, %v3380
      %v3478 = vmul.f32 %v3148, %v3382
      %v3479 = vmul.f32 %v3149, %v3382
      %v3480 = vmul.f32 %v3150, %v3384
      %v3481 = vmul.f32 %v3151, %v3384
      %v3482 = vmul.f32 %v3152, %v3386
      %v3483 = vmul.f32 %v3153, %v3386
      %v3484 = vmul.f32 %v3154, %v3388
      %v3485 = vmul.f32 %v3155, %v3388
      %v3486 = vmul.f32 %v3156, %v3390
      %v3487 = vmul.f32 %v3157, %v3390
      %v3488 = vmul.f32 %v3158, %v3392
      %v3489 = vmul.f32 %v3159, %v3392
      %v3490 = vmul.f32 %v3160, %v3394
      %v3491 = vmul.f32 %v3161, %v3394
      %v3492 = vmul.f32 %v3162, %v3396
      %v3493 = vmul.f32 %v3163, %v3396
      %v3494 = vmul.f32 %v3164, %v3398
      %v3495 = vmul.f32 %v3165, %v3398
      %v3496 = vmul.f32 %v3166, %v3400
      %v3497 = vmul.f32 %v3167, %v3400
      %v3498 = vmul.f32 %v3168, %v3402
      %v3499 = vmul.f32 %v3169, %v3402
      %v3500 = vmul.f32 %v3170, %v3404
      %v3501 = vmul.f32 %v3171, %v3404
      %v3502 = vmul.f32 %v3172, %v3406
      %v3503 = vmul.f32 %v3173, %v3406
      %v3504 = vmul.f32 %v3174, %v3408
      %v3505 = vmul.f32 %v3175, %v3408
      %v3506 = vmul.f32 %v3176, %v3410
      %v3507 = vmul.f32 %v3177, %v3410
      %v3508 = vmul.f32 %v3178, %v3412
      %v3509 = vmul.f32 %v3179, %v3412
      %v3510 = vmul.f32 %v3180, %v3414
      %v3511 = vmul.f32 %v3181, %v3414
      %v3512 = vmul.f32 %v3182, %v3416
      %v3513 = vmul.f32 %v3183, %v3416
      %v3514 = vmul.f32 %v3184, %v3418
      %v3515 = vmul.f32 %v3185, %v3418
      %v3516 = vmul.f32 %v3186, %v3420
      %v3517 = vmul.f32 %v3187, %v3420
      %v3518 = vmul.f32 %v3188, %v3422
      %v3519 = vmul.f32 %v3189, %v3422
      %v3520 = vmul.f32 %v3190, %v3424
      %v3521 = vmul.f32 %v3191, %v3424
      %v3522 = vmul.f32 %v3192, %v3426
      %v3523 = vmul.f32 %v3193, %v3426
      %v3524 = vmul.f32 %v3194, %v3428
      %v3525 = vmul.f32 %v3195, %v3428
      %v3526 = vmul.f32 %v3196, %v3430
      %v3527 = vmul.f32 %v3197, %v3430
      %v3528 = vmul.f32 %v3198, %v3432
      %v3529 = vmul.f32 %v3199, %v3432
      %v3530 = vmul.f32 %v3200, %v3434
      %v3531 = vmul.f32 %v3201, %v3434
      %v3532 = vmul.f32 %v3202, %v3436
      %v3533 = vmul.f32 %v3203, %v3436
      %v3534 = vmul.f32 %v3204, %v3438
      %v3535 = vmul.f32 %v3205, %v3438
      %v3536 = vmul.f32 %v3206, %v3440
      %v3537 = vmul.f32 %v3207, %v3440
      %v3538 = vmul.f32 %v3375, %v3439
      %v3539 = vmul.f32 %v3376, %v3439
      %v3540 = vld [vmem:[#allocation3] sm:$0xe0]
      %v3541 = vld [vmem:[#allocation3 + $0x8] sm:$0xe0]
      %v3542 = vld [vmem:[#allocation3 + $0x200] sm:$0x1f]
      %v3543 = vld [vmem:[#allocation3 + $0x208] sm:$0x1f]
      %vm3544 = vcmask 1044480
      %v3545 = vrot.slane %v1754, 3
      %v3546 = vrot.slane %v1758, 3
      %v3547 = vsel %vm3544, %v3545, %v3546
      %v3548 = vrot.slane %v1762, 3
      %v3549 = vsel %vm3544, %v3546, %v3548
      %v3550 = vrot.slane %v1766, 3
      %v3551 = vsel %vm3544, %v3548, %v3550
      %v3552 = vrot.slane %v1770, 3
      %v3553 = vsel %vm3544, %v3550, %v3552
      %v3554 = vrot.slane %v1774, 3
      %v3555 = vsel %vm3544, %v3552, %v3554
      %v3556 = vrot.slane %v1778, 3
      %v3557 = vsel %vm3544, %v3554, %v3556
      %v3558 = vrot.slane %v1782, 3
      %v3559 = vsel %vm3544, %v3556, %v3558
      %v3560 = vrot.slane %v1786, 3
      %v3561 = vsel %vm3544, %v3558, %v3560
      %v3562 = vrot.slane %v1790, 3
      %v3563 = vsel %vm3544, %v3560, %v3562
      %v3564 = vrot.slane %v1794, 3
      %v3565 = vsel %vm3544, %v3562, %v3564
      %v3566 = vrot.slane %v1798, 3
      %v3567 = vsel %vm3544, %v3564, %v3566
      %v3568 = vrot.slane %v1802, 3
      %v3569 = vsel %vm3544, %v3566, %v3568
      %v3570 = vrot.slane %v1806, 3
      %v3571 = vsel %vm3544, %v3568, %v3570
      %v3572 = vrot.slane %v1810, 3
      %v3573 = vsel %vm3544, %v3570, %v3572
      %v3574 = vrot.slane %v1814, 3
      %v3575 = vsel %vm3544, %v3572, %v3574
      %v3576 = vrot.slane %v1818, 3
      %v3577 = vsel %vm3544, %v3574, %v3576
      %v3578 = vrot.slane %v1822, 3
      %v3579 = vsel %vm3544, %v3576, %v3578
      %v3580 = vrot.slane %v1826, 3
      %v3581 = vsel %vm3544, %v3578, %v3580
      %v3582 = vrot.slane %v1830, 3
      %v3583 = vsel %vm3544, %v3580, %v3582
      %v3584 = vrot.slane %v1834, 3
      %v3585 = vsel %vm3544, %v3582, %v3584
      %v3586 = vrot.slane %v1838, 3
      %v3587 = vsel %vm3544, %v3584, %v3586
      %v3588 = vrot.slane %v1842, 3
      %v3589 = vsel %vm3544, %v3586, %v3588
      %v3590 = vrot.slane %v1846, 3
      %v3591 = vsel %vm3544, %v3588, %v3590
      %v3592 = vrot.slane %v1850, 3
      %v3593 = vsel %vm3544, %v3590, %v3592
      %v3594 = vrot.slane %v1854, 3
      %v3595 = vsel %vm3544, %v3592, %v3594
      %v3596 = vrot.slane %v1858, 3
      %v3597 = vsel %vm3544, %v3594, %v3596
      %v3598 = vrot.slane %v1862, 3
      %v3599 = vsel %vm3544, %v3596, %v3598
      %v3600 = vrot.slane %v1866, 3
      %v3601 = vsel %vm3544, %v3598, %v3600
      %v3602 = vrot.slane %v1870, 3
      %v3603 = vsel %vm3544, %v3600, %v3602
      %v3604 = vrot.slane %v1874, 3
      %v3605 = vsel %vm3544, %v3602, %v3604
      %v3606 = vrot.slane %v1878, 3
      %v3607 = vsel %vm3544, %v3604, %v3606
      %v3641 = vmul.f32 %v3540, %v3545
      %v3642 = vmul.f32 %v3541, %v3545
      %v3643 = vmul.f32 %v3146, %v3547
      %v3644 = vmul.f32 %v3147, %v3547
      %v3645 = vmul.f32 %v3148, %v3549
      %v3646 = vmul.f32 %v3149, %v3549
      %v3647 = vmul.f32 %v3150, %v3551
      %v3648 = vmul.f32 %v3151, %v3551
      %v3649 = vmul.f32 %v3152, %v3553
      %v3650 = vmul.f32 %v3153, %v3553
      %v3651 = vmul.f32 %v3154, %v3555
      %v3652 = vmul.f32 %v3155, %v3555
      %v3653 = vmul.f32 %v3156, %v3557
      %v3654 = vmul.f32 %v3157, %v3557
      %v3655 = vmul.f32 %v3158, %v3559
      %v3656 = vmul.f32 %v3159, %v3559
      %v3657 = vmul.f32 %v3160, %v3561
      %v3658 = vmul.f32 %v3161, %v3561
      %v3659 = vmul.f32 %v3162, %v3563
      %v3660 = vmul.f32 %v3163, %v3563
      %v3661 = vmul.f32 %v3164, %v3565
      %v3662 = vmul.f32 %v3165, %v3565
      %v3663 = vmul.f32 %v3166, %v3567
      %v3664 = vmul.f32 %v3167, %v3567
      %v3665 = vmul.f32 %v3168, %v3569
      %v3666 = vmul.f32 %v3169, %v3569
      %v3667 = vmul.f32 %v3170, %v3571
      %v3668 = vmul.f32 %v3171, %v3571
      %v3669 = vmul.f32 %v3172, %v3573
      %v3670 = vmul.f32 %v3173, %v3573
      %v3671 = vmul.f32 %v3174, %v3575
      %v3672 = vmul.f32 %v3175, %v3575
      %v3673 = vmul.f32 %v3176, %v3577
      %v3674 = vmul.f32 %v3177, %v3577
      %v3675 = vmul.f32 %v3178, %v3579
      %v3676 = vmul.f32 %v3179, %v3579
      %v3677 = vmul.f32 %v3180, %v3581
      %v3678 = vmul.f32 %v3181, %v3581
      %v3679 = vmul.f32 %v3182, %v3583
      %v3680 = vmul.f32 %v3183, %v3583
      %v3681 = vmul.f32 %v3184, %v3585
      %v3682 = vmul.f32 %v3185, %v3585
      %v3683 = vmul.f32 %v3186, %v3587
      %v3684 = vmul.f32 %v3187, %v3587
      %v3685 = vmul.f32 %v3188, %v3589
      %v3686 = vmul.f32 %v3189, %v3589
      %v3687 = vmul.f32 %v3190, %v3591
      %v3688 = vmul.f32 %v3191, %v3591
      %v3689 = vmul.f32 %v3192, %v3593
      %v3690 = vmul.f32 %v3193, %v3593
      %v3691 = vmul.f32 %v3194, %v3595
      %v3692 = vmul.f32 %v3195, %v3595
      %v3693 = vmul.f32 %v3196, %v3597
      %v3694 = vmul.f32 %v3197, %v3597
      %v3695 = vmul.f32 %v3198, %v3599
      %v3696 = vmul.f32 %v3199, %v3599
      %v3697 = vmul.f32 %v3200, %v3601
      %v3698 = vmul.f32 %v3201, %v3601
      %v3699 = vmul.f32 %v3202, %v3603
      %v3700 = vmul.f32 %v3203, %v3603
      %v3701 = vmul.f32 %v3204, %v3605
      %v3702 = vmul.f32 %v3205, %v3605
      %v3703 = vmul.f32 %v3206, %v3607
      %v3704 = vmul.f32 %v3207, %v3607
      %v3705 = vmul.f32 %v3542, %v3606
      %v3706 = vmul.f32 %v3543, %v3606
      %vm3773 = vcmask 1046528
      %v3774 = vrot.slane %v3307, 1
      %v3775 = vrot.slane %v3309, 1
      %v3776 = vsel %vm3773, %v3774, %v3775
      %v3777 = vrot.slane %v3308, 1
      %v3778 = vrot.slane %v3310, 1
      %v3779 = vsel %vm3773, %v3777, %v3778
      %v3780 = vrot.slane %v3311, 1
      %v3781 = vsel %vm3773, %v3775, %v3780
      %v3782 = vrot.slane %v3312, 1
      %v3783 = vsel %vm3773, %v3778, %v3782
      %v3784 = vrot.slane %v3313, 1
      %v3785 = vsel %vm3773, %v3780, %v3784
      %v3786 = vrot.slane %v3314, 1
      %v3787 = vsel %vm3773, %v3782, %v3786
      %v3788 = vrot.slane %v3315, 1
      %v3789 = vsel %vm3773, %v3784, %v3788
      %v3790 = vrot.slane %v3316, 1
      %v3791 = vsel %vm3773, %v3786, %v3790
      %v3792 = vrot.slane %v3317, 1
      %v3793 = vsel %vm3773, %v3788, %v3792
      %v3794 = vrot.slane %v3318, 1
      %v3795 = vsel %vm3773, %v3790, %v3794
      %v3796 = vrot.slane %v3319, 1
      %v3797 = vsel %vm3773, %v3792, %v3796
      %v3798 = vrot.slane %v3320, 1
      %v3799 = vsel %vm3773, %v3794, %v3798
      %v3800 = vrot.slane %v3321, 1
      %v3801 = vsel %vm3773, %v3796, %v3800
      %v3802 = vrot.slane %v3322, 1
      %v3803 = vsel %vm3773, %v3798, %v3802
      %v3804 = vrot.slane %v3323, 1
      %v3805 = vsel %vm3773, %v3800, %v3804
      %v3806 = vrot.slane %v3324, 1
      %v3807 = vsel %vm3773, %v3802, %v3806
      %v3808 = vrot.slane %v3325, 1
      %v3809 = vsel %vm3773, %v3804, %v3808
      %v3810 = vrot.slane %v3326, 1
      %v3811 = vsel %vm3773, %v3806, %v3810
      %v3812 = vrot.slane %v3327, 1
      %v3813 = vsel %vm3773, %v3808, %v3812
      %v3814 = vrot.slane %v3328, 1
      %v3815 = vsel %vm3773, %v3810, %v3814
      %v3816 = vrot.slane %v3329, 1
      %v3817 = vsel %vm3773, %v3812, %v3816
      %v3818 = vrot.slane %v3330, 1
      %v3819 = vsel %vm3773, %v3814, %v3818
      %v3820 = vrot.slane %v3331, 1
      %v3821 = vsel %vm3773, %v3816, %v3820
      %v3822 = vrot.slane %v3332, 1
      %v3823 = vsel %vm3773, %v3818, %v3822
      %v3824 = vrot.slane %v3333, 1
      %v3825 = vsel %vm3773, %v3820, %v3824
      %v3826 = vrot.slane %v3334, 1
      %v3827 = vsel %vm3773, %v3822, %v3826
      %v3828 = vrot.slane %v3335, 1
      %v3829 = vsel %vm3773, %v3824, %v3828
      %v3830 = vrot.slane %v3336, 1
      %v3831 = vsel %vm3773, %v3826, %v3830
      %v3832 = vrot.slane %v3337, 1
      %v3833 = vsel %vm3773, %v3828, %v3832
      %v3834 = vrot.slane %v3338, 1
      %v3835 = vsel %vm3773, %v3830, %v3834
      %v3836 = vrot.slane %v3339, 1
      %v3837 = vsel %vm3773, %v3832, %v3836
      %v3838 = vrot.slane %v3340, 1
      %v3839 = vsel %vm3773, %v3834, %v3838
      %v3840 = vrot.slane %v3341, 1
      %v3841 = vsel %vm3773, %v3836, %v3840
      %v3842 = vrot.slane %v3342, 1
      %v3843 = vsel %vm3773, %v3838, %v3842
      %v3844 = vrot.slane %v3343, 1
      %v3845 = vsel %vm3773, %v3840, %v3844
      %v3846 = vrot.slane %v3344, 1
      %v3847 = vsel %vm3773, %v3842, %v3846
      %v3848 = vrot.slane %v3345, 1
      %v3849 = vsel %vm3773, %v3844, %v3848
      %v3850 = vrot.slane %v3346, 1
      %v3851 = vsel %vm3773, %v3846, %v3850
      %v3852 = vrot.slane %v3347, 1
      %v3853 = vsel %vm3773, %v3848, %v3852
      %v3854 = vrot.slane %v3348, 1
      %v3855 = vsel %vm3773, %v3850, %v3854
      %v3856 = vrot.slane %v3349, 1
      %v3857 = vsel %vm3773, %v3852, %v3856
      %v3858 = vrot.slane %v3350, 1
      %v3859 = vsel %vm3773, %v3854, %v3858
      %v3860 = vrot.slane %v3351, 1
      %v3861 = vsel %vm3773, %v3856, %v3860
      %v3862 = vrot.slane %v3352, 1
      %v3863 = vsel %vm3773, %v3858, %v3862
      %v3864 = vrot.slane %v3353, 1
      %v3865 = vsel %vm3773, %v3860, %v3864
      %v3866 = vrot.slane %v3354, 1
      %v3867 = vsel %vm3773, %v3862, %v3866
      %v3868 = vrot.slane %v3355, 1
      %v3869 = vsel %vm3773, %v3864, %v3868
      %v3870 = vrot.slane %v3356, 1
      %v3871 = vsel %vm3773, %v3866, %v3870
      %v3872 = vrot.slane %v3357, 1
      %v3873 = vsel %vm3773, %v3868, %v3872
      %v3874 = vrot.slane %v3358, 1
      %v3875 = vsel %vm3773, %v3870, %v3874
      %v3876 = vrot.slane %v3359, 1
      %v3877 = vsel %vm3773, %v3872, %v3876
      %v3878 = vrot.slane %v3360, 1
      %v3879 = vsel %vm3773, %v3874, %v3878
      %v3880 = vrot.slane %v3361, 1
      %v3881 = vsel %vm3773, %v3876, %v3880
      %v3882 = vrot.slane %v3362, 1
      %v3883 = vsel %vm3773, %v3878, %v3882
      %v3884 = vrot.slane %v3363, 1
      %v3885 = vsel %vm3773, %v3880, %v3884
      %v3886 = vrot.slane %v3364, 1
      %v3887 = vsel %vm3773, %v3882, %v3886
      %v3888 = vrot.slane %v3365, 1
      %v3889 = vsel %vm3773, %v3884, %v3888
      %v3890 = vrot.slane %v3366, 1
      %v3891 = vsel %vm3773, %v3886, %v3890
      %v3892 = vrot.slane %v3367, 1
      %v3893 = vsel %vm3773, %v3888, %v3892
      %v3894 = vrot.slane %v3368, 1
      %v3895 = vsel %vm3773, %v3890, %v3894
      %v3896 = vrot.slane %v3369, 1
      %v3897 = vsel %vm3773, %v3892, %v3896
      %v3898 = vrot.slane %v3370, 1
      %v3899 = vsel %vm3773, %v3894, %v3898
      %v3900 = vrot.slane %v3371, 1
      %v3901 = vsel %vm3773, %v3896, %v3900
      %v3902 = vrot.slane %v3372, 1
      %v3903 = vsel %vm3773, %v3898, %v3902
      %v4034 = vrot.slane %v3474, 4
      %v4035 = vrot.slane %v3476, 4
      %v4036 = vsel %vm3377, %v4034, %v4035
      %v4037 = vrot.slane %v3475, 4
      %v4038 = vrot.slane %v3477, 4
      %v4039 = vsel %vm3377, %v4037, %v4038
      %v4040 = vrot.slane %v3478, 4
      %v4041 = vsel %vm3377, %v4035, %v4040
      %v4042 = vrot.slane %v3479, 4
      %v4043 = vsel %vm3377, %v4038, %v4042
      %v4044 = vrot.slane %v3480, 4
      %v4045 = vsel %vm3377, %v4040, %v4044
      %v4046 = vrot.slane %v3481, 4
      %v4047 = vsel %vm3377, %v4042, %v4046
      %v4048 = vrot.slane %v3482, 4
      %v4049 = vsel %vm3377, %v4044, %v4048
      %v4050 = vrot.slane %v3483, 4
      %v4051 = vsel %vm3377, %v4046, %v4050
      %v4052 = vrot.slane %v3484, 4
      %v4053 = vsel %vm3377, %v4048, %v4052
      %v4054 = vrot.slane %v3485, 4
      %v4055 = vsel %vm3377, %v4050, %v4054
      %v4056 = vrot.slane %v3486, 4
      %v4057 = vsel %vm3377, %v4052, %v4056
      %v4058 = vrot.slane %v3487, 4
      %v4059 = vsel %vm3377, %v4054, %v4058
      %v4060 = vrot.slane %v3488, 4
      %v4061 = vsel %vm3377, %v4056, %v4060
      %v4062 = vrot.slane %v3489, 4
      %v4063 = vsel %vm3377, %v4058, %v4062
      %v4064 = vrot.slane %v3490, 4
      %v4065 = vsel %vm3377, %v4060, %v4064
      %v4066 = vrot.slane %v3491, 4
      %v4067 = vsel %vm3377, %v4062, %v4066
      %v4068 = vrot.slane %v3492, 4
      %v4069 = vsel %vm3377, %v4064, %v4068
      %v4070 = vrot.slane %v3493, 4
      %v4071 = vsel %vm3377, %v4066, %v4070
      %v4072 = vrot.slane %v3494, 4
      %v4073 = vsel %vm3377, %v4068, %v4072
      %v4074 = vrot.slane %v3495, 4
      %v4075 = vsel %vm3377, %v4070, %v4074
      %v4076 = vrot.slane %v3496, 4
      %v4077 = vsel %vm3377, %v4072, %v4076
      %v4078 = vrot.slane %v3497, 4
      %v4079 = vsel %vm3377, %v4074, %v4078
      %v4080 = vrot.slane %v3498, 4
      %v4081 = vsel %vm3377, %v4076, %v4080
      %v4082 = vrot.slane %v3499, 4
      %v4083 = vsel %vm3377, %v4078, %v4082
      %v4084 = vrot.slane %v3500, 4
      %v4085 = vsel %vm3377, %v4080, %v4084
      %v4086 = vrot.slane %v3501, 4
      %v4087 = vsel %vm3377, %v4082, %v4086
      %v4088 = vrot.slane %v3502, 4
      %v4089 = vsel %vm3377, %v4084, %v4088
      %v4090 = vrot.slane %v3503, 4
      %v4091 = vsel %vm3377, %v4086, %v4090
      %v4092 = vrot.slane %v3504, 4
      %v4093 = vsel %vm3377, %v4088, %v4092
      %v4094 = vrot.slane %v3505, 4
      %v4095 = vsel %vm3377, %v4090, %v4094
      %v4096 = vrot.slane %v3506, 4
      %v4097 = vsel %vm3377, %v4092, %v4096
      %v4098 = vrot.slane %v3507, 4
      %v4099 = vsel %vm3377, %v4094, %v4098
      %v4100 = vrot.slane %v3508, 4
      %v4101 = vsel %vm3377, %v4096, %v4100
      %v4102 = vrot.slane %v3509, 4
      %v4103 = vsel %vm3377, %v4098, %v4102
      %v4104 = vrot.slane %v3510, 4
      %v4105 = vsel %vm3377, %v4100, %v4104
      %v4106 = vrot.slane %v3511, 4
      %v4107 = vsel %vm3377, %v4102, %v4106
      %v4108 = vrot.slane %v3512, 4
      %v4109 = vsel %vm3377, %v4104, %v4108
      %v4110 = vrot.slane %v3513, 4
      %v4111 = vsel %vm3377, %v4106, %v4110
      %v4112 = vrot.slane %v3514, 4
      %v4113 = vsel %vm3377, %v4108, %v4112
      %v4114 = vrot.slane %v3515, 4
      %v4115 = vsel %vm3377, %v4110, %v4114
      %v4116 = vrot.slane %v3516, 4
      %v4117 = vsel %vm3377, %v4112, %v4116
      %v4118 = vrot.slane %v3517, 4
      %v4119 = vsel %vm3377, %v4114, %v4118
      %v4120 = vrot.slane %v3518, 4
      %v4121 = vsel %vm3377, %v4116, %v4120
      %v4122 = vrot.slane %v3519, 4
      %v4123 = vsel %vm3377, %v4118, %v4122
      %v4124 = vrot.slane %v3520, 4
      %v4125 = vsel %vm3377, %v4120, %v4124
      %v4126 = vrot.slane %v3521, 4
      %v4127 = vsel %vm3377, %v4122, %v4126
      %v4128 = vrot.slane %v3522, 4
      %v4129 = vsel %vm3377, %v4124, %v4128
      %v4130 = vrot.slane %v3523, 4
      %v4131 = vsel %vm3377, %v4126, %v4130
      %v4132 = vrot.slane %v3524, 4
      %v4133 = vsel %vm3377, %v4128, %v4132
      %v4134 = vrot.slane %v3525, 4
      %v4135 = vsel %vm3377, %v4130, %v4134
      %v4136 = vrot.slane %v3526, 4
      %v4137 = vsel %vm3377, %v4132, %v4136
      %v4138 = vrot.slane %v3527, 4
      %v4139 = vsel %vm3377, %v4134, %v4138
      %v4140 = vrot.slane %v3528, 4
      %v4141 = vsel %vm3377, %v4136, %v4140
      %v4142 = vrot.slane %v3529, 4
      %v4143 = vsel %vm3377, %v4138, %v4142
      %v4144 = vrot.slane %v3530, 4
      %v4145 = vsel %vm3377, %v4140, %v4144
      %v4146 = vrot.slane %v3531, 4
      %v4147 = vsel %vm3377, %v4142, %v4146
      %v4148 = vrot.slane %v3532, 4
      %v4149 = vsel %vm3377, %v4144, %v4148
      %v4150 = vrot.slane %v3533, 4
      %v4151 = vsel %vm3377, %v4146, %v4150
      %v4152 = vrot.slane %v3534, 4
      %v4153 = vsel %vm3377, %v4148, %v4152
      %v4154 = vrot.slane %v3535, 4
      %v4155 = vsel %vm3377, %v4150, %v4154
      %v4156 = vrot.slane %v3536, 4
      %v4157 = vsel %vm3377, %v4152, %v4156
      %v4158 = vrot.slane %v3537, 4
      %v4159 = vsel %vm3377, %v4154, %v4158
      %v4160 = vrot.slane %v3538, 4
      %v4161 = vsel %vm3377, %v4156, %v4160
      %v4162 = vrot.slane %v3539, 4
      %v4163 = vsel %vm3377, %v4158, %v4162
      %vm4294 = vcmask 1042432
      %v4295 = vrot.slane %v3641, 5
      %v4296 = vrot.slane %v3643, 5
      %v4297 = vsel %vm4294, %v4295, %v4296
      %v4298 = vrot.slane %v3642, 5
      %v4299 = vrot.slane %v3644, 5
      %v4300 = vsel %vm4294, %v4298, %v4299
      %v4301 = vrot.slane %v3645, 5
      %v4302 = vsel %vm4294, %v4296, %v4301
      %v4303 = vrot.slane %v3646, 5
      %v4304 = vsel %vm4294, %v4299, %v4303
      %v4305 = vrot.slane %v3647, 5
      %v4306 = vsel %vm4294, %v4301, %v4305
      %v4307 = vrot.slane %v3648, 5
      %v4308 = vsel %vm4294, %v4303, %v4307
      %v4309 = vrot.slane %v3649, 5
      %v4310 = vsel %vm4294, %v4305, %v4309
      %v4311 = vrot.slane %v3650, 5
      %v4312 = vsel %vm4294, %v4307, %v4311
      %v4313 = vrot.slane %v3651, 5
      %v4314 = vsel %vm4294, %v4309, %v4313
      %v4315 = vrot.slane %v3652, 5
      %v4316 = vsel %vm4294, %v4311, %v4315
      %v4317 = vrot.slane %v3653, 5
      %v4318 = vsel %vm4294, %v4313, %v4317
      %v4319 = vrot.slane %v3654, 5
      %v4320 = vsel %vm4294, %v4315, %v4319
      %v4321 = vrot.slane %v3655, 5
      %v4322 = vsel %vm4294, %v4317, %v4321
      %v4323 = vrot.slane %v3656, 5
      %v4324 = vsel %vm4294, %v4319, %v4323
      %v4325 = vrot.slane %v3657, 5
      %v4326 = vsel %vm4294, %v4321, %v4325
      %v4327 = vrot.slane %v3658, 5
      %v4328 = vsel %vm4294, %v4323, %v4327
      %v4329 = vrot.slane %v3659, 5
      %v4330 = vsel %vm4294, %v4325, %v4329
      %v4331 = vrot.slane %v3660, 5
      %v4332 = vsel %vm4294, %v4327, %v4331
      %v4333 = vrot.slane %v3661, 5
      %v4334 = vsel %vm4294, %v4329, %v4333
      %v4335 = vrot.slane %v3662, 5
      %v4336 = vsel %vm4294, %v4331, %v4335
      %v4337 = vrot.slane %v3663, 5
      %v4338 = vsel %vm4294, %v4333, %v4337
      %v4339 = vrot.slane %v3664, 5
      %v4340 = vsel %vm4294, %v4335, %v4339
      %v4341 = vrot.slane %v3665, 5
      %v4342 = vsel %vm4294, %v4337, %v4341
      %v4343 = vrot.slane %v3666, 5
      %v4344 = vsel %vm4294, %v4339, %v4343
      %v4345 = vrot.slane %v3667, 5
      %v4346 = vsel %vm4294, %v4341, %v4345
      %v4347 = vrot.slane %v3668, 5
      %v4348 = vsel %vm4294, %v4343, %v4347
      %v4349 = vrot.slane %v3669, 5
      %v4350 = vsel %vm4294, %v4345, %v4349
      %v4351 = vrot.slane %v3670, 5
      %v4352 = vsel %vm4294, %v4347, %v4351
      %v4353 = vrot.slane %v3671, 5
      %v4354 = vsel %vm4294, %v4349, %v4353
      %v4355 = vrot.slane %v3672, 5
      %v4356 = vsel %vm4294, %v4351, %v4355
      %v4357 = vrot.slane %v3673, 5
      %v4358 = vsel %vm4294, %v4353, %v4357
      %v4359 = vrot.slane %v3674, 5
      %v4360 = vsel %vm4294, %v4355, %v4359
      %v4361 = vrot.slane %v3675, 5
      %v4362 = vsel %vm4294, %v4357, %v4361
      %v4363 = vrot.slane %v3676, 5
      %v4364 = vsel %vm4294, %v4359, %v4363
      %v4365 = vrot.slane %v3677, 5
      %v4366 = vsel %vm4294, %v4361, %v4365
      %v4367 = vrot.slane %v3678, 5
      %v4368 = vsel %vm4294, %v4363, %v4367
      %v4369 = vrot.slane %v3679, 5
      %v4370 = vsel %vm4294, %v4365, %v4369
      %v4371 = vrot.slane %v3680, 5
      %v4372 = vsel %vm4294, %v4367, %v4371
      %v4373 = vrot.slane %v3681, 5
      %v4374 = vsel %vm4294, %v4369, %v4373
      %v4375 = vrot.slane %v3682, 5
      %v4376 = vsel %vm4294, %v4371, %v4375
      %v4377 = vrot.slane %v3683, 5
      %v4378 = vsel %vm4294, %v4373, %v4377
      %v4379 = vrot.slane %v3684, 5
      %v4380 = vsel %vm4294, %v4375, %v4379
      %v4381 = vrot.slane %v3685, 5
      %v4382 = vsel %vm4294, %v4377, %v4381
      %v4383 = vrot.slane %v3686, 5
      %v4384 = vsel %vm4294, %v4379, %v4383
      %v4385 = vrot.slane %v3687, 5
      %v4386 = vsel %vm4294, %v4381, %v4385
      %v4387 = vrot.slane %v3688, 5
      %v4388 = vsel %vm4294, %v4383, %v4387
      %v4389 = vrot.slane %v3689, 5
      %v4390 = vsel %vm4294, %v4385, %v4389
      %v4391 = vrot.slane %v3690, 5
      %v4392 = vsel %vm4294, %v4387, %v4391
      %v4393 = vrot.slane %v3691, 5
      %v4394 = vsel %vm4294, %v4389, %v4393
      %v4395 = vrot.slane %v3692, 5
      %v4396 = vsel %vm4294, %v4391, %v4395
      %v4397 = vrot.slane %v3693, 5
      %v4398 = vsel %vm4294, %v4393, %v4397
      %v4399 = vrot.slane %v3694, 5
      %v4400 = vsel %vm4294, %v4395, %v4399
      %v4401 = vrot.slane %v3695, 5
      %v4402 = vsel %vm4294, %v4397, %v4401
      %v4403 = vrot.slane %v3696, 5
      %v4404 = vsel %vm4294, %v4399, %v4403
      %v4405 = vrot.slane %v3697, 5
      %v4406 = vsel %vm4294, %v4401, %v4405
      %v4407 = vrot.slane %v3698, 5
      %v4408 = vsel %vm4294, %v4403, %v4407
      %v4409 = vrot.slane %v3699, 5
      %v4410 = vsel %vm4294, %v4405, %v4409
      %v4411 = vrot.slane %v3700, 5
      %v4412 = vsel %vm4294, %v4407, %v4411
      %v4413 = vrot.slane %v3701, 5
      %v4414 = vsel %vm4294, %v4409, %v4413
      %v4415 = vrot.slane %v3702, 5
      %v4416 = vsel %vm4294, %v4411, %v4415
      %v4417 = vrot.slane %v3703, 5
      %v4418 = vsel %vm4294, %v4413, %v4417
      %v4419 = vrot.slane %v3704, 5
      %v4420 = vsel %vm4294, %v4415, %v4419
      %v4421 = vrot.slane %v3705, 5
      %v4422 = vsel %vm4294, %v4417, %v4421
      %v4423 = vrot.slane %v3706, 5
      %v4424 = vsel %vm4294, %v4419, %v4423
      %v4489 = vld [vmem:[%s5] sm:$0xff]
      %v4490 = vld [vmem:[%s5 + $0x8] sm:$0xff]
      %v4491 = vld [vmem:[%s5 + $0x10] sm:$0xff]
      %v4492 = vld [vmem:[%s5 + $0x18] sm:$0xff]
      %v4493 = vld [vmem:[%s5 + $0x20] sm:$0xff]
      %v4494 = vld [vmem:[%s5 + $0x28] sm:$0xff]
      %v4495 = vld [vmem:[%s5 + $0x30] sm:$0xff]
      %v4496 = vld [vmem:[%s5 + $0x38] sm:$0xff]
      %v4497 = vld [vmem:[%s5 + $0x40] sm:$0xff]
      %v4498 = vld [vmem:[%s5 + $0x48] sm:$0xff]
      %v4499 = vld [vmem:[%s5 + $0x50] sm:$0xff]
      %v4500 = vld [vmem:[%s5 + $0x58] sm:$0xff]
      %v4501 = vld [vmem:[%s5 + $0x60] sm:$0xff]
      %v4502 = vld [vmem:[%s5 + $0x68] sm:$0xff]
      %v4503 = vld [vmem:[%s5 + $0x70] sm:$0xff]
      %v4504 = vld [vmem:[%s5 + $0x78] sm:$0xff]
      %v4505 = vld [vmem:[%s5 + $0x80] sm:$0xff]
      %v4506 = vld [vmem:[%s5 + $0x88] sm:$0xff]
      %v4507 = vld [vmem:[%s5 + $0x90] sm:$0xff]
      %v4508 = vld [vmem:[%s5 + $0x98] sm:$0xff]
      %v4509 = vld [vmem:[%s5 + $0xa0] sm:$0xff]
      %v4510 = vld [vmem:[%s5 + $0xa8] sm:$0xff]
      %v4511 = vld [vmem:[%s5 + $0xb0] sm:$0xff]
      %v4512 = vld [vmem:[%s5 + $0xb8] sm:$0xff]
      %v4513 = vld [vmem:[%s5 + $0xc0] sm:$0xff]
      %v4514 = vld [vmem:[%s5 + $0xc8] sm:$0xff]
      %v4515 = vld [vmem:[%s5 + $0xd0] sm:$0xff]
      %v4516 = vld [vmem:[%s5 + $0xd8] sm:$0xff]
      %v4517 = vld [vmem:[%s5 + $0xe0] sm:$0xff]
      %v4518 = vld [vmem:[%s5 + $0xe8] sm:$0xff]
      %v4519 = vld [vmem:[%s5 + $0xf0] sm:$0xff]
      %v4520 = vld [vmem:[%s5 + $0xf8] sm:$0xff]
      %v4521 = vld [vmem:[%s5 + $0x100] sm:$0xff]
      %v4522 = vld [vmem:[%s5 + $0x108] sm:$0xff]
      %v4523 = vld [vmem:[%s5 + $0x110] sm:$0xff]
      %v4524 = vld [vmem:[%s5 + $0x118] sm:$0xff]
      %v4525 = vld [vmem:[%s5 + $0x120] sm:$0xff]
      %v4526 = vld [vmem:[%s5 + $0x128] sm:$0xff]
      %v4527 = vld [vmem:[%s5 + $0x130] sm:$0xff]
      %v4528 = vld [vmem:[%s5 + $0x138] sm:$0xff]
      %v4529 = vld [vmem:[%s5 + $0x140] sm:$0xff]
      %v4530 = vld [vmem:[%s5 + $0x148] sm:$0xff]
      %v4531 = vld [vmem:[%s5 + $0x150] sm:$0xff]
      %v4532 = vld [vmem:[%s5 + $0x158] sm:$0xff]
      %v4533 = vld [vmem:[%s5 + $0x160] sm:$0xff]
      %v4534 = vld [vmem:[%s5 + $0x168] sm:$0xff]
      %v4535 = vld [vmem:[%s5 + $0x170] sm:$0xff]
      %v4536 = vld [vmem:[%s5 + $0x178] sm:$0xff]
      %v4537 = vld [vmem:[%s5 + $0x180] sm:$0xff]
      %v4538 = vld [vmem:[%s5 + $0x188] sm:$0xff]
      %v4539 = vld [vmem:[%s5 + $0x190] sm:$0xff]
      %v4540 = vld [vmem:[%s5 + $0x198] sm:$0xff]
      %v4541 = vld [vmem:[%s5 + $0x1a0] sm:$0xff]
      %v4542 = vld [vmem:[%s5 + $0x1a8] sm:$0xff]
      %v4543 = vld [vmem:[%s5 + $0x1b0] sm:$0xff]
      %v4544 = vld [vmem:[%s5 + $0x1b8] sm:$0xff]
      %v4545 = vld [vmem:[%s5 + $0x1c0] sm:$0xff]
      %v4546 = vld [vmem:[%s5 + $0x1c8] sm:$0xff]
      %v4547 = vld [vmem:[%s5 + $0x1d0] sm:$0xff]
      %v4548 = vld [vmem:[%s5 + $0x1d8] sm:$0xff]
      %v4549 = vld [vmem:[%s5 + $0x1e0] sm:$0xff]
      %v4550 = vld [vmem:[%s5 + $0x1e8] sm:$0xff]
      %v4551 = vld [vmem:[%s5 + $0x1f0] sm:$0xff]
      %v4552 = vld [vmem:[%s5 + $0x1f8] sm:$0xff]
      %v4553 = vld [vmem:[%s5 + $0x200] sm:$0xff]
      %v4554 = vld [vmem:[%s5 + $0x208] sm:$0xff]
      %v4555 = vld [vmem:[%s5 + $0x210] sm:$0xff]
      %v4556 = vld [vmem:[%s5 + $0x218] sm:$0xff]
      %v4557 = vld [vmem:[%s5 + $0x220] sm:$0xff]
      %v4558 = vld [vmem:[%s5 + $0x228] sm:$0xff]
      %v4559 = vld [vmem:[%s5 + $0x230] sm:$0xff]
      %v4560 = vld [vmem:[%s5 + $0x238] sm:$0xff]
      %v4561 = vld [vmem:[%s5 + $0x240] sm:$0xff]
      %v4562 = vld [vmem:[%s5 + $0x248] sm:$0xff]
      %v4563 = vld [vmem:[%s5 + $0x250] sm:$0xff]
      %v4564 = vld [vmem:[%s5 + $0x258] sm:$0xff]
      %v4565 = vld [vmem:[%s5 + $0x260] sm:$0xff]
      %v4566 = vld [vmem:[%s5 + $0x268] sm:$0xff]
      %v4567 = vld [vmem:[%s5 + $0x270] sm:$0xff]
      %v4568 = vld [vmem:[%s5 + $0x278] sm:$0xff]
      %v4569 = vld [vmem:[%s5 + $0x280] sm:$0xff]
      %v4570 = vld [vmem:[%s5 + $0x288] sm:$0xff]
      %v4571 = vld [vmem:[%s5 + $0x290] sm:$0xff]
      %v4572 = vld [vmem:[%s5 + $0x298] sm:$0xff]
      %v4573 = vld [vmem:[%s5 + $0x2a0] sm:$0xff]
      %v4574 = vld [vmem:[%s5 + $0x2a8] sm:$0xff]
      %v4575 = vld [vmem:[%s5 + $0x2b0] sm:$0xff]
      %v4576 = vld [vmem:[%s5 + $0x2b8] sm:$0xff]
      %v4577 = vld [vmem:[%s5 + $0x2c0] sm:$0xff]
      %v4578 = vld [vmem:[%s5 + $0x2c8] sm:$0xff]
      %v4579 = vld [vmem:[%s5 + $0x2d0] sm:$0xff]
      %v4580 = vld [vmem:[%s5 + $0x2d8] sm:$0xff]
      %v4581 = vld [vmem:[%s5 + $0x2e0] sm:$0xff]
      %v4582 = vld [vmem:[%s5 + $0x2e8] sm:$0xff]
      %v4583 = vld [vmem:[%s5 + $0x2f0] sm:$0xff]
      %v4584 = vld [vmem:[%s5 + $0x2f8] sm:$0xff]
      %v4585 = vld [vmem:[%s5 + $0x300] sm:$0xff]
      %v4586 = vld [vmem:[%s5 + $0x308] sm:$0xff]
      %v4587 = vld [vmem:[%s5 + $0x310] sm:$0xff]
      %v4588 = vld [vmem:[%s5 + $0x318] sm:$0xff]
      %v4589 = vld [vmem:[%s5 + $0x320] sm:$0xff]
      %v4590 = vld [vmem:[%s5 + $0x328] sm:$0xff]
      %v4591 = vld [vmem:[%s5 + $0x330] sm:$0xff]
      %v4592 = vld [vmem:[%s5 + $0x338] sm:$0xff]
      %v4593 = vld [vmem:[%s5 + $0x340] sm:$0xff]
      %v4594 = vld [vmem:[%s5 + $0x348] sm:$0xff]
      %v4595 = vld [vmem:[%s5 + $0x350] sm:$0xff]
      %v4596 = vld [vmem:[%s5 + $0x358] sm:$0xff]
      %v4597 = vld [vmem:[%s5 + $0x360] sm:$0xff]
      %v4598 = vld [vmem:[%s5 + $0x368] sm:$0xff]
      %v4599 = vld [vmem:[%s5 + $0x370] sm:$0xff]
      %v4600 = vld [vmem:[%s5 + $0x378] sm:$0xff]
      %v4601 = vld [vmem:[%s5 + $0x380] sm:$0xff]
      %v4602 = vld [vmem:[%s5 + $0x388] sm:$0xff]
      %v4603 = vld [vmem:[%s5 + $0x390] sm:$0xff]
      %v4604 = vld [vmem:[%s5 + $0x398] sm:$0xff]
      %v4605 = vld [vmem:[%s5 + $0x3a0] sm:$0xff]
      %v4606 = vld [vmem:[%s5 + $0x3a8] sm:$0xff]
      %v4607 = vld [vmem:[%s5 + $0x3b0] sm:$0xff]
      %v4608 = vld [vmem:[%s5 + $0x3b8] sm:$0xff]
      %v4609 = vld [vmem:[%s5 + $0x3c0] sm:$0xff]
      %v4610 = vld [vmem:[%s5 + $0x3c8] sm:$0xff]
      %v4611 = vld [vmem:[%s5 + $0x3d0] sm:$0xff]
      %v4612 = vld [vmem:[%s5 + $0x3d8] sm:$0xff]
      %v4613 = vld [vmem:[%s5 + $0x3e0] sm:$0xff]
      %v4614 = vld [vmem:[%s5 + $0x3e8] sm:$0xff]
      %v4615 = vld [vmem:[%s5 + $0x3f0] sm:$0xff]
      %v4616 = vld [vmem:[%s5 + $0x3f8] sm:$0xff]
      %v4617 = vld [vmem:[%s5 + $0x400] sm:$0xff]
      %v4618 = vld [vmem:[%s5 + $0x408] sm:$0xff]
      %v4619 = vld [vmem:[%s5 + $0x410] sm:$0xff]
      %v4620 = vld [vmem:[%s5 + $0x418] sm:$0xff]
      %v4621 = vld [vmem:[%s5 + $0x420] sm:$0xff]
      %v4622 = vld [vmem:[%s5 + $0x428] sm:$0xff]
      %v4623 = vld [vmem:[%s5 + $0x430] sm:$0xff]
      %v4624 = vld [vmem:[%s5 + $0x438] sm:$0xff]
      %v4625 = vld [vmem:[%s5 + $0x440] sm:$0xff]
      %v4626 = vld [vmem:[%s5 + $0x448] sm:$0xff]
      %v4627 = vld [vmem:[%s5 + $0x450] sm:$0xff]
      %v4628 = vld [vmem:[%s5 + $0x458] sm:$0xff]
      %v4629 = vld [vmem:[%s5 + $0x460] sm:$0xff]
      %v4630 = vld [vmem:[%s5 + $0x468] sm:$0xff]
      %v4631 = vld [vmem:[%s5 + $0x470] sm:$0xff]
      %v4632 = vld [vmem:[%s5 + $0x478] sm:$0xff]
      %v4633 = vld [vmem:[%s5 + $0x480] sm:$0xff]
      %v4634 = vld [vmem:[%s5 + $0x488] sm:$0xff]
      %v4635 = vld [vmem:[%s5 + $0x490] sm:$0xff]
      %v4636 = vld [vmem:[%s5 + $0x498] sm:$0xff]
      %v4637 = vld [vmem:[%s5 + $0x4a0] sm:$0xff]
      %v4638 = vld [vmem:[%s5 + $0x4a8] sm:$0xff]
      %v4639 = vld [vmem:[%s5 + $0x4b0] sm:$0xff]
      %v4640 = vld [vmem:[%s5 + $0x4b8] sm:$0xff]
      %v4641 = vld [vmem:[%s5 + $0x4c0] sm:$0xff]
      %v4642 = vld [vmem:[%s5 + $0x4c8] sm:$0xff]
      %v4643 = vld [vmem:[%s5 + $0x4d0] sm:$0xff]
      %v4644 = vld [vmem:[%s5 + $0x4d8] sm:$0xff]
      %v4645 = vld [vmem:[%s5 + $0x4e0] sm:$0xff]
      %v4646 = vld [vmem:[%s5 + $0x4e8] sm:$0xff]
      %v4647 = vld [vmem:[%s5 + $0x4f0] sm:$0xff]
      %v4648 = vld [vmem:[%s5 + $0x4f8] sm:$0xff]
      %v4649 = vld [vmem:[%s5 + $0x500] sm:$0xff]
      %v4650 = vld [vmem:[%s5 + $0x508] sm:$0xff]
      %v4651 = vld [vmem:[%s5 + $0x510] sm:$0xff]
      %v4652 = vld [vmem:[%s5 + $0x518] sm:$0xff]
      %v4653 = vld [vmem:[%s5 + $0x520] sm:$0xff]
      %v4654 = vld [vmem:[%s5 + $0x528] sm:$0xff]
      %v4655 = vld [vmem:[%s5 + $0x530] sm:$0xff]
      %v4656 = vld [vmem:[%s5 + $0x538] sm:$0xff]
      %v4657 = vld [vmem:[%s5 + $0x540] sm:$0xff]
      %v4658 = vld [vmem:[%s5 + $0x548] sm:$0xff]
      %v4659 = vld [vmem:[%s5 + $0x550] sm:$0xff]
      %v4660 = vld [vmem:[%s5 + $0x558] sm:$0xff]
      %v4661 = vld [vmem:[%s5 + $0x560] sm:$0xff]
      %v4662 = vld [vmem:[%s5 + $0x568] sm:$0xff]
      %v4663 = vld [vmem:[%s5 + $0x570] sm:$0xff]
      %v4664 = vld [vmem:[%s5 + $0x578] sm:$0xff]
      %v4665 = vld [vmem:[%s5 + $0x580] sm:$0xff]
      %v4666 = vld [vmem:[%s5 + $0x588] sm:$0xff]
      %v4667 = vld [vmem:[%s5 + $0x590] sm:$0xff]
      %v4668 = vld [vmem:[%s5 + $0x598] sm:$0xff]
      %v4669 = vld [vmem:[%s5 + $0x5a0] sm:$0xff]
      %v4670 = vld [vmem:[%s5 + $0x5a8] sm:$0xff]
      %v4671 = vld [vmem:[%s5 + $0x5b0] sm:$0xff]
      %v4672 = vld [vmem:[%s5 + $0x5b8] sm:$0xff]
      %v4673 = vld [vmem:[%s5 + $0x5c0] sm:$0xff]
      %v4674 = vld [vmem:[%s5 + $0x5c8] sm:$0xff]
      %v4675 = vld [vmem:[%s5 + $0x5d0] sm:$0xff]
      %v4676 = vld [vmem:[%s5 + $0x5d8] sm:$0xff]
      %v4677 = vld [vmem:[%s5 + $0x5e0] sm:$0xff]
      %v4678 = vld [vmem:[%s5 + $0x5e8] sm:$0xff]
      %v4679 = vld [vmem:[%s5 + $0x5f0] sm:$0xff]
      %v4680 = vld [vmem:[%s5 + $0x5f8] sm:$0xff]
      %v4681 = vld [vmem:[%s5 + $0x600] sm:$0xff]
      %v4682 = vld [vmem:[%s5 + $0x608] sm:$0xff]
      %v4683 = vld [vmem:[%s5 + $0x610] sm:$0xff]
      %v4684 = vld [vmem:[%s5 + $0x618] sm:$0xff]
      %v4685 = vld [vmem:[%s5 + $0x620] sm:$0xff]
      %v4686 = vld [vmem:[%s5 + $0x628] sm:$0xff]
      %v4687 = vld [vmem:[%s5 + $0x630] sm:$0xff]
      %v4688 = vld [vmem:[%s5 + $0x638] sm:$0xff]
      %v4689 = vld [vmem:[%s5 + $0x640] sm:$0xff]
      %v4690 = vld [vmem:[%s5 + $0x648] sm:$0xff]
      %v4691 = vld [vmem:[%s5 + $0x650] sm:$0xff]
      %v4692 = vld [vmem:[%s5 + $0x658] sm:$0xff]
      %v4693 = vld [vmem:[%s5 + $0x660] sm:$0xff]
      %v4694 = vld [vmem:[%s5 + $0x668] sm:$0xff]
      %v4695 = vld [vmem:[%s5 + $0x670] sm:$0xff]
      %v4696 = vld [vmem:[%s5 + $0x678] sm:$0xff]
      %v4697 = vld [vmem:[%s5 + $0x680] sm:$0xff]
      %v4698 = vld [vmem:[%s5 + $0x688] sm:$0xff]
      %v4699 = vld [vmem:[%s5 + $0x690] sm:$0xff]
      %v4700 = vld [vmem:[%s5 + $0x698] sm:$0xff]
      %v4701 = vld [vmem:[%s5 + $0x6a0] sm:$0xff]
      %v4702 = vld [vmem:[%s5 + $0x6a8] sm:$0xff]
      %v4703 = vld [vmem:[%s5 + $0x6b0] sm:$0xff]
      %v4704 = vld [vmem:[%s5 + $0x6b8] sm:$0xff]
      %v4705 = vld [vmem:[%s5 + $0x6c0] sm:$0xff]
      %v4706 = vld [vmem:[%s5 + $0x6c8] sm:$0xff]
      %v4707 = vld [vmem:[%s5 + $0x6d0] sm:$0xff]
      %v4708 = vld [vmem:[%s5 + $0x6d8] sm:$0xff]
      %v4709 = vld [vmem:[%s5 + $0x6e0] sm:$0xff]
      %v4710 = vld [vmem:[%s5 + $0x6e8] sm:$0xff]
      %v4711 = vld [vmem:[%s5 + $0x6f0] sm:$0xff]
      %v4712 = vld [vmem:[%s5 + $0x6f8] sm:$0xff]
      %v4713 = vld [vmem:[%s5 + $0x700] sm:$0xff]
      %v4714 = vld [vmem:[%s5 + $0x708] sm:$0xff]
      %v4715 = vld [vmem:[%s5 + $0x710] sm:$0xff]
      %v4716 = vld [vmem:[%s5 + $0x718] sm:$0xff]
      %v4717 = vld [vmem:[%s5 + $0x720] sm:$0xff]
      %v4718 = vld [vmem:[%s5 + $0x728] sm:$0xff]
      %v4719 = vld [vmem:[%s5 + $0x730] sm:$0xff]
      %v4720 = vld [vmem:[%s5 + $0x738] sm:$0xff]
      %v4721 = vld [vmem:[%s5 + $0x740] sm:$0xff]
      %v4722 = vld [vmem:[%s5 + $0x748] sm:$0xff]
      %v4723 = vld [vmem:[%s5 + $0x750] sm:$0xff]
      %v4724 = vld [vmem:[%s5 + $0x758] sm:$0xff]
      %v4725 = vld [vmem:[%s5 + $0x760] sm:$0xff]
      %v4726 = vld [vmem:[%s5 + $0x768] sm:$0xff]
      %v4727 = vld [vmem:[%s5 + $0x770] sm:$0xff]
      %v4728 = vld [vmem:[%s5 + $0x778] sm:$0xff]
      %v4729 = vld [vmem:[%s5 + $0x780] sm:$0xff]
      %v4730 = vld [vmem:[%s5 + $0x788] sm:$0xff]
      %v4731 = vld [vmem:[%s5 + $0x790] sm:$0xff]
      %v4732 = vld [vmem:[%s5 + $0x798] sm:$0xff]
      %v4733 = vld [vmem:[%s5 + $0x7a0] sm:$0xff]
      %v4734 = vld [vmem:[%s5 + $0x7a8] sm:$0xff]
      %v4735 = vld [vmem:[%s5 + $0x7b0] sm:$0xff]
      %v4736 = vld [vmem:[%s5 + $0x7b8] sm:$0xff]
      %v4737 = vld [vmem:[%s5 + $0x7c0] sm:$0xff]
      %v4738 = vld [vmem:[%s5 + $0x7c8] sm:$0xff]
      %v4739 = vld [vmem:[%s5 + $0x7d0] sm:$0xff]
      %v4740 = vld [vmem:[%s5 + $0x7d8] sm:$0xff]
      %v4741 = vld [vmem:[%s5 + $0x7e0] sm:$0xff]
      %v4742 = vld [vmem:[%s5 + $0x7e8] sm:$0xff]
      %v4743 = vld [vmem:[%s5 + $0x7f0] sm:$0xff]
      %v4744 = vld [vmem:[%s5 + $0x7f8] sm:$0xff]
      %v4745 = vld [vmem:[%s6] sm:$0x3]
      %v4747 = vperm.slane %v4745, 0
      %v4748 = vperm.slane %v4745, 1
      %4751 = vmatpush.msra.mxu0 %v4519
      %4752 = vmatpush.msra.mxu0 %v4517
      %4753 = vmatpush.msra.mxu0 %v4515
      %4754 = vmatpush.msra.mxu0 %v4513
      %4755 = vmatpush.msra.mxu0 %v4511
      %4756 = vmatpush.msra.mxu0 %v4509
      %4757 = vmatpush.msra.mxu0 %v4507
      %4758 = vmatpush.msra.mxu0 %v4505
      %4759 = vmatpush.msra.mxu0 %v4503
      %4760 = vmatpush.msra.mxu0 %v4501
      %4761 = vmatpush.msra.mxu0 %v4499
      %4762 = vmatpush.msra.mxu0 %v4497
      %4763 = vmatpush.msra.mxu0 %v4495
      %4764 = vmatpush.msra.mxu0 %v4493
      %4765 = vmatpush.msra.mxu0 %v4491
      %4766 = vmatpush.msra.mxu0 %v4489
      %4767 = vmatmul.f32.gmra.mxu0 %v3080
      %v4768 = vpop.f32.mrf.mxu0
      %v4769 = vadd.f32 %v4747, %v4768
      %4770 = vmatmul.f32.gmra.mxu0 %v3082
      %v4771 = vpop.f32.mrf.mxu0
      %v4772 = vadd.f32 %v4747, %v4771
      %4773 = vmatmul.f32.gmra.mxu0 %v3084
      %v4774 = vpop.f32.mrf.mxu0
      %v4775 = vadd.f32 %v4747, %v4774
      %4776 = vmatmul.f32.gmra.mxu0 %v3086
      %v4777 = vpop.f32.mrf.mxu0
      %v4778 = vadd.f32 %v4747, %v4777
      %4779 = vmatmul.f32.gmra.mxu0 %v3088
      %v4780 = vpop.f32.mrf.mxu0
      %v4781 = vadd.f32 %v4747, %v4780
      %4782 = vmatmul.f32.gmra.mxu0 %v3090
      %v4783 = vpop.f32.mrf.mxu0
      %v4784 = vadd.f32 %v4747, %v4783
      %4785 = vmatmul.f32.gmra.mxu0 %v3092
      %v4786 = vpop.f32.mrf.mxu0
      %v4787 = vadd.f32 %v4747, %v4786
      %4788 = vmatmul.f32.gmra.mxu0 %v3094
      %v4789 = vpop.f32.mrf.mxu0
      %v4790 = vadd.f32 %v4747, %v4789
      %4791 = vmatmul.f32.gmra.mxu0 %v3096
      %v4792 = vpop.f32.mrf.mxu0
      %v4793 = vadd.f32 %v4747, %v4792
      %4794 = vmatmul.f32.gmra.mxu0 %v3098
      %v4795 = vpop.f32.mrf.mxu0
      %v4796 = vadd.f32 %v4747, %v4795
      %4797 = vmatmul.f32.gmra.mxu0 %v3100
      %v4798 = vpop.f32.mrf.mxu0
      %v4799 = vadd.f32 %v4747, %v4798
      %4800 = vmatmul.f32.gmra.mxu0 %v3102
      %v4801 = vpop.f32.mrf.mxu0
      %v4802 = vadd.f32 %v4747, %v4801
      %4803 = vmatmul.f32.gmra.mxu0 %v3104
      %v4804 = vpop.f32.mrf.mxu0
      %v4805 = vadd.f32 %v4747, %v4804
      %4806 = vmatmul.f32.gmra.mxu0 %v3106
      %v4807 = vpop.f32.mrf.mxu0
      %v4808 = vadd.f32 %v4747, %v4807
      %4809 = vmatmul.f32.gmra.mxu0 %v3108
      %v4810 = vpop.f32.mrf.mxu0
      %v4811 = vadd.f32 %v4747, %v4810
      %4812 = vmatmul.f32.gmra.mxu0 %v3110
      %v4813 = vpop.f32.mrf.mxu0
      %v4814 = vadd.f32 %v4747, %v4813
      %4815 = vmatmul.f32.gmra.mxu0 %v3112
      %v4816 = vpop.f32.mrf.mxu0
      %v4817 = vadd.f32 %v4747, %v4816
      %4818 = vmatmul.f32.gmra.mxu0 %v3114
      %v4819 = vpop.f32.mrf.mxu0
      %v4820 = vadd.f32 %v4747, %v4819
      %4821 = vmatmul.f32.gmra.mxu0 %v3116
      %v4822 = vpop.f32.mrf.mxu0
      %v4823 = vadd.f32 %v4747, %v4822
      %4824 = vmatmul.f32.gmra.mxu0 %v3118
      %v4825 = vpop.f32.mrf.mxu0
      %v4826 = vadd.f32 %v4747, %v4825
      %4827 = vmatmul.f32.gmra.mxu0 %v3120
      %v4828 = vpop.f32.mrf.mxu0
      %v4829 = vadd.f32 %v4747, %v4828
      %4830 = vmatmul.f32.gmra.mxu0 %v3122
      %v4831 = vpop.f32.mrf.mxu0
      %v4832 = vadd.f32 %v4747, %v4831
      %4833 = vmatmul.f32.gmra.mxu0 %v3124
      %v4834 = vpop.f32.mrf.mxu0
      %v4835 = vadd.f32 %v4747, %v4834
      %4836 = vmatmul.f32.gmra.mxu0 %v3126
      %v4837 = vpop.f32.mrf.mxu0
      %v4838 = vadd.f32 %v4747, %v4837
      %4839 = vmatmul.f32.gmra.mxu0 %v3128
      %v4840 = vpop.f32.mrf.mxu0
      %v4841 = vadd.f32 %v4747, %v4840
      %4842 = vmatmul.f32.gmra.mxu0 %v3130
      %v4843 = vpop.f32.mrf.mxu0
      %v4844 = vadd.f32 %v4747, %v4843
      %4845 = vmatmul.f32.gmra.mxu0 %v3132
      %v4846 = vpop.f32.mrf.mxu0
      %v4847 = vadd.f32 %v4747, %v4846
      %4848 = vmatmul.f32.gmra.mxu0 %v3134
      %v4849 = vpop.f32.mrf.mxu0
      %v4850 = vadd.f32 %v4747, %v4849
      %4851 = vmatmul.f32.gmra.mxu0 %v3136
      %v4852 = vpop.f32.mrf.mxu0
      %v4853 = vadd.f32 %v4747, %v4852
      %4854 = vmatmul.f32.gmra.mxu0 %v3138
      %v4855 = vpop.f32.mrf.mxu0
      %v4856 = vadd.f32 %v4747, %v4855
      %4857 = vmatmul.f32.gmra.mxu0 %v3140
      %v4858 = vpop.f32.mrf.mxu0
      %v4859 = vadd.f32 %v4747, %v4858
      %4860 = vmatmul.f32.gmra.mxu0 %v3142
      %v4861 = vpop.f32.mrf.mxu0
      %v4862 = vadd.f32 %v4747, %v4861
      %4863 = vdwg.mxu0
      %4864 = vmatpush.msra.mxu0 %v4551
      %4865 = vmatpush.msra.mxu0 %v4549
      %4866 = vmatpush.msra.mxu0 %v4547
      %4867 = vmatpush.msra.mxu0 %v4545
      %4868 = vmatpush.msra.mxu0 %v4543
      %4869 = vmatpush.msra.mxu0 %v4541
      %4870 = vmatpush.msra.mxu0 %v4539
      %4871 = vmatpush.msra.mxu0 %v4537
      %4872 = vmatpush.msra.mxu0 %v4535
      %4873 = vmatpush.msra.mxu0 %v4533
      %4874 = vmatpush.msra.mxu0 %v4531
      %4875 = vmatpush.msra.mxu0 %v4529
      %4876 = vmatpush.msra.mxu0 %v4527
      %4877 = vmatpush.msra.mxu0 %v4525
      %4878 = vmatpush.msra.mxu0 %v4523
      %4879 = vmatpush.msra.mxu0 %v4521
      %4880 = vmatmul.f32.gmra.mxu0 %v3081
      %v4881 = vpop.f32.mrf.mxu0
      %v4882 = vadd.f32 %v4769, %v4881
      %4883 = vmatmul.f32.gmra.mxu0 %v3083
      %v4884 = vpop.f32.mrf.mxu0
      %v4885 = vadd.f32 %v4772, %v4884
      %4886 = vmatmul.f32.gmra.mxu0 %v3085
      %v4887 = vpop.f32.mrf.mxu0
      %v4888 = vadd.f32 %v4775, %v4887
      %4889 = vmatmul.f32.gmra.mxu0 %v3087
      %v4890 = vpop.f32.mrf.mxu0
      %v4891 = vadd.f32 %v4778, %v4890
      %4892 = vmatmul.f32.gmra.mxu0 %v3089
      %v4893 = vpop.f32.mrf.mxu0
      %v4894 = vadd.f32 %v4781, %v4893
      %4895 = vmatmul.f32.gmra.mxu0 %v3091
      %v4896 = vpop.f32.mrf.mxu0
      %v4897 = vadd.f32 %v4784, %v4896
      %4898 = vmatmul.f32.gmra.mxu0 %v3093
      %v4899 = vpop.f32.mrf.mxu0
      %v4900 = vadd.f32 %v4787, %v4899
      %4901 = vmatmul.f32.gmra.mxu0 %v3095
      %v4902 = vpop.f32.mrf.mxu0
      %v4903 = vadd.f32 %v4790, %v4902
      %4904 = vmatmul.f32.gmra.mxu0 %v3097
      %v4905 = vpop.f32.mrf.mxu0
      %v4906 = vadd.f32 %v4793, %v4905
      %4907 = vmatmul.f32.gmra.mxu0 %v3099
      %v4908 = vpop.f32.mrf.mxu0
      %v4909 = vadd.f32 %v4796, %v4908
      %4910 = vmatmul.f32.gmra.mxu0 %v3101
      %v4911 = vpop.f32.mrf.mxu0
      %v4912 = vadd.f32 %v4799, %v4911
      %4913 = vmatmul.f32.gmra.mxu0 %v3103
      %v4914 = vpop.f32.mrf.mxu0
      %v4915 = vadd.f32 %v4802, %v4914
      %4916 = vmatmul.f32.gmra.mxu0 %v3105
      %v4917 = vpop.f32.mrf.mxu0
      %v4918 = vadd.f32 %v4805, %v4917
      %4919 = vmatmul.f32.gmra.mxu0 %v3107
      %v4920 = vpop.f32.mrf.mxu0
      %v4921 = vadd.f32 %v4808, %v4920
      %4922 = vmatmul.f32.gmra.mxu0 %v3109
      %v4923 = vpop.f32.mrf.mxu0
      %v4924 = vadd.f32 %v4811, %v4923
      %4925 = vmatmul.f32.gmra.mxu0 %v3111
      %v4926 = vpop.f32.mrf.mxu0
      %v4927 = vadd.f32 %v4814, %v4926
      %4928 = vmatmul.f32.gmra.mxu0 %v3113
      %v4929 = vpop.f32.mrf.mxu0
      %v4930 = vadd.f32 %v4817, %v4929
      %4931 = vmatmul.f32.gmra.mxu0 %v3115
      %v4932 = vpop.f32.mrf.mxu0
      %v4933 = vadd.f32 %v4820, %v4932
      %4934 = vmatmul.f32.gmra.mxu0 %v3117
      %v4935 = vpop.f32.mrf.mxu0
      %v4936 = vadd.f32 %v4823, %v4935
      %4937 = vmatmul.f32.gmra.mxu0 %v3119
      %v4938 = vpop.f32.mrf.mxu0
      %v4939 = vadd.f32 %v4826, %v4938
      %4940 = vmatmul.f32.gmra.mxu0 %v3121
      %v4941 = vpop.f32.mrf.mxu0
      %v4942 = vadd.f32 %v4829, %v4941
      %4943 = vmatmul.f32.gmra.mxu0 %v3123
      %v4944 = vpop.f32.mrf.mxu0
      %v4945 = vadd.f32 %v4832, %v4944
      %4946 = vmatmul.f32.gmra.mxu0 %v3125
      %v4947 = vpop.f32.mrf.mxu0
      %v4948 = vadd.f32 %v4835, %v4947
      %4949 = vmatmul.f32.gmra.mxu0 %v3127
      %v4950 = vpop.f32.mrf.mxu0
      %v4951 = vadd.f32 %v4838, %v4950
      %4952 = vmatmul.f32.gmra.mxu0 %v3129
      %v4953 = vpop.f32.mrf.mxu0
      %v4954 = vadd.f32 %v4841, %v4953
      %4955 = vmatmul.f32.gmra.mxu0 %v3131
      %v4956 = vpop.f32.mrf.mxu0
      %v4957 = vadd.f32 %v4844, %v4956
      %4958 = vmatmul.f32.gmra.mxu0 %v3133
      %v4959 = vpop.f32.mrf.mxu0
      %v4960 = vadd.f32 %v4847, %v4959
      %4961 = vmatmul.f32.gmra.mxu0 %v3135
      %v4962 = vpop.f32.mrf.mxu0
      %v4963 = vadd.f32 %v4850, %v4962
      %4964 = vmatmul.f32.gmra.mxu0 %v3137
      %v4965 = vpop.f32.mrf.mxu0
      %v4966 = vadd.f32 %v4853, %v4965
      %4967 = vmatmul.f32.gmra.mxu0 %v3139
      %v4968 = vpop.f32.mrf.mxu0
      %v4969 = vadd.f32 %v4856, %v4968
      %4970 = vmatmul.f32.gmra.mxu0 %v3141
      %v4971 = vpop.f32.mrf.mxu0
      %v4972 = vadd.f32 %v4859, %v4971
      %4973 = vmatmul.f32.gmra.mxu0 %v3143
      %v4974 = vpop.f32.mrf.mxu0
      %v4975 = vadd.f32 %v4862, %v4974
      %4976 = vdwg.mxu0
      %4977 = vmatpush.msra.mxu0 %v4583
      %4978 = vmatpush.msra.mxu0 %v4581
      %4979 = vmatpush.msra.mxu0 %v4579
      %4980 = vmatpush.msra.mxu0 %v4577
      %4981 = vmatpush.msra.mxu0 %v4575
      %4982 = vmatpush.msra.mxu0 %v4573
      %4983 = vmatpush.msra.mxu0 %v4571
      %4984 = vmatpush.msra.mxu0 %v4569
      %4985 = vmatpush.msra.mxu0 %v4567
      %4986 = vmatpush.msra.mxu0 %v4565
      %4987 = vmatpush.msra.mxu0 %v4563
      %4988 = vmatpush.msra.mxu0 %v4561
      %4989 = vmatpush.msra.mxu0 %v4559
      %4990 = vmatpush.msra.mxu0 %v4557
      %4991 = vmatpush.msra.mxu0 %v4555
      %4992 = vmatpush.msra.mxu0 %v4553
      %4993 = vmatmul.f32.gmra.mxu0 %v3776
      %v4994 = vpop.f32.mrf.mxu0
      %v4995 = vadd.f32 %v4882, %v4994
      %4996 = vmatmul.f32.gmra.mxu0 %v3781
      %v4997 = vpop.f32.mrf.mxu0
      %v4998 = vadd.f32 %v4885, %v4997
      %4999 = vmatmul.f32.gmra.mxu0 %v3785
      %v5000 = vpop.f32.mrf.mxu0
      %v5001 = vadd.f32 %v4888, %v5000
      %5002 = vmatmul.f32.gmra.mxu0 %v3789
      %v5003 = vpop.f32.mrf.mxu0
      %v5004 = vadd.f32 %v4891, %v5003
      %5005 = vmatmul.f32.gmra.mxu0 %v3793
      %v5006 = vpop.f32.mrf.mxu0
      %v5007 = vadd.f32 %v4894, %v5006
      %5008 = vmatmul.f32.gmra.mxu0 %v3797
      %v5009 = vpop.f32.mrf.mxu0
      %v5010 = vadd.f32 %v4897, %v5009
      %5011 = vmatmul.f32.gmra.mxu0 %v3801
      %v5012 = vpop.f32.mrf.mxu0
      %v5013 = vadd.f32 %v4900, %v5012
      %5014 = vmatmul.f32.gmra.mxu0 %v3805
      %v5015 = vpop.f32.mrf.mxu0
      %v5016 = vadd.f32 %v4903, %v5015
      %5017 = vmatmul.f32.gmra.mxu0 %v3809
      %v5018 = vpop.f32.mrf.mxu0
      %v5019 = vadd.f32 %v4906, %v5018
      %5020 = vmatmul.f32.gmra.mxu0 %v3813
      %v5021 = vpop.f32.mrf.mxu0
      %v5022 = vadd.f32 %v4909, %v5021
      %5023 = vmatmul.f32.gmra.mxu0 %v3817
      %v5024 = vpop.f32.mrf.mxu0
      %v5025 = vadd.f32 %v4912, %v5024
      %5026 = vmatmul.f32.gmra.mxu0 %v3821
      %v5027 = vpop.f32.mrf.mxu0
      %v5028 = vadd.f32 %v4915, %v5027
      %5029 = vmatmul.f32.gmra.mxu0 %v3825
      %v5030 = vpop.f32.mrf.mxu0
      %v5031 = vadd.f32 %v4918, %v5030
      %5032 = vmatmul.f32.gmra.mxu0 %v3829
      %v5033 = vpop.f32.mrf.mxu0
      %v5034 = vadd.f32 %v4921, %v5033
      %5035 = vmatmul.f32.gmra.mxu0 %v3833
      %v5036 = vpop.f32.mrf.mxu0
      %v5037 = vadd.f32 %v4924, %v5036
      %5038 = vmatmul.f32.gmra.mxu0 %v3837
      %v5039 = vpop.f32.mrf.mxu0
      %v5040 = vadd.f32 %v4927, %v5039
      %5041 = vmatmul.f32.gmra.mxu0 %v3841
      %v5042 = vpop.f32.mrf.mxu0
      %v5043 = vadd.f32 %v4930, %v5042
      %5044 = vmatmul.f32.gmra.mxu0 %v3845
      %v5045 = vpop.f32.mrf.mxu0
      %v5046 = vadd.f32 %v4933, %v5045
      %5047 = vmatmul.f32.gmra.mxu0 %v3849
      %v5048 = vpop.f32.mrf.mxu0
      %v5049 = vadd.f32 %v4936, %v5048
      %5050 = vmatmul.f32.gmra.mxu0 %v3853
      %v5051 = vpop.f32.mrf.mxu0
      %v5052 = vadd.f32 %v4939, %v5051
      %5053 = vmatmul.f32.gmra.mxu0 %v3857
      %v5054 = vpop.f32.mrf.mxu0
      %v5055 = vadd.f32 %v4942, %v5054
      %5056 = vmatmul.f32.gmra.mxu0 %v3861
      %v5057 = vpop.f32.mrf.mxu0
      %v5058 = vadd.f32 %v4945, %v5057
      %5059 = vmatmul.f32.gmra.mxu0 %v3865
      %v5060 = vpop.f32.mrf.mxu0
      %v5061 = vadd.f32 %v4948, %v5060
      %5062 = vmatmul.f32.gmra.mxu0 %v3869
      %v5063 = vpop.f32.mrf.mxu0
      %v5064 = vadd.f32 %v4951, %v5063
      %5065 = vmatmul.f32.gmra.mxu0 %v3873
      %v5066 = vpop.f32.mrf.mxu0
      %v5067 = vadd.f32 %v4954, %v5066
      %5068 = vmatmul.f32.gmra.mxu0 %v3877
      %v5069 = vpop.f32.mrf.mxu0
      %v5070 = vadd.f32 %v4957, %v5069
      %5071 = vmatmul.f32.gmra.mxu0 %v3881
      %v5072 = vpop.f32.mrf.mxu0
      %v5073 = vadd.f32 %v4960, %v5072
      %5074 = vmatmul.f32.gmra.mxu0 %v3885
      %v5075 = vpop.f32.mrf.mxu0
      %v5076 = vadd.f32 %v4963, %v5075
      %5077 = vmatmul.f32.gmra.mxu0 %v3889
      %v5078 = vpop.f32.mrf.mxu0
      %v5079 = vadd.f32 %v4966, %v5078
      %5080 = vmatmul.f32.gmra.mxu0 %v3893
      %v5081 = vpop.f32.mrf.mxu0
      %v5082 = vadd.f32 %v4969, %v5081
      %5083 = vmatmul.f32.gmra.mxu0 %v3897
      %v5084 = vpop.f32.mrf.mxu0
      %v5085 = vadd.f32 %v4972, %v5084
      %5086 = vmatmul.f32.gmra.mxu0 %v3901
      %v5087 = vpop.f32.mrf.mxu0
      %v5088 = vadd.f32 %v4975, %v5087
      %5089 = vdwg.mxu0
      %5090 = vmatpush.msra.mxu0 %v4615
      %5091 = vmatpush.msra.mxu0 %v4613
      %5092 = vmatpush.msra.mxu0 %v4611
      %5093 = vmatpush.msra.mxu0 %v4609
      %5094 = vmatpush.msra.mxu0 %v4607
      %5095 = vmatpush.msra.mxu0 %v4605
      %5096 = vmatpush.msra.mxu0 %v4603
      %5097 = vmatpush.msra.mxu0 %v4601
      %5098 = vmatpush.msra.mxu0 %v4599
      %5099 = vmatpush.msra.mxu0 %v4597
      %5100 = vmatpush.msra.mxu0 %v4595
      %5101 = vmatpush.msra.mxu0 %v4593
      %5102 = vmatpush.msra.mxu0 %v4591
      %5103 = vmatpush.msra.mxu0 %v4589
      %5104 = vmatpush.msra.mxu0 %v4587
      %5105 = vmatpush.msra.mxu0 %v4585
      %5106 = vmatmul.f32.gmra.mxu0 %v3779
      %v5107 = vpop.f32.mrf.mxu0
      %v5108 = vadd.f32 %v4995, %v5107
      %5109 = vmatmul.f32.gmra.mxu0 %v3783
      %v5110 = vpop.f32.mrf.mxu0
      %v5111 = vadd.f32 %v4998, %v5110
      %5112 = vmatmul.f32.gmra.mxu0 %v3787
      %v5113 = vpop.f32.mrf.mxu0
      %v5114 = vadd.f32 %v5001, %v5113
      %5115 = vmatmul.f32.gmra.mxu0 %v3791
      %v5116 = vpop.f32.mrf.mxu0
      %v5117 = vadd.f32 %v5004, %v5116
      %5118 = vmatmul.f32.gmra.mxu0 %v3795
      %v5119 = vpop.f32.mrf.mxu0
      %v5120 = vadd.f32 %v5007, %v5119
      %5121 = vmatmul.f32.gmra.mxu0 %v3799
      %v5122 = vpop.f32.mrf.mxu0
      %v5123 = vadd.f32 %v5010, %v5122
      %5124 = vmatmul.f32.gmra.mxu0 %v3803
      %v5125 = vpop.f32.mrf.mxu0
      %v5126 = vadd.f32 %v5013, %v5125
      %5127 = vmatmul.f32.gmra.mxu0 %v3807
      %v5128 = vpop.f32.mrf.mxu0
      %v5129 = vadd.f32 %v5016, %v5128
      %5130 = vmatmul.f32.gmra.mxu0 %v3811
      %v5131 = vpop.f32.mrf.mxu0
      %v5132 = vadd.f32 %v5019, %v5131
      %5133 = vmatmul.f32.gmra.mxu0 %v3815
      %v5134 = vpop.f32.mrf.mxu0
      %v5135 = vadd.f32 %v5022, %v5134
      %5136 = vmatmul.f32.gmra.mxu0 %v3819
      %v5137 = vpop.f32.mrf.mxu0
      %v5138 = vadd.f32 %v5025, %v5137
      %5139 = vmatmul.f32.gmra.mxu0 %v3823
      %v5140 = vpop.f32.mrf.mxu0
      %v5141 = vadd.f32 %v5028, %v5140
      %5142 = vmatmul.f32.gmra.mxu0 %v3827
      %v5143 = vpop.f32.mrf.mxu0
      %v5144 = vadd.f32 %v5031, %v5143
      %5145 = vmatmul.f32.gmra.mxu0 %v3831
      %v5146 = vpop.f32.mrf.mxu0
      %v5147 = vadd.f32 %v5034, %v5146
      %5148 = vmatmul.f32.gmra.mxu0 %v3835
      %v5149 = vpop.f32.mrf.mxu0
      %v5150 = vadd.f32 %v5037, %v5149
      %5151 = vmatmul.f32.gmra.mxu0 %v3839
      %v5152 = vpop.f32.mrf.mxu0
      %v5153 = vadd.f32 %v5040, %v5152
      %5154 = vmatmul.f32.gmra.mxu0 %v3843
      %v5155 = vpop.f32.mrf.mxu0
      %v5156 = vadd.f32 %v5043, %v5155
      %5157 = vmatmul.f32.gmra.mxu0 %v3847
      %v5158 = vpop.f32.mrf.mxu0
      %v5159 = vadd.f32 %v5046, %v5158
      %5160 = vmatmul.f32.gmra.mxu0 %v3851
      %v5161 = vpop.f32.mrf.mxu0
      %v5162 = vadd.f32 %v5049, %v5161
      %5163 = vmatmul.f32.gmra.mxu0 %v3855
      %v5164 = vpop.f32.mrf.mxu0
      %v5165 = vadd.f32 %v5052, %v5164
      %5166 = vmatmul.f32.gmra.mxu0 %v3859
      %v5167 = vpop.f32.mrf.mxu0
      %v5168 = vadd.f32 %v5055, %v5167
      %5169 = vmatmul.f32.gmra.mxu0 %v3863
      %v5170 = vpop.f32.mrf.mxu0
      %v5171 = vadd.f32 %v5058, %v5170
      %5172 = vmatmul.f32.gmra.mxu0 %v3867
      %v5173 = vpop.f32.mrf.mxu0
      %v5174 = vadd.f32 %v5061, %v5173
      %5175 = vmatmul.f32.gmra.mxu0 %v3871
      %v5176 = vpop.f32.mrf.mxu0
      %v5177 = vadd.f32 %v5064, %v5176
      %5178 = vmatmul.f32.gmra.mxu0 %v3875
      %v5179 = vpop.f32.mrf.mxu0
      %v5180 = vadd.f32 %v5067, %v5179
      %5181 = vmatmul.f32.gmra.mxu0 %v3879
      %v5182 = vpop.f32.mrf.mxu0
      %v5183 = vadd.f32 %v5070, %v5182
      %5184 = vmatmul.f32.gmra.mxu0 %v3883
      %v5185 = vpop.f32.mrf.mxu0
      %v5186 = vadd.f32 %v5073, %v5185
      %5187 = vmatmul.f32.gmra.mxu0 %v3887
      %v5188 = vpop.f32.mrf.mxu0
      %v5189 = vadd.f32 %v5076, %v5188
      %5190 = vmatmul.f32.gmra.mxu0 %v3891
      %v5191 = vpop.f32.mrf.mxu0
      %v5192 = vadd.f32 %v5079, %v5191
      %5193 = vmatmul.f32.gmra.mxu0 %v3895
      %v5194 = vpop.f32.mrf.mxu0
      %v5195 = vadd.f32 %v5082, %v5194
      %5196 = vmatmul.f32.gmra.mxu0 %v3899
      %v5197 = vpop.f32.mrf.mxu0
      %v5198 = vadd.f32 %v5085, %v5197
      %5199 = vmatmul.f32.gmra.mxu0 %v3903
      %v5200 = vpop.f32.mrf.mxu0
      %v5201 = vadd.f32 %v5088, %v5200
      %5202 = vdwg.mxu0
      %5203 = vmatpush.msra.mxu0 %v4647
      %5204 = vmatpush.msra.mxu0 %v4645
      %5205 = vmatpush.msra.mxu0 %v4643
      %5206 = vmatpush.msra.mxu0 %v4641
      %5207 = vmatpush.msra.mxu0 %v4639
      %5208 = vmatpush.msra.mxu0 %v4637
      %5209 = vmatpush.msra.mxu0 %v4635
      %5210 = vmatpush.msra.mxu0 %v4633
      %5211 = vmatpush.msra.mxu0 %v4631
      %5212 = vmatpush.msra.mxu0 %v4629
      %5213 = vmatpush.msra.mxu0 %v4627
      %5214 = vmatpush.msra.mxu0 %v4625
      %5215 = vmatpush.msra.mxu0 %v4623
      %5216 = vmatpush.msra.mxu0 %v4621
      %5217 = vmatpush.msra.mxu0 %v4619
      %5218 = vmatpush.msra.mxu0 %v4617
      %5219 = vmatmul.f32.gmra.mxu0 %v4036
      %v5220 = vpop.f32.mrf.mxu0
      %v5221 = vadd.f32 %v5108, %v5220
      %5222 = vmatmul.f32.gmra.mxu0 %v4041
      %v5223 = vpop.f32.mrf.mxu0
      %v5224 = vadd.f32 %v5111, %v5223
      %5225 = vmatmul.f32.gmra.mxu0 %v4045
      %v5226 = vpop.f32.mrf.mxu0
      %v5227 = vadd.f32 %v5114, %v5226
      %5228 = vmatmul.f32.gmra.mxu0 %v4049
      %v5229 = vpop.f32.mrf.mxu0
      %v5230 = vadd.f32 %v5117, %v5229
      %5231 = vmatmul.f32.gmra.mxu0 %v4053
      %v5232 = vpop.f32.mrf.mxu0
      %v5233 = vadd.f32 %v5120, %v5232
      %5234 = vmatmul.f32.gmra.mxu0 %v4057
      %v5235 = vpop.f32.mrf.mxu0
      %v5236 = vadd.f32 %v5123, %v5235
      %5237 = vmatmul.f32.gmra.mxu0 %v4061
      %v5238 = vpop.f32.mrf.mxu0
      %v5239 = vadd.f32 %v5126, %v5238
      %5240 = vmatmul.f32.gmra.mxu0 %v4065
      %v5241 = vpop.f32.mrf.mxu0
      %v5242 = vadd.f32 %v5129, %v5241
      %5243 = vmatmul.f32.gmra.mxu0 %v4069
      %v5244 = vpop.f32.mrf.mxu0
      %v5245 = vadd.f32 %v5132, %v5244
      %5246 = vmatmul.f32.gmra.mxu0 %v4073
      %v5247 = vpop.f32.mrf.mxu0
      %v5248 = vadd.f32 %v5135, %v5247
      %5249 = vmatmul.f32.gmra.mxu0 %v4077
      %v5250 = vpop.f32.mrf.mxu0
      %v5251 = vadd.f32 %v5138, %v5250
      %5252 = vmatmul.f32.gmra.mxu0 %v4081
      %v5253 = vpop.f32.mrf.mxu0
      %v5254 = vadd.f32 %v5141, %v5253
      %5255 = vmatmul.f32.gmra.mxu0 %v4085
      %v5256 = vpop.f32.mrf.mxu0
      %v5257 = vadd.f32 %v5144, %v5256
      %5258 = vmatmul.f32.gmra.mxu0 %v4089
      %v5259 = vpop.f32.mrf.mxu0
      %v5260 = vadd.f32 %v5147, %v5259
      %5261 = vmatmul.f32.gmra.mxu0 %v4093
      %v5262 = vpop.f32.mrf.mxu0
      %v5263 = vadd.f32 %v5150, %v5262
      %5264 = vmatmul.f32.gmra.mxu0 %v4097
      %v5265 = vpop.f32.mrf.mxu0
      %v5266 = vadd.f32 %v5153, %v5265
      %5267 = vmatmul.f32.gmra.mxu0 %v4101
      %v5268 = vpop.f32.mrf.mxu0
      %v5269 = vadd.f32 %v5156, %v5268
      %5270 = vmatmul.f32.gmra.mxu0 %v4105
      %v5271 = vpop.f32.mrf.mxu0
      %v5272 = vadd.f32 %v5159, %v5271
      %5273 = vmatmul.f32.gmra.mxu0 %v4109
      %v5274 = vpop.f32.mrf.mxu0
      %v5275 = vadd.f32 %v5162, %v5274
      %5276 = vmatmul.f32.gmra.mxu0 %v4113
      %v5277 = vpop.f32.mrf.mxu0
      %v5278 = vadd.f32 %v5165, %v5277
      %5279 = vmatmul.f32.gmra.mxu0 %v4117
      %v5280 = vpop.f32.mrf.mxu0
      %v5281 = vadd.f32 %v5168, %v5280
      %5282 = vmatmul.f32.gmra.mxu0 %v4121
      %v5283 = vpop.f32.mrf.mxu0
      %v5284 = vadd.f32 %v5171, %v5283
      %5285 = vmatmul.f32.gmra.mxu0 %v4125
      %v5286 = vpop.f32.mrf.mxu0
      %v5287 = vadd.f32 %v5174, %v5286
      %5288 = vmatmul.f32.gmra.mxu0 %v4129
      %v5289 = vpop.f32.mrf.mxu0
      %v5290 = vadd.f32 %v5177, %v5289
      %5291 = vmatmul.f32.gmra.mxu0 %v4133
      %v5292 = vpop.f32.mrf.mxu0
      %v5293 = vadd.f32 %v5180, %v5292
      %5294 = vmatmul.f32.gmra.mxu0 %v4137
      %v5295 = vpop.f32.mrf.mxu0
      %v5296 = vadd.f32 %v5183, %v5295
      %5297 = vmatmul.f32.gmra.mxu0 %v4141
      %v5298 = vpop.f32.mrf.mxu0
      %v5299 = vadd.f32 %v5186, %v5298
      %5300 = vmatmul.f32.gmra.mxu0 %v4145
      %v5301 = vpop.f32.mrf.mxu0
      %v5302 = vadd.f32 %v5189, %v5301
      %5303 = vmatmul.f32.gmra.mxu0 %v4149
      %v5304 = vpop.f32.mrf.mxu0
      %v5305 = vadd.f32 %v5192, %v5304
      %5306 = vmatmul.f32.gmra.mxu0 %v4153
      %v5307 = vpop.f32.mrf.mxu0
      %v5308 = vadd.f32 %v5195, %v5307
      %5309 = vmatmul.f32.gmra.mxu0 %v4157
      %v5310 = vpop.f32.mrf.mxu0
      %v5311 = vadd.f32 %v5198, %v5310
      %5312 = vmatmul.f32.gmra.mxu0 %v4161
      %v5313 = vpop.f32.mrf.mxu0
      %v5314 = vadd.f32 %v5201, %v5313
      %5315 = vdwg.mxu0
      %5316 = vmatpush.msra.mxu0 %v4679
      %5317 = vmatpush.msra.mxu0 %v4677
      %5318 = vmatpush.msra.mxu0 %v4675
      %5319 = vmatpush.msra.mxu0 %v4673
      %5320 = vmatpush.msra.mxu0 %v4671
      %5321 = vmatpush.msra.mxu0 %v4669
      %5322 = vmatpush.msra.mxu0 %v4667
      %5323 = vmatpush.msra.mxu0 %v4665
      %5324 = vmatpush.msra.mxu0 %v4663
      %5325 = vmatpush.msra.mxu0 %v4661
      %5326 = vmatpush.msra.mxu0 %v4659
      %5327 = vmatpush.msra.mxu0 %v4657
      %5328 = vmatpush.msra.mxu0 %v4655
      %5329 = vmatpush.msra.mxu0 %v4653
      %5330 = vmatpush.msra.mxu0 %v4651
      %5331 = vmatpush.msra.mxu0 %v4649
      %5332 = vmatmul.f32.gmra.mxu0 %v4039
      %v5333 = vpop.f32.mrf.mxu0
      %v5334 = vadd.f32 %v5221, %v5333
      %5335 = vmatmul.f32.gmra.mxu0 %v4043
      %v5336 = vpop.f32.mrf.mxu0
      %v5337 = vadd.f32 %v5224, %v5336
      %5338 = vmatmul.f32.gmra.mxu0 %v4047
      %v5339 = vpop.f32.mrf.mxu0
      %v5340 = vadd.f32 %v5227, %v5339
      %5341 = vmatmul.f32.gmra.mxu0 %v4051
      %v5342 = vpop.f32.mrf.mxu0
      %v5343 = vadd.f32 %v5230, %v5342
      %5344 = vmatmul.f32.gmra.mxu0 %v4055
      %v5345 = vpop.f32.mrf.mxu0
      %v5346 = vadd.f32 %v5233, %v5345
      %5347 = vmatmul.f32.gmra.mxu0 %v4059
      %v5348 = vpop.f32.mrf.mxu0
      %v5349 = vadd.f32 %v5236, %v5348
      %5350 = vmatmul.f32.gmra.mxu0 %v4063
      %v5351 = vpop.f32.mrf.mxu0
      %v5352 = vadd.f32 %v5239, %v5351
      %5353 = vmatmul.f32.gmra.mxu0 %v4067
      %v5354 = vpop.f32.mrf.mxu0
      %v5355 = vadd.f32 %v5242, %v5354
      %5356 = vmatmul.f32.gmra.mxu0 %v4071
      %v5357 = vpop.f32.mrf.mxu0
      %v5358 = vadd.f32 %v5245, %v5357
      %5359 = vmatmul.f32.gmra.mxu0 %v4075
      %v5360 = vpop.f32.mrf.mxu0
      %v5361 = vadd.f32 %v5248, %v5360
      %5362 = vmatmul.f32.gmra.mxu0 %v4079
      %v5363 = vpop.f32.mrf.mxu0
      %v5364 = vadd.f32 %v5251, %v5363
      %5365 = vmatmul.f32.gmra.mxu0 %v4083
      %v5366 = vpop.f32.mrf.mxu0
      %v5367 = vadd.f32 %v5254, %v5366
      %5368 = vmatmul.f32.gmra.mxu0 %v4087
      %v5369 = vpop.f32.mrf.mxu0
      %v5370 = vadd.f32 %v5257, %v5369
      %5371 = vmatmul.f32.gmra.mxu0 %v4091
      %v5372 = vpop.f32.mrf.mxu0
      %v5373 = vadd.f32 %v5260, %v5372
      %5374 = vmatmul.f32.gmra.mxu0 %v4095
      %v5375 = vpop.f32.mrf.mxu0
      %v5376 = vadd.f32 %v5263, %v5375
      %5377 = vmatmul.f32.gmra.mxu0 %v4099
      %v5378 = vpop.f32.mrf.mxu0
      %v5379 = vadd.f32 %v5266, %v5378
      %5380 = vmatmul.f32.gmra.mxu0 %v4103
      %v5381 = vpop.f32.mrf.mxu0
      %v5382 = vadd.f32 %v5269, %v5381
      %5383 = vmatmul.f32.gmra.mxu0 %v4107
      %v5384 = vpop.f32.mrf.mxu0
      %v5385 = vadd.f32 %v5272, %v5384
      %5386 = vmatmul.f32.gmra.mxu0 %v4111
      %v5387 = vpop.f32.mrf.mxu0
      %v5388 = vadd.f32 %v5275, %v5387
      %5389 = vmatmul.f32.gmra.mxu0 %v4115
      %v5390 = vpop.f32.mrf.mxu0
      %v5391 = vadd.f32 %v5278, %v5390
      %5392 = vmatmul.f32.gmra.mxu0 %v4119
      %v5393 = vpop.f32.mrf.mxu0
      %v5394 = vadd.f32 %v5281, %v5393
      %5395 = vmatmul.f32.gmra.mxu0 %v4123
      %v5396 = vpop.f32.mrf.mxu0
      %v5397 = vadd.f32 %v5284, %v5396
      %5398 = vmatmul.f32.gmra.mxu0 %v4127
      %v5399 = vpop.f32.mrf.mxu0
      %v5400 = vadd.f32 %v5287, %v5399
      %5401 = vmatmul.f32.gmra.mxu0 %v4131
      %v5402 = vpop.f32.mrf.mxu0
      %v5403 = vadd.f32 %v5290, %v5402
      %5404 = vmatmul.f32.gmra.mxu0 %v4135
      %v5405 = vpop.f32.mrf.mxu0
      %v5406 = vadd.f32 %v5293, %v5405
      %5407 = vmatmul.f32.gmra.mxu0 %v4139
      %v5408 = vpop.f32.mrf.mxu0
      %v5409 = vadd.f32 %v5296, %v5408
      %5410 = vmatmul.f32.gmra.mxu0 %v4143
      %v5411 = vpop.f32.mrf.mxu0
      %v5412 = vadd.f32 %v5299, %v5411
      %5413 = vmatmul.f32.gmra.mxu0 %v4147
      %v5414 = vpop.f32.mrf.mxu0
      %v5415 = vadd.f32 %v5302, %v5414
      %5416 = vmatmul.f32.gmra.mxu0 %v4151
      %v5417 = vpop.f32.mrf.mxu0
      %v5418 = vadd.f32 %v5305, %v5417
      %5419 = vmatmul.f32.gmra.mxu0 %v4155
      %v5420 = vpop.f32.mrf.mxu0
      %v5421 = vadd.f32 %v5308, %v5420
      %5422 = vmatmul.f32.gmra.mxu0 %v4159
      %v5423 = vpop.f32.mrf.mxu0
      %v5424 = vadd.f32 %v5311, %v5423
      %5425 = vmatmul.f32.gmra.mxu0 %v4163
      %v5426 = vpop.f32.mrf.mxu0
      %v5427 = vadd.f32 %v5314, %v5426
      %5428 = vdwg.mxu0
      %5429 = vmatpush.msra.mxu0 %v4711
      %5430 = vmatpush.msra.mxu0 %v4709
      %5431 = vmatpush.msra.mxu0 %v4707
      %5432 = vmatpush.msra.mxu0 %v4705
      %5433 = vmatpush.msra.mxu0 %v4703
      %5434 = vmatpush.msra.mxu0 %v4701
      %5435 = vmatpush.msra.mxu0 %v4699
      %5436 = vmatpush.msra.mxu0 %v4697
      %5437 = vmatpush.msra.mxu0 %v4695
      %5438 = vmatpush.msra.mxu0 %v4693
      %5439 = vmatpush.msra.mxu0 %v4691
      %5440 = vmatpush.msra.mxu0 %v4689
      %5441 = vmatpush.msra.mxu0 %v4687
      %5442 = vmatpush.msra.mxu0 %v4685
      %5443 = vmatpush.msra.mxu0 %v4683
      %5444 = vmatpush.msra.mxu0 %v4681
      %5445 = vmatmul.f32.gmra.mxu0 %v4297
      %v5446 = vpop.f32.mrf.mxu0
      %v5447 = vadd.f32 %v5334, %v5446
      %5448 = vmatmul.f32.gmra.mxu0 %v4302
      %v5449 = vpop.f32.mrf.mxu0
      %v5450 = vadd.f32 %v5337, %v5449
      %5451 = vmatmul.f32.gmra.mxu0 %v4306
      %v5452 = vpop.f32.mrf.mxu0
      %v5453 = vadd.f32 %v5340, %v5452
      %5454 = vmatmul.f32.gmra.mxu0 %v4310
      %v5455 = vpop.f32.mrf.mxu0
      %v5456 = vadd.f32 %v5343, %v5455
      %5457 = vmatmul.f32.gmra.mxu0 %v4314
      %v5458 = vpop.f32.mrf.mxu0
      %v5459 = vadd.f32 %v5346, %v5458
      %5460 = vmatmul.f32.gmra.mxu0 %v4318
      %v5461 = vpop.f32.mrf.mxu0
      %v5462 = vadd.f32 %v5349, %v5461
      %5463 = vmatmul.f32.gmra.mxu0 %v4322
      %v5464 = vpop.f32.mrf.mxu0
      %v5465 = vadd.f32 %v5352, %v5464
      %5466 = vmatmul.f32.gmra.mxu0 %v4326
      %v5467 = vpop.f32.mrf.mxu0
      %v5468 = vadd.f32 %v5355, %v5467
      %5469 = vmatmul.f32.gmra.mxu0 %v4330
      %v5470 = vpop.f32.mrf.mxu0
      %v5471 = vadd.f32 %v5358, %v5470
      %5472 = vmatmul.f32.gmra.mxu0 %v4334
      %v5473 = vpop.f32.mrf.mxu0
      %v5474 = vadd.f32 %v5361, %v5473
      %5475 = vmatmul.f32.gmra.mxu0 %v4338
      %v5476 = vpop.f32.mrf.mxu0
      %v5477 = vadd.f32 %v5364, %v5476
      %5478 = vmatmul.f32.gmra.mxu0 %v4342
      %v5479 = vpop.f32.mrf.mxu0
      %v5480 = vadd.f32 %v5367, %v5479
      %5481 = vmatmul.f32.gmra.mxu0 %v4346
      %v5482 = vpop.f32.mrf.mxu0
      %v5483 = vadd.f32 %v5370, %v5482
      %5484 = vmatmul.f32.gmra.mxu0 %v4350
      %v5485 = vpop.f32.mrf.mxu0
      %v5486 = vadd.f32 %v5373, %v5485
      %5487 = vmatmul.f32.gmra.mxu0 %v4354
      %v5488 = vpop.f32.mrf.mxu0
      %v5489 = vadd.f32 %v5376, %v5488
      %5490 = vmatmul.f32.gmra.mxu0 %v4358
      %v5491 = vpop.f32.mrf.mxu0
      %v5492 = vadd.f32 %v5379, %v5491
      %5493 = vmatmul.f32.gmra.mxu0 %v4362
      %v5494 = vpop.f32.mrf.mxu0
      %v5495 = vadd.f32 %v5382, %v5494
      %5496 = vmatmul.f32.gmra.mxu0 %v4366
      %v5497 = vpop.f32.mrf.mxu0
      %v5498 = vadd.f32 %v5385, %v5497
      %5499 = vmatmul.f32.gmra.mxu0 %v4370
      %v5500 = vpop.f32.mrf.mxu0
      %v5501 = vadd.f32 %v5388, %v5500
      %5502 = vmatmul.f32.gmra.mxu0 %v4374
      %v5503 = vpop.f32.mrf.mxu0
      %v5504 = vadd.f32 %v5391, %v5503
      %5505 = vmatmul.f32.gmra.mxu0 %v4378
      %v5506 = vpop.f32.mrf.mxu0
      %v5507 = vadd.f32 %v5394, %v5506
      %5508 = vmatmul.f32.gmra.mxu0 %v4382
      %v5509 = vpop.f32.mrf.mxu0
      %v5510 = vadd.f32 %v5397, %v5509
      %5511 = vmatmul.f32.gmra.mxu0 %v4386
      %v5512 = vpop.f32.mrf.mxu0
      %v5513 = vadd.f32 %v5400, %v5512
      %5514 = vmatmul.f32.gmra.mxu0 %v4390
      %v5515 = vpop.f32.mrf.mxu0
      %v5516 = vadd.f32 %v5403, %v5515
      %5517 = vmatmul.f32.gmra.mxu0 %v4394
      %v5518 = vpop.f32.mrf.mxu0
      %v5519 = vadd.f32 %v5406, %v5518
      %5520 = vmatmul.f32.gmra.mxu0 %v4398
      %v5521 = vpop.f32.mrf.mxu0
      %v5522 = vadd.f32 %v5409, %v5521
      %5523 = vmatmul.f32.gmra.mxu0 %v4402
      %v5524 = vpop.f32.mrf.mxu0
      %v5525 = vadd.f32 %v5412, %v5524
      %5526 = vmatmul.f32.gmra.mxu0 %v4406
      %v5527 = vpop.f32.mrf.mxu0
      %v5528 = vadd.f32 %v5415, %v5527
      %5529 = vmatmul.f32.gmra.mxu0 %v4410
      %v5530 = vpop.f32.mrf.mxu0
      %v5531 = vadd.f32 %v5418, %v5530
      %5532 = vmatmul.f32.gmra.mxu0 %v4414
      %v5533 = vpop.f32.mrf.mxu0
      %v5534 = vadd.f32 %v5421, %v5533
      %5535 = vmatmul.f32.gmra.mxu0 %v4418
      %v5536 = vpop.f32.mrf.mxu0
      %v5537 = vadd.f32 %v5424, %v5536
      %5538 = vmatmul.f32.gmra.mxu0 %v4422
      %v5539 = vpop.f32.mrf.mxu0
      %v5540 = vadd.f32 %v5427, %v5539
      %5541 = vdwg.mxu0
      %5542 = vmatpush.msra.mxu0 %v4743
      %5543 = vmatpush.msra.mxu0 %v4741
      %5544 = vmatpush.msra.mxu0 %v4739
      %5545 = vmatpush.msra.mxu0 %v4737
      %5546 = vmatpush.msra.mxu0 %v4735
      %5547 = vmatpush.msra.mxu0 %v4733
      %5548 = vmatpush.msra.mxu0 %v4731
      %5549 = vmatpush.msra.mxu0 %v4729
      %5550 = vmatpush.msra.mxu0 %v4727
      %5551 = vmatpush.msra.mxu0 %v4725
      %5552 = vmatpush.msra.mxu0 %v4723
      %5553 = vmatpush.msra.mxu0 %v4721
      %5554 = vmatpush.msra.mxu0 %v4719
      %5555 = vmatpush.msra.mxu0 %v4717
      %5556 = vmatpush.msra.mxu0 %v4715
      %5557 = vmatpush.msra.mxu0 %v4713
      %5558 = vmatmul.f32.gmra.mxu0 %v4300
      %v5559 = vpop.f32.mrf.mxu0
      %v5560 = vadd.f32 %v5447, %v5559
      %5561 = vmatmul.f32.gmra.mxu0 %v4304
      %v5562 = vpop.f32.mrf.mxu0
      %v5563 = vadd.f32 %v5450, %v5562
      %5564 = vmatmul.f32.gmra.mxu0 %v4308
      %v5565 = vpop.f32.mrf.mxu0
      %v5566 = vadd.f32 %v5453, %v5565
      %5567 = vmatmul.f32.gmra.mxu0 %v4312
      %v5568 = vpop.f32.mrf.mxu0
      %v5569 = vadd.f32 %v5456, %v5568
      %5570 = vmatmul.f32.gmra.mxu0 %v4316
      %v5571 = vpop.f32.mrf.mxu0
      %v5572 = vadd.f32 %v5459, %v5571
      %5573 = vmatmul.f32.gmra.mxu0 %v4320
      %v5574 = vpop.f32.mrf.mxu0
      %v5575 = vadd.f32 %v5462, %v5574
      %5576 = vmatmul.f32.gmra.mxu0 %v4324
      %v5577 = vpop.f32.mrf.mxu0
      %v5578 = vadd.f32 %v5465, %v5577
      %5579 = vmatmul.f32.gmra.mxu0 %v4328
      %v5580 = vpop.f32.mrf.mxu0
      %v5581 = vadd.f32 %v5468, %v5580
      %5582 = vmatmul.f32.gmra.mxu0 %v4332
      %v5583 = vpop.f32.mrf.mxu0
      %v5584 = vadd.f32 %v5471, %v5583
      %5585 = vmatmul.f32.gmra.mxu0 %v4336
      %v5586 = vpop.f32.mrf.mxu0
      %v5587 = vadd.f32 %v5474, %v5586
      %5588 = vmatmul.f32.gmra.mxu0 %v4340
      %v5589 = vpop.f32.mrf.mxu0
      %v5590 = vadd.f32 %v5477, %v5589
      %5591 = vmatmul.f32.gmra.mxu0 %v4344
      %v5592 = vpop.f32.mrf.mxu0
      %v5593 = vadd.f32 %v5480, %v5592
      %5594 = vmatmul.f32.gmra.mxu0 %v4348
      %v5595 = vpop.f32.mrf.mxu0
      %v5596 = vadd.f32 %v5483, %v5595
      %5597 = vmatmul.f32.gmra.mxu0 %v4352
      %v5598 = vpop.f32.mrf.mxu0
      %v5599 = vadd.f32 %v5486, %v5598
      %5600 = vmatmul.f32.gmra.mxu0 %v4356
      %v5601 = vpop.f32.mrf.mxu0
      %v5602 = vadd.f32 %v5489, %v5601
      %5603 = vmatmul.f32.gmra.mxu0 %v4360
      %v5604 = vpop.f32.mrf.mxu0
      %v5605 = vadd.f32 %v5492, %v5604
      %5606 = vmatmul.f32.gmra.mxu0 %v4364
      %v5607 = vpop.f32.mrf.mxu0
      %v5608 = vadd.f32 %v5495, %v5607
      %5609 = vmatmul.f32.gmra.mxu0 %v4368
      %v5610 = vpop.f32.mrf.mxu0
      %v5611 = vadd.f32 %v5498, %v5610
      %5612 = vmatmul.f32.gmra.mxu0 %v4372
      %v5613 = vpop.f32.mrf.mxu0
      %v5614 = vadd.f32 %v5501, %v5613
      %5615 = vmatmul.f32.gmra.mxu0 %v4376
      %v5616 = vpop.f32.mrf.mxu0
      %v5617 = vadd.f32 %v5504, %v5616
      %5618 = vmatmul.f32.gmra.mxu0 %v4380
      %v5619 = vpop.f32.mrf.mxu0
      %v5620 = vadd.f32 %v5507, %v5619
      %5621 = vmatmul.f32.gmra.mxu0 %v4384
      %v5622 = vpop.f32.mrf.mxu0
      %v5623 = vadd.f32 %v5510, %v5622
      %5624 = vmatmul.f32.gmra.mxu0 %v4388
      %v5625 = vpop.f32.mrf.mxu0
      %v5626 = vadd.f32 %v5513, %v5625
      %5627 = vmatmul.f32.gmra.mxu0 %v4392
      %v5628 = vpop.f32.mrf.mxu0
      %v5629 = vadd.f32 %v5516, %v5628
      %5630 = vmatmul.f32.gmra.mxu0 %v4396
      %v5631 = vpop.f32.mrf.mxu0
      %v5632 = vadd.f32 %v5519, %v5631
      %5633 = vmatmul.f32.gmra.mxu0 %v4400
      %v5634 = vpop.f32.mrf.mxu0
      %v5635 = vadd.f32 %v5522, %v5634
      %5636 = vmatmul.f32.gmra.mxu0 %v4404
      %v5637 = vpop.f32.mrf.mxu0
      %v5638 = vadd.f32 %v5525, %v5637
      %5639 = vmatmul.f32.gmra.mxu0 %v4408
      %v5640 = vpop.f32.mrf.mxu0
      %v5641 = vadd.f32 %v5528, %v5640
      %5642 = vmatmul.f32.gmra.mxu0 %v4412
      %v5643 = vpop.f32.mrf.mxu0
      %v5644 = vadd.f32 %v5531, %v5643
      %5645 = vmatmul.f32.gmra.mxu0 %v4416
      %v5646 = vpop.f32.mrf.mxu0
      %v5647 = vadd.f32 %v5534, %v5646
      %5648 = vmatmul.f32.gmra.mxu0 %v4420
      %v5649 = vpop.f32.mrf.mxu0
      %v5650 = vadd.f32 %v5537, %v5649
      %5651 = vmatmul.f32.gmra.mxu0 %v4424
      %v5652 = vpop.f32.mrf.mxu0
      %v5653 = vadd.f32 %v5540, %v5652
      %5654 = vdwg.mxu0
      %5655 = vmatpush.msra.mxu0 %v4520
      %5656 = vmatpush.msra.mxu0 %v4518
      %5657 = vmatpush.msra.mxu0 %v4516
      %5658 = vmatpush.msra.mxu0 %v4514
      %5659 = vmatpush.msra.mxu0 %v4512
      %5660 = vmatpush.msra.mxu0 %v4510
      %5661 = vmatpush.msra.mxu0 %v4508
      %5662 = vmatpush.msra.mxu0 %v4506
      %5663 = vmatpush.msra.mxu0 %v4504
      %5664 = vmatpush.msra.mxu0 %v4502
      %5665 = vmatpush.msra.mxu0 %v4500
      %5666 = vmatpush.msra.mxu0 %v4498
      %5667 = vmatpush.msra.mxu0 %v4496
      %5668 = vmatpush.msra.mxu0 %v4494
      %5669 = vmatpush.msra.mxu0 %v4492
      %5670 = vmatpush.msra.mxu0 %v4490
      %5671 = vmatmul.f32.gmra.mxu0 %v3080
      %v5672 = vpop.f32.mrf.mxu0
      %v5673 = vadd.f32 %v4748, %v5672
      %5674 = vmatmul.f32.gmra.mxu0 %v3082
      %v5675 = vpop.f32.mrf.mxu0
      %v5676 = vadd.f32 %v4748, %v5675
      %5677 = vmatmul.f32.gmra.mxu0 %v3084
      %v5678 = vpop.f32.mrf.mxu0
      %v5679 = vadd.f32 %v4748, %v5678
      %5680 = vmatmul.f32.gmra.mxu0 %v3086
      %v5681 = vpop.f32.mrf.mxu0
      %v5682 = vadd.f32 %v4748, %v5681
      %5683 = vmatmul.f32.gmra.mxu0 %v3088
      %v5684 = vpop.f32.mrf.mxu0
      %v5685 = vadd.f32 %v4748, %v5684
      %5686 = vmatmul.f32.gmra.mxu0 %v3090
      %v5687 = vpop.f32.mrf.mxu0
      %v5688 = vadd.f32 %v4748, %v5687
      %5689 = vmatmul.f32.gmra.mxu0 %v3092
      %v5690 = vpop.f32.mrf.mxu0
      %v5691 = vadd.f32 %v4748, %v5690
      %5692 = vmatmul.f32.gmra.mxu0 %v3094
      %v5693 = vpop.f32.mrf.mxu0
      %v5694 = vadd.f32 %v4748, %v5693
      %5695 = vmatmul.f32.gmra.mxu0 %v3096
      %v5696 = vpop.f32.mrf.mxu0
      %v5697 = vadd.f32 %v4748, %v5696
      %5698 = vmatmul.f32.gmra.mxu0 %v3098
      %v5699 = vpop.f32.mrf.mxu0
      %v5700 = vadd.f32 %v4748, %v5699
      %5701 = vmatmul.f32.gmra.mxu0 %v3100
      %v5702 = vpop.f32.mrf.mxu0
      %v5703 = vadd.f32 %v4748, %v5702
      %5704 = vmatmul.f32.gmra.mxu0 %v3102
      %v5705 = vpop.f32.mrf.mxu0
      %v5706 = vadd.f32 %v4748, %v5705
      %5707 = vmatmul.f32.gmra.mxu0 %v3104
      %v5708 = vpop.f32.mrf.mxu0
      %v5709 = vadd.f32 %v4748, %v5708
      %5710 = vmatmul.f32.gmra.mxu0 %v3106
      %v5711 = vpop.f32.mrf.mxu0
      %v5712 = vadd.f32 %v4748, %v5711
      %5713 = vmatmul.f32.gmra.mxu0 %v3108
      %v5714 = vpop.f32.mrf.mxu0
      %v5715 = vadd.f32 %v4748, %v5714
      %5716 = vmatmul.f32.gmra.mxu0 %v3110
      %v5717 = vpop.f32.mrf.mxu0
      %v5718 = vadd.f32 %v4748, %v5717
      %5719 = vmatmul.f32.gmra.mxu0 %v3112
      %v5720 = vpop.f32.mrf.mxu0
      %v5721 = vadd.f32 %v4748, %v5720
      %5722 = vmatmul.f32.gmra.mxu0 %v3114
      %v5723 = vpop.f32.mrf.mxu0
      %v5724 = vadd.f32 %v4748, %v5723
      %5725 = vmatmul.f32.gmra.mxu0 %v3116
      %v5726 = vpop.f32.mrf.mxu0
      %v5727 = vadd.f32 %v4748, %v5726
      %5728 = vmatmul.f32.gmra.mxu0 %v3118
      %v5729 = vpop.f32.mrf.mxu0
      %v5730 = vadd.f32 %v4748, %v5729
      %5731 = vmatmul.f32.gmra.mxu0 %v3120
      %v5732 = vpop.f32.mrf.mxu0
      %v5733 = vadd.f32 %v4748, %v5732
      %5734 = vmatmul.f32.gmra.mxu0 %v3122
      %v5735 = vpop.f32.mrf.mxu0
      %v5736 = vadd.f32 %v4748, %v5735
      %5737 = vmatmul.f32.gmra.mxu0 %v3124
      %v5738 = vpop.f32.mrf.mxu0
      %v5739 = vadd.f32 %v4748, %v5738
      %5740 = vmatmul.f32.gmra.mxu0 %v3126
      %v5741 = vpop.f32.mrf.mxu0
      %v5742 = vadd.f32 %v4748, %v5741
      %5743 = vmatmul.f32.gmra.mxu0 %v3128
      %v5744 = vpop.f32.mrf.mxu0
      %v5745 = vadd.f32 %v4748, %v5744
      %5746 = vmatmul.f32.gmra.mxu0 %v3130
      %v5747 = vpop.f32.mrf.mxu0
      %v5748 = vadd.f32 %v4748, %v5747
      %5749 = vmatmul.f32.gmra.mxu0 %v3132
      %v5750 = vpop.f32.mrf.mxu0
      %v5751 = vadd.f32 %v4748, %v5750
      %5752 = vmatmul.f32.gmra.mxu0 %v3134
      %v5753 = vpop.f32.mrf.mxu0
      %v5754 = vadd.f32 %v4748, %v5753
      %5755 = vmatmul.f32.gmra.mxu0 %v3136
      %v5756 = vpop.f32.mrf.mxu0
      %v5757 = vadd.f32 %v4748, %v5756
      %5758 = vmatmul.f32.gmra.mxu0 %v3138
      %v5759 = vpop.f32.mrf.mxu0
      %v5760 = vadd.f32 %v4748, %v5759
      %5761 = vmatmul.f32.gmra.mxu0 %v3140
      %v5762 = vpop.f32.mrf.mxu0
      %v5763 = vadd.f32 %v4748, %v5762
      %5764 = vmatmul.f32.gmra.mxu0 %v3142
      %v5765 = vpop.f32.mrf.mxu0
      %v5766 = vadd.f32 %v4748, %v5765
      %5767 = vdwg.mxu0
      %5768 = vmatpush.msra.mxu0 %v4552
      %5769 = vmatpush.msra.mxu0 %v4550
      %5770 = vmatpush.msra.mxu0 %v4548
      %5771 = vmatpush.msra.mxu0 %v4546
      %5772 = vmatpush.msra.mxu0 %v4544
      %5773 = vmatpush.msra.mxu0 %v4542
      %5774 = vmatpush.msra.mxu0 %v4540
      %5775 = vmatpush.msra.mxu0 %v4538
      %5776 = vmatpush.msra.mxu0 %v4536
      %5777 = vmatpush.msra.mxu0 %v4534
      %5778 = vmatpush.msra.mxu0 %v4532
      %5779 = vmatpush.msra.mxu0 %v4530
      %5780 = vmatpush.msra.mxu0 %v4528
      %5781 = vmatpush.msra.mxu0 %v4526
      %5782 = vmatpush.msra.mxu0 %v4524
      %5783 = vmatpush.msra.mxu0 %v4522
      %5784 = vmatmul.f32.gmra.mxu0 %v3081
      %v5785 = vpop.f32.mrf.mxu0
      %v5786 = vadd.f32 %v5673, %v5785
      %5787 = vmatmul.f32.gmra.mxu0 %v3083
      %v5788 = vpop.f32.mrf.mxu0
      %v5789 = vadd.f32 %v5676, %v5788
      %5790 = vmatmul.f32.gmra.mxu0 %v3085
      %v5791 = vpop.f32.mrf.mxu0
      %v5792 = vadd.f32 %v5679, %v5791
      %5793 = vmatmul.f32.gmra.mxu0 %v3087
      %v5794 = vpop.f32.mrf.mxu0
      %v5795 = vadd.f32 %v5682, %v5794
      %5796 = vmatmul.f32.gmra.mxu0 %v3089
      %v5797 = vpop.f32.mrf.mxu0
      %v5798 = vadd.f32 %v5685, %v5797
      %5799 = vmatmul.f32.gmra.mxu0 %v3091
      %v5800 = vpop.f32.mrf.mxu0
      %v5801 = vadd.f32 %v5688, %v5800
      %5802 = vmatmul.f32.gmra.mxu0 %v3093
      %v5803 = vpop.f32.mrf.mxu0
      %v5804 = vadd.f32 %v5691, %v5803
      %5805 = vmatmul.f32.gmra.mxu0 %v3095
      %v5806 = vpop.f32.mrf.mxu0
      %v5807 = vadd.f32 %v5694, %v5806
      %5808 = vmatmul.f32.gmra.mxu0 %v3097
      %v5809 = vpop.f32.mrf.mxu0
      %v5810 = vadd.f32 %v5697, %v5809
      %5811 = vmatmul.f32.gmra.mxu0 %v3099
      %v5812 = vpop.f32.mrf.mxu0
      %v5813 = vadd.f32 %v5700, %v5812
      %5814 = vmatmul.f32.gmra.mxu0 %v3101
      %v5815 = vpop.f32.mrf.mxu0
      %v5816 = vadd.f32 %v5703, %v5815
      %5817 = vmatmul.f32.gmra.mxu0 %v3103
      %v5818 = vpop.f32.mrf.mxu0
      %v5819 = vadd.f32 %v5706, %v5818
      %5820 = vmatmul.f32.gmra.mxu0 %v3105
      %v5821 = vpop.f32.mrf.mxu0
      %v5822 = vadd.f32 %v5709, %v5821
      %5823 = vmatmul.f32.gmra.mxu0 %v3107
      %v5824 = vpop.f32.mrf.mxu0
      %v5825 = vadd.f32 %v5712, %v5824
      %5826 = vmatmul.f32.gmra.mxu0 %v3109
      %v5827 = vpop.f32.mrf.mxu0
      %v5828 = vadd.f32 %v5715, %v5827
      %5829 = vmatmul.f32.gmra.mxu0 %v3111
      %v5830 = vpop.f32.mrf.mxu0
      %v5831 = vadd.f32 %v5718, %v5830
      %5832 = vmatmul.f32.gmra.mxu0 %v3113
      %v5833 = vpop.f32.mrf.mxu0
      %v5834 = vadd.f32 %v5721, %v5833
      %5835 = vmatmul.f32.gmra.mxu0 %v3115
      %v5836 = vpop.f32.mrf.mxu0
      %v5837 = vadd.f32 %v5724, %v5836
      %5838 = vmatmul.f32.gmra.mxu0 %v3117
      %v5839 = vpop.f32.mrf.mxu0
      %v5840 = vadd.f32 %v5727, %v5839
      %5841 = vmatmul.f32.gmra.mxu0 %v3119
      %v5842 = vpop.f32.mrf.mxu0
      %v5843 = vadd.f32 %v5730, %v5842
      %5844 = vmatmul.f32.gmra.mxu0 %v3121
      %v5845 = vpop.f32.mrf.mxu0
      %v5846 = vadd.f32 %v5733, %v5845
      %5847 = vmatmul.f32.gmra.mxu0 %v3123
      %v5848 = vpop.f32.mrf.mxu0
      %v5849 = vadd.f32 %v5736, %v5848
      %5850 = vmatmul.f32.gmra.mxu0 %v3125
      %v5851 = vpop.f32.mrf.mxu0
      %v5852 = vadd.f32 %v5739, %v5851
      %5853 = vmatmul.f32.gmra.mxu0 %v3127
      %v5854 = vpop.f32.mrf.mxu0
      %v5855 = vadd.f32 %v5742, %v5854
      %5856 = vmatmul.f32.gmra.mxu0 %v3129
      %v5857 = vpop.f32.mrf.mxu0
      %v5858 = vadd.f32 %v5745, %v5857
      %5859 = vmatmul.f32.gmra.mxu0 %v3131
      %v5860 = vpop.f32.mrf.mxu0
      %v5861 = vadd.f32 %v5748, %v5860
      %5862 = vmatmul.f32.gmra.mxu0 %v3133
      %v5863 = vpop.f32.mrf.mxu0
      %v5864 = vadd.f32 %v5751, %v5863
      %5865 = vmatmul.f32.gmra.mxu0 %v3135
      %v5866 = vpop.f32.mrf.mxu0
      %v5867 = vadd.f32 %v5754, %v5866
      %5868 = vmatmul.f32.gmra.mxu0 %v3137
      %v5869 = vpop.f32.mrf.mxu0
      %v5870 = vadd.f32 %v5757, %v5869
      %5871 = vmatmul.f32.gmra.mxu0 %v3139
      %v5872 = vpop.f32.mrf.mxu0
      %v5873 = vadd.f32 %v5760, %v5872
      %5874 = vmatmul.f32.gmra.mxu0 %v3141
      %v5875 = vpop.f32.mrf.mxu0
      %v5876 = vadd.f32 %v5763, %v5875
      %5877 = vmatmul.f32.gmra.mxu0 %v3143
      %v5878 = vpop.f32.mrf.mxu0
      %v5879 = vadd.f32 %v5766, %v5878
      %5880 = vdwg.mxu0
      %5881 = vmatpush.msra.mxu0 %v4584
      %5882 = vmatpush.msra.mxu0 %v4582
      %5883 = vmatpush.msra.mxu0 %v4580
      %5884 = vmatpush.msra.mxu0 %v4578
      %5885 = vmatpush.msra.mxu0 %v4576
      %5886 = vmatpush.msra.mxu0 %v4574
      %5887 = vmatpush.msra.mxu0 %v4572
      %5888 = vmatpush.msra.mxu0 %v4570
      %5889 = vmatpush.msra.mxu0 %v4568
      %5890 = vmatpush.msra.mxu0 %v4566
      %5891 = vmatpush.msra.mxu0 %v4564
      %5892 = vmatpush.msra.mxu0 %v4562
      %5893 = vmatpush.msra.mxu0 %v4560
      %5894 = vmatpush.msra.mxu0 %v4558
      %5895 = vmatpush.msra.mxu0 %v4556
      %5896 = vmatpush.msra.mxu0 %v4554
      %5897 = vmatmul.f32.gmra.mxu0 %v3776
      %v5898 = vpop.f32.mrf.mxu0
      %v5899 = vadd.f32 %v5786, %v5898
      %5900 = vmatmul.f32.gmra.mxu0 %v3781
      %v5901 = vpop.f32.mrf.mxu0
      %v5902 = vadd.f32 %v5789, %v5901
      %5903 = vmatmul.f32.gmra.mxu0 %v3785
      %v5904 = vpop.f32.mrf.mxu0
      %v5905 = vadd.f32 %v5792, %v5904
      %5906 = vmatmul.f32.gmra.mxu0 %v3789
      %v5907 = vpop.f32.mrf.mxu0
      %v5908 = vadd.f32 %v5795, %v5907
      %5909 = vmatmul.f32.gmra.mxu0 %v3793
      %v5910 = vpop.f32.mrf.mxu0
      %v5911 = vadd.f32 %v5798, %v5910
      %5912 = vmatmul.f32.gmra.mxu0 %v3797
      %v5913 = vpop.f32.mrf.mxu0
      %v5914 = vadd.f32 %v5801, %v5913
      %5915 = vmatmul.f32.gmra.mxu0 %v3801
      %v5916 = vpop.f32.mrf.mxu0
      %v5917 = vadd.f32 %v5804, %v5916
      %5918 = vmatmul.f32.gmra.mxu0 %v3805
      %v5919 = vpop.f32.mrf.mxu0
      %v5920 = vadd.f32 %v5807, %v5919
      %5921 = vmatmul.f32.gmra.mxu0 %v3809
      %v5922 = vpop.f32.mrf.mxu0
      %v5923 = vadd.f32 %v5810, %v5922
      %5924 = vmatmul.f32.gmra.mxu0 %v3813
      %v5925 = vpop.f32.mrf.mxu0
      %v5926 = vadd.f32 %v5813, %v5925
      %5927 = vmatmul.f32.gmra.mxu0 %v3817
      %v5928 = vpop.f32.mrf.mxu0
      %v5929 = vadd.f32 %v5816, %v5928
      %5930 = vmatmul.f32.gmra.mxu0 %v3821
      %v5931 = vpop.f32.mrf.mxu0
      %v5932 = vadd.f32 %v5819, %v5931
      %5933 = vmatmul.f32.gmra.mxu0 %v3825
      %v5934 = vpop.f32.mrf.mxu0
      %v5935 = vadd.f32 %v5822, %v5934
      %5936 = vmatmul.f32.gmra.mxu0 %v3829
      %v5937 = vpop.f32.mrf.mxu0
      %v5938 = vadd.f32 %v5825, %v5937
      %5939 = vmatmul.f32.gmra.mxu0 %v3833
      %v5940 = vpop.f32.mrf.mxu0
      %v5941 = vadd.f32 %v5828, %v5940
      %5942 = vmatmul.f32.gmra.mxu0 %v3837
      %v5943 = vpop.f32.mrf.mxu0
      %v5944 = vadd.f32 %v5831, %v5943
      %5945 = vmatmul.f32.gmra.mxu0 %v3841
      %v5946 = vpop.f32.mrf.mxu0
      %v5947 = vadd.f32 %v5834, %v5946
      %5948 = vmatmul.f32.gmra.mxu0 %v3845
      %v5949 = vpop.f32.mrf.mxu0
      %v5950 = vadd.f32 %v5837, %v5949
      %5951 = vmatmul.f32.gmra.mxu0 %v3849
      %v5952 = vpop.f32.mrf.mxu0
      %v5953 = vadd.f32 %v5840, %v5952
      %5954 = vmatmul.f32.gmra.mxu0 %v3853
      %v5955 = vpop.f32.mrf.mxu0
      %v5956 = vadd.f32 %v5843, %v5955
      %5957 = vmatmul.f32.gmra.mxu0 %v3857
      %v5958 = vpop.f32.mrf.mxu0
      %v5959 = vadd.f32 %v5846, %v5958
      %5960 = vmatmul.f32.gmra.mxu0 %v3861
      %v5961 = vpop.f32.mrf.mxu0
      %v5962 = vadd.f32 %v5849, %v5961
      %5963 = vmatmul.f32.gmra.mxu0 %v3865
      %v5964 = vpop.f32.mrf.mxu0
      %v5965 = vadd.f32 %v5852, %v5964
      %5966 = vmatmul.f32.gmra.mxu0 %v3869
      %v5967 = vpop.f32.mrf.mxu0
      %v5968 = vadd.f32 %v5855, %v5967
      %5969 = vmatmul.f32.gmra.mxu0 %v3873
      %v5970 = vpop.f32.mrf.mxu0
      %v5971 = vadd.f32 %v5858, %v5970
      %5972 = vmatmul.f32.gmra.mxu0 %v3877
      %v5973 = vpop.f32.mrf.mxu0
      %v5974 = vadd.f32 %v5861, %v5973
      %5975 = vmatmul.f32.gmra.mxu0 %v3881
      %v5976 = vpop.f32.mrf.mxu0
      %v5977 = vadd.f32 %v5864, %v5976
      %5978 = vmatmul.f32.gmra.mxu0 %v3885
      %v5979 = vpop.f32.mrf.mxu0
      %v5980 = vadd.f32 %v5867, %v5979
      %5981 = vmatmul.f32.gmra.mxu0 %v3889
      %v5982 = vpop.f32.mrf.mxu0
      %v5983 = vadd.f32 %v5870, %v5982
      %5984 = vmatmul.f32.gmra.mxu0 %v3893
      %v5985 = vpop.f32.mrf.mxu0
      %v5986 = vadd.f32 %v5873, %v5985
      %5987 = vmatmul.f32.gmra.mxu0 %v3897
      %v5988 = vpop.f32.mrf.mxu0
      %v5989 = vadd.f32 %v5876, %v5988
      %5990 = vmatmul.f32.gmra.mxu0 %v3901
      %v5991 = vpop.f32.mrf.mxu0
      %v5992 = vadd.f32 %v5879, %v5991
      %5993 = vdwg.mxu0
      %5994 = vmatpush.msra.mxu0 %v4616
      %5995 = vmatpush.msra.mxu0 %v4614
      %5996 = vmatpush.msra.mxu0 %v4612
      %5997 = vmatpush.msra.mxu0 %v4610
      %5998 = vmatpush.msra.mxu0 %v4608
      %5999 = vmatpush.msra.mxu0 %v4606
      %6000 = vmatpush.msra.mxu0 %v4604
      %6001 = vmatpush.msra.mxu0 %v4602
      %6002 = vmatpush.msra.mxu0 %v4600
      %6003 = vmatpush.msra.mxu0 %v4598
      %6004 = vmatpush.msra.mxu0 %v4596
      %6005 = vmatpush.msra.mxu0 %v4594
      %6006 = vmatpush.msra.mxu0 %v4592
      %6007 = vmatpush.msra.mxu0 %v4590
      %6008 = vmatpush.msra.mxu0 %v4588
      %6009 = vmatpush.msra.mxu0 %v4586
      %6010 = vmatmul.f32.gmra.mxu0 %v3779
      %v6011 = vpop.f32.mrf.mxu0
      %v6012 = vadd.f32 %v5899, %v6011
      %6013 = vmatmul.f32.gmra.mxu0 %v3783
      %v6014 = vpop.f32.mrf.mxu0
      %v6015 = vadd.f32 %v5902, %v6014
      %6016 = vmatmul.f32.gmra.mxu0 %v3787
      %v6017 = vpop.f32.mrf.mxu0
      %v6018 = vadd.f32 %v5905, %v6017
      %6019 = vmatmul.f32.gmra.mxu0 %v3791
      %v6020 = vpop.f32.mrf.mxu0
      %v6021 = vadd.f32 %v5908, %v6020
      %6022 = vmatmul.f32.gmra.mxu0 %v3795
      %v6023 = vpop.f32.mrf.mxu0
      %v6024 = vadd.f32 %v5911, %v6023
      %6025 = vmatmul.f32.gmra.mxu0 %v3799
      %v6026 = vpop.f32.mrf.mxu0
      %v6027 = vadd.f32 %v5914, %v6026
      %6028 = vmatmul.f32.gmra.mxu0 %v3803
      %v6029 = vpop.f32.mrf.mxu0
      %v6030 = vadd.f32 %v5917, %v6029
      %6031 = vmatmul.f32.gmra.mxu0 %v3807
      %v6032 = vpop.f32.mrf.mxu0
      %v6033 = vadd.f32 %v5920, %v6032
      %6034 = vmatmul.f32.gmra.mxu0 %v3811
      %v6035 = vpop.f32.mrf.mxu0
      %v6036 = vadd.f32 %v5923, %v6035
      %6037 = vmatmul.f32.gmra.mxu0 %v3815
      %v6038 = vpop.f32.mrf.mxu0
      %v6039 = vadd.f32 %v5926, %v6038
      %6040 = vmatmul.f32.gmra.mxu0 %v3819
      %v6041 = vpop.f32.mrf.mxu0
      %v6042 = vadd.f32 %v5929, %v6041
      %6043 = vmatmul.f32.gmra.mxu0 %v3823
      %v6044 = vpop.f32.mrf.mxu0
      %v6045 = vadd.f32 %v5932, %v6044
      %6046 = vmatmul.f32.gmra.mxu0 %v3827
      %v6047 = vpop.f32.mrf.mxu0
      %v6048 = vadd.f32 %v5935, %v6047
      %6049 = vmatmul.f32.gmra.mxu0 %v3831
      %v6050 = vpop.f32.mrf.mxu0
      %v6051 = vadd.f32 %v5938, %v6050
      %6052 = vmatmul.f32.gmra.mxu0 %v3835
      %v6053 = vpop.f32.mrf.mxu0
      %v6054 = vadd.f32 %v5941, %v6053
      %6055 = vmatmul.f32.gmra.mxu0 %v3839
      %v6056 = vpop.f32.mrf.mxu0
      %v6057 = vadd.f32 %v5944, %v6056
      %6058 = vmatmul.f32.gmra.mxu0 %v3843
      %v6059 = vpop.f32.mrf.mxu0
      %v6060 = vadd.f32 %v5947, %v6059
      %6061 = vmatmul.f32.gmra.mxu0 %v3847
      %v6062 = vpop.f32.mrf.mxu0
      %v6063 = vadd.f32 %v5950, %v6062
      %6064 = vmatmul.f32.gmra.mxu0 %v3851
      %v6065 = vpop.f32.mrf.mxu0
      %v6066 = vadd.f32 %v5953, %v6065
      %6067 = vmatmul.f32.gmra.mxu0 %v3855
      %v6068 = vpop.f32.mrf.mxu0
      %v6069 = vadd.f32 %v5956, %v6068
      %6070 = vmatmul.f32.gmra.mxu0 %v3859
      %v6071 = vpop.f32.mrf.mxu0
      %v6072 = vadd.f32 %v5959, %v6071
      %6073 = vmatmul.f32.gmra.mxu0 %v3863
      %v6074 = vpop.f32.mrf.mxu0
      %v6075 = vadd.f32 %v5962, %v6074
      %6076 = vmatmul.f32.gmra.mxu0 %v3867
      %v6077 = vpop.f32.mrf.mxu0
      %v6078 = vadd.f32 %v5965, %v6077
      %6079 = vmatmul.f32.gmra.mxu0 %v3871
      %v6080 = vpop.f32.mrf.mxu0
      %v6081 = vadd.f32 %v5968, %v6080
      %6082 = vmatmul.f32.gmra.mxu0 %v3875
      %v6083 = vpop.f32.mrf.mxu0
      %v6084 = vadd.f32 %v5971, %v6083
      %6085 = vmatmul.f32.gmra.mxu0 %v3879
      %v6086 = vpop.f32.mrf.mxu0
      %v6087 = vadd.f32 %v5974, %v6086
      %6088 = vmatmul.f32.gmra.mxu0 %v3883
      %v6089 = vpop.f32.mrf.mxu0
      %v6090 = vadd.f32 %v5977, %v6089
      %6091 = vmatmul.f32.gmra.mxu0 %v3887
      %v6092 = vpop.f32.mrf.mxu0
      %v6093 = vadd.f32 %v5980, %v6092
      %6094 = vmatmul.f32.gmra.mxu0 %v3891
      %v6095 = vpop.f32.mrf.mxu0
      %v6096 = vadd.f32 %v5983, %v6095
      %6097 = vmatmul.f32.gmra.mxu0 %v3895
      %v6098 = vpop.f32.mrf.mxu0
      %v6099 = vadd.f32 %v5986, %v6098
      %6100 = vmatmul.f32.gmra.mxu0 %v3899
      %v6101 = vpop.f32.mrf.mxu0
      %v6102 = vadd.f32 %v5989, %v6101
      %6103 = vmatmul.f32.gmra.mxu0 %v3903
      %v6104 = vpop.f32.mrf.mxu0
      %v6105 = vadd.f32 %v5992, %v6104
      %6106 = vdwg.mxu0
      %6107 = vmatpush.msra.mxu0 %v4648
      %6108 = vmatpush.msra.mxu0 %v4646
      %6109 = vmatpush.msra.mxu0 %v4644
      %6110 = vmatpush.msra.mxu0 %v4642
      %6111 = vmatpush.msra.mxu0 %v4640
      %6112 = vmatpush.msra.mxu0 %v4638
      %6113 = vmatpush.msra.mxu0 %v4636
      %6114 = vmatpush.msra.mxu0 %v4634
      %6115 = vmatpush.msra.mxu0 %v4632
      %6116 = vmatpush.msra.mxu0 %v4630
      %6117 = vmatpush.msra.mxu0 %v4628
      %6118 = vmatpush.msra.mxu0 %v4626
      %6119 = vmatpush.msra.mxu0 %v4624
      %6120 = vmatpush.msra.mxu0 %v4622
      %6121 = vmatpush.msra.mxu0 %v4620
      %6122 = vmatpush.msra.mxu0 %v4618
      %6123 = vmatmul.f32.gmra.mxu0 %v4036
      %v6124 = vpop.f32.mrf.mxu0
      %v6125 = vadd.f32 %v6012, %v6124
      %6126 = vmatmul.f32.gmra.mxu0 %v4041
      %v6127 = vpop.f32.mrf.mxu0
      %v6128 = vadd.f32 %v6015, %v6127
      %6129 = vmatmul.f32.gmra.mxu0 %v4045
      %v6130 = vpop.f32.mrf.mxu0
      %v6131 = vadd.f32 %v6018, %v6130
      %6132 = vmatmul.f32.gmra.mxu0 %v4049
      %v6133 = vpop.f32.mrf.mxu0
      %v6134 = vadd.f32 %v6021, %v6133
      %6135 = vmatmul.f32.gmra.mxu0 %v4053
      %v6136 = vpop.f32.mrf.mxu0
      %v6137 = vadd.f32 %v6024, %v6136
      %6138 = vmatmul.f32.gmra.mxu0 %v4057
      %v6139 = vpop.f32.mrf.mxu0
      %v6140 = vadd.f32 %v6027, %v6139
      %6141 = vmatmul.f32.gmra.mxu0 %v4061
      %v6142 = vpop.f32.mrf.mxu0
      %v6143 = vadd.f32 %v6030, %v6142
      %6144 = vmatmul.f32.gmra.mxu0 %v4065
      %v6145 = vpop.f32.mrf.mxu0
      %v6146 = vadd.f32 %v6033, %v6145
      %6147 = vmatmul.f32.gmra.mxu0 %v4069
      %v6148 = vpop.f32.mrf.mxu0
      %v6149 = vadd.f32 %v6036, %v6148
      %6150 = vmatmul.f32.gmra.mxu0 %v4073
      %v6151 = vpop.f32.mrf.mxu0
      %v6152 = vadd.f32 %v6039, %v6151
      %6153 = vmatmul.f32.gmra.mxu0 %v4077
      %v6154 = vpop.f32.mrf.mxu0
      %v6155 = vadd.f32 %v6042, %v6154
      %6156 = vmatmul.f32.gmra.mxu0 %v4081
      %v6157 = vpop.f32.mrf.mxu0
      %v6158 = vadd.f32 %v6045, %v6157
      %6159 = vmatmul.f32.gmra.mxu0 %v4085
      %v6160 = vpop.f32.mrf.mxu0
      %v6161 = vadd.f32 %v6048, %v6160
      %6162 = vmatmul.f32.gmra.mxu0 %v4089
      %v6163 = vpop.f32.mrf.mxu0
      %v6164 = vadd.f32 %v6051, %v6163
      %6165 = vmatmul.f32.gmra.mxu0 %v4093
      %v6166 = vpop.f32.mrf.mxu0
      %v6167 = vadd.f32 %v6054, %v6166
      %6168 = vmatmul.f32.gmra.mxu0 %v4097
      %v6169 = vpop.f32.mrf.mxu0
      %v6170 = vadd.f32 %v6057, %v6169
      %6171 = vmatmul.f32.gmra.mxu0 %v4101
      %v6172 = vpop.f32.mrf.mxu0
      %v6173 = vadd.f32 %v6060, %v6172
      %6174 = vmatmul.f32.gmra.mxu0 %v4105
      %v6175 = vpop.f32.mrf.mxu0
      %v6176 = vadd.f32 %v6063, %v6175
      %6177 = vmatmul.f32.gmra.mxu0 %v4109
      %v6178 = vpop.f32.mrf.mxu0
      %v6179 = vadd.f32 %v6066, %v6178
      %6180 = vmatmul.f32.gmra.mxu0 %v4113
      %v6181 = vpop.f32.mrf.mxu0
      %v6182 = vadd.f32 %v6069, %v6181
      %6183 = vmatmul.f32.gmra.mxu0 %v4117
      %v6184 = vpop.f32.mrf.mxu0
      %v6185 = vadd.f32 %v6072, %v6184
      %6186 = vmatmul.f32.gmra.mxu0 %v4121
      %v6187 = vpop.f32.mrf.mxu0
      %v6188 = vadd.f32 %v6075, %v6187
      %6189 = vmatmul.f32.gmra.mxu0 %v4125
      %v6190 = vpop.f32.mrf.mxu0
      %v6191 = vadd.f32 %v6078, %v6190
      %6192 = vmatmul.f32.gmra.mxu0 %v4129
      %v6193 = vpop.f32.mrf.mxu0
      %v6194 = vadd.f32 %v6081, %v6193
      %6195 = vmatmul.f32.gmra.mxu0 %v4133
      %v6196 = vpop.f32.mrf.mxu0
      %v6197 = vadd.f32 %v6084, %v6196
      %6198 = vmatmul.f32.gmra.mxu0 %v4137
      %v6199 = vpop.f32.mrf.mxu0
      %v6200 = vadd.f32 %v6087, %v6199
      %6201 = vmatmul.f32.gmra.mxu0 %v4141
      %v6202 = vpop.f32.mrf.mxu0
      %v6203 = vadd.f32 %v6090, %v6202
      %6204 = vmatmul.f32.gmra.mxu0 %v4145
      %v6205 = vpop.f32.mrf.mxu0
      %v6206 = vadd.f32 %v6093, %v6205
      %6207 = vmatmul.f32.gmra.mxu0 %v4149
      %v6208 = vpop.f32.mrf.mxu0
      %v6209 = vadd.f32 %v6096, %v6208
      %6210 = vmatmul.f32.gmra.mxu0 %v4153
      %v6211 = vpop.f32.mrf.mxu0
      %v6212 = vadd.f32 %v6099, %v6211
      %6213 = vmatmul.f32.gmra.mxu0 %v4157
      %v6214 = vpop.f32.mrf.mxu0
      %v6215 = vadd.f32 %v6102, %v6214
      %6216 = vmatmul.f32.gmra.mxu0 %v4161
      %v6217 = vpop.f32.mrf.mxu0
      %v6218 = vadd.f32 %v6105, %v6217
      %6219 = vdwg.mxu0
      %6220 = vmatpush.msra.mxu0 %v4680
      %6221 = vmatpush.msra.mxu0 %v4678
      %6222 = vmatpush.msra.mxu0 %v4676
      %6223 = vmatpush.msra.mxu0 %v4674
      %6224 = vmatpush.msra.mxu0 %v4672
      %6225 = vmatpush.msra.mxu0 %v4670
      %6226 = vmatpush.msra.mxu0 %v4668
      %6227 = vmatpush.msra.mxu0 %v4666
      %6228 = vmatpush.msra.mxu0 %v4664
      %6229 = vmatpush.msra.mxu0 %v4662
      %6230 = vmatpush.msra.mxu0 %v4660
      %6231 = vmatpush.msra.mxu0 %v4658
      %6232 = vmatpush.msra.mxu0 %v4656
      %6233 = vmatpush.msra.mxu0 %v4654
      %6234 = vmatpush.msra.mxu0 %v4652
      %6235 = vmatpush.msra.mxu0 %v4650
      %6236 = vmatmul.f32.gmra.mxu0 %v4039
      %v6237 = vpop.f32.mrf.mxu0
      %v6238 = vadd.f32 %v6125, %v6237
      %6239 = vmatmul.f32.gmra.mxu0 %v4043
      %v6240 = vpop.f32.mrf.mxu0
      %v6241 = vadd.f32 %v6128, %v6240
      %6242 = vmatmul.f32.gmra.mxu0 %v4047
      %v6243 = vpop.f32.mrf.mxu0
      %v6244 = vadd.f32 %v6131, %v6243
      %6245 = vmatmul.f32.gmra.mxu0 %v4051
      %v6246 = vpop.f32.mrf.mxu0
      %v6247 = vadd.f32 %v6134, %v6246
      %6248 = vmatmul.f32.gmra.mxu0 %v4055
      %v6249 = vpop.f32.mrf.mxu0
      %v6250 = vadd.f32 %v6137, %v6249
      %6251 = vmatmul.f32.gmra.mxu0 %v4059
      %v6252 = vpop.f32.mrf.mxu0
      %v6253 = vadd.f32 %v6140, %v6252
      %6254 = vmatmul.f32.gmra.mxu0 %v4063
      %v6255 = vpop.f32.mrf.mxu0
      %v6256 = vadd.f32 %v6143, %v6255
      %6257 = vmatmul.f32.gmra.mxu0 %v4067
      %v6258 = vpop.f32.mrf.mxu0
      %v6259 = vadd.f32 %v6146, %v6258
      %6260 = vmatmul.f32.gmra.mxu0 %v4071
      %v6261 = vpop.f32.mrf.mxu0
      %v6262 = vadd.f32 %v6149, %v6261
      %6263 = vmatmul.f32.gmra.mxu0 %v4075
      %v6264 = vpop.f32.mrf.mxu0
      %v6265 = vadd.f32 %v6152, %v6264
      %6266 = vmatmul.f32.gmra.mxu0 %v4079
      %v6267 = vpop.f32.mrf.mxu0
      %v6268 = vadd.f32 %v6155, %v6267
      %6269 = vmatmul.f32.gmra.mxu0 %v4083
      %v6270 = vpop.f32.mrf.mxu0
      %v6271 = vadd.f32 %v6158, %v6270
      %6272 = vmatmul.f32.gmra.mxu0 %v4087
      %v6273 = vpop.f32.mrf.mxu0
      %v6274 = vadd.f32 %v6161, %v6273
      %6275 = vmatmul.f32.gmra.mxu0 %v4091
      %v6276 = vpop.f32.mrf.mxu0
      %v6277 = vadd.f32 %v6164, %v6276
      %6278 = vmatmul.f32.gmra.mxu0 %v4095
      %v6279 = vpop.f32.mrf.mxu0
      %v6280 = vadd.f32 %v6167, %v6279
      %6281 = vmatmul.f32.gmra.mxu0 %v4099
      %v6282 = vpop.f32.mrf.mxu0
      %v6283 = vadd.f32 %v6170, %v6282
      %6284 = vmatmul.f32.gmra.mxu0 %v4103
      %v6285 = vpop.f32.mrf.mxu0
      %v6286 = vadd.f32 %v6173, %v6285
      %6287 = vmatmul.f32.gmra.mxu0 %v4107
      %v6288 = vpop.f32.mrf.mxu0
      %v6289 = vadd.f32 %v6176, %v6288
      %6290 = vmatmul.f32.gmra.mxu0 %v4111
      %v6291 = vpop.f32.mrf.mxu0
      %v6292 = vadd.f32 %v6179, %v6291
      %6293 = vmatmul.f32.gmra.mxu0 %v4115
      %v6294 = vpop.f32.mrf.mxu0
      %v6295 = vadd.f32 %v6182, %v6294
      %6296 = vmatmul.f32.gmra.mxu0 %v4119
      %v6297 = vpop.f32.mrf.mxu0
      %v6298 = vadd.f32 %v6185, %v6297
      %6299 = vmatmul.f32.gmra.mxu0 %v4123
      %v6300 = vpop.f32.mrf.mxu0
      %v6301 = vadd.f32 %v6188, %v6300
      %6302 = vmatmul.f32.gmra.mxu0 %v4127
      %v6303 = vpop.f32.mrf.mxu0
      %v6304 = vadd.f32 %v6191, %v6303
      %6305 = vmatmul.f32.gmra.mxu0 %v4131
      %v6306 = vpop.f32.mrf.mxu0
      %v6307 = vadd.f32 %v6194, %v6306
      %6308 = vmatmul.f32.gmra.mxu0 %v4135
      %v6309 = vpop.f32.mrf.mxu0
      %v6310 = vadd.f32 %v6197, %v6309
      %6311 = vmatmul.f32.gmra.mxu0 %v4139
      %v6312 = vpop.f32.mrf.mxu0
      %v6313 = vadd.f32 %v6200, %v6312
      %6314 = vmatmul.f32.gmra.mxu0 %v4143
      %v6315 = vpop.f32.mrf.mxu0
      %v6316 = vadd.f32 %v6203, %v6315
      %6317 = vmatmul.f32.gmra.mxu0 %v4147
      %v6318 = vpop.f32.mrf.mxu0
      %v6319 = vadd.f32 %v6206, %v6318
      %6320 = vmatmul.f32.gmra.mxu0 %v4151
      %v6321 = vpop.f32.mrf.mxu0
      %v6322 = vadd.f32 %v6209, %v6321
      %6323 = vmatmul.f32.gmra.mxu0 %v4155
      %v6324 = vpop.f32.mrf.mxu0
      %v6325 = vadd.f32 %v6212, %v6324
      %6326 = vmatmul.f32.gmra.mxu0 %v4159
      %v6327 = vpop.f32.mrf.mxu0
      %v6328 = vadd.f32 %v6215, %v6327
      %6329 = vmatmul.f32.gmra.mxu0 %v4163
      %v6330 = vpop.f32.mrf.mxu0
      %v6331 = vadd.f32 %v6218, %v6330
      %6332 = vdwg.mxu0
      %6333 = vmatpush.msra.mxu0 %v4712
      %6334 = vmatpush.msra.mxu0 %v4710
      %6335 = vmatpush.msra.mxu0 %v4708
      %6336 = vmatpush.msra.mxu0 %v4706
      %6337 = vmatpush.msra.mxu0 %v4704
      %6338 = vmatpush.msra.mxu0 %v4702
      %6339 = vmatpush.msra.mxu0 %v4700
      %6340 = vmatpush.msra.mxu0 %v4698
      %6341 = vmatpush.msra.mxu0 %v4696
      %6342 = vmatpush.msra.mxu0 %v4694
      %6343 = vmatpush.msra.mxu0 %v4692
      %6344 = vmatpush.msra.mxu0 %v4690
      %6345 = vmatpush.msra.mxu0 %v4688
      %6346 = vmatpush.msra.mxu0 %v4686
      %6347 = vmatpush.msra.mxu0 %v4684
      %6348 = vmatpush.msra.mxu0 %v4682
      %6349 = vmatmul.f32.gmra.mxu0 %v4297
      %v6350 = vpop.f32.mrf.mxu0
      %v6351 = vadd.f32 %v6238, %v6350
      %6352 = vmatmul.f32.gmra.mxu0 %v4302
      %v6353 = vpop.f32.mrf.mxu0
      %v6354 = vadd.f32 %v6241, %v6353
      %6355 = vmatmul.f32.gmra.mxu0 %v4306
      %v6356 = vpop.f32.mrf.mxu0
      %v6357 = vadd.f32 %v6244, %v6356
      %6358 = vmatmul.f32.gmra.mxu0 %v4310
      %v6359 = vpop.f32.mrf.mxu0
      %v6360 = vadd.f32 %v6247, %v6359
      %6361 = vmatmul.f32.gmra.mxu0 %v4314
      %v6362 = vpop.f32.mrf.mxu0
      %v6363 = vadd.f32 %v6250, %v6362
      %6364 = vmatmul.f32.gmra.mxu0 %v4318
      %v6365 = vpop.f32.mrf.mxu0
      %v6366 = vadd.f32 %v6253, %v6365
      %6367 = vmatmul.f32.gmra.mxu0 %v4322
      %v6368 = vpop.f32.mrf.mxu0
      %v6369 = vadd.f32 %v6256, %v6368
      %6370 = vmatmul.f32.gmra.mxu0 %v4326
      %v6371 = vpop.f32.mrf.mxu0
      %v6372 = vadd.f32 %v6259, %v6371
      %6373 = vmatmul.f32.gmra.mxu0 %v4330
      %v6374 = vpop.f32.mrf.mxu0
      %v6375 = vadd.f32 %v6262, %v6374
      %6376 = vmatmul.f32.gmra.mxu0 %v4334
      %v6377 = vpop.f32.mrf.mxu0
      %v6378 = vadd.f32 %v6265, %v6377
      %6379 = vmatmul.f32.gmra.mxu0 %v4338
      %v6380 = vpop.f32.mrf.mxu0
      %v6381 = vadd.f32 %v6268, %v6380
      %6382 = vmatmul.f32.gmra.mxu0 %v4342
      %v6383 = vpop.f32.mrf.mxu0
      %v6384 = vadd.f32 %v6271, %v6383
      %6385 = vmatmul.f32.gmra.mxu0 %v4346
      %v6386 = vpop.f32.mrf.mxu0
      %v6387 = vadd.f32 %v6274, %v6386
      %6388 = vmatmul.f32.gmra.mxu0 %v4350
      %v6389 = vpop.f32.mrf.mxu0
      %v6390 = vadd.f32 %v6277, %v6389
      %6391 = vmatmul.f32.gmra.mxu0 %v4354
      %v6392 = vpop.f32.mrf.mxu0
      %v6393 = vadd.f32 %v6280, %v6392
      %6394 = vmatmul.f32.gmra.mxu0 %v4358
      %v6395 = vpop.f32.mrf.mxu0
      %v6396 = vadd.f32 %v6283, %v6395
      %6397 = vmatmul.f32.gmra.mxu0 %v4362
      %v6398 = vpop.f32.mrf.mxu0
      %v6399 = vadd.f32 %v6286, %v6398
      %6400 = vmatmul.f32.gmra.mxu0 %v4366
      %v6401 = vpop.f32.mrf.mxu0
      %v6402 = vadd.f32 %v6289, %v6401
      %6403 = vmatmul.f32.gmra.mxu0 %v4370
      %v6404 = vpop.f32.mrf.mxu0
      %v6405 = vadd.f32 %v6292, %v6404
      %6406 = vmatmul.f32.gmra.mxu0 %v4374
      %v6407 = vpop.f32.mrf.mxu0
      %v6408 = vadd.f32 %v6295, %v6407
      %6409 = vmatmul.f32.gmra.mxu0 %v4378
      %v6410 = vpop.f32.mrf.mxu0
      %v6411 = vadd.f32 %v6298, %v6410
      %6412 = vmatmul.f32.gmra.mxu0 %v4382
      %v6413 = vpop.f32.mrf.mxu0
      %v6414 = vadd.f32 %v6301, %v6413
      %6415 = vmatmul.f32.gmra.mxu0 %v4386
      %v6416 = vpop.f32.mrf.mxu0
      %v6417 = vadd.f32 %v6304, %v6416
      %6418 = vmatmul.f32.gmra.mxu0 %v4390
      %v6419 = vpop.f32.mrf.mxu0
      %v6420 = vadd.f32 %v6307, %v6419
      %6421 = vmatmul.f32.gmra.mxu0 %v4394
      %v6422 = vpop.f32.mrf.mxu0
      %v6423 = vadd.f32 %v6310, %v6422
      %6424 = vmatmul.f32.gmra.mxu0 %v4398
      %v6425 = vpop.f32.mrf.mxu0
      %v6426 = vadd.f32 %v6313, %v6425
      %6427 = vmatmul.f32.gmra.mxu0 %v4402
      %v6428 = vpop.f32.mrf.mxu0
      %v6429 = vadd.f32 %v6316, %v6428
      %6430 = vmatmul.f32.gmra.mxu0 %v4406
      %v6431 = vpop.f32.mrf.mxu0
      %v6432 = vadd.f32 %v6319, %v6431
      %6433 = vmatmul.f32.gmra.mxu0 %v4410
      %v6434 = vpop.f32.mrf.mxu0
      %v6435 = vadd.f32 %v6322, %v6434
      %6436 = vmatmul.f32.gmra.mxu0 %v4414
      %v6437 = vpop.f32.mrf.mxu0
      %v6438 = vadd.f32 %v6325, %v6437
      %6439 = vmatmul.f32.gmra.mxu0 %v4418
      %v6440 = vpop.f32.mrf.mxu0
      %v6441 = vadd.f32 %v6328, %v6440
      %6442 = vmatmul.f32.gmra.mxu0 %v4422
      %v6443 = vpop.f32.mrf.mxu0
      %v6444 = vadd.f32 %v6331, %v6443
      %6445 = vdwg.mxu0
      %6446 = vmatpush.msra.mxu0 %v4744
      %6447 = vmatpush.msra.mxu0 %v4742
      %6448 = vmatpush.msra.mxu0 %v4740
      %6449 = vmatpush.msra.mxu0 %v4738
      %6450 = vmatpush.msra.mxu0 %v4736
      %6451 = vmatpush.msra.mxu0 %v4734
      %6452 = vmatpush.msra.mxu0 %v4732
      %6453 = vmatpush.msra.mxu0 %v4730
      %6454 = vmatpush.msra.mxu0 %v4728
      %6455 = vmatpush.msra.mxu0 %v4726
      %6456 = vmatpush.msra.mxu0 %v4724
      %6457 = vmatpush.msra.mxu0 %v4722
      %6458 = vmatpush.msra.mxu0 %v4720
      %6459 = vmatpush.msra.mxu0 %v4718
      %6460 = vmatpush.msra.mxu0 %v4716
      %6461 = vmatpush.msra.mxu0 %v4714
      %6462 = vmatmul.f32.gmra.mxu0 %v4300
      %v6463 = vpop.f32.mrf.mxu0
      %v6464 = vadd.f32 %v6351, %v6463
      %6465 = vmatmul.f32.gmra.mxu0 %v4304
      %v6466 = vpop.f32.mrf.mxu0
      %v6467 = vadd.f32 %v6354, %v6466
      %6468 = vmatmul.f32.gmra.mxu0 %v4308
      %v6469 = vpop.f32.mrf.mxu0
      %v6470 = vadd.f32 %v6357, %v6469
      %6471 = vmatmul.f32.gmra.mxu0 %v4312
      %v6472 = vpop.f32.mrf.mxu0
      %v6473 = vadd.f32 %v6360, %v6472
      %6474 = vmatmul.f32.gmra.mxu0 %v4316
      %v6475 = vpop.f32.mrf.mxu0
      %v6476 = vadd.f32 %v6363, %v6475
      %6477 = vmatmul.f32.gmra.mxu0 %v4320
      %v6478 = vpop.f32.mrf.mxu0
      %v6479 = vadd.f32 %v6366, %v6478
      %6480 = vmatmul.f32.gmra.mxu0 %v4324
      %v6481 = vpop.f32.mrf.mxu0
      %v6482 = vadd.f32 %v6369, %v6481
      %6483 = vmatmul.f32.gmra.mxu0 %v4328
      %v6484 = vpop.f32.mrf.mxu0
      %v6485 = vadd.f32 %v6372, %v6484
      %6486 = vmatmul.f32.gmra.mxu0 %v4332
      %v6487 = vpop.f32.mrf.mxu0
      %v6488 = vadd.f32 %v6375, %v6487
      %6489 = vmatmul.f32.gmra.mxu0 %v4336
      %v6490 = vpop.f32.mrf.mxu0
      %v6491 = vadd.f32 %v6378, %v6490
      %6492 = vmatmul.f32.gmra.mxu0 %v4340
      %v6493 = vpop.f32.mrf.mxu0
      %v6494 = vadd.f32 %v6381, %v6493
      %6495 = vmatmul.f32.gmra.mxu0 %v4344
      %v6496 = vpop.f32.mrf.mxu0
      %v6497 = vadd.f32 %v6384, %v6496
      %6498 = vmatmul.f32.gmra.mxu0 %v4348
      %v6499 = vpop.f32.mrf.mxu0
      %v6500 = vadd.f32 %v6387, %v6499
      %6501 = vmatmul.f32.gmra.mxu0 %v4352
      %v6502 = vpop.f32.mrf.mxu0
      %v6503 = vadd.f32 %v6390, %v6502
      %6504 = vmatmul.f32.gmra.mxu0 %v4356
      %v6505 = vpop.f32.mrf.mxu0
      %v6506 = vadd.f32 %v6393, %v6505
      %6507 = vmatmul.f32.gmra.mxu0 %v4360
      %v6508 = vpop.f32.mrf.mxu0
      %v6509 = vadd.f32 %v6396, %v6508
      %6510 = vmatmul.f32.gmra.mxu0 %v4364
      %v6511 = vpop.f32.mrf.mxu0
      %v6512 = vadd.f32 %v6399, %v6511
      %6513 = vmatmul.f32.gmra.mxu0 %v4368
      %v6514 = vpop.f32.mrf.mxu0
      %v6515 = vadd.f32 %v6402, %v6514
      %6516 = vmatmul.f32.gmra.mxu0 %v4372
      %v6517 = vpop.f32.mrf.mxu0
      %v6518 = vadd.f32 %v6405, %v6517
      %6519 = vmatmul.f32.gmra.mxu0 %v4376
      %v6520 = vpop.f32.mrf.mxu0
      %v6521 = vadd.f32 %v6408, %v6520
      %6522 = vmatmul.f32.gmra.mxu0 %v4380
      %v6523 = vpop.f32.mrf.mxu0
      %v6524 = vadd.f32 %v6411, %v6523
      %6525 = vmatmul.f32.gmra.mxu0 %v4384
      %v6526 = vpop.f32.mrf.mxu0
      %v6527 = vadd.f32 %v6414, %v6526
      %6528 = vmatmul.f32.gmra.mxu0 %v4388
      %v6529 = vpop.f32.mrf.mxu0
      %v6530 = vadd.f32 %v6417, %v6529
      %6531 = vmatmul.f32.gmra.mxu0 %v4392
      %v6532 = vpop.f32.mrf.mxu0
      %v6533 = vadd.f32 %v6420, %v6532
      %6534 = vmatmul.f32.gmra.mxu0 %v4396
      %v6535 = vpop.f32.mrf.mxu0
      %v6536 = vadd.f32 %v6423, %v6535
      %6537 = vmatmul.f32.gmra.mxu0 %v4400
      %v6538 = vpop.f32.mrf.mxu0
      %v6539 = vadd.f32 %v6426, %v6538
      %6540 = vmatmul.f32.gmra.mxu0 %v4404
      %v6541 = vpop.f32.mrf.mxu0
      %v6542 = vadd.f32 %v6429, %v6541
      %6543 = vmatmul.f32.gmra.mxu0 %v4408
      %v6544 = vpop.f32.mrf.mxu0
      %v6545 = vadd.f32 %v6432, %v6544
      %6546 = vmatmul.f32.gmra.mxu0 %v4412
      %v6547 = vpop.f32.mrf.mxu0
      %v6548 = vadd.f32 %v6435, %v6547
      %6549 = vmatmul.f32.gmra.mxu0 %v4416
      %v6550 = vpop.f32.mrf.mxu0
      %v6551 = vadd.f32 %v6438, %v6550
      %6552 = vmatmul.f32.gmra.mxu0 %v4420
      %v6553 = vpop.f32.mrf.mxu0
      %v6554 = vadd.f32 %v6441, %v6553
      %6555 = vmatmul.f32.gmra.mxu0 %v4424
      %v6556 = vpop.f32.mrf.mxu0
      %v6557 = vadd.f32 %v6444, %v6556
      %6558 = vdwg.mxu0
      %6559 = vst [vmem:[%s285] sm:$0xff] %v5560
      %6560 = vst [vmem:[%s285 + $0x8] sm:$0xff] %v6464
      %6561 = vst [vmem:[%s285 + $0x10] sm:$0xff] %v5563
      %6562 = vst [vmem:[%s285 + $0x18] sm:$0xff] %v6467
      %6563 = vst [vmem:[%s285 + $0x20] sm:$0xff] %v5566
      %6564 = vst [vmem:[%s285 + $0x28] sm:$0xff] %v6470
      %6565 = vst [vmem:[%s285 + $0x30] sm:$0xff] %v5569
      %6566 = vst [vmem:[%s285 + $0x38] sm:$0xff] %v6473
      %6567 = vst [vmem:[%s285 + $0x40] sm:$0xff] %v5572
      %6568 = vst [vmem:[%s285 + $0x48] sm:$0xff] %v6476
      %6569 = vst [vmem:[%s285 + $0x50] sm:$0xff] %v5575
      %6570 = vst [vmem:[%s285 + $0x58] sm:$0xff] %v6479
      %6571 = vst [vmem:[%s285 + $0x60] sm:$0xff] %v5578
      %6572 = vst [vmem:[%s285 + $0x68] sm:$0xff] %v6482
      %6573 = vst [vmem:[%s285 + $0x70] sm:$0xff] %v5581
      %6574 = vst [vmem:[%s285 + $0x78] sm:$0xff] %v6485
      %6575 = vst [vmem:[%s285 + $0x80] sm:$0xff] %v5584
      %6576 = vst [vmem:[%s285 + $0x88] sm:$0xff] %v6488
      %6577 = vst [vmem:[%s285 + $0x90] sm:$0xff] %v5587
      %6578 = vst [vmem:[%s285 + $0x98] sm:$0xff] %v6491
      %6579 = vst [vmem:[%s285 + $0xa0] sm:$0xff] %v5590
      %6580 = vst [vmem:[%s285 + $0xa8] sm:$0xff] %v6494
      %6581 = vst [vmem:[%s285 + $0xb0] sm:$0xff] %v5593
      %6582 = vst [vmem:[%s285 + $0xb8] sm:$0xff] %v6497
      %6583 = vst [vmem:[%s285 + $0xc0] sm:$0xff] %v5596
      %6584 = vst [vmem:[%s285 + $0xc8] sm:$0xff] %v6500
      %6585 = vst [vmem:[%s285 + $0xd0] sm:$0xff] %v5599
      %6586 = vst [vmem:[%s285 + $0xd8] sm:$0xff] %v6503
      %6587 = vst [vmem:[%s285 + $0xe0] sm:$0xff] %v5602
      %6588 = vst [vmem:[%s285 + $0xe8] sm:$0xff] %v6506
      %6589 = vst [vmem:[%s285 + $0xf0] sm:$0xff] %v5605
      %6590 = vst [vmem:[%s285 + $0xf8] sm:$0xff] %v6509
      %6591 = vst [vmem:[%s285 + $0x100] sm:$0xff] %v5608
      %6592 = vst [vmem:[%s285 + $0x108] sm:$0xff] %v6512
      %6593 = vst [vmem:[%s285 + $0x110] sm:$0xff] %v5611
      %6594 = vst [vmem:[%s285 + $0x118] sm:$0xff] %v6515
      %6595 = vst [vmem:[%s285 + $0x120] sm:$0xff] %v5614
      %6596 = vst [vmem:[%s285 + $0x128] sm:$0xff] %v6518
      %6597 = vst [vmem:[%s285 + $0x130] sm:$0xff] %v5617
      %6598 = vst [vmem:[%s285 + $0x138] sm:$0xff] %v6521
      %6599 = vst [vmem:[%s285 + $0x140] sm:$0xff] %v5620
      %6600 = vst [vmem:[%s285 + $0x148] sm:$0xff] %v6524
      %6601 = vst [vmem:[%s285 + $0x150] sm:$0xff] %v5623
      %6602 = vst [vmem:[%s285 + $0x158] sm:$0xff] %v6527
      %6603 = vst [vmem:[%s285 + $0x160] sm:$0xff] %v5626
      %6604 = vst [vmem:[%s285 + $0x168] sm:$0xff] %v6530
      %6605 = vst [vmem:[%s285 + $0x170] sm:$0xff] %v5629
      %6606 = vst [vmem:[%s285 + $0x178] sm:$0xff] %v6533
      %6607 = vst [vmem:[%s285 + $0x180] sm:$0xff] %v5632
      %6608 = vst [vmem:[%s285 + $0x188] sm:$0xff] %v6536
      %6609 = vst [vmem:[%s285 + $0x190] sm:$0xff] %v5635
      %6610 = vst [vmem:[%s285 + $0x198] sm:$0xff] %v6539
      %6611 = vst [vmem:[%s285 + $0x1a0] sm:$0xff] %v5638
      %6612 = vst [vmem:[%s285 + $0x1a8] sm:$0xff] %v6542
      %6613 = vst [vmem:[%s285 + $0x1b0] sm:$0xff] %v5641
      %6614 = vst [vmem:[%s285 + $0x1b8] sm:$0xff] %v6545
      %6615 = vst [vmem:[%s285 + $0x1c0] sm:$0xff] %v5644
      %6616 = vst [vmem:[%s285 + $0x1c8] sm:$0xff] %v6548
      %6617 = vst [vmem:[%s285 + $0x1d0] sm:$0xff] %v5647
      %6618 = vst [vmem:[%s285 + $0x1d8] sm:$0xff] %v6551
      %6619 = vst [vmem:[%s285 + $0x1e0] sm:$0xff] %v5650
      %6620 = vst [vmem:[%s285 + $0x1e8] sm:$0xff] %v6554
      %6621 = vst [vmem:[%s285 + $0x1f0] sm:$0xff] %v5653
      %6622 = vst [vmem:[%s285 + $0x1f8] sm:$0xff] %v6557
      %s6623 = smul.u32 32, %s18
      %p6624 = scmp.lt.s32.totalorder %s6623, 63
      %s6625 = scalar_select %p6624, %s6623, 63
      %s6626 = smul.addr %s6625, 2
      %s6627 = smul.addr %s6626, 8
      %s6628 = scalar_lea.vmem %s7, %s6627
      // Predicated region
      $region49: #{decoder_forward.1} parent=47 // pred_check
        %p6629 = pneg %p188
      $region50: #{decoder_forward.1} parent=47 // pred_check_branch
        %6631 = sbr.rel (%p6629) target = $region52
      $region51: #{decoder_forward.1} parent=47 // pred_region
        %s6632 = smul.u32 32, %s18
      $region52: #{decoder_forward.1} parent=47 // pred_fallthru
        _
    $region48: #{decoder_forward.1} parent=5 // pred_fallthru
      _
    %p6633 = scmp.le.s32.totalorder 2, %s13
    // Predicated region
    $region53: #{decoder_forward.1} parent=5 // pred_check
      %p6634 = pneg %p6633
    $region54: #{decoder_forward.1} parent=5 // pred_check_branch
      %6636 = sbr.rel (%p6634) target = $region56
    $region55: #{decoder_forward.1} parent=5 // pred_region
      %s6637 = ssub.s32 %s13, 2
      // Predicated region
      $region57: #{decoder_forward.1} parent=55 // pred_check
        %p6638 = pneg %p194
      $region58: #{decoder_forward.1} parent=55 // pred_check_branch
        %6640 = sbr.rel (%p6638) target = $region60
      $region59: #{decoder_forward.1} parent=55 // pred_region
        %s6641 = smul.u32 32, %s19
        %p6642 = scmp.lt.s32.totalorder %s6641, 63
        %s6643 = scalar_select %p6642, %s6641, 63
        %s6644 = smul.addr %s6643, 2
        %s6645 = smul.addr %s6644, 8
        %s6646 = scalar_lea.vmem %s7, %s6645
      $region60: #{decoder_forward.1} parent=55 // pred_fallthru
        _
    $region56: #{decoder_forward.1} parent=5 // pred_fallthru
      _
  $region6: #{decoder_forward.1} parent=0 // loop_footer
    %s17 = sadd.s32 1, %s13
  $region7: #{decoder_forward.1} parent=0 // loop_footer_branch
    %12 = sbr.rel target = $region3
  $region8: #{decoder_forward.1} parent=0 // loop_exit
    _

</llo_original>
